<compile_context>
chip_gen: v7x
topology: tpu7x:2x2x1
jax: 0.10.0
libtpu: 0.0.40
codegen_flags: <defaults>
</compile_context>

<pallas_src>
import functools

import numpy as np

import jax
import jax.numpy as jnp
from jax import lax
from jax.experimental import pallas as pl
from jax.experimental.pallas import tpu as pltpu

EPS = 1e-5          # PyTorch LayerNorm default
LANE = 128
NEG_INF = -1e30


# ----------------------------------------------------------------------------
# The single fused kernel (one grid step == one block of batch elements)
# ----------------------------------------------------------------------------
def _fwd_kernel(src_ref, trg_ref, slab_ref, out_ref, *, idx, B, Lt, E):
    def ld(ent):
        off, r, c = ent
        return slab_ref[off:off + r, 0:c]          # static slice of the slab

    def layernorm(x, g_ent, b_ent):
        mu = jnp.mean(x, axis=-1, keepdims=True)
        xc = x - mu
        var = jnp.mean(xc * xc, axis=-1, keepdims=True)
        return xc * lax.rsqrt(var + EPS) * ld(g_ent) + ld(b_ent)

    def attention(x_q, x_kv, ap, c, fused):
        """SelfAttention(values=x_kv, keys=x_kv, query=x_q), batch folded."""
        wqkv = ld(ap["wqkv"])                      # (E, 3E), 1/sqrt(E) folded into Q
        if fused:                                  # self-attention: single QKV matmul
            qkv = jnp.dot(x_q, wqkv, preferred_element_type=jnp.float32)
            qp, kp, vp = qkv[:, 0:E], qkv[:, E:2 * E], qkv[:, 2 * E:3 * E]
        else:                                      # cross-attention: Q + fused KV
            qp = jnp.dot(x_q, wqkv[:, 0:E], preferred_element_type=jnp.float32)
            kv = jnp.dot(x_kv, wqkv[:, E:3 * E], preferred_element_type=jnp.float32)
            kp, vp = kv[:, 0:E], kv[:, E:2 * E]

        hm = ld(c["hmask"])                        # (H*B*Lq, E) head-lane mask
        # Stack per-head masked queries along sublanes: one tiny MXU matmul + 1 mul.
        q_stack = jnp.dot(ld(c["tile"]), qp, preferred_element_type=jnp.float32) * hm
        # Scores in NT form: contract E of q_stack against E of kp (no kp.T copy).
        s = lax.dot_general(q_stack, kp, (((1,), (1,)), ((), ())),
                            preferred_element_type=jnp.float32)   # (H*B*Lq, B*Lk)
        if B > 1:
            s = s + ld(c["neg"])                   # mask cross-batch score blocks
        s = s - jnp.max(s, axis=-1, keepdims=True)
        e = jnp.exp(s)
        attn = e / jnp.sum(e, axis=-1, keepdims=True)             # exact softmax
        o = jnp.dot(attn, vp, preferred_element_type=jnp.float32)  # (H*B*Lq, E)
        # Concat-of-heads: mask each head block to its lanes, fold the head axis.
        cat = jnp.dot(ld(c["untile"]), o * hm, preferred_element_type=jnp.float32)
        return (jnp.dot(cat, ld(ap["wo_t"]), preferred_element_type=jnp.float32)
                + ld(ap["bo"]))

    def ffn(x, t):
        h = jnp.dot(x, ld(t["w1_t"]), preferred_element_type=jnp.float32) + ld(t["b1"])
        h = jnp.maximum(h, 0.0)
        return jnp.dot(h, ld(t["w2_t"]), preferred_element_type=jnp.float32) + ld(t["b2"])

    def tblock(x_kv, x_q, t, c, fused):
        a = attention(x_q, x_kv, t["attn"], c, fused)
        x = layernorm(a + x_q, t["ln1_g"], t["ln1_b"])            # norm1(attn + query)
        return layernorm(ffn(x, t) + x, t["ln2_g"], t["ln2_b"])   # norm2(fwd + x)

    def embed(tok_ref, emb_ent, temp_ent):
        tok = tok_ref[...]                                        # (B*L, 1) int32
        cols = lax.broadcasted_iota(jnp.int32, (tok.shape[0], emb_ent[1]), 1)
        onehot = (cols == tok).astype(jnp.float32)                # (B*L, Vp)
        return (jnp.dot(onehot, ld(emb_ent), preferred_element_type=jnp.float32)
                + ld(temp_ent))                                   # temp pre-tiled (B*L, E)

    # --- CellEncoder ---------------------------------------------------------
    enc = embed(src_ref, idx["enc_emb"], idx["enc_temp"])
    for t in idx["enc_layers"]:
        enc = tblock(enc, enc, t, idx["aconst"]["enc"], fused=True)

    # --- CellDecoder ---------------------------------------------------------
    dec = embed(trg_ref, idx["dec_emb"], idx["dec_temp"])
    for d in idx["dec_layers"]:
        a = attention(dec, dec, d["self_attn"], idx["aconst"]["dec_self"], fused=True)
        q = layernorm(a + dec, d["ln_g"], d["ln_b"])              # layernorm(attn + x)
        dec = tblock(enc, q, d["tblock"], idx["aconst"]["dec_cross"], fused=False)

    logits = (jnp.dot(dec, ld(idx["fc_w_t"]), preferred_element_type=jnp.float32)
              + ld(idx["fc_b"]))                                  # (B*Lt, V)
    # torch Softmax(dim=1): softmax over the SEQUENCE axis, per batch element.
    for b in range(B):
        lg = logits[b * Lt:(b + 1) * Lt, :]
        m = jnp.max(lg, axis=0, keepdims=True)
        e = jnp.exp(lg - m)
        out_ref[b] = (e / jnp.sum(e, axis=0, keepdims=True)).astype(out_ref.dtype)


# ----------------------------------------------------------------------------
# Host-side one-time parameter packing into a single lane-dense (R, 128) slab
# ----------------------------------------------------------------------------
class _Packer:
    """Packs 2-D f32 parameters into one (rows, 128) slab.  Each entry starts
    on an 8-row (sublane-tile) boundary; returns (row_off, rows, cols)."""

    def __init__(self):
        self._blocks = []
        self._rows = 0

    def add(self, arr):
        arr = np.asarray(arr, np.float32)
        if arr.ndim == 1:
            arr = arr[None, :]
        r, c = arr.shape
        assert c <= LANE, f"parameter too wide for the 128-lane slab: {arr.shape}"
        r8 = -(-r // 8) * 8
        block = np.zeros((r8, LANE), np.float32)
        block[:r, :c] = arr
        off = self._rows
        self._blocks.append(block)
        self._rows += r8
        return (off, r, c)

    def finish(self):
        return np.concatenate(self._blocks, axis=0)


def pack_params(params, *, heads, batch, num_batch_blocks=1):
    enc, dec = params["encoder"], params["decoder"]
    Ls, E = enc["temp"].shape
    Lt = dec["temp"].shape[0]
    V = dec["fc_w"].shape[0]
    hd = E // heads
    assert hd * heads == E
    assert 3 * E <= LANE, "fused QKV weight must fit in 128 lanes"
    assert batch % num_batch_blocks == 0
    B = batch // num_batch_blocks
    assert heads * B * max(Ls, Lt) <= LANE, "head/batch-stacked sublane axis too large"

    pk = _Packer()

    def bd(w):                       # block-diag of the shared per-head Linear (transposed)
        w = np.asarray(w, np.float32)
        out = np.zeros((E, E), np.float32)
        for h in range(heads):
            out[h * hd:(h + 1) * hd, h * hd:(h + 1) * hd] = w.T
        return out

    def add_attn(ap):
        wqkv = np.concatenate([bd(ap["wq"]) / np.sqrt(E),    # fold 1/sqrt(E) into Wq
                               bd(ap["wk"]), bd(ap["wv"])], axis=1)
        return {"wqkv": pk.add(wqkv),
                "wo_t": pk.add(np.asarray(ap["wo"], np.float32).T),
                "bo": pk.add(ap["bo"])}

    def add_tblock(tp):
        return {"attn": add_attn(tp["attn"]),
                "ln1_g": pk.add(tp["ln1_g"]), "ln1_b": pk.add(tp["ln1_b"]),
                "ln2_g": pk.add(tp["ln2_g"]), "ln2_b": pk.add(tp["ln2_b"]),
                "w1_t": pk.add(np.asarray(tp["w1"], np.float32).T),
                "b1": pk.add(tp["b1"]),
                "w2_t": pk.add(np.asarray(tp["w2"], np.float32).T),
                "b2": pk.add(tp["b2"])}

    def add_emb(tbl):
        tbl = np.asarray(tbl, np.float32)
        vp = -(-tbl.shape[0] // 8) * 8            # pad vocab rows to a sublane multiple
        padded = np.zeros((vp, tbl.shape[1]), np.float32)
        padded[:tbl.shape[0]] = tbl
        return pk.add(padded)

    aconst_cache = {}

    def add_aconst(Lq, Lk):
        if (Lq, Lk) in aconst_cache:
            return aconst_cache[(Lq, Lk)]
        BLq, BLk = B * Lq, B * Lk
        tile = np.tile(np.eye(BLq, dtype=np.float32), (heads, 1))   # (H*BLq, BLq)
        untile = np.ascontiguousarray(tile.T)                       # (BLq, H*BLq)
        hmask = np.zeros((heads * BLq, E), np.float32)
        neg = np.full((heads * BLq, BLk), NEG_INF, np.float32)
        for h in range(heads):
            hmask[h * BLq:(h + 1) * BLq, h * hd:(h + 1) * hd] = 1.0
            for b in range(B):
                neg[h * BLq + b * Lq:h * BLq + (b + 1) * Lq, b * Lk:(b + 1) * Lk] = 0.0
        ent = {"tile": pk.add(tile), "untile": pk.add(untile),
               "hmask": pk.add(hmask), "neg": pk.add(neg)}
        aconst_cache[(Lq, Lk)] = ent
        return ent

    index = {
        "enc_emb": add_emb(enc["emb"]),
        "enc_temp": pk.add(np.tile(np.asarray(enc["temp"], np.float32), (B, 1))),
        "dec_emb": add_emb(dec["emb"]),
        "dec_temp": pk.add(np.tile(np.asarray(dec["temp"], np.float32), (B, 1))),
        "fc_w_t": pk.add(np.asarray(dec["fc_w"], np.float32).T),
        "fc_b": pk.add(dec["fc_b"]),
        "aconst": {"enc": add_aconst(Ls, Ls),
                   "dec_self": add_aconst(Lt, Lt),
                   "dec_cross": add_aconst(Lt, Ls)},
        "enc_layers": [add_tblock(t) for t in enc["layers"]],
        "dec_layers": [{"self_attn": add_attn(d["self_attn"]),
                        "ln_g": pk.add(d["ln_g"]), "ln_b": pk.add(d["ln_b"]),
                        "tblock": add_tblock(d["tblock"])}
                       for d in dec["layers"]],
    }
    slab = pk.finish()
    spec = {"index": index, "B": B, "G": num_batch_blocks, "batch": batch,
            "Ls": Ls, "Lt": Lt, "E": E, "heads": heads, "V": V,
            "slab_rows": slab.shape[0]}
    return jnp.asarray(slab), spec


# ----------------------------------------------------------------------------
# Wrapper
# ----------------------------------------------------------------------------
def transformer_fwd(slab, src, trg, *, spec):
    B, G, N = spec["B"], spec["G"], spec["batch"]
    Ls, Lt, V, R = spec["Ls"], spec["Lt"], spec["V"], spec["slab_rows"]

    src_flat = src.astype(jnp.int32).reshape(N * Ls, 1)
    trg_flat = trg.astype(jnp.int32).reshape(N * Lt, 1)

    kern = functools.partial(_fwd_kernel, idx=spec["index"],
                             B=B, Lt=Lt, E=spec["E"])

    return pl.pallas_call(
        kern,
        out_shape=jax.ShapeDtypeStruct((N, Lt, V), jnp.float32),
        grid=(G,),
        in_specs=[
            pl.BlockSpec((B * Ls, 1), lambda g: (g, 0)),    # src tokens of this batch block
            pl.BlockSpec((B * Lt, 1), lambda g: (g, 0)),    # trg tokens of this batch block
            pl.BlockSpec((R, LANE), lambda g: (0, 0)),      # the whole parameter slab
        ],
        out_specs=pl.BlockSpec((B, Lt, V), lambda g: (g, 0, 0)),
        compiler_params=pltpu.CompilerParams(
            dimension_semantics=("parallel",),              # batch blocks -> v7x's 2 TCs
            vmem_limit_bytes=32 * 1024 * 1024),
    )(src_flat, trg_flat, slab)


# ----------------------------------------------------------------------------
# Deterministic torch-layout parameter init (mirrors the PyTorch module)
# ----------------------------------------------------------------------------
def _init_linear(key, fan_in, fan_out, bias=True):
    k1, k2 = jax.random.split(key)
    bound = 1.0 / (fan_in ** 0.5)
    w = jax.random.uniform(k1, (fan_out, fan_in), jnp.float32, -bound, bound)
    if bias:
        b = jax.random.uniform(k2, (fan_out,), jnp.float32, -bound, bound)
        return w, b
    return w, None


def _init_attention(key, E, heads):
    hd = E // heads
    ks = jax.random.split(key, 4)
    wv, _ = _init_linear(ks[0], hd, hd, bias=False)
    wk, _ = _init_linear(ks[1], hd, hd, bias=False)
    wq, _ = _init_linear(ks[2], hd, hd, bias=False)
    wo, bo = _init_linear(ks[3], E, E, bias=True)
    return {"wq": wq, "wk": wk, "wv": wv, "wo": wo, "bo": bo}


def _init_tblock(key, E, heads, fe):
    H = fe * E
    ks = jax.random.split(key, 3)
    w1, b1 = _init_linear(ks[1], E, H)
    w2, b2 = _init_linear(ks[2], H, E)
    return {"attn": _init_attention(ks[0], E, heads),
            "ln1_g": jnp.ones((E,), jnp.float32), "ln1_b": jnp.zeros((E,), jnp.float32),
            "ln2_g": jnp.ones((E,), jnp.float32), "ln2_b": jnp.zeros((E,), jnp.float32),
            "w1": w1, "b1": b1, "w2": w2, "b2": b2}


def _init_dblock(key, E, heads, fe):
    ks = jax.random.split(key, 2)
    return {"self_attn": _init_attention(ks[0], E, heads),
            "ln_g": jnp.ones((E,), jnp.float32), "ln_b": jnp.zeros((E,), jnp.float32),
            "tblock": _init_tblock(ks[1], E, heads, fe)}


def init_transformer(key, *, src_len, tgt_len, E, heads, num_layers, fe,
                     no_of_link, coord_dim):
    ks = jax.random.split(key, 6 + 2 * num_layers)
    # CellEncoder: the Transformer ctor passes `coord_dim` where CellEncoder
    # expects `no_of_link`, so the encoder embedding table has coord_dim + 1 rows.
    enc = {"emb": jax.random.normal(ks[0], (coord_dim + 1, E), jnp.float32),
           "temp": jax.random.normal(ks[1], (src_len, E), jnp.float32),
           "layers": [_init_tblock(ks[4 + i], E, heads, fe) for i in range(num_layers)]}
    fc_w, fc_b = _init_linear(ks[3], E, no_of_link + 1)
    dec = {"emb": jax.random.normal(ks[2], (no_of_link + 1, E), jnp.float32),
           "temp": jax.random.normal(ks[5], (tgt_len, E), jnp.float32),
           "layers": [_init_dblock(ks[4 + num_layers + i], E, heads, fe)
                      for i in range(num_layers)],
           "fc_w": fc_w, "fc_b": fc_b}
    return {"encoder": enc, "decoder": dec}


# ----------------------------------------------------------------------------
# Pure-JAX reference (torch-faithful formulation) for validation
# ----------------------------------------------------------------------------
def _ref_attention(values, keys, query, ap, heads):
    N, Lq, E = query.shape
    hd = E // heads
    v = values.reshape(N, -1, heads, hd) @ ap["wv"].T
    k = keys.reshape(N, -1, heads, hd) @ ap["wk"].T
    q = query.reshape(N, Lq, heads, hd) @ ap["wq"].T
    energy = jnp.einsum("nqhd,nkhd->nhqk", q, k)
    att = jax.nn.softmax(energy / (E ** 0.5), axis=-1)
    out = jnp.einsum("nhqk,nkhd->nqhd", att, v).reshape(N, Lq, E)
    return out @ ap["wo"].T + ap["bo"]


def _ref_layernorm(x, g, b):
    mu = x.mean(-1, keepdims=True)
    var = ((x - mu) ** 2).mean(-1, keepdims=True)
    return (x - mu) / jnp.sqrt(var + EPS) * g + b


def _ref_tblock(kv, q, lp, heads):
    a = _ref_attention(kv, kv, q, lp["attn"], heads)
    x = _ref_layernorm(a + q, lp["ln1_g"], lp["ln1_b"])
    f = jnp.maximum(x @ lp["w1"].T + lp["b1"], 0.0) @ lp["w2"].T + lp["b2"]
    return _ref_layernorm(f + x, lp["ln2_g"], lp["ln2_b"])


def reference_fwd(params, src, trg, heads):
    pe, pd = params["encoder"], params["decoder"]
    enc = pe["emb"][src] + pe["temp"][None]
    for lp in pe["layers"]:
        enc = _ref_tblock(enc, enc, lp, heads)
    dec = pd["emb"][trg] + pd["temp"][None]
    for lp in pd["layers"]:
        a = _ref_attention(dec, dec, dec, lp["self_attn"], heads)
        q = _ref_layernorm(a + dec, lp["ln_g"], lp["ln_b"])
        dec = _ref_tblock(enc, q, lp["tblock"], heads)
    logits = dec @ pd["fc_w"].T + pd["fc_b"]
    return jax.nn.softmax(logits, axis=1)     # torch Softmax(dim=1)


# ----------------------------------------------------------------------------
if __name__ == "__main__":
    N, Ls, Lt = 2, 8, 8
    E, heads, num_layers, fe = 32, 4, 2, 4
    no_of_link, coord_dim = 15, 2

    key = jax.random.PRNGKey(0)
    kparam, ksrc, ktrg = jax.random.split(key, 3)

    params = init_transformer(kparam, src_len=Ls, tgt_len=Lt, E=E, heads=heads,
                              num_layers=num_layers, fe=fe,
                              no_of_link=no_of_link, coord_dim=coord_dim)

    src = jax.random.randint(ksrc, (N, Ls), 0, coord_dim + 1, dtype=jnp.int32)
    trg = jax.random.randint(ktrg, (N, Lt), 0, no_of_link + 1, dtype=jnp.int32)

    # One-time host-side packing (single slab, one DMA per invocation).
    # On v7x pass num_batch_blocks=2 to spread batch blocks over both TensorCores.
    slab, spec = pack_params(params, heads=heads, batch=N, num_batch_blocks=1)

    fwd = jax.jit(functools.partial(transformer_fwd, spec=spec))
    out = jax.block_until_ready(fwd(slab, src, trg))

    assert out.shape == (N, Lt, no_of_link + 1), out.shape
    assert bool(jnp.all(jnp.isfinite(out)))
    # torch Softmax(dim=1): probabilities sum to 1 over the sequence axis.
    assert bool(jnp.allclose(out.sum(axis=1), 1.0, atol=1e-4))

    # Cross-check against the plain-JAX torch-faithful reference.
    ref = reference_fwd(params, src, trg, heads)
    max_err = float(jnp.max(jnp.abs(out - ref)))
    assert max_err < 1e-3, max_err

    print("KERNEL_OK")
</pallas_src>

<mosaic_0001>
module attributes {stable_mosaic.version = 11 : i64} {
  func.func @_fwd_kernel(%arg0: i32, %arg1: memref<16x1xi32, #tpu.memory_space<vmem>>, %arg2: memref<16x1xi32, #tpu.memory_space<vmem>>, %arg3: memref<1600x128xf32, #tpu.memory_space<vmem>>, %arg4: memref<2x8x16xf32, #tpu.memory_space<vmem>>) attributes {dimension_semantics = [#tpu.dimension_semantics<parallel>], iteration_bounds = array<i64: 1>, scalar_prefetch = 0 : i64, scratch_operands = 0 : i64, tpu.core_type = #tpu.core_type<tc>, window_params = [{transform_indices = @transform_0, window_bounds = array<i64: 16, 1>}, {transform_indices = @transform_1, window_bounds = array<i64: 16, 1>}, {pipeline_mode = #tpu.pipeline_mode<synchronous>, transform_indices = @transform_2, window_bounds = array<i64: 1600, 128>}, {transform_indices = @transform_3, window_bounds = array<i64: 2, 8, 16>}]} {
    %c0 = arith.constant 0 : index
    %c0_0 = arith.constant 0 : index
    %0 = vector.load %arg1[%c0, %c0_0] : memref<16x1xi32, #tpu.memory_space<vmem>>, vector<16x1xi32>
    %1 = tpu.iota {dimensions = array<i32: 1>} : vector<16x8xi32>
    %2 = vector.broadcast %0 : vector<16x1xi32> to vector<16x8xi32>
    %3 = arith.cmpi eq, %1, %2 : vector<16x8xi32>
    %4 = arith.extui %3 : vector<16x8xi1> to vector<16x8xi32>
    %5 = arith.sitofp %4 : vector<16x8xi32> to vector<16x8xf32>
    %c0_1 = arith.constant 0 : index
    %c0_2 = arith.constant 0 : index
    %6 = vector.load %arg3[%c0_1, %c0_2] : memref<1600x128xf32, #tpu.memory_space<vmem>>, vector<8x32xf32>
    %cst = arith.constant dense<0.000000e+00> : vector<16x32xf32>
    %7 = tpu.matmul %5, %6, %cst {dimension_numbers = #tpu.dot_dimension_numbers<[1], [0], [0], [1], [0, 0, 1, 1], [], []>} : vector<16x8xf32>, vector<8x32xf32>, vector<16x32xf32> -> vector<16x32xf32>
    %c8 = arith.constant 8 : index
    %c0_3 = arith.constant 0 : index
    %8 = vector.load %arg3[%c8, %c0_3] : memref<1600x128xf32, #tpu.memory_space<vmem>>, vector<16x32xf32>
    %9 = arith.addf %7, %8 : vector<16x32xf32>
    %c304 = arith.constant 304 : index
    %c0_4 = arith.constant 0 : index
    %10 = vector.load %arg3[%c304, %c0_4] : memref<1600x128xf32, #tpu.memory_space<vmem>>, vector<32x96xf32>
    %cst_5 = arith.constant dense<0.000000e+00> : vector<16x96xf32>
    %11 = tpu.matmul %9, %10, %cst_5 {dimension_numbers = #tpu.dot_dimension_numbers<[1], [0], [0], [1], [0, 0, 1, 1], [], []>} : vector<16x32xf32>, vector<32x96xf32>, vector<16x96xf32> -> vector<16x96xf32>
    %12 = vector.extract_strided_slice %11 {offsets = [0, 0], sizes = [16, 32], strides = [1, 1]} : vector<16x96xf32> to vector<16x32xf32>
    %13 = vector.extract_strided_slice %11 {offsets = [0, 32], sizes = [16, 32], strides = [1, 1]} : vector<16x96xf32> to vector<16x32xf32>
    %14 = vector.extract_strided_slice %11 {offsets = [0, 64], sizes = [16, 32], strides = [1, 1]} : vector<16x96xf32> to vector<16x32xf32>
    %c176 = arith.constant 176 : index
    %c0_6 = arith.constant 0 : index
    %15 = vector.load %arg3[%c176, %c0_6] : memref<1600x128xf32, #tpu.memory_space<vmem>>, vector<64x32xf32>
    %c96 = arith.constant 96 : index
    %c0_7 = arith.constant 0 : index
    %16 = vector.load %arg3[%c96, %c0_7] : memref<1600x128xf32, #tpu.memory_space<vmem>>, vector<64x16xf32>
    %cst_8 = arith.constant dense<0.000000e+00> : vector<64x32xf32>
    %17 = tpu.matmul %16, %12, %cst_8 {dimension_numbers = #tpu.dot_dimension_numbers<[1], [0], [0], [1], [0, 0, 1, 1], [], []>} : vector<64x16xf32>, vector<16x32xf32>, vector<64x32xf32> -> vector<64x32xf32>
    %18 = arith.mulf %17, %15 : vector<64x32xf32>
    %cst_9 = arith.constant dense<0.000000e+00> : vector<64x16xf32>
    %19 = tpu.matmul %18, %13, %cst_9 {dimension_numbers = #tpu.dot_dimension_numbers<[1], [1], [0], [0], [0, 0, 1, 0], [], []>} : vector<64x32xf32>, vector<16x32xf32>, vector<64x16xf32> -> vector<64x16xf32>
    %c240 = arith.constant 240 : index
    %c0_10 = arith.constant 0 : index
    %20 = vector.load %arg3[%c240, %c0_10] : memref<1600x128xf32, #tpu.memory_space<vmem>>, vector<64x16xf32>
    %21 = arith.addf %19, %20 : vector<64x16xf32>
    %cst_11 = arith.constant dense<0xFF800000> : vector<64xf32>
    %22 = vector.multi_reduction <maximumf>, %21, %cst_11 [1] : vector<64x16xf32> to vector<64xf32>
    %23 = vector.shape_cast %22 : vector<64xf32> to vector<64x1xf32>
    %24 = vector.broadcast %23 : vector<64x1xf32> to vector<64x16xf32>
    %25 = arith.subf %21, %24 : vector<64x16xf32>
    %26 = math.exp %25 : vector<64x16xf32>
    %cst_12 = arith.constant dense<0.000000e+00> : vector<64xf32>
    %27 = vector.multi_reduction <add>, %26, %cst_12 [1] : vector<64x16xf32> to vector<64xf32>
    %28 = vector.shape_cast %27 : vector<64xf32> to vector<64x1xf32>
    %29 = vector.broadcast %28 : vector<64x1xf32> to vector<64x16xf32>
    %30 = arith.divf %26, %29 : vector<64x16xf32>
    %cst_13 = arith.constant dense<0.000000e+00> : vector<64x32xf32>
    %31 = tpu.matmul %30, %14, %cst_13 {dimension_numbers = #tpu.dot_dimension_numbers<[1], [0], [0], [1], [0, 0, 1, 1], [], []>} : vector<64x16xf32>, vector<16x32xf32>, vector<64x32xf32> -> vector<64x32xf32>
    %c160 = arith.constant 160 : index
    %c0_14 = arith.constant 0 : index
    %32 = vector.load %arg3[%c160, %c0_14] : memref<1600x128xf32, #tpu.memory_space<vmem>>, vector<16x64xf32>
    %33 = arith.mulf %31, %15 : vector<64x32xf32>
    %cst_15 = arith.constant dense<0.000000e+00> : vector<16x32xf32>
    %34 = tpu.matmul %32, %33, %cst_15 {dimension_numbers = #tpu.dot_dimension_numbers<[1], [0], [0], [1], [0, 0, 1, 1], [], []>} : vector<16x64xf32>, vector<64x32xf32>, vector<16x32xf32> -> vector<16x32xf32>
    %c336 = arith.constant 336 : index
    %c0_16 = arith.constant 0 : index
    %35 = vector.load %arg3[%c336, %c0_16] : memref<1600x128xf32, #tpu.memory_space<vmem>>, vector<32x32xf32>
    %cst_17 = arith.constant dense<0.000000e+00> : vector<16x32xf32>
    %36 = tpu.matmul %34, %35, %cst_17 {dimension_numbers = #tpu.dot_dimension_numbers<[1], [0], [0], [1], [0, 0, 1, 1], [], []>} : vector<16x32xf32>, vector<32x32xf32>, vector<16x32xf32> -> vector<16x32xf32>
    %c368 = arith.constant 368 : index
    %c0_18 = arith.constant 0 : index
    %37 = vector.load %arg3[%c368, %c0_18] : memref<1600x128xf32, #tpu.memory_space<vmem>>, vector<1x32xf32>
    %38 = vector.broadcast %37 : vector<1x32xf32> to vector<16x32xf32>
    %39 = arith.addf %36, %38 : vector<16x32xf32>
    %40 = arith.addf %39, %9 : vector<16x32xf32>
    %cst_19 = arith.constant dense<0.000000e+00> : vector<16xf32>
    %41 = vector.multi_reduction <add>, %40, %cst_19 [1] : vector<16x32xf32> to vector<16xf32>
    %42 = vector.shape_cast %41 : vector<16xf32> to vector<16x1xf32>
    %cst_20 = arith.constant 3.200000e+01 : f32
    %43 = vector.broadcast %cst_20 : f32 to vector<16x1xf32>
    %44 = arith.divf %42, %43 : vector<16x1xf32>
    %45 = vector.broadcast %44 : vector<16x1xf32> to vector<16x32xf32>
    %46 = arith.subf %40, %45 : vector<16x32xf32>
    %47 = arith.mulf %46, %46 : vector<16x32xf32>
    %cst_21 = arith.constant dense<0.000000e+00> : vector<16xf32>
    %48 = vector.multi_reduction <add>, %47, %cst_21 [1] : vector<16x32xf32> to vector<16xf32>
    %49 = vector.shape_cast %48 : vector<16xf32> to vector<16x1xf32>
    %cst_22 = arith.constant 3.200000e+01 : f32
    %50 = vector.broadcast %cst_22 : f32 to vector<16x1xf32>
    %51 = arith.divf %49, %50 : vector<16x1xf32>
    %cst_23 = arith.constant 9.99999974E-6 : f32
    %52 = vector.broadcast %cst_23 : f32 to vector<16x1xf32>
    %53 = arith.addf %51, %52 : vector<16x1xf32>
    %54 = math.rsqrt %53 : vector<16x1xf32>
    %55 = vector.broadcast %54 : vector<16x1xf32> to vector<16x32xf32>
    %56 = arith.mulf %46, %55 : vector<16x32xf32>
    %c376 = arith.constant 376 : index
    %c0_24 = arith.constant 0 : index
    %57 = vector.load %arg3[%c376, %c0_24] : memref<1600x128xf32, #tpu.memory_space<vmem>>, vector<1x32xf32>
    %58 = vector.broadcast %57 : vector<1x32xf32> to vector<16x32xf32>
    %59 = arith.mulf %56, %58 : vector<16x32xf32>
    %c384 = arith.constant 384 : index
    %c0_25 = arith.constant 0 : index
    %60 = vector.load %arg3[%c384, %c0_25] : memref<1600x128xf32, #tpu.memory_space<vmem>>, vector<1x32xf32>
    %61 = vector.broadcast %60 : vector<1x32xf32> to vector<16x32xf32>
    %62 = arith.addf %59, %61 : vector<16x32xf32>
    %c408 = arith.constant 408 : index
    %c0_26 = arith.constant 0 : index
    %63 = vector.load %arg3[%c408, %c0_26] : memref<1600x128xf32, #tpu.memory_space<vmem>>, vector<32x128xf32>
    %cst_27 = arith.constant dense<0.000000e+00> : vector<16x128xf32>
    %64 = tpu.matmul %62, %63, %cst_27 {dimension_numbers = #tpu.dot_dimension_numbers<[1], [0], [0], [1], [0, 0, 1, 1], [], []>} : vector<16x32xf32>, vector<32x128xf32>, vector<16x128xf32> -> vector<16x128xf32>
    %c440 = arith.constant 440 : index
    %c0_28 = arith.constant 0 : index
    %65 = vector.load %arg3[%c440, %c0_28] : memref<1600x128xf32, #tpu.memory_space<vmem>>, vector<1x128xf32>
    %66 = vector.broadcast %65 : vector<1x128xf32> to vector<16x128xf32>
    %67 = arith.addf %64, %66 : vector<16x128xf32>
    %cst_29 = arith.constant 0.000000e+00 : f32
    %68 = vector.broadcast %cst_29 : f32 to vector<16x128xf32>
    %69 = arith.maximumf %67, %68 : vector<16x128xf32>
    %c448 = arith.constant 448 : index
    %c0_30 = arith.constant 0 : index
    %70 = vector.load %arg3[%c448, %c0_30] : memref<1600x128xf32, #tpu.memory_space<vmem>>, vector<128x32xf32>
    %cst_31 = arith.constant dense<0.000000e+00> : vector<16x32xf32>
    %71 = tpu.matmul %69, %70, %cst_31 {dimension_numbers = #tpu.dot_dimension_numbers<[1], [0], [0], [1], [0, 0, 1, 1], [], []>} : vector<16x128xf32>, vector<128x32xf32>, vector<16x32xf32> -> vector<16x32xf32>
    %c576 = arith.constant 576 : index
    %c0_32 = arith.constant 0 : index
    %72 = vector.load %arg3[%c576, %c0_32] : memref<1600x128xf32, #tpu.memory_space<vmem>>, vector<1x32xf32>
    %73 = vector.broadcast %72 : vector<1x32xf32> to vector<16x32xf32>
    %74 = arith.addf %71, %73 : vector<16x32xf32>
    %75 = arith.addf %74, %62 : vector<16x32xf32>
    %cst_33 = arith.constant dense<0.000000e+00> : vector<16xf32>
    %76 = vector.multi_reduction <add>, %75, %cst_33 [1] : vector<16x32xf32> to vector<16xf32>
    %77 = vector.shape_cast %76 : vector<16xf32> to vector<16x1xf32>
    %cst_34 = arith.constant 3.200000e+01 : f32
    %78 = vector.broadcast %cst_34 : f32 to vector<16x1xf32>
    %79 = arith.divf %77, %78 : vector<16x1xf32>
    %80 = vector.broadcast %79 : vector<16x1xf32> to vector<16x32xf32>
    %81 = arith.subf %75, %80 : vector<16x32xf32>
    %82 = arith.mulf %81, %81 : vector<16x32xf32>
    %cst_35 = arith.constant dense<0.000000e+00> : vector<16xf32>
    %83 = vector.multi_reduction <add>, %82, %cst_35 [1] : vector<16x32xf32> to vector<16xf32>
    %84 = vector.shape_cast %83 : vector<16xf32> to vector<16x1xf32>
    %cst_36 = arith.constant 3.200000e+01 : f32
    %85 = vector.broadcast %cst_36 : f32 to vector<16x1xf32>
    %86 = arith.divf %84, %85 : vector<16x1xf32>
    %cst_37 = arith.constant 9.99999974E-6 : f32
    %87 = vector.broadcast %cst_37 : f32 to vector<16x1xf32>
    %88 = arith.addf %86, %87 : vector<16x1xf32>
    %89 = math.rsqrt %88 : vector<16x1xf32>
    %90 = vector.broadcast %89 : vector<16x1xf32> to vector<16x32xf32>
    %91 = arith.mulf %81, %90 : vector<16x32xf32>
    %c392 = arith.constant 392 : index
    %c0_38 = arith.constant 0 : index
    %92 = vector.load %arg3[%c392, %c0_38] : memref<1600x128xf32, #tpu.memory_space<vmem>>, vector<1x32xf32>
    %93 = vector.broadcast %92 : vector<1x32xf32> to vector<16x32xf32>
    %94 = arith.mulf %91, %93 : vector<16x32xf32>
    %c400 = arith.constant 400 : index
    %c0_39 = arith.constant 0 : index
    %95 = vector.load %arg3[%c400, %c0_39] : memref<1600x128xf32, #tpu.memory_space<vmem>>, vector<1x32xf32>
    %96 = vector.broadcast %95 : vector<1x32xf32> to vector<16x32xf32>
    %97 = arith.addf %94, %96 : vector<16x32xf32>
    %c584 = arith.constant 584 : index
    %c0_40 = arith.constant 0 : index
    %98 = vector.load %arg3[%c584, %c0_40] : memref<1600x128xf32, #tpu.memory_space<vmem>>, vector<32x96xf32>
    %cst_41 = arith.constant dense<0.000000e+00> : vector<16x96xf32>
    %99 = tpu.matmul %97, %98, %cst_41 {dimension_numbers = #tpu.dot_dimension_numbers<[1], [0], [0], [1], [0, 0, 1, 1], [], []>} : vector<16x32xf32>, vector<32x96xf32>, vector<16x96xf32> -> vector<16x96xf32>
    %100 = vector.extract_strided_slice %99 {offsets = [0, 0], sizes = [16, 32], strides = [1, 1]} : vector<16x96xf32> to vector<16x32xf32>
    %101 = vector.extract_strided_slice %99 {offsets = [0, 32], sizes = [16, 32], strides = [1, 1]} : vector<16x96xf32> to vector<16x32xf32>
    %102 = vector.extract_strided_slice %99 {offsets = [0, 64], sizes = [16, 32], strides = [1, 1]} : vector<16x96xf32> to vector<16x32xf32>
    %c176_42 = arith.constant 176 : index
    %c0_43 = arith.constant 0 : index
    %103 = vector.load %arg3[%c176_42, %c0_43] : memref<1600x128xf32, #tpu.memory_space<vmem>>, vector<64x32xf32>
    %c96_44 = arith.constant 96 : index
    %c0_45 = arith.constant 0 : index
    %104 = vector.load %arg3[%c96_44, %c0_45] : memref<1600x128xf32, #tpu.memory_space<vmem>>, vector<64x16xf32>
    %cst_46 = arith.constant dense<0.000000e+00> : vector<64x32xf32>
    %105 = tpu.matmul %104, %100, %cst_46 {dimension_numbers = #tpu.dot_dimension_numbers<[1], [0], [0], [1], [0, 0, 1, 1], [], []>} : vector<64x16xf32>, vector<16x32xf32>, vector<64x32xf32> -> vector<64x32xf32>
    %106 = arith.mulf %105, %103 : vector<64x32xf32>
    %cst_47 = arith.constant dense<0.000000e+00> : vector<64x16xf32>
    %107 = tpu.matmul %106, %101, %cst_47 {dimension_numbers = #tpu.dot_dimension_numbers<[1], [1], [0], [0], [0, 0, 1, 0], [], []>} : vector<64x32xf32>, vector<16x32xf32>, vector<64x16xf32> -> vector<64x16xf32>
    %c240_48 = arith.constant 240 : index
    %c0_49 = arith.constant 0 : index
    %108 = vector.load %arg3[%c240_48, %c0_49] : memref<1600x128xf32, #tpu.memory_space<vmem>>, vector<64x16xf32>
    %109 = arith.addf %107, %108 : vector<64x16xf32>
    %cst_50 = arith.constant dense<0xFF800000> : vector<64xf32>
    %110 = vector.multi_reduction <maximumf>, %109, %cst_50 [1] : vector<64x16xf32> to vector<64xf32>
    %111 = vector.shape_cast %110 : vector<64xf32> to vector<64x1xf32>
    %112 = vector.broadcast %111 : vector<64x1xf32> to vector<64x16xf32>
    %113 = arith.subf %109, %112 : vector<64x16xf32>
    %114 = math.exp %113 : vector<64x16xf32>
    %cst_51 = arith.constant dense<0.000000e+00> : vector<64xf32>
    %115 = vector.multi_reduction <add>, %114, %cst_51 [1] : vector<64x16xf32> to vector<64xf32>
    %116 = vector.shape_cast %115 : vector<64xf32> to vector<64x1xf32>
    %117 = vector.broadcast %116 : vector<64x1xf32> to vector<64x16xf32>
    %118 = arith.divf %114, %117 : vector<64x16xf32>
    %cst_52 = arith.constant dense<0.000000e+00> : vector<64x32xf32>
    %119 = tpu.matmul %118, %102, %cst_52 {dimension_numbers = #tpu.dot_dimension_numbers<[1], [0], [0], [1], [0, 0, 1, 1], [], []>} : vector<64x16xf32>, vector<16x32xf32>, vector<64x32xf32> -> vector<64x32xf32>
    %c160_53 = arith.constant 160 : index
    %c0_54 = arith.constant 0 : index
    %120 = vector.load %arg3[%c160_53, %c0_54] : memref<1600x128xf32, #tpu.memory_space<vmem>>, vector<16x64xf32>
    %121 = arith.mulf %119, %103 : vector<64x32xf32>
    %cst_55 = arith.constant dense<0.000000e+00> : vector<16x32xf32>
    %122 = tpu.matmul %120, %121, %cst_55 {dimension_numbers = #tpu.dot_dimension_numbers<[1], [0], [0], [1], [0, 0, 1, 1], [], []>} : vector<16x64xf32>, vector<64x32xf32>, vector<16x32xf32> -> vector<16x32xf32>
    %c616 = arith.constant 616 : index
    %c0_56 = arith.constant 0 : index
    %123 = vector.load %arg3[%c616, %c0_56] : memref<1600x128xf32, #tpu.memory_space<vmem>>, vector<32x32xf32>
    %cst_57 = arith.constant dense<0.000000e+00> : vector<16x32xf32>
    %124 = tpu.matmul %122, %123, %cst_57 {dimension_numbers = #tpu.dot_dimension_numbers<[1], [0], [0], [1], [0, 0, 1, 1], [], []>} : vector<16x32xf32>, vector<32x32xf32>, vector<16x32xf32> -> vector<16x32xf32>
    %c648 = arith.constant 648 : index
    %c0_58 = arith.constant 0 : index
    %125 = vector.load %arg3[%c648, %c0_58] : memref<1600x128xf32, #tpu.memory_space<vmem>>, vector<1x32xf32>
    %126 = vector.broadcast %125 : vector<1x32xf32> to vector<16x32xf32>
    %127 = arith.addf %124, %126 : vector<16x32xf32>
    %128 = arith.addf %127, %97 : vector<16x32xf32>
    %cst_59 = arith.constant dense<0.000000e+00> : vector<16xf32>
    %129 = vector.multi_reduction <add>, %128, %cst_59 [1] : vector<16x32xf32> to vector<16xf32>
    %130 = vector.shape_cast %129 : vector<16xf32> to vector<16x1xf32>
    %cst_60 = arith.constant 3.200000e+01 : f32
    %131 = vector.broadcast %cst_60 : f32 to vector<16x1xf32>
    %132 = arith.divf %130, %131 : vector<16x1xf32>
    %133 = vector.broadcast %132 : vector<16x1xf32> to vector<16x32xf32>
    %134 = arith.subf %128, %133 : vector<16x32xf32>
    %135 = arith.mulf %134, %134 : vector<16x32xf32>
    %cst_61 = arith.constant dense<0.000000e+00> : vector<16xf32>
    %136 = vector.multi_reduction <add>, %135, %cst_61 [1] : vector<16x32xf32> to vector<16xf32>
    %137 = vector.shape_cast %136 : vector<16xf32> to vector<16x1xf32>
    %cst_62 = arith.constant 3.200000e+01 : f32
    %138 = vector.broadcast %cst_62 : f32 to vector<16x1xf32>
    %139 = arith.divf %137, %138 : vector<16x1xf32>
    %cst_63 = arith.constant 9.99999974E-6 : f32
    %140 = vector.broadcast %cst_63 : f32 to vector<16x1xf32>
    %141 = arith.addf %139, %140 : vector<16x1xf32>
    %142 = math.rsqrt %141 : vector<16x1xf32>
    %143 = vector.broadcast %142 : vector<16x1xf32> to vector<16x32xf32>
    %144 = arith.mulf %134, %143 : vector<16x32xf32>
    %c656 = arith.constant 656 : index
    %c0_64 = arith.constant 0 : index
    %145 = vector.load %arg3[%c656, %c0_64] : memref<1600x128xf32, #tpu.memory_space<vmem>>, vector<1x32xf32>
    %146 = vector.broadcast %145 : vector<1x32xf32> to vector<16x32xf32>
    %147 = arith.mulf %144, %146 : vector<16x32xf32>
    %c664 = arith.constant 664 : index
    %c0_65 = arith.constant 0 : index
    %148 = vector.load %arg3[%c664, %c0_65] : memref<1600x128xf32, #tpu.memory_space<vmem>>, vector<1x32xf32>
    %149 = vector.broadcast %148 : vector<1x32xf32> to vector<16x32xf32>
    %150 = arith.addf %147, %149 : vector<16x32xf32>
    %c688 = arith.constant 688 : index
    %c0_66 = arith.constant 0 : index
    %151 = vector.load %arg3[%c688, %c0_66] : memref<1600x128xf32, #tpu.memory_space<vmem>>, vector<32x128xf32>
    %cst_67 = arith.constant dense<0.000000e+00> : vector<16x128xf32>
    %152 = tpu.matmul %150, %151, %cst_67 {dimension_numbers = #tpu.dot_dimension_numbers<[1], [0], [0], [1], [0, 0, 1, 1], [], []>} : vector<16x32xf32>, vector<32x128xf32>, vector<16x128xf32> -> vector<16x128xf32>
    %c720 = arith.constant 720 : index
    %c0_68 = arith.constant 0 : index
    %153 = vector.load %arg3[%c720, %c0_68] : memref<1600x128xf32, #tpu.memory_space<vmem>>, vector<1x128xf32>
    %154 = vector.broadcast %153 : vector<1x128xf32> to vector<16x128xf32>
    %155 = arith.addf %152, %154 : vector<16x128xf32>
    %cst_69 = arith.constant 0.000000e+00 : f32
    %156 = vector.broadcast %cst_69 : f32 to vector<16x128xf32>
    %157 = arith.maximumf %155, %156 : vector<16x128xf32>
    %c728 = arith.constant 728 : index
    %c0_70 = arith.constant 0 : index
    %158 = vector.load %arg3[%c728, %c0_70] : memref<1600x128xf32, #tpu.memory_space<vmem>>, vector<128x32xf32>
    %cst_71 = arith.constant dense<0.000000e+00> : vector<16x32xf32>
    %159 = tpu.matmul %157, %158, %cst_71 {dimension_numbers = #tpu.dot_dimension_numbers<[1], [0], [0], [1], [0, 0, 1, 1], [], []>} : vector<16x128xf32>, vector<128x32xf32>, vector<16x32xf32> -> vector<16x32xf32>
    %c856 = arith.constant 856 : index
    %c0_72 = arith.constant 0 : index
    %160 = vector.load %arg3[%c856, %c0_72] : memref<1600x128xf32, #tpu.memory_space<vmem>>, vector<1x32xf32>
    %161 = vector.broadcast %160 : vector<1x32xf32> to vector<16x32xf32>
    %162 = arith.addf %159, %161 : vector<16x32xf32>
    %163 = arith.addf %162, %150 : vector<16x32xf32>
    %cst_73 = arith.constant dense<0.000000e+00> : vector<16xf32>
    %164 = vector.multi_reduction <add>, %163, %cst_73 [1] : vector<16x32xf32> to vector<16xf32>
    %165 = vector.shape_cast %164 : vector<16xf32> to vector<16x1xf32>
    %cst_74 = arith.constant 3.200000e+01 : f32
    %166 = vector.broadcast %cst_74 : f32 to vector<16x1xf32>
    %167 = arith.divf %165, %166 : vector<16x1xf32>
    %168 = vector.broadcast %167 : vector<16x1xf32> to vector<16x32xf32>
    %169 = arith.subf %163, %168 : vector<16x32xf32>
    %170 = arith.mulf %169, %169 : vector<16x32xf32>
    %cst_75 = arith.constant dense<0.000000e+00> : vector<16xf32>
    %171 = vector.multi_reduction <add>, %170, %cst_75 [1] : vector<16x32xf32> to vector<16xf32>
    %172 = vector.shape_cast %171 : vector<16xf32> to vector<16x1xf32>
    %cst_76 = arith.constant 3.200000e+01 : f32
    %173 = vector.broadcast %cst_76 : f32 to vector<16x1xf32>
    %174 = arith.divf %172, %173 : vector<16x1xf32>
    %cst_77 = arith.constant 9.99999974E-6 : f32
    %175 = vector.broadcast %cst_77 : f32 to vector<16x1xf32>
    %176 = arith.addf %174, %175 : vector<16x1xf32>
    %177 = math.rsqrt %176 : vector<16x1xf32>
    %178 = vector.broadcast %177 : vector<16x1xf32> to vector<16x32xf32>
    %179 = arith.mulf %169, %178 : vector<16x32xf32>
    %c672 = arith.constant 672 : index
    %c0_78 = arith.constant 0 : index
    %180 = vector.load %arg3[%c672, %c0_78] : memref<1600x128xf32, #tpu.memory_space<vmem>>, vector<1x32xf32>
    %181 = vector.broadcast %180 : vector<1x32xf32> to vector<16x32xf32>
    %182 = arith.mulf %179, %181 : vector<16x32xf32>
    %c680 = arith.constant 680 : index
    %c0_79 = arith.constant 0 : index
    %183 = vector.load %arg3[%c680, %c0_79] : memref<1600x128xf32, #tpu.memory_space<vmem>>, vector<1x32xf32>
    %184 = vector.broadcast %183 : vector<1x32xf32> to vector<16x32xf32>
    %185 = arith.addf %182, %184 : vector<16x32xf32>
    %c0_80 = arith.constant 0 : index
    %c0_81 = arith.constant 0 : index
    %186 = vector.load %arg2[%c0_80, %c0_81] : memref<16x1xi32, #tpu.memory_space<vmem>>, vector<16x1xi32>
    %187 = tpu.iota {dimensions = array<i32: 1>} : vector<16x16xi32>
    %188 = vector.broadcast %186 : vector<16x1xi32> to vector<16x16xi32>
    %189 = arith.cmpi eq, %187, %188 : vector<16x16xi32>
    %190 = arith.extui %189 : vector<16x16xi1> to vector<16x16xi32>
    %191 = arith.sitofp %190 : vector<16x16xi32> to vector<16x16xf32>
    %c24 = arith.constant 24 : index
    %c0_82 = arith.constant 0 : index
    %192 = vector.load %arg3[%c24, %c0_82] : memref<1600x128xf32, #tpu.memory_space<vmem>>, vector<16x32xf32>
    %cst_83 = arith.constant dense<0.000000e+00> : vector<16x32xf32>
    %193 = tpu.matmul %191, %192, %cst_83 {dimension_numbers = #tpu.dot_dimension_numbers<[1], [0], [0], [1], [0, 0, 1, 1], [], []>} : vector<16x16xf32>, vector<16x32xf32>, vector<16x32xf32> -> vector<16x32xf32>
    %c40 = arith.constant 40 : index
    %c0_84 = arith.constant 0 : index
    %194 = vector.load %arg3[%c40, %c0_84] : memref<1600x128xf32, #tpu.memory_space<vmem>>, vector<16x32xf32>
    %195 = arith.addf %193, %194 : vector<16x32xf32>
    %c864 = arith.constant 864 : index
    %c0_85 = arith.constant 0 : index
    %196 = vector.load %arg3[%c864, %c0_85] : memref<1600x128xf32, #tpu.memory_space<vmem>>, vector<32x96xf32>
    %cst_86 = arith.constant dense<0.000000e+00> : vector<16x96xf32>
    %197 = tpu.matmul %195, %196, %cst_86 {dimension_numbers = #tpu.dot_dimension_numbers<[1], [0], [0], [1], [0, 0, 1, 1], [], []>} : vector<16x32xf32>, vector<32x96xf32>, vector<16x96xf32> -> vector<16x96xf32>
    %198 = vector.extract_strided_slice %197 {offsets = [0, 0], sizes = [16, 32], strides = [1, 1]} : vector<16x96xf32> to vector<16x32xf32>
    %199 = vector.extract_strided_slice %197 {offsets = [0, 32], sizes = [16, 32], strides = [1, 1]} : vector<16x96xf32> to vector<16x32xf32>
    %200 = vector.extract_strided_slice %197 {offsets = [0, 64], sizes = [16, 32], strides = [1, 1]} : vector<16x96xf32> to vector<16x32xf32>
    %c176_87 = arith.constant 176 : index
    %c0_88 = arith.constant 0 : index
    %201 = vector.load %arg3[%c176_87, %c0_88] : memref<1600x128xf32, #tpu.memory_space<vmem>>, vector<64x32xf32>
    %c96_89 = arith.constant 96 : index
    %c0_90 = arith.constant 0 : index
    %202 = vector.load %arg3[%c96_89, %c0_90] : memref<1600x128xf32, #tpu.memory_space<vmem>>, vector<64x16xf32>
    %cst_91 = arith.constant dense<0.000000e+00> : vector<64x32xf32>
    %203 = tpu.matmul %202, %198, %cst_91 {dimension_numbers = #tpu.dot_dimension_numbers<[1], [0], [0], [1], [0, 0, 1, 1], [], []>} : vector<64x16xf32>, vector<16x32xf32>, vector<64x32xf32> -> vector<64x32xf32>
    %204 = arith.mulf %203, %201 : vector<64x32xf32>
    %cst_92 = arith.constant dense<0.000000e+00> : vector<64x16xf32>
    %205 = tpu.matmul %204, %199, %cst_92 {dimension_numbers = #tpu.dot_dimension_numbers<[1], [1], [0], [0], [0, 0, 1, 0], [], []>} : vector<64x32xf32>, vector<16x32xf32>, vector<64x16xf32> -> vector<64x16xf32>
    %c240_93 = arith.constant 240 : index
    %c0_94 = arith.constant 0 : index
    %206 = vector.load %arg3[%c240_93, %c0_94] : memref<1600x128xf32, #tpu.memory_space<vmem>>, vector<64x16xf32>
    %207 = arith.addf %205, %206 : vector<64x16xf32>
    %cst_95 = arith.constant dense<0xFF800000> : vector<64xf32>
    %208 = vector.multi_reduction <maximumf>, %207, %cst_95 [1] : vector<64x16xf32> to vector<64xf32>
    %209 = vector.shape_cast %208 : vector<64xf32> to vector<64x1xf32>
    %210 = vector.broadcast %209 : vector<64x1xf32> to vector<64x16xf32>
    %211 = arith.subf %207, %210 : vector<64x16xf32>
    %212 = math.exp %211 : vector<64x16xf32>
    %cst_96 = arith.constant dense<0.000000e+00> : vector<64xf32>
    %213 = vector.multi_reduction <add>, %212, %cst_96 [1] : vector<64x16xf32> to vector<64xf32>
    %214 = vector.shape_cast %213 : vector<64xf32> to vector<64x1xf32>
    %215 = vector.broadcast %214 : vector<64x1xf32> to vector<64x16xf32>
    %216 = arith.divf %212, %215 : vector<64x16xf32>
    %cst_97 = arith.constant dense<0.000000e+00> : vector<64x32xf32>
    %217 = tpu.matmul %216, %200, %cst_97 {dimension_numbers = #tpu.dot_dimension_numbers<[1], [0], [0], [1], [0, 0, 1, 1], [], []>} : vector<64x16xf32>, vector<16x32xf32>, vector<64x32xf32> -> vector<64x32xf32>
    %c160_98 = arith.constant 160 : index
    %c0_99 = arith.constant 0 : index
    %218 = vector.load %arg3[%c160_98, %c0_99] : memref<1600x128xf32, #tpu.memory_space<vmem>>, vector<16x64xf32>
    %219 = arith.mulf %217, %201 : vector<64x32xf32>
    %cst_100 = arith.constant dense<0.000000e+00> : vector<16x32xf32>
    %220 = tpu.matmul %218, %219, %cst_100 {dimension_numbers = #tpu.dot_dimension_numbers<[1], [0], [0], [1], [0, 0, 1, 1], [], []>} : vector<16x64xf32>, vector<64x32xf32>, vector<16x32xf32> -> vector<16x32xf32>
    %c896 = arith.constant 896 : index
    %c0_101 = arith.constant 0 : index
    %221 = vector.load %arg3[%c896, %c0_101] : memref<1600x128xf32, #tpu.memory_space<vmem>>, vector<32x32xf32>
    %cst_102 = arith.constant dense<0.000000e+00> : vector<16x32xf32>
    %222 = tpu.matmul %220, %221, %cst_102 {dimension_numbers = #tpu.dot_dimension_numbers<[1], [0], [0], [1], [0, 0, 1, 1], [], []>} : vector<16x32xf32>, vector<32x32xf32>, vector<16x32xf32> -> vector<16x32xf32>
    %c928 = arith.constant 928 : index
    %c0_103 = arith.constant 0 : index
    %223 = vector.load %arg3[%c928, %c0_103] : memref<1600x128xf32, #tpu.memory_space<vmem>>, vector<1x32xf32>
    %224 = vector.broadcast %223 : vector<1x32xf32> to vector<16x32xf32>
    %225 = arith.addf %222, %224 : vector<16x32xf32>
    %226 = arith.addf %225, %195 : vector<16x32xf32>
    %cst_104 = arith.constant dense<0.000000e+00> : vector<16xf32>
    %227 = vector.multi_reduction <add>, %226, %cst_104 [1] : vector<16x32xf32> to vector<16xf32>
    %228 = vector.shape_cast %227 : vector<16xf32> to vector<16x1xf32>
    %cst_105 = arith.constant 3.200000e+01 : f32
    %229 = vector.broadcast %cst_105 : f32 to vector<16x1xf32>
    %230 = arith.divf %228, %229 : vector<16x1xf32>
    %231 = vector.broadcast %230 : vector<16x1xf32> to vector<16x32xf32>
    %232 = arith.subf %226, %231 : vector<16x32xf32>
    %233 = arith.mulf %232, %232 : vector<16x32xf32>
    %cst_106 = arith.constant dense<0.000000e+00> : vector<16xf32>
    %234 = vector.multi_reduction <add>, %233, %cst_106 [1] : vector<16x32xf32> to vector<16xf32>
    %235 = vector.shape_cast %234 : vector<16xf32> to vector<16x1xf32>
    %cst_107 = arith.constant 3.200000e+01 : f32
    %236 = vector.broadcast %cst_107 : f32 to vector<16x1xf32>
    %237 = arith.divf %235, %236 : vector<16x1xf32>
    %cst_108 = arith.constant 9.99999974E-6 : f32
    %238 = vector.broadcast %cst_108 : f32 to vector<16x1xf32>
    %239 = arith.addf %237, %238 : vector<16x1xf32>
    %240 = math.rsqrt %239 : vector<16x1xf32>
    %241 = vector.broadcast %240 : vector<16x1xf32> to vector<16x32xf32>
    %242 = arith.mulf %232, %241 : vector<16x32xf32>
    %c936 = arith.constant 936 : index
    %c0_109 = arith.constant 0 : index
    %243 = vector.load %arg3[%c936, %c0_109] : memref<1600x128xf32, #tpu.memory_space<vmem>>, vector<1x32xf32>
    %244 = vector.broadcast %243 : vector<1x32xf32> to vector<16x32xf32>
    %245 = arith.mulf %242, %244 : vector<16x32xf32>
    %c944 = arith.constant 944 : index
    %c0_110 = arith.constant 0 : index
    %246 = vector.load %arg3[%c944, %c0_110] : memref<1600x128xf32, #tpu.memory_space<vmem>>, vector<1x32xf32>
    %247 = vector.broadcast %246 : vector<1x32xf32> to vector<16x32xf32>
    %248 = arith.addf %245, %247 : vector<16x32xf32>
    %c952 = arith.constant 952 : index
    %c0_111 = arith.constant 0 : index
    %249 = vector.load %arg3[%c952, %c0_111] : memref<1600x128xf32, #tpu.memory_space<vmem>>, vector<32x96xf32>
    %250 = vector.extract_strided_slice %249 {offsets = [0, 0], sizes = [32, 32], strides = [1, 1]} : vector<32x96xf32> to vector<32x32xf32>
    %cst_112 = arith.constant dense<0.000000e+00> : vector<16x32xf32>
    %251 = tpu.matmul %248, %250, %cst_112 {dimension_numbers = #tpu.dot_dimension_numbers<[1], [0], [0], [1], [0, 0, 1, 1], [], []>} : vector<16x32xf32>, vector<32x32xf32>, vector<16x32xf32> -> vector<16x32xf32>
    %252 = vector.extract_strided_slice %249 {offsets = [0, 32], sizes = [32, 64], strides = [1, 1]} : vector<32x96xf32> to vector<32x64xf32>
    %cst_113 = arith.constant dense<0.000000e+00> : vector<16x64xf32>
    %253 = tpu.matmul %185, %252, %cst_113 {dimension_numbers = #tpu.dot_dimension_numbers<[1], [0], [0], [1], [0, 0, 1, 1], [], []>} : vector<16x32xf32>, vector<32x64xf32>, vector<16x64xf32> -> vector<16x64xf32>
    %254 = vector.extract_strided_slice %253 {offsets = [0, 0], sizes = [16, 32], strides = [1, 1]} : vector<16x64xf32> to vector<16x32xf32>
    %255 = vector.extract_strided_slice %253 {offsets = [0, 32], sizes = [16, 32], strides = [1, 1]} : vector<16x64xf32> to vector<16x32xf32>
    %c176_114 = arith.constant 176 : index
    %c0_115 = arith.constant 0 : index
    %256 = vector.load %arg3[%c176_114, %c0_115] : memref<1600x128xf32, #tpu.memory_space<vmem>>, vector<64x32xf32>
    %c96_116 = arith.constant 96 : index
    %c0_117 = arith.constant 0 : index
    %257 = vector.load %arg3[%c96_116, %c0_117] : memref<1600x128xf32, #tpu.memory_space<vmem>>, vector<64x16xf32>
    %cst_118 = arith.constant dense<0.000000e+00> : vector<64x32xf32>
    %258 = tpu.matmul %257, %251, %cst_118 {dimension_numbers = #tpu.dot_dimension_numbers<[1], [0], [0], [1], [0, 0, 1, 1], [], []>} : vector<64x16xf32>, vector<16x32xf32>, vector<64x32xf32> -> vector<64x32xf32>
    %259 = arith.mulf %258, %256 : vector<64x32xf32>
    %cst_119 = arith.constant dense<0.000000e+00> : vector<64x16xf32>
    %260 = tpu.matmul %259, %254, %cst_119 {dimension_numbers = #tpu.dot_dimension_numbers<[1], [1], [0], [0], [0, 0, 1, 0], [], []>} : vector<64x32xf32>, vector<16x32xf32>, vector<64x16xf32> -> vector<64x16xf32>
    %c240_120 = arith.constant 240 : index
    %c0_121 = arith.constant 0 : index
    %261 = vector.load %arg3[%c240_120, %c0_121] : memref<1600x128xf32, #tpu.memory_space<vmem>>, vector<64x16xf32>
    %262 = arith.addf %260, %261 : vector<64x16xf32>
    %cst_122 = arith.constant dense<0xFF800000> : vector<64xf32>
    %263 = vector.multi_reduction <maximumf>, %262, %cst_122 [1] : vector<64x16xf32> to vector<64xf32>
    %264 = vector.shape_cast %263 : vector<64xf32> to vector<64x1xf32>
    %265 = vector.broadcast %264 : vector<64x1xf32> to vector<64x16xf32>
    %266 = arith.subf %262, %265 : vector<64x16xf32>
    %267 = math.exp %266 : vector<64x16xf32>
    %cst_123 = arith.constant dense<0.000000e+00> : vector<64xf32>
    %268 = vector.multi_reduction <add>, %267, %cst_123 [1] : vector<64x16xf32> to vector<64xf32>
    %269 = vector.shape_cast %268 : vector<64xf32> to vector<64x1xf32>
    %270 = vector.broadcast %269 : vector<64x1xf32> to vector<64x16xf32>
    %271 = arith.divf %267, %270 : vector<64x16xf32>
    %cst_124 = arith.constant dense<0.000000e+00> : vector<64x32xf32>
    %272 = tpu.matmul %271, %255, %cst_124 {dimension_numbers = #tpu.dot_dimension_numbers<[1], [0], [0], [1], [0, 0, 1, 1], [], []>} : vector<64x16xf32>, vector<16x32xf32>, vector<64x32xf32> -> vector<64x32xf32>
    %c160_125 = arith.constant 160 : index
    %c0_126 = arith.constant 0 : index
    %273 = vector.load %arg3[%c160_125, %c0_126] : memref<1600x128xf32, #tpu.memory_space<vmem>>, vector<16x64xf32>
    %274 = arith.mulf %272, %256 : vector<64x32xf32>
    %cst_127 = arith.constant dense<0.000000e+00> : vector<16x32xf32>
    %275 = tpu.matmul %273, %274, %cst_127 {dimension_numbers = #tpu.dot_dimension_numbers<[1], [0], [0], [1], [0, 0, 1, 1], [], []>} : vector<16x64xf32>, vector<64x32xf32>, vector<16x32xf32> -> vector<16x32xf32>
    %c984 = arith.constant 984 : index
    %c0_128 = arith.constant 0 : index
    %276 = vector.load %arg3[%c984, %c0_128] : memref<1600x128xf32, #tpu.memory_space<vmem>>, vector<32x32xf32>
    %cst_129 = arith.constant dense<0.000000e+00> : vector<16x32xf32>
    %277 = tpu.matmul %275, %276, %cst_129 {dimension_numbers = #tpu.dot_dimension_numbers<[1], [0], [0], [1], [0, 0, 1, 1], [], []>} : vector<16x32xf32>, vector<32x32xf32>, vector<16x32xf32> -> vector<16x32xf32>
    %c1016 = arith.constant 1016 : index
    %c0_130 = arith.constant 0 : index
    %278 = vector.load %arg3[%c1016, %c0_130] : memref<1600x128xf32, #tpu.memory_space<vmem>>, vector<1x32xf32>
    %279 = vector.broadcast %278 : vector<1x32xf32> to vector<16x32xf32>
    %280 = arith.addf %277, %279 : vector<16x32xf32>
    %281 = arith.addf %280, %248 : vector<16x32xf32>
    %cst_131 = arith.constant dense<0.000000e+00> : vector<16xf32>
    %282 = vector.multi_reduction <add>, %281, %cst_131 [1] : vector<16x32xf32> to vector<16xf32>
    %283 = vector.shape_cast %282 : vector<16xf32> to vector<16x1xf32>
    %cst_132 = arith.constant 3.200000e+01 : f32
    %284 = vector.broadcast %cst_132 : f32 to vector<16x1xf32>
    %285 = arith.divf %283, %284 : vector<16x1xf32>
    %286 = vector.broadcast %285 : vector<16x1xf32> to vector<16x32xf32>
    %287 = arith.subf %281, %286 : vector<16x32xf32>
    %288 = arith.mulf %287, %287 : vector<16x32xf32>
    %cst_133 = arith.constant dense<0.000000e+00> : vector<16xf32>
    %289 = vector.multi_reduction <add>, %288, %cst_133 [1] : vector<16x32xf32> to vector<16xf32>
    %290 = vector.shape_cast %289 : vector<16xf32> to vector<16x1xf32>
    %cst_134 = arith.constant 3.200000e+01 : f32
    %291 = vector.broadcast %cst_134 : f32 to vector<16x1xf32>
    %292 = arith.divf %290, %291 : vector<16x1xf32>
    %cst_135 = arith.constant 9.99999974E-6 : f32
    %293 = vector.broadcast %cst_135 : f32 to vector<16x1xf32>
    %294 = arith.addf %292, %293 : vector<16x1xf32>
    %295 = math.rsqrt %294 : vector<16x1xf32>
    %296 = vector.broadcast %295 : vector<16x1xf32> to vector<16x32xf32>
    %297 = arith.mulf %287, %296 : vector<16x32xf32>
    %c1024 = arith.constant 1024 : index
    %c0_136 = arith.constant 0 : index
    %298 = vector.load %arg3[%c1024, %c0_136] : memref<1600x128xf32, #tpu.memory_space<vmem>>, vector<1x32xf32>
    %299 = vector.broadcast %298 : vector<1x32xf32> to vector<16x32xf32>
    %300 = arith.mulf %297, %299 : vector<16x32xf32>
    %c1032 = arith.constant 1032 : index
    %c0_137 = arith.constant 0 : index
    %301 = vector.load %arg3[%c1032, %c0_137] : memref<1600x128xf32, #tpu.memory_space<vmem>>, vector<1x32xf32>
    %302 = vector.broadcast %301 : vector<1x32xf32> to vector<16x32xf32>
    %303 = arith.addf %300, %302 : vector<16x32xf32>
    %c1056 = arith.constant 1056 : index
    %c0_138 = arith.constant 0 : index
    %304 = vector.load %arg3[%c1056, %c0_138] : memref<1600x128xf32, #tpu.memory_space<vmem>>, vector<32x128xf32>
    %cst_139 = arith.constant dense<0.000000e+00> : vector<16x128xf32>
    %305 = tpu.matmul %303, %304, %cst_139 {dimension_numbers = #tpu.dot_dimension_numbers<[1], [0], [0], [1], [0, 0, 1, 1], [], []>} : vector<16x32xf32>, vector<32x128xf32>, vector<16x128xf32> -> vector<16x128xf32>
    %c1088 = arith.constant 1088 : index
    %c0_140 = arith.constant 0 : index
    %306 = vector.load %arg3[%c1088, %c0_140] : memref<1600x128xf32, #tpu.memory_space<vmem>>, vector<1x128xf32>
    %307 = vector.broadcast %306 : vector<1x128xf32> to vector<16x128xf32>
    %308 = arith.addf %305, %307 : vector<16x128xf32>
    %cst_141 = arith.constant 0.000000e+00 : f32
    %309 = vector.broadcast %cst_141 : f32 to vector<16x128xf32>
    %310 = arith.maximumf %308, %309 : vector<16x128xf32>
    %c1096 = arith.constant 1096 : index
    %c0_142 = arith.constant 0 : index
    %311 = vector.load %arg3[%c1096, %c0_142] : memref<1600x128xf32, #tpu.memory_space<vmem>>, vector<128x32xf32>
    %cst_143 = arith.constant dense<0.000000e+00> : vector<16x32xf32>
    %312 = tpu.matmul %310, %311, %cst_143 {dimension_numbers = #tpu.dot_dimension_numbers<[1], [0], [0], [1], [0, 0, 1, 1], [], []>} : vector<16x128xf32>, vector<128x32xf32>, vector<16x32xf32> -> vector<16x32xf32>
    %c1224 = arith.constant 1224 : index
    %c0_144 = arith.constant 0 : index
    %313 = vector.load %arg3[%c1224, %c0_144] : memref<1600x128xf32, #tpu.memory_space<vmem>>, vector<1x32xf32>
    %314 = vector.broadcast %313 : vector<1x32xf32> to vector<16x32xf32>
    %315 = arith.addf %312, %314 : vector<16x32xf32>
    %316 = arith.addf %315, %303 : vector<16x32xf32>
    %cst_145 = arith.constant dense<0.000000e+00> : vector<16xf32>
    %317 = vector.multi_reduction <add>, %316, %cst_145 [1] : vector<16x32xf32> to vector<16xf32>
    %318 = vector.shape_cast %317 : vector<16xf32> to vector<16x1xf32>
    %cst_146 = arith.constant 3.200000e+01 : f32
    %319 = vector.broadcast %cst_146 : f32 to vector<16x1xf32>
    %320 = arith.divf %318, %319 : vector<16x1xf32>
    %321 = vector.broadcast %320 : vector<16x1xf32> to vector<16x32xf32>
    %322 = arith.subf %316, %321 : vector<16x32xf32>
    %323 = arith.mulf %322, %322 : vector<16x32xf32>
    %cst_147 = arith.constant dense<0.000000e+00> : vector<16xf32>
    %324 = vector.multi_reduction <add>, %323, %cst_147 [1] : vector<16x32xf32> to vector<16xf32>
    %325 = vector.shape_cast %324 : vector<16xf32> to vector<16x1xf32>
    %cst_148 = arith.constant 3.200000e+01 : f32
    %326 = vector.broadcast %cst_148 : f32 to vector<16x1xf32>
    %327 = arith.divf %325, %326 : vector<16x1xf32>
    %cst_149 = arith.constant 9.99999974E-6 : f32
    %328 = vector.broadcast %cst_149 : f32 to vector<16x1xf32>
    %329 = arith.addf %327, %328 : vector<16x1xf32>
    %330 = math.rsqrt %329 : vector<16x1xf32>
    %331 = vector.broadcast %330 : vector<16x1xf32> to vector<16x32xf32>
    %332 = arith.mulf %322, %331 : vector<16x32xf32>
    %c1040 = arith.constant 1040 : index
    %c0_150 = arith.constant 0 : index
    %333 = vector.load %arg3[%c1040, %c0_150] : memref<1600x128xf32, #tpu.memory_space<vmem>>, vector<1x32xf32>
    %334 = vector.broadcast %333 : vector<1x32xf32> to vector<16x32xf32>
    %335 = arith.mulf %332, %334 : vector<16x32xf32>
    %c1048 = arith.constant 1048 : index
    %c0_151 = arith.constant 0 : index
    %336 = vector.load %arg3[%c1048, %c0_151] : memref<1600x128xf32, #tpu.memory_space<vmem>>, vector<1x32xf32>
    %337 = vector.broadcast %336 : vector<1x32xf32> to vector<16x32xf32>
    %338 = arith.addf %335, %337 : vector<16x32xf32>
    %c1232 = arith.constant 1232 : index
    %c0_152 = arith.constant 0 : index
    %339 = vector.load %arg3[%c1232, %c0_152] : memref<1600x128xf32, #tpu.memory_space<vmem>>, vector<32x96xf32>
    %cst_153 = arith.constant dense<0.000000e+00> : vector<16x96xf32>
    %340 = tpu.matmul %338, %339, %cst_153 {dimension_numbers = #tpu.dot_dimension_numbers<[1], [0], [0], [1], [0, 0, 1, 1], [], []>} : vector<16x32xf32>, vector<32x96xf32>, vector<16x96xf32> -> vector<16x96xf32>
    %341 = vector.extract_strided_slice %340 {offsets = [0, 0], sizes = [16, 32], strides = [1, 1]} : vector<16x96xf32> to vector<16x32xf32>
    %342 = vector.extract_strided_slice %340 {offsets = [0, 32], sizes = [16, 32], strides = [1, 1]} : vector<16x96xf32> to vector<16x32xf32>
    %343 = vector.extract_strided_slice %340 {offsets = [0, 64], sizes = [16, 32], strides = [1, 1]} : vector<16x96xf32> to vector<16x32xf32>
    %c176_154 = arith.constant 176 : index
    %c0_155 = arith.constant 0 : index
    %344 = vector.load %arg3[%c176_154, %c0_155] : memref<1600x128xf32, #tpu.memory_space<vmem>>, vector<64x32xf32>
    %c96_156 = arith.constant 96 : index
    %c0_157 = arith.constant 0 : index
    %345 = vector.load %arg3[%c96_156, %c0_157] : memref<1600x128xf32, #tpu.memory_space<vmem>>, vector<64x16xf32>
    %cst_158 = arith.constant dense<0.000000e+00> : vector<64x32xf32>
    %346 = tpu.matmul %345, %341, %cst_158 {dimension_numbers = #tpu.dot_dimension_numbers<[1], [0], [0], [1], [0, 0, 1, 1], [], []>} : vector<64x16xf32>, vector<16x32xf32>, vector<64x32xf32> -> vector<64x32xf32>
    %347 = arith.mulf %346, %344 : vector<64x32xf32>
    %cst_159 = arith.constant dense<0.000000e+00> : vector<64x16xf32>
    %348 = tpu.matmul %347, %342, %cst_159 {dimension_numbers = #tpu.dot_dimension_numbers<[1], [1], [0], [0], [0, 0, 1, 0], [], []>} : vector<64x32xf32>, vector<16x32xf32>, vector<64x16xf32> -> vector<64x16xf32>
    %c240_160 = arith.constant 240 : index
    %c0_161 = arith.constant 0 : index
    %349 = vector.load %arg3[%c240_160, %c0_161] : memref<1600x128xf32, #tpu.memory_space<vmem>>, vector<64x16xf32>
    %350 = arith.addf %348, %349 : vector<64x16xf32>
    %cst_162 = arith.constant dense<0xFF800000> : vector<64xf32>
    %351 = vector.multi_reduction <maximumf>, %350, %cst_162 [1] : vector<64x16xf32> to vector<64xf32>
    %352 = vector.shape_cast %351 : vector<64xf32> to vector<64x1xf32>
    %353 = vector.broadcast %352 : vector<64x1xf32> to vector<64x16xf32>
    %354 = arith.subf %350, %353 : vector<64x16xf32>
    %355 = math.exp %354 : vector<64x16xf32>
    %cst_163 = arith.constant dense<0.000000e+00> : vector<64xf32>
    %356 = vector.multi_reduction <add>, %355, %cst_163 [1] : vector<64x16xf32> to vector<64xf32>
    %357 = vector.shape_cast %356 : vector<64xf32> to vector<64x1xf32>
    %358 = vector.broadcast %357 : vector<64x1xf32> to vector<64x16xf32>
    %359 = arith.divf %355, %358 : vector<64x16xf32>
    %cst_164 = arith.constant dense<0.000000e+00> : vector<64x32xf32>
    %360 = tpu.matmul %359, %343, %cst_164 {dimension_numbers = #tpu.dot_dimension_numbers<[1], [0], [0], [1], [0, 0, 1, 1], [], []>} : vector<64x16xf32>, vector<16x32xf32>, vector<64x32xf32> -> vector<64x32xf32>
    %c160_165 = arith.constant 160 : index
    %c0_166 = arith.constant 0 : index
    %361 = vector.load %arg3[%c160_165, %c0_166] : memref<1600x128xf32, #tpu.memory_space<vmem>>, vector<16x64xf32>
    %362 = arith.mulf %360, %344 : vector<64x32xf32>
    %cst_167 = arith.constant dense<0.000000e+00> : vector<16x32xf32>
    %363 = tpu.matmul %361, %362, %cst_167 {dimension_numbers = #tpu.dot_dimension_numbers<[1], [0], [0], [1], [0, 0, 1, 1], [], []>} : vector<16x64xf32>, vector<64x32xf32>, vector<16x32xf32> -> vector<16x32xf32>
    %c1264 = arith.constant 1264 : index
    %c0_168 = arith.constant 0 : index
    %364 = vector.load %arg3[%c1264, %c0_168] : memref<1600x128xf32, #tpu.memory_space<vmem>>, vector<32x32xf32>
    %cst_169 = arith.constant dense<0.000000e+00> : vector<16x32xf32>
    %365 = tpu.matmul %363, %364, %cst_169 {dimension_numbers = #tpu.dot_dimension_numbers<[1], [0], [0], [1], [0, 0, 1, 1], [], []>} : vector<16x32xf32>, vector<32x32xf32>, vector<16x32xf32> -> vector<16x32xf32>
    %c1296 = arith.constant 1296 : index
    %c0_170 = arith.constant 0 : index
    %366 = vector.load %arg3[%c1296, %c0_170] : memref<1600x128xf32, #tpu.memory_space<vmem>>, vector<1x32xf32>
    %367 = vector.broadcast %366 : vector<1x32xf32> to vector<16x32xf32>
    %368 = arith.addf %365, %367 : vector<16x32xf32>
    %369 = arith.addf %368, %338 : vector<16x32xf32>
    %cst_171 = arith.constant dense<0.000000e+00> : vector<16xf32>
    %370 = vector.multi_reduction <add>, %369, %cst_171 [1] : vector<16x32xf32> to vector<16xf32>
    %371 = vector.shape_cast %370 : vector<16xf32> to vector<16x1xf32>
    %cst_172 = arith.constant 3.200000e+01 : f32
    %372 = vector.broadcast %cst_172 : f32 to vector<16x1xf32>
    %373 = arith.divf %371, %372 : vector<16x1xf32>
    %374 = vector.broadcast %373 : vector<16x1xf32> to vector<16x32xf32>
    %375 = arith.subf %369, %374 : vector<16x32xf32>
    %376 = arith.mulf %375, %375 : vector<16x32xf32>
    %cst_173 = arith.constant dense<0.000000e+00> : vector<16xf32>
    %377 = vector.multi_reduction <add>, %376, %cst_173 [1] : vector<16x32xf32> to vector<16xf32>
    %378 = vector.shape_cast %377 : vector<16xf32> to vector<16x1xf32>
    %cst_174 = arith.constant 3.200000e+01 : f32
    %379 = vector.broadcast %cst_174 : f32 to vector<16x1xf32>
    %380 = arith.divf %378, %379 : vector<16x1xf32>
    %cst_175 = arith.constant 9.99999974E-6 : f32
    %381 = vector.broadcast %cst_175 : f32 to vector<16x1xf32>
    %382 = arith.addf %380, %381 : vector<16x1xf32>
    %383 = math.rsqrt %382 : vector<16x1xf32>
    %384 = vector.broadcast %383 : vector<16x1xf32> to vector<16x32xf32>
    %385 = arith.mulf %375, %384 : vector<16x32xf32>
    %c1304 = arith.constant 1304 : index
    %c0_176 = arith.constant 0 : index
    %386 = vector.load %arg3[%c1304, %c0_176] : memref<1600x128xf32, #tpu.memory_space<vmem>>, vector<1x32xf32>
    %387 = vector.broadcast %386 : vector<1x32xf32> to vector<16x32xf32>
    %388 = arith.mulf %385, %387 : vector<16x32xf32>
    %c1312 = arith.constant 1312 : index
    %c0_177 = arith.constant 0 : index
    %389 = vector.load %arg3[%c1312, %c0_177] : memref<1600x128xf32, #tpu.memory_space<vmem>>, vector<1x32xf32>
    %390 = vector.broadcast %389 : vector<1x32xf32> to vector<16x32xf32>
    %391 = arith.addf %388, %390 : vector<16x32xf32>
    %c1320 = arith.constant 1320 : index
    %c0_178 = arith.constant 0 : index
    %392 = vector.load %arg3[%c1320, %c0_178] : memref<1600x128xf32, #tpu.memory_space<vmem>>, vector<32x96xf32>
    %393 = vector.extract_strided_slice %392 {offsets = [0, 0], sizes = [32, 32], strides = [1, 1]} : vector<32x96xf32> to vector<32x32xf32>
    %cst_179 = arith.constant dense<0.000000e+00> : vector<16x32xf32>
    %394 = tpu.matmul %391, %393, %cst_179 {dimension_numbers = #tpu.dot_dimension_numbers<[1], [0], [0], [1], [0, 0, 1, 1], [], []>} : vector<16x32xf32>, vector<32x32xf32>, vector<16x32xf32> -> vector<16x32xf32>
    %395 = vector.extract_strided_slice %392 {offsets = [0, 32], sizes = [32, 64], strides = [1, 1]} : vector<32x96xf32> to vector<32x64xf32>
    %cst_180 = arith.constant dense<0.000000e+00> : vector<16x64xf32>
    %396 = tpu.matmul %185, %395, %cst_180 {dimension_numbers = #tpu.dot_dimension_numbers<[1], [0], [0], [1], [0, 0, 1, 1], [], []>} : vector<16x32xf32>, vector<32x64xf32>, vector<16x64xf32> -> vector<16x64xf32>
    %397 = vector.extract_strided_slice %396 {offsets = [0, 0], sizes = [16, 32], strides = [1, 1]} : vector<16x64xf32> to vector<16x32xf32>
    %398 = vector.extract_strided_slice %396 {offsets = [0, 32], sizes = [16, 32], strides = [1, 1]} : vector<16x64xf32> to vector<16x32xf32>
    %c176_181 = arith.constant 176 : index
    %c0_182 = arith.constant 0 : index
    %399 = vector.load %arg3[%c176_181, %c0_182] : memref<1600x128xf32, #tpu.memory_space<vmem>>, vector<64x32xf32>
    %c96_183 = arith.constant 96 : index
    %c0_184 = arith.constant 0 : index
    %400 = vector.load %arg3[%c96_183, %c0_184] : memref<1600x128xf32, #tpu.memory_space<vmem>>, vector<64x16xf32>
    %cst_185 = arith.constant dense<0.000000e+00> : vector<64x32xf32>
    %401 = tpu.matmul %400, %394, %cst_185 {dimension_numbers = #tpu.dot_dimension_numbers<[1], [0], [0], [1], [0, 0, 1, 1], [], []>} : vector<64x16xf32>, vector<16x32xf32>, vector<64x32xf32> -> vector<64x32xf32>
    %402 = arith.mulf %401, %399 : vector<64x32xf32>
    %cst_186 = arith.constant dense<0.000000e+00> : vector<64x16xf32>
    %403 = tpu.matmul %402, %397, %cst_186 {dimension_numbers = #tpu.dot_dimension_numbers<[1], [1], [0], [0], [0, 0, 1, 0], [], []>} : vector<64x32xf32>, vector<16x32xf32>, vector<64x16xf32> -> vector<64x16xf32>
    %c240_187 = arith.constant 240 : index
    %c0_188 = arith.constant 0 : index
    %404 = vector.load %arg3[%c240_187, %c0_188] : memref<1600x128xf32, #tpu.memory_space<vmem>>, vector<64x16xf32>
    %405 = arith.addf %403, %404 : vector<64x16xf32>
    %cst_189 = arith.constant dense<0xFF800000> : vector<64xf32>
    %406 = vector.multi_reduction <maximumf>, %405, %cst_189 [1] : vector<64x16xf32> to vector<64xf32>
    %407 = vector.shape_cast %406 : vector<64xf32> to vector<64x1xf32>
    %408 = vector.broadcast %407 : vector<64x1xf32> to vector<64x16xf32>
    %409 = arith.subf %405, %408 : vector<64x16xf32>
    %410 = math.exp %409 : vector<64x16xf32>
    %cst_190 = arith.constant dense<0.000000e+00> : vector<64xf32>
    %411 = vector.multi_reduction <add>, %410, %cst_190 [1] : vector<64x16xf32> to vector<64xf32>
    %412 = vector.shape_cast %411 : vector<64xf32> to vector<64x1xf32>
    %413 = vector.broadcast %412 : vector<64x1xf32> to vector<64x16xf32>
    %414 = arith.divf %410, %413 : vector<64x16xf32>
    %cst_191 = arith.constant dense<0.000000e+00> : vector<64x32xf32>
    %415 = tpu.matmul %414, %398, %cst_191 {dimension_numbers = #tpu.dot_dimension_numbers<[1], [0], [0], [1], [0, 0, 1, 1], [], []>} : vector<64x16xf32>, vector<16x32xf32>, vector<64x32xf32> -> vector<64x32xf32>
    %c160_192 = arith.constant 160 : index
    %c0_193 = arith.constant 0 : index
    %416 = vector.load %arg3[%c160_192, %c0_193] : memref<1600x128xf32, #tpu.memory_space<vmem>>, vector<16x64xf32>
    %417 = arith.mulf %415, %399 : vector<64x32xf32>
    %cst_194 = arith.constant dense<0.000000e+00> : vector<16x32xf32>
    %418 = tpu.matmul %416, %417, %cst_194 {dimension_numbers = #tpu.dot_dimension_numbers<[1], [0], [0], [1], [0, 0, 1, 1], [], []>} : vector<16x64xf32>, vector<64x32xf32>, vector<16x32xf32> -> vector<16x32xf32>
    %c1352 = arith.constant 1352 : index
    %c0_195 = arith.constant 0 : index
    %419 = vector.load %arg3[%c1352, %c0_195] : memref<1600x128xf32, #tpu.memory_space<vmem>>, vector<32x32xf32>
    %cst_196 = arith.constant dense<0.000000e+00> : vector<16x32xf32>
    %420 = tpu.matmul %418, %419, %cst_196 {dimension_numbers = #tpu.dot_dimension_numbers<[1], [0], [0], [1], [0, 0, 1, 1], [], []>} : vector<16x32xf32>, vector<32x32xf32>, vector<16x32xf32> -> vector<16x32xf32>
    %c1384 = arith.constant 1384 : index
    %c0_197 = arith.constant 0 : index
    %421 = vector.load %arg3[%c1384, %c0_197] : memref<1600x128xf32, #tpu.memory_space<vmem>>, vector<1x32xf32>
    %422 = vector.broadcast %421 : vector<1x32xf32> to vector<16x32xf32>
    %423 = arith.addf %420, %422 : vector<16x32xf32>
    %424 = arith.addf %423, %391 : vector<16x32xf32>
    %cst_198 = arith.constant dense<0.000000e+00> : vector<16xf32>
    %425 = vector.multi_reduction <add>, %424, %cst_198 [1] : vector<16x32xf32> to vector<16xf32>
    %426 = vector.shape_cast %425 : vector<16xf32> to vector<16x1xf32>
    %cst_199 = arith.constant 3.200000e+01 : f32
    %427 = vector.broadcast %cst_199 : f32 to vector<16x1xf32>
    %428 = arith.divf %426, %427 : vector<16x1xf32>
    %429 = vector.broadcast %428 : vector<16x1xf32> to vector<16x32xf32>
    %430 = arith.subf %424, %429 : vector<16x32xf32>
    %431 = arith.mulf %430, %430 : vector<16x32xf32>
    %cst_200 = arith.constant dense<0.000000e+00> : vector<16xf32>
    %432 = vector.multi_reduction <add>, %431, %cst_200 [1] : vector<16x32xf32> to vector<16xf32>
    %433 = vector.shape_cast %432 : vector<16xf32> to vector<16x1xf32>
    %cst_201 = arith.constant 3.200000e+01 : f32
    %434 = vector.broadcast %cst_201 : f32 to vector<16x1xf32>
    %435 = arith.divf %433, %434 : vector<16x1xf32>
    %cst_202 = arith.constant 9.99999974E-6 : f32
    %436 = vector.broadcast %cst_202 : f32 to vector<16x1xf32>
    %437 = arith.addf %435, %436 : vector<16x1xf32>
    %438 = math.rsqrt %437 : vector<16x1xf32>
    %439 = vector.broadcast %438 : vector<16x1xf32> to vector<16x32xf32>
    %440 = arith.mulf %430, %439 : vector<16x32xf32>
    %c1392 = arith.constant 1392 : index
    %c0_203 = arith.constant 0 : index
    %441 = vector.load %arg3[%c1392, %c0_203] : memref<1600x128xf32, #tpu.memory_space<vmem>>, vector<1x32xf32>
    %442 = vector.broadcast %441 : vector<1x32xf32> to vector<16x32xf32>
    %443 = arith.mulf %440, %442 : vector<16x32xf32>
    %c1400 = arith.constant 1400 : index
    %c0_204 = arith.constant 0 : index
    %444 = vector.load %arg3[%c1400, %c0_204] : memref<1600x128xf32, #tpu.memory_space<vmem>>, vector<1x32xf32>
    %445 = vector.broadcast %444 : vector<1x32xf32> to vector<16x32xf32>
    %446 = arith.addf %443, %445 : vector<16x32xf32>
    %c1424 = arith.constant 1424 : index
    %c0_205 = arith.constant 0 : index
    %447 = vector.load %arg3[%c1424, %c0_205] : memref<1600x128xf32, #tpu.memory_space<vmem>>, vector<32x128xf32>
    %cst_206 = arith.constant dense<0.000000e+00> : vector<16x128xf32>
    %448 = tpu.matmul %446, %447, %cst_206 {dimension_numbers = #tpu.dot_dimension_numbers<[1], [0], [0], [1], [0, 0, 1, 1], [], []>} : vector<16x32xf32>, vector<32x128xf32>, vector<16x128xf32> -> vector<16x128xf32>
    %c1456 = arith.constant 1456 : index
    %c0_207 = arith.constant 0 : index
    %449 = vector.load %arg3[%c1456, %c0_207] : memref<1600x128xf32, #tpu.memory_space<vmem>>, vector<1x128xf32>
    %450 = vector.broadcast %449 : vector<1x128xf32> to vector<16x128xf32>
    %451 = arith.addf %448, %450 : vector<16x128xf32>
    %cst_208 = arith.constant 0.000000e+00 : f32
    %452 = vector.broadcast %cst_208 : f32 to vector<16x128xf32>
    %453 = arith.maximumf %451, %452 : vector<16x128xf32>
    %c1464 = arith.constant 1464 : index
    %c0_209 = arith.constant 0 : index
    %454 = vector.load %arg3[%c1464, %c0_209] : memref<1600x128xf32, #tpu.memory_space<vmem>>, vector<128x32xf32>
    %cst_210 = arith.constant dense<0.000000e+00> : vector<16x32xf32>
    %455 = tpu.matmul %453, %454, %cst_210 {dimension_numbers = #tpu.dot_dimension_numbers<[1], [0], [0], [1], [0, 0, 1, 1], [], []>} : vector<16x128xf32>, vector<128x32xf32>, vector<16x32xf32> -> vector<16x32xf32>
    %c1592 = arith.constant 1592 : index
    %c0_211 = arith.constant 0 : index
    %456 = vector.load %arg3[%c1592, %c0_211] : memref<1600x128xf32, #tpu.memory_space<vmem>>, vector<1x32xf32>
    %457 = vector.broadcast %456 : vector<1x32xf32> to vector<16x32xf32>
    %458 = arith.addf %455, %457 : vector<16x32xf32>
    %459 = arith.addf %458, %446 : vector<16x32xf32>
    %cst_212 = arith.constant dense<0.000000e+00> : vector<16xf32>
    %460 = vector.multi_reduction <add>, %459, %cst_212 [1] : vector<16x32xf32> to vector<16xf32>
    %461 = vector.shape_cast %460 : vector<16xf32> to vector<16x1xf32>
    %cst_213 = arith.constant 3.200000e+01 : f32
    %462 = vector.broadcast %cst_213 : f32 to vector<16x1xf32>
    %463 = arith.divf %461, %462 : vector<16x1xf32>
    %464 = vector.broadcast %463 : vector<16x1xf32> to vector<16x32xf32>
    %465 = arith.subf %459, %464 : vector<16x32xf32>
    %466 = arith.mulf %465, %465 : vector<16x32xf32>
    %cst_214 = arith.constant dense<0.000000e+00> : vector<16xf32>
    %467 = vector.multi_reduction <add>, %466, %cst_214 [1] : vector<16x32xf32> to vector<16xf32>
    %468 = vector.shape_cast %467 : vector<16xf32> to vector<16x1xf32>
    %cst_215 = arith.constant 3.200000e+01 : f32
    %469 = vector.broadcast %cst_215 : f32 to vector<16x1xf32>
    %470 = arith.divf %468, %469 : vector<16x1xf32>
    %cst_216 = arith.constant 9.99999974E-6 : f32
    %471 = vector.broadcast %cst_216 : f32 to vector<16x1xf32>
    %472 = arith.addf %470, %471 : vector<16x1xf32>
    %473 = math.rsqrt %472 : vector<16x1xf32>
    %474 = vector.broadcast %473 : vector<16x1xf32> to vector<16x32xf32>
    %475 = arith.mulf %465, %474 : vector<16x32xf32>
    %c1408 = arith.constant 1408 : index
    %c0_217 = arith.constant 0 : index
    %476 = vector.load %arg3[%c1408, %c0_217] : memref<1600x128xf32, #tpu.memory_space<vmem>>, vector<1x32xf32>
    %477 = vector.broadcast %476 : vector<1x32xf32> to vector<16x32xf32>
    %478 = arith.mulf %475, %477 : vector<16x32xf32>
    %c1416 = arith.constant 1416 : index
    %c0_218 = arith.constant 0 : index
    %479 = vector.load %arg3[%c1416, %c0_218] : memref<1600x128xf32, #tpu.memory_space<vmem>>, vector<1x32xf32>
    %480 = vector.broadcast %479 : vector<1x32xf32> to vector<16x32xf32>
    %481 = arith.addf %478, %480 : vector<16x32xf32>
    %c56 = arith.constant 56 : index
    %c0_219 = arith.constant 0 : index
    %482 = vector.load %arg3[%c56, %c0_219] : memref<1600x128xf32, #tpu.memory_space<vmem>>, vector<32x16xf32>
    %cst_220 = arith.constant dense<0.000000e+00> : vector<16x16xf32>
    %483 = tpu.matmul %481, %482, %cst_220 {dimension_numbers = #tpu.dot_dimension_numbers<[1], [0], [0], [1], [0, 0, 1, 1], [], []>} : vector<16x32xf32>, vector<32x16xf32>, vector<16x16xf32> -> vector<16x16xf32>
    %c88 = arith.constant 88 : index
    %c0_221 = arith.constant 0 : index
    %484 = vector.load %arg3[%c88, %c0_221] : memref<1600x128xf32, #tpu.memory_space<vmem>>, vector<1x16xf32>
    %485 = vector.broadcast %484 : vector<1x16xf32> to vector<16x16xf32>
    %486 = arith.addf %483, %485 : vector<16x16xf32>
    %487 = vector.extract_strided_slice %486 {offsets = [0, 0], sizes = [8, 16], strides = [1, 1]} : vector<16x16xf32> to vector<8x16xf32>
    %cst_222 = arith.constant dense<0xFF800000> : vector<16xf32>
    %488 = vector.multi_reduction <maximumf>, %487, %cst_222 [0] : vector<8x16xf32> to vector<16xf32>
    %489 = vector.shape_cast %488 : vector<16xf32> to vector<1x16xf32>
    %490 = vector.broadcast %489 : vector<1x16xf32> to vector<8x16xf32>
    %491 = arith.subf %487, %490 : vector<8x16xf32>
    %492 = math.exp %491 : vector<8x16xf32>
    %cst_223 = arith.constant dense<0.000000e+00> : vector<16xf32>
    %493 = vector.multi_reduction <add>, %492, %cst_223 [0] : vector<8x16xf32> to vector<16xf32>
    %494 = vector.shape_cast %493 : vector<16xf32> to vector<1x16xf32>
    %495 = vector.broadcast %494 : vector<1x16xf32> to vector<8x16xf32>
    %496 = arith.divf %492, %495 : vector<8x16xf32>
    %c0_224 = arith.constant 0 : index
    %c0_225 = arith.constant 0 : index
    %c0_226 = arith.constant 0 : index
    %497 = vector.load %arg4[%c0_224, %c0_225, %c0_226] : memref<2x8x16xf32, #tpu.memory_space<vmem>>, vector<1x8x16xf32>
    %498 = vector.shape_cast %497 : vector<1x8x16xf32> to vector<8x16xf32>
    %499 = vector.shape_cast %496 : vector<8x16xf32> to vector<1x8x16xf32>
    tpu.vector_store %arg4[%c0_224, %c0_225, %c0_226], %499 {strides = array<i32>} : memref<2x8x16xf32, #tpu.memory_space<vmem>>, vector<1x8x16xf32>,
    %500 = vector.extract_strided_slice %486 {offsets = [8, 0], sizes = [8, 16], strides = [1, 1]} : vector<16x16xf32> to vector<8x16xf32>
    %cst_227 = arith.constant dense<0xFF800000> : vector<16xf32>
    %501 = vector.multi_reduction <maximumf>, %500, %cst_227 [0] : vector<8x16xf32> to vector<16xf32>
    %502 = vector.shape_cast %501 : vector<16xf32> to vector<1x16xf32>
    %503 = vector.broadcast %502 : vector<1x16xf32> to vector<8x16xf32>
    %504 = arith.subf %500, %503 : vector<8x16xf32>
    %505 = math.exp %504 : vector<8x16xf32>
    %cst_228 = arith.constant dense<0.000000e+00> : vector<16xf32>
    %506 = vector.multi_reduction <add>, %505, %cst_228 [0] : vector<8x16xf32> to vector<16xf32>
    %507 = vector.shape_cast %506 : vector<16xf32> to vector<1x16xf32>
    %508 = vector.broadcast %507 : vector<1x16xf32> to vector<8x16xf32>
    %509 = arith.divf %505, %508 : vector<8x16xf32>
    %c1 = arith.constant 1 : index
    %c0_229 = arith.constant 0 : index
    %c0_230 = arith.constant 0 : index
    %510 = vector.load %arg4[%c1, %c0_229, %c0_230] : memref<2x8x16xf32, #tpu.memory_space<vmem>>, vector<1x8x16xf32>
    %511 = vector.shape_cast %510 : vector<1x8x16xf32> to vector<8x16xf32>
    %512 = vector.shape_cast %509 : vector<8x16xf32> to vector<1x8x16xf32>
    tpu.vector_store %arg4[%c1, %c0_229, %c0_230], %512 {strides = array<i32>} : memref<2x8x16xf32, #tpu.memory_space<vmem>>, vector<1x8x16xf32>,
    return
  }
  func.func @transform_0(%arg0: i32) -> (i32, i32) {
    %c0_i32 = arith.constant 0 : i32
    %c0_i32_0 = arith.constant 0 : i32
    return %arg0, %c0_i32 : i32, i32
  }
  func.func @transform_1(%arg0: i32) -> (i32, i32) {
    %c0_i32 = arith.constant 0 : i32
    %c0_i32_0 = arith.constant 0 : i32
    return %arg0, %c0_i32 : i32, i32
  }
  func.func @transform_2(%arg0: i32) -> (i32, i32) {
    %c0_i32 = arith.constant 0 : i32
    %c0_i32_0 = arith.constant 0 : i32
    %c0_i32_1 = arith.constant 0 : i32
    return %c0_i32, %c0_i32_0 : i32, i32
  }
  func.func @transform_3(%arg0: i32) -> (i32, i32, i32) {
    %c0_i32 = arith.constant 0 : i32
    %c0_i32_0 = arith.constant 0 : i32
    %c0_i32_1 = arith.constant 0 : i32
    return %arg0, %c0_i32, %c0_i32_0 : i32, i32, i32
  }
}

</mosaic_0001>

<llo_original>
// kernel: transformer_fwd.1
$region0: #{transformer_fwd.1}
  #allocation0 [shape = 'u32[]', space=smem, size = 0x4, offset = 0x4, fixed_abs, tag = 'smem constant byte address 0x4 - core index']
  #allocation1 [shape = 'u32[144,128]{1,0:T(1,128)}', space=vmem, size = 0x12000, scoped, tag = 'internal scratch']
  %s0 = inlined_call_operand.vmem [shape: s32[16,1], index: 0, kind: input, shape index: {}]
  %s1 = inlined_call_operand.vmem [shape: s32[16,1], index: 1, kind: input, shape index: {}]
  %s2 = inlined_call_operand.hbm [shape: f32[1600,128], index: 2, kind: input, shape index: {}]
  %s3 = inlined_call_operand.hbm [shape: f32[2,8,16], index: 3, kind: output, shape index: {}]
  %s4 = sld [smem:[#allocation0]]
  $region26: #{transformer_fwd.1} parent=0
    _
  %s6 = ssub.s32 1, %s4
  %s7 = scalar_select 0, %s6, %s4
  $region1: #{transformer_fwd.1} parent=0
    #allocation2 [shape = 'u8[819200]{0}', space=vmem, size = 0xc8000, scoped, tag = 'input window, operand 2, single buffered']
    #allocation3 [shape = 's32[1]{0}', space=sflag, size = 0x4, scoped, tag = 'scoped memory for transformer_fwd.1']
    #allocation4 [shape = 's32[1]{0}', space=sflag, size = 0x4, scoped, tag = 'scoped memory for transformer_fwd.1']
    #allocation5 [shape = 'u8[8192]{0}', space=vmem, size = 0x2000, scoped, tag = 'output window, operand 0, single buffered']
    %8 = vsyncpa [#allocation3], 0
    %9 = vsyncpa [#allocation4], 0
    // Predicated region
    $region2: #{transformer_fwd.1} parent=1 // pred_check
      _
    $region3: #{transformer_fwd.1} parent=1 // pred_check_branch
      %11 = sbr.rel (0) target = $region5
    $region4: #{transformer_fwd.1} parent=1 // pred_region
      _
    $region5: #{transformer_fwd.1} parent=1 // pred_fallthru
      _
    // Predicated region
    $region6: #{transformer_fwd.1} parent=1 // pred_check
      _
    $region7: #{transformer_fwd.1} parent=1 // pred_check_branch
      %13 = sbr.rel (0) target = $region9
    $region8: #{transformer_fwd.1} parent=1 // pred_region
      _
    $region9: #{transformer_fwd.1} parent=1 // pred_fallthru
      _
    // Predicated region
    $region10: #{transformer_fwd.1} parent=1 // pred_check
      _
    $region11: #{transformer_fwd.1} parent=1 // pred_check_branch
      %15 = sbr.rel (0) target = $region13
    $region12: #{transformer_fwd.1} parent=1 // pred_region
      %s17 = ssub.s32 25600, 25600
      %18 = vsyncadd [#allocation3], %s17
      %s19 = sshll.u32 [#allocation2], 4
      %s20 = int_to_ptr.vmem [resolvable:$true] %s19
      %25 = dma.hbm_to_vmem [thread:$0]  %s2, 25600, %s20, [#allocation3], 128, 128, 8
    $region13: #{transformer_fwd.1} parent=1 // pred_fallthru
      _
    // Predicated region
    $region14: #{transformer_fwd.1} parent=1 // pred_check
      _
    $region15: #{transformer_fwd.1} parent=1 // pred_check_branch
      %27 = sbr.rel (0) target = $region17
    $region16: #{transformer_fwd.1} parent=1 // pred_region
      %28 = dma.done [#allocation3], 25600
    $region17: #{transformer_fwd.1} parent=1 // pred_fallthru
      _
    %v29 = vld [vmem:[%s0] sm:$0xff]
    %v30 = vld [vmem:[%s0 + $0x8] sm:$0xff]
    %v31 = vlaneseq
    %v32 = vand.u32 %v31, 127
    %33 = vset.pattern.permute.xlu0 0
    %34 = vperm.xlu0 %33, %v29
    %v35 = vpop.permute.xlu0 %34
    %36 = vset.pattern.permute.xlu0 0
    %37 = vperm.xlu0 %36, %v30
    %v38 = vpop.permute.xlu0 %37
    %vm39 = vcmp.eq.s32.totalorder %v32, %v35
    %vm40 = vcmp.eq.s32.totalorder %v32, %v38
    %v41 = vsel %vm39, 1, 0
    %v42 = vsel %vm40, 1, 0
    %v43 = vcvt.s32.f32 %v41
    %v44 = vcvt.s32.f32 %v42
    %v45 = vld [vmem:[#allocation2] sm:$0xff]
    %v46 = vld [vmem:[#allocation2 + $0x8] sm:$0xff]
    %v47 = vld [vmem:[#allocation2 + $0x10] sm:$0xff]
    %vm48 = vcmask 64512
    %v50 = vsel %vm48, %v43, 0
    %v53 = vsel %vm48, %v44, 0
    %55 = vmatprep.subr.mxu0 0.0
    %56 = vmatpush1.msra.mxu0 %v45
    %57 = vmatprep.subr.mxu0 0.0
    %58 = vmatpush1.msra.mxu0 0.0
    %59 = vmatprep.subr.mxu0 0.0
    %60 = vmatpush1.msra.mxu0 0.0
    %61 = vmatprep.subr.mxu0 0.0
    %62 = vmatpush1.msra.mxu0 0.0
    %63 = vmatprep.subr.mxu0 0.0
    %64 = vmatpush1.msra.mxu0 0.0
    %65 = vmatprep.subr.mxu0 0.0
    %66 = vmatpush1.msra.mxu0 0.0
    %67 = vmatprep.subr.mxu0 0.0
    %68 = vmatpush1.msra.mxu0 0.0
    %69 = vmatprep.subr.mxu0 0.0
    %70 = vmatpush1.msra.mxu0 0.0
    %71 = vmatprep.subr.mxu0 0.0
    %72 = vmatpush1.msra.mxu0 0.0
    %73 = vmatprep.subr.mxu0 0.0
    %74 = vmatpush1.msra.mxu0 0.0
    %75 = vmatprep.subr.mxu0 0.0
    %76 = vmatpush1.msra.mxu0 0.0
    %77 = vmatprep.subr.mxu0 0.0
    %78 = vmatpush1.msra.mxu0 0.0
    %79 = vmatprep.subr.mxu0 0.0
    %80 = vmatpush1.msra.mxu0 0.0
    %81 = vmatprep.subr.mxu0 0.0
    %82 = vmatpush1.msra.mxu0 0.0
    %83 = vmatprep.subr.mxu0 0.0
    %84 = vmatpush1.msra.mxu0 0.0
    %85 = vmatprep.subr.mxu0 0.0
    %86 = vmatpush1.msra.mxu0 0.0
    %87 = vmatprep.subr.mxu0 0.0
    %88 = vmatpush1.msra.mxu0 0.0
    %89 = vmatprep.subr.mxu0 0.0
    %90 = vmatpush1.msra.mxu0 0.0
    %91 = vmatprep.subr.mxu0 0.0
    %92 = vmatpush1.msra.mxu0 0.0
    %93 = vmatprep.subr.mxu0 0.0
    %94 = vmatpush1.msra.mxu0 0.0
    %95 = vmatprep.subr.mxu0 0.0
    %96 = vmatpush1.msra.mxu0 0.0
    %97 = vmatprep.subr.mxu0 0.0
    %98 = vmatpush1.msra.mxu0 0.0
    %99 = vmatprep.subr.mxu0 0.0
    %100 = vmatpush1.msra.mxu0 0.0
    %101 = vmatprep.subr.mxu0 0.0
    %102 = vmatpush1.msra.mxu0 0.0
    %103 = vmatprep.subr.mxu0 0.0
    %104 = vmatpush1.msra.mxu0 0.0
    %105 = vmatprep.subr.mxu0 0.0
    %106 = vmatpush1.msra.mxu0 0.0
    %107 = vmatprep.subr.mxu0 0.0
    %108 = vmatpush1.msra.mxu0 0.0
    %109 = vmatprep.subr.mxu0 0.0
    %110 = vmatpush1.msra.mxu0 0.0
    %111 = vmatprep.subr.mxu0 0.0
    %112 = vmatpush1.msra.mxu0 0.0
    %113 = vmatprep.subr.mxu0 0.0
    %114 = vmatpush1.msra.mxu0 0.0
    %115 = vmatprep.subr.mxu0 0.0
    %116 = vmatpush1.msra.mxu0 0.0
    %117 = vmatprep.subr.mxu0 0.0
    %118 = vmatpush1.msra.mxu0 0.0
    %119 = vmatprep.mubr.f32.mxu0 0.0
    %120 = vmatmul.mubr.f32.gmra.mrb[0].mxu0 %v50
    %v121 = vpop.f32.mrb[0].mxu0
    %v122 = vadd.f32 %v46, %v121
    %v123 = vpop.f32.mrb[0].mxu0
    %124 = vmatprep.mubr.f32.mxu0 0.0
    %125 = vmatmul.mubr.f32.gmra.mrb[0].mxu0 %v53
    %v126 = vpop.f32.mrb[0].mxu0
    %v127 = vadd.f32 %v47, %v126
    %v128 = vpop.f32.mrb[0].mxu0
    %129 = vdwg.mxu0
    %v130 = vld [vmem:[#allocation2 + $0x130] sm:$0xff]
    %v131 = vld [vmem:[#allocation2 + $0x138] sm:$0xff]
    %v132 = vld [vmem:[#allocation2 + $0x140] sm:$0xff]
    %v133 = vld [vmem:[#allocation2 + $0x148] sm:$0xff]
    %vm134 = vcmask 261120
    %v136 = vsel %vm134, %v122, 0
    %v139 = vsel %vm134, %v127, 0
    %141 = vmatprep.subr.mxu0 0.0
    %142 = vmatpush1.msra.mxu0 %v130
    %143 = vmatprep.subr.mxu0 0.0
    %144 = vmatpush1.msra.mxu0 %v131
    %145 = vmatprep.subr.mxu0 0.0
    %146 = vmatpush1.msra.mxu0 %v132
    %147 = vmatprep.subr.mxu0 0.0
    %148 = vmatpush1.msra.mxu0 %v133
    %149 = vmatprep.subr.mxu0 0.0
    %150 = vmatpush1.msra.mxu0 0.0
    %151 = vmatprep.subr.mxu0 0.0
    %152 = vmatpush1.msra.mxu0 0.0
    %153 = vmatprep.subr.mxu0 0.0
    %154 = vmatpush1.msra.mxu0 0.0
    %155 = vmatprep.subr.mxu0 0.0
    %156 = vmatpush1.msra.mxu0 0.0
    %157 = vmatprep.subr.mxu0 0.0
    %158 = vmatpush1.msra.mxu0 0.0
    %159 = vmatprep.subr.mxu0 0.0
    %160 = vmatpush1.msra.mxu0 0.0
    %161 = vmatprep.subr.mxu0 0.0
    %162 = vmatpush1.msra.mxu0 0.0
    %163 = vmatprep.subr.mxu0 0.0
    %164 = vmatpush1.msra.mxu0 0.0
    %165 = vmatprep.subr.mxu0 0.0
    %166 = vmatpush1.msra.mxu0 0.0
    %167 = vmatprep.subr.mxu0 0.0
    %168 = vmatpush1.msra.mxu0 0.0
    %169 = vmatprep.subr.mxu0 0.0
    %170 = vmatpush1.msra.mxu0 0.0
    %171 = vmatprep.subr.mxu0 0.0
    %172 = vmatpush1.msra.mxu0 0.0
    %173 = vmatprep.subr.mxu0 0.0
    %174 = vmatpush1.msra.mxu0 0.0
    %175 = vmatprep.subr.mxu0 0.0
    %176 = vmatpush1.msra.mxu0 0.0
    %177 = vmatprep.subr.mxu0 0.0
    %178 = vmatpush1.msra.mxu0 0.0
    %179 = vmatprep.subr.mxu0 0.0
    %180 = vmatpush1.msra.mxu0 0.0
    %181 = vmatprep.subr.mxu0 0.0
    %182 = vmatpush1.msra.mxu0 0.0
    %183 = vmatprep.subr.mxu0 0.0
    %184 = vmatpush1.msra.mxu0 0.0
    %185 = vmatprep.subr.mxu0 0.0
    %186 = vmatpush1.msra.mxu0 0.0
    %187 = vmatprep.subr.mxu0 0.0
    %188 = vmatpush1.msra.mxu0 0.0
    %189 = vmatprep.subr.mxu0 0.0
    %190 = vmatpush1.msra.mxu0 0.0
    %191 = vmatprep.subr.mxu0 0.0
    %192 = vmatpush1.msra.mxu0 0.0
    %193 = vmatprep.subr.mxu0 0.0
    %194 = vmatpush1.msra.mxu0 0.0
    %195 = vmatprep.subr.mxu0 0.0
    %196 = vmatpush1.msra.mxu0 0.0
    %197 = vmatprep.subr.mxu0 0.0
    %198 = vmatpush1.msra.mxu0 0.0
    %199 = vmatprep.subr.mxu0 0.0
    %200 = vmatpush1.msra.mxu0 0.0
    %201 = vmatprep.subr.mxu0 0.0
    %202 = vmatpush1.msra.mxu0 0.0
    %203 = vmatprep.subr.mxu0 0.0
    %204 = vmatpush1.msra.mxu0 0.0
    %205 = vmatprep.mubr.f32.mxu0 0.0
    %206 = vmatmul.mubr.f32.gmra.mrb[0].mxu0 %v136
    %v207 = vpop.f32.mrb[0].mxu0
    %v208 = vadd.f32 0.0, %v207
    %v209 = vpop.f32.mrb[0].mxu0
    %210 = vmatprep.mubr.f32.mxu0 0.0
    %211 = vmatmul.mubr.f32.gmra.mrb[0].mxu0 %v139
    %v212 = vpop.f32.mrb[0].mxu0
    %v213 = vadd.f32 0.0, %v212
    %v214 = vpop.f32.mrb[0].mxu0
    %215 = vdwg.mxu0
    %v216 = vld [vmem:[#allocation2 + $0xb0] sm:$0xff]
    %v217 = vld [vmem:[#allocation2 + $0xb8] sm:$0xff]
    %v218 = vld [vmem:[#allocation2 + $0xc0] sm:$0xff]
    %v219 = vld [vmem:[#allocation2 + $0xc8] sm:$0xff]
    %v220 = vld [vmem:[#allocation2 + $0xd0] sm:$0xff]
    %v221 = vld [vmem:[#allocation2 + $0xd8] sm:$0xff]
    %v222 = vld [vmem:[#allocation2 + $0xe0] sm:$0xff]
    %v223 = vld [vmem:[#allocation2 + $0xe8] sm:$0xff]
    %v224 = vld [vmem:[#allocation2 + $0x60] sm:$0xff]
    %v225 = vld [vmem:[#allocation2 + $0x68] sm:$0xff]
    %v226 = vld [vmem:[#allocation2 + $0x70] sm:$0xff]
    %v227 = vld [vmem:[#allocation2 + $0x78] sm:$0xff]
    %v228 = vld [vmem:[#allocation2 + $0x80] sm:$0xff]
    %v229 = vld [vmem:[#allocation2 + $0x88] sm:$0xff]
    %v230 = vld [vmem:[#allocation2 + $0x90] sm:$0xff]
    %v231 = vld [vmem:[#allocation2 + $0x98] sm:$0xff]
    %vm232 = vcmask 130048
    %v234 = vsel %vm232, %v224, 0
    %v237 = vsel %vm232, %v225, 0
    %v240 = vsel %vm232, %v226, 0
    %v243 = vsel %vm232, %v227, 0
    %v246 = vsel %vm232, %v228, 0
    %v249 = vsel %vm232, %v229, 0
    %v252 = vsel %vm232, %v230, 0
    %v255 = vsel %vm232, %v231, 0
    %257 = vmatprep.subr.mxu0 0.0
    %258 = vmatpush1.msra.mxu0 %v208
    %259 = vmatprep.subr.mxu0 0.0
    %260 = vmatpush1.msra.mxu0 %v213
    %261 = vmatprep.subr.mxu0 0.0
    %262 = vmatpush1.msra.mxu0 0.0
    %263 = vmatprep.subr.mxu0 0.0
    %264 = vmatpush1.msra.mxu0 0.0
    %265 = vmatprep.subr.mxu0 0.0
    %266 = vmatpush1.msra.mxu0 0.0
    %267 = vmatprep.subr.mxu0 0.0
    %268 = vmatpush1.msra.mxu0 0.0
    %269 = vmatprep.subr.mxu0 0.0
    %270 = vmatpush1.msra.mxu0 0.0
    %271 = vmatprep.subr.mxu0 0.0
    %272 = vmatpush1.msra.mxu0 0.0
    %273 = vmatprep.subr.mxu0 0.0
    %274 = vmatpush1.msra.mxu0 0.0
    %275 = vmatprep.subr.mxu0 0.0
    %276 = vmatpush1.msra.mxu0 0.0
    %277 = vmatprep.subr.mxu0 0.0
    %278 = vmatpush1.msra.mxu0 0.0
    %279 = vmatprep.subr.mxu0 0.0
    %280 = vmatpush1.msra.mxu0 0.0
    %281 = vmatprep.subr.mxu0 0.0
    %282 = vmatpush1.msra.mxu0 0.0
    %283 = vmatprep.subr.mxu0 0.0
    %284 = vmatpush1.msra.mxu0 0.0
    %285 = vmatprep.subr.mxu0 0.0
    %286 = vmatpush1.msra.mxu0 0.0
    %287 = vmatprep.subr.mxu0 0.0
    %288 = vmatpush1.msra.mxu0 0.0
    %289 = vmatprep.subr.mxu0 0.0
    %290 = vmatpush1.msra.mxu0 0.0
    %291 = vmatprep.subr.mxu0 0.0
    %292 = vmatpush1.msra.mxu0 0.0
    %293 = vmatprep.subr.mxu0 0.0
    %294 = vmatpush1.msra.mxu0 0.0
    %295 = vmatprep.subr.mxu0 0.0
    %296 = vmatpush1.msra.mxu0 0.0
    %297 = vmatprep.subr.mxu0 0.0
    %298 = vmatpush1.msra.mxu0 0.0
    %299 = vmatprep.subr.mxu0 0.0
    %300 = vmatpush1.msra.mxu0 0.0
    %301 = vmatprep.subr.mxu0 0.0
    %302 = vmatpush1.msra.mxu0 0.0
    %303 = vmatprep.subr.mxu0 0.0
    %304 = vmatpush1.msra.mxu0 0.0
    %305 = vmatprep.subr.mxu0 0.0
    %306 = vmatpush1.msra.mxu0 0.0
    %307 = vmatprep.subr.mxu0 0.0
    %308 = vmatpush1.msra.mxu0 0.0
    %309 = vmatprep.subr.mxu0 0.0
    %310 = vmatpush1.msra.mxu0 0.0
    %311 = vmatprep.subr.mxu0 0.0
    %312 = vmatpush1.msra.mxu0 0.0
    %313 = vmatprep.subr.mxu0 0.0
    %314 = vmatpush1.msra.mxu0 0.0
    %315 = vmatprep.subr.mxu0 0.0
    %316 = vmatpush1.msra.mxu0 0.0
    %317 = vmatprep.subr.mxu0 0.0
    %318 = vmatpush1.msra.mxu0 0.0
    %319 = vmatprep.subr.mxu0 0.0
    %320 = vmatpush1.msra.mxu0 0.0
    %321 = vmatprep.mubr.f32.mxu0 0.0
    %322 = vmatmul.mubr.f32.gmra.mrb[0].mxu0 %v234
    %v323 = vpop.f32.mrb[0].mxu0
    %v324 = vadd.f32 0.0, %v323
    %v325 = vpop.f32.mrb[0].mxu0
    %326 = vmatprep.mubr.f32.mxu0 0.0
    %327 = vmatmul.mubr.f32.gmra.mrb[0].mxu0 %v237
    %v328 = vpop.f32.mrb[0].mxu0
    %v329 = vadd.f32 0.0, %v328
    %v330 = vpop.f32.mrb[0].mxu0
    %331 = vmatprep.mubr.f32.mxu0 0.0
    %332 = vmatmul.mubr.f32.gmra.mrb[0].mxu0 %v240
    %v333 = vpop.f32.mrb[0].mxu0
    %v334 = vadd.f32 0.0, %v333
    %v335 = vpop.f32.mrb[0].mxu0
    %336 = vmatprep.mubr.f32.mxu0 0.0
    %337 = vmatmul.mubr.f32.gmra.mrb[0].mxu0 %v243
    %v338 = vpop.f32.mrb[0].mxu0
    %v339 = vadd.f32 0.0, %v338
    %v340 = vpop.f32.mrb[0].mxu0
    %341 = vmatprep.mubr.f32.mxu0 0.0
    %342 = vmatmul.mubr.f32.gmra.mrb[0].mxu0 %v246
    %v343 = vpop.f32.mrb[0].mxu0
    %v344 = vadd.f32 0.0, %v343
    %v345 = vpop.f32.mrb[0].mxu0
    %346 = vmatprep.mubr.f32.mxu0 0.0
    %347 = vmatmul.mubr.f32.gmra.mrb[0].mxu0 %v249
    %v348 = vpop.f32.mrb[0].mxu0
    %v349 = vadd.f32 0.0, %v348
    %v350 = vpop.f32.mrb[0].mxu0
    %351 = vmatprep.mubr.f32.mxu0 0.0
    %352 = vmatmul.mubr.f32.gmra.mrb[0].mxu0 %v252
    %v353 = vpop.f32.mrb[0].mxu0
    %v354 = vadd.f32 0.0, %v353
    %v355 = vpop.f32.mrb[0].mxu0
    %356 = vmatprep.mubr.f32.mxu0 0.0
    %357 = vmatmul.mubr.f32.gmra.mrb[0].mxu0 %v255
    %v358 = vpop.f32.mrb[0].mxu0
    %v359 = vadd.f32 0.0, %v358
    %v360 = vpop.f32.mrb[0].mxu0
    %361 = vdwg.mxu0
    %v362 = vmul.f32 %v324, %v216
    %v363 = vmul.f32 %v329, %v217
    %v364 = vmul.f32 %v334, %v218
    %v365 = vmul.f32 %v339, %v219
    %v366 = vmul.f32 %v344, %v220
    %v367 = vmul.f32 %v349, %v221
    %v368 = vmul.f32 %v354, %v222
    %v369 = vmul.f32 %v359, %v223
    %v370 = vld [vmem:[#allocation2 + $0xf0] sm:$0xff]
    %v371 = vld [vmem:[#allocation2 + $0xf8] sm:$0xff]
    %v372 = vld [vmem:[#allocation2 + $0x100] sm:$0xff]
    %v373 = vld [vmem:[#allocation2 + $0x108] sm:$0xff]
    %v374 = vld [vmem:[#allocation2 + $0x110] sm:$0xff]
    %v375 = vld [vmem:[#allocation2 + $0x118] sm:$0xff]
    %v376 = vld [vmem:[#allocation2 + $0x120] sm:$0xff]
    %v377 = vld [vmem:[#allocation2 + $0x128] sm:$0xff]
    %380 = vrot.lane.b32.xlu0 %v208, 96
    %v381 = vpop.permute.xlu0 %380
    %382 = vrot.lane.b32.xlu0 %v213, 96
    %v383 = vpop.permute.xlu0 %382
    %v385 = vsel %vm134, %v362, 0
    %v388 = vsel %vm134, %v363, 0
    %v391 = vsel %vm134, %v364, 0
    %v394 = vsel %vm134, %v365, 0
    %v397 = vsel %vm134, %v366, 0
    %v400 = vsel %vm134, %v367, 0
    %v403 = vsel %vm134, %v368, 0
    %v406 = vsel %vm134, %v369, 0
    %v408 = vsel %vm134, %v381, 0
    %v410 = vsel %vm134, %v383, 0
    %412 = vmatprep.subr.mxu0 0.0
    %413 = vmatpush1.xpose.msra.mxu0 %v408
    %414 = vmatprep.subr.mxu0 0.0
    %415 = vmatpush1.xpose.msra.mxu0 %v410
    %416 = vmatprep.subr.mxu0 0.0
    %417 = vmatpush1.xpose.msra.mxu0 0.0
    %418 = vmatprep.subr.mxu0 0.0
    %419 = vmatpush1.xpose.msra.mxu0 0.0
    %420 = vmatprep.subr.mxu0 0.0
    %421 = vmatpush1.xpose.msra.mxu0 0.0
    %422 = vmatprep.subr.mxu0 0.0
    %423 = vmatpush1.xpose.msra.mxu0 0.0
    %424 = vmatprep.subr.mxu0 0.0
    %425 = vmatpush1.xpose.msra.mxu0 0.0
    %426 = vmatprep.subr.mxu0 0.0
    %427 = vmatpush1.xpose.msra.mxu0 0.0
    %428 = vmatprep.subr.mxu0 0.0
    %429 = vmatpush1.xpose.msra.mxu0 0.0
    %430 = vmatprep.subr.mxu0 0.0
    %431 = vmatpush1.xpose.msra.mxu0 0.0
    %432 = vmatprep.subr.mxu0 0.0
    %433 = vmatpush1.xpose.msra.mxu0 0.0
    %434 = vmatprep.subr.mxu0 0.0
    %435 = vmatpush1.xpose.msra.mxu0 0.0
    %436 = vmatprep.subr.mxu0 0.0
    %437 = vmatpush1.xpose.msra.mxu0 0.0
    %438 = vmatprep.subr.mxu0 0.0
    %439 = vmatpush1.xpose.msra.mxu0 0.0
    %440 = vmatprep.subr.mxu0 0.0
    %441 = vmatpush1.xpose.msra.mxu0 0.0
    %442 = vmatprep.subr.mxu0 0.0
    %443 = vmatpush1.xpose.msra.mxu0 0.0
    %444 = vmatprep.subr.mxu0 0.0
    %445 = vmatpush1.xpose.msra.mxu0 0.0
    %446 = vmatprep.subr.mxu0 0.0
    %447 = vmatpush1.xpose.msra.mxu0 0.0
    %448 = vmatprep.subr.mxu0 0.0
    %449 = vmatpush1.xpose.msra.mxu0 0.0
    %450 = vmatprep.subr.mxu0 0.0
    %451 = vmatpush1.xpose.msra.mxu0 0.0
    %452 = vmatprep.subr.mxu0 0.0
    %453 = vmatpush1.xpose.msra.mxu0 0.0
    %454 = vmatprep.subr.mxu0 0.0
    %455 = vmatpush1.xpose.msra.mxu0 0.0
    %456 = vmatprep.subr.mxu0 0.0
    %457 = vmatpush1.xpose.msra.mxu0 0.0
    %458 = vmatprep.subr.mxu0 0.0
    %459 = vmatpush1.xpose.msra.mxu0 0.0
    %460 = vmatprep.subr.mxu0 0.0
    %461 = vmatpush1.xpose.msra.mxu0 0.0
    %462 = vmatprep.subr.mxu0 0.0
    %463 = vmatpush1.xpose.msra.mxu0 0.0
    %464 = vmatprep.subr.mxu0 0.0
    %465 = vmatpush1.xpose.msra.mxu0 0.0
    %466 = vmatprep.subr.mxu0 0.0
    %467 = vmatpush1.xpose.msra.mxu0 0.0
    %468 = vmatprep.subr.mxu0 0.0
    %469 = vmatpush1.xpose.msra.mxu0 0.0
    %470 = vmatprep.subr.mxu0 0.0
    %471 = vmatpush1.xpose.msra.mxu0 0.0
    %472 = vmatprep.subr.mxu0 0.0
    %473 = vmatpush1.xpose.msra.mxu0 0.0
    %474 = vmatprep.subr.mxu0 0.0
    %475 = vmatpush1.xpose.msra.mxu0 0.0
    %476 = vmatprep.mubr.f32.mxu0 0.0
    %477 = vmatmul.mubr.f32.gmra.mrb[0].mxu0 %v385
    %v478 = vpop.f32.mrb[0].mxu0
    %v479 = vadd.f32 %v370, %v478
    %v480 = vpop.f32.mrb[0].mxu0
    %481 = vmatprep.mubr.f32.mxu0 0.0
    %482 = vmatmul.mubr.f32.gmra.mrb[0].mxu0 %v388
    %v483 = vpop.f32.mrb[0].mxu0
    %v484 = vadd.f32 %v371, %v483
    %v485 = vpop.f32.mrb[0].mxu0
    %486 = vmatprep.mubr.f32.mxu0 0.0
    %487 = vmatmul.mubr.f32.gmra.mrb[0].mxu0 %v391
    %v488 = vpop.f32.mrb[0].mxu0
    %v489 = vadd.f32 %v372, %v488
    %v490 = vpop.f32.mrb[0].mxu0
    %491 = vmatprep.mubr.f32.mxu0 0.0
    %492 = vmatmul.mubr.f32.gmra.mrb[0].mxu0 %v394
    %v493 = vpop.f32.mrb[0].mxu0
    %v494 = vadd.f32 %v373, %v493
    %v495 = vpop.f32.mrb[0].mxu0
    %496 = vmatprep.mubr.f32.mxu0 0.0
    %497 = vmatmul.mubr.f32.gmra.mrb[0].mxu0 %v397
    %v498 = vpop.f32.mrb[0].mxu0
    %v499 = vadd.f32 %v374, %v498
    %v500 = vpop.f32.mrb[0].mxu0
    %501 = vmatprep.mubr.f32.mxu0 0.0
    %502 = vmatmul.mubr.f32.gmra.mrb[0].mxu0 %v400
    %v503 = vpop.f32.mrb[0].mxu0
    %v504 = vadd.f32 %v375, %v503
    %v505 = vpop.f32.mrb[0].mxu0
    %506 = vmatprep.mubr.f32.mxu0 0.0
    %507 = vmatmul.mubr.f32.gmra.mrb[0].mxu0 %v403
    %v508 = vpop.f32.mrb[0].mxu0
    %v509 = vadd.f32 %v376, %v508
    %v510 = vpop.f32.mrb[0].mxu0
    %511 = vmatprep.mubr.f32.mxu0 0.0
    %512 = vmatmul.mubr.f32.gmra.mrb[0].mxu0 %v406
    %v513 = vpop.f32.mrb[0].mxu0
    %v514 = vadd.f32 %v377, %v513
    %v515 = vpop.f32.mrb[0].mxu0
    %516 = vdwg.mxu0
    %v517 = vsel %vm232, %v479, -inf
    %518 = vmax.xlane.f32.xlu0 %v517
    %v519 = vpop.xlane.xlu0 %518
    %v520 = vsel %vm232, %v484, -inf
    %521 = vmax.xlane.f32.xlu0 %v520
    %v522 = vpop.xlane.xlu0 %521
    %v523 = vsel %vm232, %v489, -inf
    %524 = vmax.xlane.f32.xlu0 %v523
    %v525 = vpop.xlane.xlu0 %524
    %v526 = vsel %vm232, %v494, -inf
    %527 = vmax.xlane.f32.xlu0 %v526
    %v528 = vpop.xlane.xlu0 %527
    %v529 = vsel %vm232, %v499, -inf
    %530 = vmax.xlane.f32.xlu0 %v529
    %v531 = vpop.xlane.xlu0 %530
    %v532 = vsel %vm232, %v504, -inf
    %533 = vmax.xlane.f32.xlu0 %v532
    %v534 = vpop.xlane.xlu0 %533
    %v535 = vsel %vm232, %v509, -inf
    %536 = vmax.xlane.f32.xlu0 %v535
    %v537 = vpop.xlane.xlu0 %536
    %v538 = vsel %vm232, %v514, -inf
    %539 = vmax.xlane.f32.xlu0 %v538
    %v540 = vpop.xlane.xlu0 %539
    %v541 = vsub.f32 %v479, %v519
    %v542 = vsub.f32 %v484, %v522
    %v543 = vsub.f32 %v489, %v525
    %v544 = vsub.f32 %v494, %v528
    %v545 = vsub.f32 %v499, %v531
    %v546 = vsub.f32 %v504, %v534
    %v547 = vsub.f32 %v509, %v537
    %v548 = vsub.f32 %v514, %v540
    %v549 = vmul.f32 %v541, 1.442695
    %v550 = vpow.pop %v549
    %v551 = vmul.f32 %v542, 1.442695
    %v552 = vpow.pop %v551
    %v553 = vmul.f32 %v543, 1.442695
    %v554 = vpow.pop %v553
    %v555 = vmul.f32 %v544, 1.442695
    %v556 = vpow.pop %v555
    %v557 = vmul.f32 %v545, 1.442695
    %v558 = vpow.pop %v557
    %v559 = vmul.f32 %v546, 1.442695
    %v560 = vpow.pop %v559
    %v561 = vmul.f32 %v547, 1.442695
    %v562 = vpow.pop %v561
    %v563 = vmul.f32 %v548, 1.442695
    %v564 = vpow.pop %v563
    %v565 = vsel %vm232, %v550, 0.0
    %566 = vadd.xlane.f32.xlu0 %v565
    %v567 = vpop.xlane.xlu0 %566
    %v568 = vsel %vm232, %v552, 0.0
    %569 = vadd.xlane.f32.xlu0 %v568
    %v570 = vpop.xlane.xlu0 %569
    %v571 = vsel %vm232, %v554, 0.0
    %572 = vadd.xlane.f32.xlu0 %v571
    %v573 = vpop.xlane.xlu0 %572
    %v574 = vsel %vm232, %v556, 0.0
    %575 = vadd.xlane.f32.xlu0 %v574
    %v576 = vpop.xlane.xlu0 %575
    %v577 = vsel %vm232, %v558, 0.0
    %578 = vadd.xlane.f32.xlu0 %v577
    %v579 = vpop.xlane.xlu0 %578
    %v580 = vsel %vm232, %v560, 0.0
    %581 = vadd.xlane.f32.xlu0 %v580
    %v582 = vpop.xlane.xlu0 %581
    %v583 = vsel %vm232, %v562, 0.0
    %584 = vadd.xlane.f32.xlu0 %v583
    %v585 = vpop.xlane.xlu0 %584
    %v586 = vsel %vm232, %v564, 0.0
    %587 = vadd.xlane.f32.xlu0 %v586
    %v588 = vpop.xlane.xlu0 %587
    %v589 = vrcp.pop %v567
    %v590 = vmul.f32 %v550, %v589
    %v591 = vrcp.pop %v570
    %v592 = vmul.f32 %v552, %v591
    %v593 = vrcp.pop %v573
    %v594 = vmul.f32 %v554, %v593
    %v595 = vrcp.pop %v576
    %v596 = vmul.f32 %v556, %v595
    %v597 = vrcp.pop %v579
    %v598 = vmul.f32 %v558, %v597
    %v599 = vrcp.pop %v582
    %v600 = vmul.f32 %v560, %v599
    %v601 = vrcp.pop %v585
    %v602 = vmul.f32 %v562, %v601
    %v603 = vrcp.pop %v588
    %v604 = vmul.f32 %v564, %v603
    %605 = vrot.lane.b32.xlu0 %v208, 64
    %v606 = vpop.permute.xlu0 %605
    %607 = vrot.lane.b32.xlu0 %v213, 64
    %v608 = vpop.permute.xlu0 %607
    %v612 = vsel %vm232, %v590, 0
    %v615 = vsel %vm232, %v592, 0
    %v618 = vsel %vm232, %v594, 0
    %v621 = vsel %vm232, %v596, 0
    %v624 = vsel %vm232, %v598, 0
    %v627 = vsel %vm232, %v600, 0
    %v630 = vsel %vm232, %v602, 0
    %v633 = vsel %vm232, %v604, 0
    %635 = vmatprep.subr.mxu0 0.0
    %636 = vmatpush1.msra.mxu0 %v606
    %637 = vmatprep.subr.mxu0 0.0
    %638 = vmatpush1.msra.mxu0 %v608
    %639 = vmatprep.subr.mxu0 0.0
    %640 = vmatpush1.msra.mxu0 0.0
    %641 = vmatprep.subr.mxu0 0.0
    %642 = vmatpush1.msra.mxu0 0.0
    %643 = vmatprep.subr.mxu0 0.0
    %644 = vmatpush1.msra.mxu0 0.0
    %645 = vmatprep.subr.mxu0 0.0
    %646 = vmatpush1.msra.mxu0 0.0
    %647 = vmatprep.subr.mxu0 0.0
    %648 = vmatpush1.msra.mxu0 0.0
    %649 = vmatprep.subr.mxu0 0.0
    %650 = vmatpush1.msra.mxu0 0.0
    %651 = vmatprep.subr.mxu0 0.0
    %652 = vmatpush1.msra.mxu0 0.0
    %653 = vmatprep.subr.mxu0 0.0
    %654 = vmatpush1.msra.mxu0 0.0
    %655 = vmatprep.subr.mxu0 0.0
    %656 = vmatpush1.msra.mxu0 0.0
    %657 = vmatprep.subr.mxu0 0.0
    %658 = vmatpush1.msra.mxu0 0.0
    %659 = vmatprep.subr.mxu0 0.0
    %660 = vmatpush1.msra.mxu0 0.0
    %661 = vmatprep.subr.mxu0 0.0
    %662 = vmatpush1.msra.mxu0 0.0
    %663 = vmatprep.subr.mxu0 0.0
    %664 = vmatpush1.msra.mxu0 0.0
    %665 = vmatprep.subr.mxu0 0.0
    %666 = vmatpush1.msra.mxu0 0.0
    %667 = vmatprep.subr.mxu0 0.0
    %668 = vmatpush1.msra.mxu0 0.0
    %669 = vmatprep.subr.mxu0 0.0
    %670 = vmatpush1.msra.mxu0 0.0
    %671 = vmatprep.subr.mxu0 0.0
    %672 = vmatpush1.msra.mxu0 0.0
    %673 = vmatprep.subr.mxu0 0.0
    %674 = vmatpush1.msra.mxu0 0.0
    %675 = vmatprep.subr.mxu0 0.0
    %676 = vmatpush1.msra.mxu0 0.0
    %677 = vmatprep.subr.mxu0 0.0
    %678 = vmatpush1.msra.mxu0 0.0
    %679 = vmatprep.subr.mxu0 0.0
    %680 = vmatpush1.msra.mxu0 0.0
    %681 = vmatprep.subr.mxu0 0.0
    %682 = vmatpush1.msra.mxu0 0.0
    %683 = vmatprep.subr.mxu0 0.0
    %684 = vmatpush1.msra.mxu0 0.0
    %685 = vmatprep.subr.mxu0 0.0
    %686 = vmatpush1.msra.mxu0 0.0
    %687 = vmatprep.subr.mxu0 0.0
    %688 = vmatpush1.msra.mxu0 0.0
    %689 = vmatprep.subr.mxu0 0.0
    %690 = vmatpush1.msra.mxu0 0.0
    %691 = vmatprep.subr.mxu0 0.0
    %692 = vmatpush1.msra.mxu0 0.0
    %693 = vmatprep.subr.mxu0 0.0
    %694 = vmatpush1.msra.mxu0 0.0
    %695 = vmatprep.subr.mxu0 0.0
    %696 = vmatpush1.msra.mxu0 0.0
    %697 = vmatprep.subr.mxu0 0.0
    %698 = vmatpush1.msra.mxu0 0.0
    %699 = vmatprep.mubr.f32.mxu0 0.0
    %700 = vmatmul.mubr.f32.gmra.mrb[0].mxu0 %v612
    %v701 = vpop.f32.mrb[0].mxu0
    %v702 = vadd.f32 0.0, %v701
    %v703 = vpop.f32.mrb[0].mxu0
    %704 = vmatprep.mubr.f32.mxu0 0.0
    %705 = vmatmul.mubr.f32.gmra.mrb[0].mxu0 %v615
    %v706 = vpop.f32.mrb[0].mxu0
    %v707 = vadd.f32 0.0, %v706
    %v708 = vpop.f32.mrb[0].mxu0
    %709 = vmatprep.mubr.f32.mxu0 0.0
    %710 = vmatmul.mubr.f32.gmra.mrb[0].mxu0 %v618
    %v711 = vpop.f32.mrb[0].mxu0
    %v712 = vadd.f32 0.0, %v711
    %v713 = vpop.f32.mrb[0].mxu0
    %714 = vmatprep.mubr.f32.mxu0 0.0
    %715 = vmatmul.mubr.f32.gmra.mrb[0].mxu0 %v621
    %v716 = vpop.f32.mrb[0].mxu0
    %v717 = vadd.f32 0.0, %v716
    %v718 = vpop.f32.mrb[0].mxu0
    %719 = vmatprep.mubr.f32.mxu0 0.0
    %720 = vmatmul.mubr.f32.gmra.mrb[0].mxu0 %v624
    %v721 = vpop.f32.mrb[0].mxu0
    %v722 = vadd.f32 0.0, %v721
    %v723 = vpop.f32.mrb[0].mxu0
    %724 = vmatprep.mubr.f32.mxu0 0.0
    %725 = vmatmul.mubr.f32.gmra.mrb[0].mxu0 %v627
    %v726 = vpop.f32.mrb[0].mxu0
    %v727 = vadd.f32 0.0, %v726
    %v728 = vpop.f32.mrb[0].mxu0
    %729 = vmatprep.mubr.f32.mxu0 0.0
    %730 = vmatmul.mubr.f32.gmra.mrb[0].mxu0 %v630
    %v731 = vpop.f32.mrb[0].mxu0
    %v732 = vadd.f32 0.0, %v731
    %v733 = vpop.f32.mrb[0].mxu0
    %734 = vmatprep.mubr.f32.mxu0 0.0
    %735 = vmatmul.mubr.f32.gmra.mrb[0].mxu0 %v633
    %v736 = vpop.f32.mrb[0].mxu0
    %v737 = vadd.f32 0.0, %v736
    %v738 = vpop.f32.mrb[0].mxu0
    %739 = vdwg.mxu0
    %v740 = vld [vmem:[#allocation2 + $0xa0] sm:$0xff]
    %v741 = vld [vmem:[#allocation2 + $0xa8] sm:$0xff]
    %v742 = vmul.f32 %v702, %v216
    %v743 = vmul.f32 %v707, %v217
    %v744 = vmul.f32 %v712, %v218
    %v745 = vmul.f32 %v717, %v219
    %v746 = vmul.f32 %v722, %v220
    %v747 = vmul.f32 %v727, %v221
    %v748 = vmul.f32 %v732, %v222
    %v749 = vmul.f32 %v737, %v223
    %vm750 = vcmask 523264
    %v752 = vsel %vm750, %v740, 0
    %v755 = vsel %vm750, %v741, 0
    %757 = vmatprep.subr.mxu0 0.0
    %758 = vmatpush1.msra.mxu0 %v742
    %759 = vmatprep.subr.mxu0 0.0
    %760 = vmatpush1.msra.mxu0 %v743
    %761 = vmatprep.subr.mxu0 0.0
    %762 = vmatpush1.msra.mxu0 %v744
    %763 = vmatprep.subr.mxu0 0.0
    %764 = vmatpush1.msra.mxu0 %v745
    %765 = vmatprep.subr.mxu0 0.0
    %766 = vmatpush1.msra.mxu0 %v746
    %767 = vmatprep.subr.mxu0 0.0
    %768 = vmatpush1.msra.mxu0 %v747
    %769 = vmatprep.subr.mxu0 0.0
    %770 = vmatpush1.msra.mxu0 %v748
    %771 = vmatprep.subr.mxu0 0.0
    %772 = vmatpush1.msra.mxu0 %v749
    %773 = vmatprep.subr.mxu0 0.0
    %774 = vmatpush1.msra.mxu0 0.0
    %775 = vmatprep.subr.mxu0 0.0
    %776 = vmatpush1.msra.mxu0 0.0
    %777 = vmatprep.subr.mxu0 0.0
    %778 = vmatpush1.msra.mxu0 0.0
    %779 = vmatprep.subr.mxu0 0.0
    %780 = vmatpush1.msra.mxu0 0.0
    %781 = vmatprep.subr.mxu0 0.0
    %782 = vmatpush1.msra.mxu0 0.0
    %783 = vmatprep.subr.mxu0 0.0
    %784 = vmatpush1.msra.mxu0 0.0
    %785 = vmatprep.subr.mxu0 0.0
    %786 = vmatpush1.msra.mxu0 0.0
    %787 = vmatprep.subr.mxu0 0.0
    %788 = vmatpush1.msra.mxu0 0.0
    %789 = vmatprep.subr.mxu0 0.0
    %790 = vmatpush1.msra.mxu0 0.0
    %791 = vmatprep.subr.mxu0 0.0
    %792 = vmatpush1.msra.mxu0 0.0
    %793 = vmatprep.subr.mxu0 0.0
    %794 = vmatpush1.msra.mxu0 0.0
    %795 = vmatprep.subr.mxu0 0.0
    %796 = vmatpush1.msra.mxu0 0.0
    %797 = vmatprep.subr.mxu0 0.0
    %798 = vmatpush1.msra.mxu0 0.0
    %799 = vmatprep.subr.mxu0 0.0
    %800 = vmatpush1.msra.mxu0 0.0
    %801 = vmatprep.subr.mxu0 0.0
    %802 = vmatpush1.msra.mxu0 0.0
    %803 = vmatprep.subr.mxu0 0.0
    %804 = vmatpush1.msra.mxu0 0.0
    %805 = vmatprep.subr.mxu0 0.0
    %806 = vmatpush1.msra.mxu0 0.0
    %807 = vmatprep.subr.mxu0 0.0
    %808 = vmatpush1.msra.mxu0 0.0
    %809 = vmatprep.subr.mxu0 0.0
    %810 = vmatpush1.msra.mxu0 0.0
    %811 = vmatprep.subr.mxu0 0.0
    %812 = vmatpush1.msra.mxu0 0.0
    %813 = vmatprep.subr.mxu0 0.0
    %814 = vmatpush1.msra.mxu0 0.0
    %815 = vmatprep.subr.mxu0 0.0
    %816 = vmatpush1.msra.mxu0 0.0
    %817 = vmatprep.subr.mxu0 0.0
    %818 = vmatpush1.msra.mxu0 0.0
    %819 = vmatprep.subr.mxu0 0.0
    %820 = vmatpush1.msra.mxu0 0.0
    %821 = vmatprep.mubr.f32.mxu0 0.0
    %822 = vmatmul.mubr.f32.gmra.mrb[0].mxu0 %v752
    %v823 = vpop.f32.mrb[0].mxu0
    %v824 = vadd.f32 0.0, %v823
    %v825 = vpop.f32.mrb[0].mxu0
    %826 = vmatprep.mubr.f32.mxu0 0.0
    %827 = vmatmul.mubr.f32.gmra.mrb[0].mxu0 %v755
    %v828 = vpop.f32.mrb[0].mxu0
    %v829 = vadd.f32 0.0, %v828
    %v830 = vpop.f32.mrb[0].mxu0
    %831 = vdwg.mxu0
    %v832 = vld [vmem:[#allocation2 + $0x150] sm:$0xff]
    %v833 = vld [vmem:[#allocation2 + $0x158] sm:$0xff]
    %v834 = vld [vmem:[#allocation2 + $0x160] sm:$0xff]
    %v835 = vld [vmem:[#allocation2 + $0x168] sm:$0xff]
    %v836 = vld [vmem:[#allocation2 + $0x170] sm:$0x1]
    %v837 = vlaneseq
    %v838 = vshrl.u32 %v837, 7
    %v839 = vsub.s32 0, %v838
    %v840 = vrot.slane %v836, %v839
    %v842 = vsel %vm134, %v824, 0
    %v845 = vsel %vm134, %v829, 0
    %847 = vmatprep.subr.mxu0 0.0
    %848 = vmatpush1.msra.mxu0 %v832
    %849 = vmatprep.subr.mxu0 0.0
    %850 = vmatpush1.msra.mxu0 %v833
    %851 = vmatprep.subr.mxu0 0.0
    %852 = vmatpush1.msra.mxu0 %v834
    %853 = vmatprep.subr.mxu0 0.0
    %854 = vmatpush1.msra.mxu0 %v835
    %855 = vmatprep.subr.mxu0 0.0
    %856 = vmatpush1.msra.mxu0 0.0
    %857 = vmatprep.subr.mxu0 0.0
    %858 = vmatpush1.msra.mxu0 0.0
    %859 = vmatprep.subr.mxu0 0.0
    %860 = vmatpush1.msra.mxu0 0.0
    %861 = vmatprep.subr.mxu0 0.0
    %862 = vmatpush1.msra.mxu0 0.0
    %863 = vmatprep.subr.mxu0 0.0
    %864 = vmatpush1.msra.mxu0 0.0
    %865 = vmatprep.subr.mxu0 0.0
    %866 = vmatpush1.msra.mxu0 0.0
    %867 = vmatprep.subr.mxu0 0.0
    %868 = vmatpush1.msra.mxu0 0.0
    %869 = vmatprep.subr.mxu0 0.0
    %870 = vmatpush1.msra.mxu0 0.0
    %871 = vmatprep.subr.mxu0 0.0
    %872 = vmatpush1.msra.mxu0 0.0
    %873 = vmatprep.subr.mxu0 0.0
    %874 = vmatpush1.msra.mxu0 0.0
    %875 = vmatprep.subr.mxu0 0.0
    %876 = vmatpush1.msra.mxu0 0.0
    %877 = vmatprep.subr.mxu0 0.0
    %878 = vmatpush1.msra.mxu0 0.0
    %879 = vmatprep.subr.mxu0 0.0
    %880 = vmatpush1.msra.mxu0 0.0
    %881 = vmatprep.subr.mxu0 0.0
    %882 = vmatpush1.msra.mxu0 0.0
    %883 = vmatprep.subr.mxu0 0.0
    %884 = vmatpush1.msra.mxu0 0.0
    %885 = vmatprep.subr.mxu0 0.0
    %886 = vmatpush1.msra.mxu0 0.0
    %887 = vmatprep.subr.mxu0 0.0
    %888 = vmatpush1.msra.mxu0 0.0
    %889 = vmatprep.subr.mxu0 0.0
    %890 = vmatpush1.msra.mxu0 0.0
    %891 = vmatprep.subr.mxu0 0.0
    %892 = vmatpush1.msra.mxu0 0.0
    %893 = vmatprep.subr.mxu0 0.0
    %894 = vmatpush1.msra.mxu0 0.0
    %895 = vmatprep.subr.mxu0 0.0
    %896 = vmatpush1.msra.mxu0 0.0
    %897 = vmatprep.subr.mxu0 0.0
    %898 = vmatpush1.msra.mxu0 0.0
    %899 = vmatprep.subr.mxu0 0.0
    %900 = vmatpush1.msra.mxu0 0.0
    %901 = vmatprep.subr.mxu0 0.0
    %902 = vmatpush1.msra.mxu0 0.0
    %903 = vmatprep.subr.mxu0 0.0
    %904 = vmatpush1.msra.mxu0 0.0
    %905 = vmatprep.subr.mxu0 0.0
    %906 = vmatpush1.msra.mxu0 0.0
    %907 = vmatprep.subr.mxu0 0.0
    %908 = vmatpush1.msra.mxu0 0.0
    %909 = vmatprep.subr.mxu0 0.0
    %910 = vmatpush1.msra.mxu0 0.0
    %911 = vmatprep.mubr.f32.mxu0 0.0
    %912 = vmatmul.mubr.f32.gmra.mrb[0].mxu0 %v842
    %v913 = vpop.f32.mrb[0].mxu0
    %v914 = vadd.f32 %v840, %v913
    %v915 = vpop.f32.mrb[0].mxu0
    %916 = vmatprep.mubr.f32.mxu0 0.0
    %917 = vmatmul.mubr.f32.gmra.mrb[0].mxu0 %v845
    %v918 = vpop.f32.mrb[0].mxu0
    %v919 = vadd.f32 %v840, %v918
    %v920 = vpop.f32.mrb[0].mxu0
    %921 = vdwg.mxu0
    %v922 = vadd.f32 %v914, %v122
    %v923 = vadd.f32 %v919, %v127
    %v924 = vsel %vm134, %v922, 0.0
    %925 = vadd.xlane.f32.xlu0 %v924
    %v926 = vpop.xlane.xlu0 %925
    %v927 = vsel %vm134, %v923, 0.0
    %928 = vadd.xlane.f32.xlu0 %v927
    %v929 = vpop.xlane.xlu0 %928
    %v930 = vrcp.pop 32.0
    %v931 = vmul.f32 %v926, %v930
    %v932 = vmul.f32 %v929, %v930
    %v933 = vsub.f32 %v922, %v931
    %v934 = vsub.f32 %v923, %v932
    %v935 = vmul.f32 %v933, %v933
    %v936 = vmul.f32 %v934, %v934
    %v937 = vsel %vm134, %v935, 0.0
    %938 = vadd.xlane.f32.xlu0 %v937
    %v939 = vpop.xlane.xlu0 %938
    %v940 = vsel %vm134, %v936, 0.0
    %941 = vadd.xlane.f32.xlu0 %v940
    %v942 = vpop.xlane.xlu0 %941
    %v943 = vmul.f32 %v939, %v930
    %v944 = vmul.f32 %v942, %v930
    %v945 = vadd.f32 %v943, 1e-05
    %v946 = vadd.f32 %v944, 1e-05
    %v947 = vrsqrt.pop %v945
    %v948 = vrsqrt.pop %v946
    %v949 = vmul.f32 %v933, %v947
    %v950 = vmul.f32 %v934, %v948
    %v951 = vld [vmem:[#allocation2 + $0x178] sm:$0x1]
    %v952 = vlaneseq
    %v953 = vshrl.u32 %v952, 7
    %v954 = vsub.s32 0, %v953
    %v955 = vrot.slane %v951, %v954
    %v956 = vmul.f32 %v949, %v955
    %v957 = vmul.f32 %v950, %v955
    %v958 = vld [vmem:[#allocation2 + $0x180] sm:$0x1]
    %v959 = vlaneseq
    %v960 = vshrl.u32 %v959, 7
    %v961 = vsub.s32 0, %v960
    %v962 = vrot.slane %v958, %v961
    %v963 = vadd.f32 %v956, %v962
    %v964 = vadd.f32 %v957, %v962
    %v965 = vld [vmem:[#allocation2 + $0x198] sm:$0xff]
    %v966 = vld [vmem:[#allocation2 + $0x1a0] sm:$0xff]
    %v967 = vld [vmem:[#allocation2 + $0x1a8] sm:$0xff]
    %v968 = vld [vmem:[#allocation2 + $0x1b0] sm:$0xff]
    %v969 = vld [vmem:[#allocation2 + $0x1b8] sm:$0x1]
    %v970 = vlaneseq
    %v971 = vshrl.u32 %v970, 7
    %v972 = vsub.s32 0, %v971
    %v973 = vrot.slane %v969, %v972
    %v975 = vsel %vm134, %v963, 0
    %v978 = vsel %vm134, %v964, 0
    %980 = vmatprep.subr.mxu0 0.0
    %981 = vmatpush1.msra.mxu0 %v965
    %982 = vmatprep.subr.mxu0 0.0
    %983 = vmatpush1.msra.mxu0 %v966
    %984 = vmatprep.subr.mxu0 0.0
    %985 = vmatpush1.msra.mxu0 %v967
    %986 = vmatprep.subr.mxu0 0.0
    %987 = vmatpush1.msra.mxu0 %v968
    %988 = vmatprep.subr.mxu0 0.0
    %989 = vmatpush1.msra.mxu0 0.0
    %990 = vmatprep.subr.mxu0 0.0
    %991 = vmatpush1.msra.mxu0 0.0
    %992 = vmatprep.subr.mxu0 0.0
    %993 = vmatpush1.msra.mxu0 0.0
    %994 = vmatprep.subr.mxu0 0.0
    %995 = vmatpush1.msra.mxu0 0.0
    %996 = vmatprep.subr.mxu0 0.0
    %997 = vmatpush1.msra.mxu0 0.0
    %998 = vmatprep.subr.mxu0 0.0
    %999 = vmatpush1.msra.mxu0 0.0
    %1000 = vmatprep.subr.mxu0 0.0
    %1001 = vmatpush1.msra.mxu0 0.0
    %1002 = vmatprep.subr.mxu0 0.0
    %1003 = vmatpush1.msra.mxu0 0.0
    %1004 = vmatprep.subr.mxu0 0.0
    %1005 = vmatpush1.msra.mxu0 0.0
    %1006 = vmatprep.subr.mxu0 0.0
    %1007 = vmatpush1.msra.mxu0 0.0
    %1008 = vmatprep.subr.mxu0 0.0
    %1009 = vmatpush1.msra.mxu0 0.0
    %1010 = vmatprep.subr.mxu0 0.0
    %1011 = vmatpush1.msra.mxu0 0.0
    %1012 = vmatprep.subr.mxu0 0.0
    %1013 = vmatpush1.msra.mxu0 0.0
    %1014 = vmatprep.subr.mxu0 0.0
    %1015 = vmatpush1.msra.mxu0 0.0
    %1016 = vmatprep.subr.mxu0 0.0
    %1017 = vmatpush1.msra.mxu0 0.0
    %1018 = vmatprep.subr.mxu0 0.0
    %1019 = vmatpush1.msra.mxu0 0.0
    %1020 = vmatprep.subr.mxu0 0.0
    %1021 = vmatpush1.msra.mxu0 0.0
    %1022 = vmatprep.subr.mxu0 0.0
    %1023 = vmatpush1.msra.mxu0 0.0
    %1024 = vmatprep.subr.mxu0 0.0
    %1025 = vmatpush1.msra.mxu0 0.0
    %1026 = vmatprep.subr.mxu0 0.0
    %1027 = vmatpush1.msra.mxu0 0.0
    %1028 = vmatprep.subr.mxu0 0.0
    %1029 = vmatpush1.msra.mxu0 0.0
    %1030 = vmatprep.subr.mxu0 0.0
    %1031 = vmatpush1.msra.mxu0 0.0
    %1032 = vmatprep.subr.mxu0 0.0
    %1033 = vmatpush1.msra.mxu0 0.0
    %1034 = vmatprep.subr.mxu0 0.0
    %1035 = vmatpush1.msra.mxu0 0.0
    %1036 = vmatprep.subr.mxu0 0.0
    %1037 = vmatpush1.msra.mxu0 0.0
    %1038 = vmatprep.subr.mxu0 0.0
    %1039 = vmatpush1.msra.mxu0 0.0
    %1040 = vmatprep.subr.mxu0 0.0
    %1041 = vmatpush1.msra.mxu0 0.0
    %1042 = vmatprep.subr.mxu0 0.0
    %1043 = vmatpush1.msra.mxu0 0.0
    %1044 = vmatprep.mubr.f32.mxu0 0.0
    %1045 = vmatmul.mubr.f32.gmra.mrb[0].mxu0 %v975
    %v1046 = vpop.f32.mrb[0].mxu0
    %v1047 = vadd.f32 %v973, %v1046
    %v1048 = vpop.f32.mrb[0].mxu0
    %1049 = vmatprep.mubr.f32.mxu0 0.0
    %1050 = vmatmul.mubr.f32.gmra.mrb[0].mxu0 %v978
    %v1051 = vpop.f32.mrb[0].mxu0
    %v1052 = vadd.f32 %v973, %v1051
    %v1053 = vpop.f32.mrb[0].mxu0
    %1054 = vdwg.mxu0
    %v1055 = vmax.f32 %v1047, 0.0
    %v1056 = vmax.f32 %v1052, 0.0
    %v1057 = vld [vmem:[#allocation2 + $0x1c0] sm:$0xff]
    %v1058 = vld [vmem:[#allocation2 + $0x1c8] sm:$0xff]
    %v1059 = vld [vmem:[#allocation2 + $0x1d0] sm:$0xff]
    %v1060 = vld [vmem:[#allocation2 + $0x1d8] sm:$0xff]
    %v1061 = vld [vmem:[#allocation2 + $0x1e0] sm:$0xff]
    %v1062 = vld [vmem:[#allocation2 + $0x1e8] sm:$0xff]
    %v1063 = vld [vmem:[#allocation2 + $0x1f0] sm:$0xff]
    %v1064 = vld [vmem:[#allocation2 + $0x1f8] sm:$0xff]
    %v1065 = vld [vmem:[#allocation2 + $0x200] sm:$0xff]
    %v1066 = vld [vmem:[#allocation2 + $0x208] sm:$0xff]
    %v1067 = vld [vmem:[#allocation2 + $0x210] sm:$0xff]
    %v1068 = vld [vmem:[#allocation2 + $0x218] sm:$0xff]
    %v1069 = vld [vmem:[#allocation2 + $0x220] sm:$0xff]
    %v1070 = vld [vmem:[#allocation2 + $0x228] sm:$0xff]
    %v1071 = vld [vmem:[#allocation2 + $0x230] sm:$0xff]
    %v1072 = vld [vmem:[#allocation2 + $0x238] sm:$0xff]
    %v1073 = vld [vmem:[#allocation2 + $0x240] sm:$0x1]
    %v1074 = vlaneseq
    %v1075 = vshrl.u32 %v1074, 7
    %v1076 = vsub.s32 0, %v1075
    %v1077 = vrot.slane %v1073, %v1076
    %1078 = vmatprep.subr.mxu0 0.0
    %1079 = vmatpush1.msra.mxu0 %v1057
    %1080 = vmatprep.subr.mxu0 0.0
    %1081 = vmatpush1.msra.mxu0 %v1058
    %1082 = vmatprep.subr.mxu0 0.0
    %1083 = vmatpush1.msra.mxu0 %v1059
    %1084 = vmatprep.subr.mxu0 0.0
    %1085 = vmatpush1.msra.mxu0 %v1060
    %1086 = vmatprep.subr.mxu0 0.0
    %1087 = vmatpush1.msra.mxu0 %v1061
    %1088 = vmatprep.subr.mxu0 0.0
    %1089 = vmatpush1.msra.mxu0 %v1062
    %1090 = vmatprep.subr.mxu0 0.0
    %1091 = vmatpush1.msra.mxu0 %v1063
    %1092 = vmatprep.subr.mxu0 0.0
    %1093 = vmatpush1.msra.mxu0 %v1064
    %1094 = vmatprep.subr.mxu0 0.0
    %1095 = vmatpush1.msra.mxu0 %v1065
    %1096 = vmatprep.subr.mxu0 0.0
    %1097 = vmatpush1.msra.mxu0 %v1066
    %1098 = vmatprep.subr.mxu0 0.0
    %1099 = vmatpush1.msra.mxu0 %v1067
    %1100 = vmatprep.subr.mxu0 0.0
    %1101 = vmatpush1.msra.mxu0 %v1068
    %1102 = vmatprep.subr.mxu0 0.0
    %1103 = vmatpush1.msra.mxu0 %v1069
    %1104 = vmatprep.subr.mxu0 0.0
    %1105 = vmatpush1.msra.mxu0 %v1070
    %1106 = vmatprep.subr.mxu0 0.0
    %1107 = vmatpush1.msra.mxu0 %v1071
    %1108 = vmatprep.subr.mxu0 0.0
    %1109 = vmatpush1.msra.mxu0 %v1072
    %1110 = vmatprep.subr.mxu0 0.0
    %1111 = vmatpush1.msra.mxu0 0.0
    %1112 = vmatprep.subr.mxu0 0.0
    %1113 = vmatpush1.msra.mxu0 0.0
    %1114 = vmatprep.subr.mxu0 0.0
    %1115 = vmatpush1.msra.mxu0 0.0
    %1116 = vmatprep.subr.mxu0 0.0
    %1117 = vmatpush1.msra.mxu0 0.0
    %1118 = vmatprep.subr.mxu0 0.0
    %1119 = vmatpush1.msra.mxu0 0.0
    %1120 = vmatprep.subr.mxu0 0.0
    %1121 = vmatpush1.msra.mxu0 0.0
    %1122 = vmatprep.subr.mxu0 0.0
    %1123 = vmatpush1.msra.mxu0 0.0
    %1124 = vmatprep.subr.mxu0 0.0
    %1125 = vmatpush1.msra.mxu0 0.0
    %1126 = vmatprep.subr.mxu0 0.0
    %1127 = vmatpush1.msra.mxu0 0.0
    %1128 = vmatprep.subr.mxu0 0.0
    %1129 = vmatpush1.msra.mxu0 0.0
    %1130 = vmatprep.subr.mxu0 0.0
    %1131 = vmatpush1.msra.mxu0 0.0
    %1132 = vmatprep.subr.mxu0 0.0
    %1133 = vmatpush1.msra.mxu0 0.0
    %1134 = vmatprep.subr.mxu0 0.0
    %1135 = vmatpush1.msra.mxu0 0.0
    %1136 = vmatprep.subr.mxu0 0.0
    %1137 = vmatpush1.msra.mxu0 0.0
    %1138 = vmatprep.subr.mxu0 0.0
    %1139 = vmatpush1.msra.mxu0 0.0
    %1140 = vmatprep.subr.mxu0 0.0
    %1141 = vmatpush1.msra.mxu0 0.0
    %1142 = vmatprep.mubr.f32.mxu0 0.0
    %1143 = vmatmul.mubr.f32.gmra.mrb[0].mxu0 %v1055
    %v1144 = vpop.f32.mrb[0].mxu0
    %v1145 = vadd.f32 %v1077, %v1144
    %v1146 = vpop.f32.mrb[0].mxu0
    %1147 = vmatprep.mubr.f32.mxu0 0.0
    %1148 = vmatmul.mubr.f32.gmra.mrb[0].mxu0 %v1056
    %v1149 = vpop.f32.mrb[0].mxu0
    %v1150 = vadd.f32 %v1077, %v1149
    %v1151 = vpop.f32.mrb[0].mxu0
    %1152 = vdwg.mxu0
    %v1153 = vadd.f32 %v1145, %v963
    %v1154 = vadd.f32 %v1150, %v964
    %v1155 = vsel %vm134, %v1153, 0.0
    %1156 = vadd.xlane.f32.xlu0 %v1155
    %v1157 = vpop.xlane.xlu0 %1156
    %v1158 = vsel %vm134, %v1154, 0.0
    %1159 = vadd.xlane.f32.xlu0 %v1158
    %v1160 = vpop.xlane.xlu0 %1159
    %v1161 = vmul.f32 %v1157, %v930
    %v1162 = vmul.f32 %v1160, %v930
    %v1163 = vsub.f32 %v1153, %v1161
    %v1164 = vsub.f32 %v1154, %v1162
    %v1165 = vmul.f32 %v1163, %v1163
    %v1166 = vmul.f32 %v1164, %v1164
    %v1167 = vsel %vm134, %v1165, 0.0
    %1168 = vadd.xlane.f32.xlu0 %v1167
    %v1169 = vpop.xlane.xlu0 %1168
    %v1170 = vsel %vm134, %v1166, 0.0
    %1171 = vadd.xlane.f32.xlu0 %v1170
    %v1172 = vpop.xlane.xlu0 %1171
    %v1173 = vmul.f32 %v1169, %v930
    %v1174 = vmul.f32 %v1172, %v930
    %v1175 = vadd.f32 %v1173, 1e-05
    %v1176 = vadd.f32 %v1174, 1e-05
    %v1177 = vrsqrt.pop %v1175
    %v1178 = vrsqrt.pop %v1176
    %v1179 = vmul.f32 %v1163, %v1177
    %v1180 = vmul.f32 %v1164, %v1178
    %v1181 = vld [vmem:[#allocation2 + $0x188] sm:$0x1]
    %v1182 = vlaneseq
    %v1183 = vshrl.u32 %v1182, 7
    %v1184 = vsub.s32 0, %v1183
    %v1185 = vrot.slane %v1181, %v1184
    %v1186 = vmul.f32 %v1179, %v1185
    %v1187 = vmul.f32 %v1180, %v1185
    %v1188 = vld [vmem:[#allocation2 + $0x190] sm:$0x1]
    %v1189 = vlaneseq
    %v1190 = vshrl.u32 %v1189, 7
    %v1191 = vsub.s32 0, %v1190
    %v1192 = vrot.slane %v1188, %v1191
    %v1193 = vadd.f32 %v1186, %v1192
    %v1194 = vadd.f32 %v1187, %v1192
    %v1195 = vld [vmem:[#allocation2 + $0x248] sm:$0xff]
    %v1196 = vld [vmem:[#allocation2 + $0x250] sm:$0xff]
    %v1197 = vld [vmem:[#allocation2 + $0x258] sm:$0xff]
    %v1198 = vld [vmem:[#allocation2 + $0x260] sm:$0xff]
    %v1200 = vsel %vm134, %v1193, 0
    %v1203 = vsel %vm134, %v1194, 0
    %1205 = vmatprep.subr.mxu0 0.0
    %1206 = vmatpush1.msra.mxu0 %v1195
    %1207 = vmatprep.subr.mxu0 0.0
    %1208 = vmatpush1.msra.mxu0 %v1196
    %1209 = vmatprep.subr.mxu0 0.0
    %1210 = vmatpush1.msra.mxu0 %v1197
    %1211 = vmatprep.subr.mxu0 0.0
    %1212 = vmatpush1.msra.mxu0 %v1198
    %1213 = vmatprep.subr.mxu0 0.0
    %1214 = vmatpush1.msra.mxu0 0.0
    %1215 = vmatprep.subr.mxu0 0.0
    %1216 = vmatpush1.msra.mxu0 0.0
    %1217 = vmatprep.subr.mxu0 0.0
    %1218 = vmatpush1.msra.mxu0 0.0
    %1219 = vmatprep.subr.mxu0 0.0
    %1220 = vmatpush1.msra.mxu0 0.0
    %1221 = vmatprep.subr.mxu0 0.0
    %1222 = vmatpush1.msra.mxu0 0.0
    %1223 = vmatprep.subr.mxu0 0.0
    %1224 = vmatpush1.msra.mxu0 0.0
    %1225 = vmatprep.subr.mxu0 0.0
    %1226 = vmatpush1.msra.mxu0 0.0
    %1227 = vmatprep.subr.mxu0 0.0
    %1228 = vmatpush1.msra.mxu0 0.0
    %1229 = vmatprep.subr.mxu0 0.0
    %1230 = vmatpush1.msra.mxu0 0.0
    %1231 = vmatprep.subr.mxu0 0.0
    %1232 = vmatpush1.msra.mxu0 0.0
    %1233 = vmatprep.subr.mxu0 0.0
    %1234 = vmatpush1.msra.mxu0 0.0
    %1235 = vmatprep.subr.mxu0 0.0
    %1236 = vmatpush1.msra.mxu0 0.0
    %1237 = vmatprep.subr.mxu0 0.0
    %1238 = vmatpush1.msra.mxu0 0.0
    %1239 = vmatprep.subr.mxu0 0.0
    %1240 = vmatpush1.msra.mxu0 0.0
    %1241 = vmatprep.subr.mxu0 0.0
    %1242 = vmatpush1.msra.mxu0 0.0
    %1243 = vmatprep.subr.mxu0 0.0
    %1244 = vmatpush1.msra.mxu0 0.0
    %1245 = vmatprep.subr.mxu0 0.0
    %1246 = vmatpush1.msra.mxu0 0.0
    %1247 = vmatprep.subr.mxu0 0.0
    %1248 = vmatpush1.msra.mxu0 0.0
    %1249 = vmatprep.subr.mxu0 0.0
    %1250 = vmatpush1.msra.mxu0 0.0
    %1251 = vmatprep.subr.mxu0 0.0
    %1252 = vmatpush1.msra.mxu0 0.0
    %1253 = vmatprep.subr.mxu0 0.0
    %1254 = vmatpush1.msra.mxu0 0.0
    %1255 = vmatprep.subr.mxu0 0.0
    %1256 = vmatpush1.msra.mxu0 0.0
    %1257 = vmatprep.subr.mxu0 0.0
    %1258 = vmatpush1.msra.mxu0 0.0
    %1259 = vmatprep.subr.mxu0 0.0
    %1260 = vmatpush1.msra.mxu0 0.0
    %1261 = vmatprep.subr.mxu0 0.0
    %1262 = vmatpush1.msra.mxu0 0.0
    %1263 = vmatprep.subr.mxu0 0.0
    %1264 = vmatpush1.msra.mxu0 0.0
    %1265 = vmatprep.subr.mxu0 0.0
    %1266 = vmatpush1.msra.mxu0 0.0
    %1267 = vmatprep.subr.mxu0 0.0
    %1268 = vmatpush1.msra.mxu0 0.0
    %1269 = vmatprep.mubr.f32.mxu0 0.0
    %1270 = vmatmul.mubr.f32.gmra.mrb[0].mxu0 %v1200
    %v1271 = vpop.f32.mrb[0].mxu0
    %v1272 = vadd.f32 0.0, %v1271
    %v1273 = vpop.f32.mrb[0].mxu0
    %1274 = vmatprep.mubr.f32.mxu0 0.0
    %1275 = vmatmul.mubr.f32.gmra.mrb[0].mxu0 %v1203
    %v1276 = vpop.f32.mrb[0].mxu0
    %v1277 = vadd.f32 0.0, %v1276
    %v1278 = vpop.f32.mrb[0].mxu0
    %1279 = vdwg.mxu0
    %1280 = vmatprep.subr.mxu0 0.0
    %1281 = vmatpush1.msra.mxu0 %v1272
    %1282 = vmatprep.subr.mxu0 0.0
    %1283 = vmatpush1.msra.mxu0 %v1277
    %1284 = vmatprep.subr.mxu0 0.0
    %1285 = vmatpush1.msra.mxu0 0.0
    %1286 = vmatprep.subr.mxu0 0.0
    %1287 = vmatpush1.msra.mxu0 0.0
    %1288 = vmatprep.subr.mxu0 0.0
    %1289 = vmatpush1.msra.mxu0 0.0
    %1290 = vmatprep.subr.mxu0 0.0
    %1291 = vmatpush1.msra.mxu0 0.0
    %1292 = vmatprep.subr.mxu0 0.0
    %1293 = vmatpush1.msra.mxu0 0.0
    %1294 = vmatprep.subr.mxu0 0.0
    %1295 = vmatpush1.msra.mxu0 0.0
    %1296 = vmatprep.subr.mxu0 0.0
    %1297 = vmatpush1.msra.mxu0 0.0
    %1298 = vmatprep.subr.mxu0 0.0
    %1299 = vmatpush1.msra.mxu0 0.0
    %1300 = vmatprep.subr.mxu0 0.0
    %1301 = vmatpush1.msra.mxu0 0.0
    %1302 = vmatprep.subr.mxu0 0.0
    %1303 = vmatpush1.msra.mxu0 0.0
    %1304 = vmatprep.subr.mxu0 0.0
    %1305 = vmatpush1.msra.mxu0 0.0
    %1306 = vmatprep.subr.mxu0 0.0
    %1307 = vmatpush1.msra.mxu0 0.0
    %1308 = vmatprep.subr.mxu0 0.0
    %1309 = vmatpush1.msra.mxu0 0.0
    %1310 = vmatprep.subr.mxu0 0.0
    %1311 = vmatpush1.msra.mxu0 0.0
    %1312 = vmatprep.subr.mxu0 0.0
    %1313 = vmatpush1.msra.mxu0 0.0
    %1314 = vmatprep.subr.mxu0 0.0
    %1315 = vmatpush1.msra.mxu0 0.0
    %1316 = vmatprep.subr.mxu0 0.0
    %1317 = vmatpush1.msra.mxu0 0.0
    %1318 = vmatprep.subr.mxu0 0.0
    %1319 = vmatpush1.msra.mxu0 0.0
    %1320 = vmatprep.subr.mxu0 0.0
    %1321 = vmatpush1.msra.mxu0 0.0
    %1322 = vmatprep.subr.mxu0 0.0
    %1323 = vmatpush1.msra.mxu0 0.0
    %1324 = vmatprep.subr.mxu0 0.0
    %1325 = vmatpush1.msra.mxu0 0.0
    %1326 = vmatprep.subr.mxu0 0.0
    %1327 = vmatpush1.msra.mxu0 0.0
    %1328 = vmatprep.subr.mxu0 0.0
    %1329 = vmatpush1.msra.mxu0 0.0
    %1330 = vmatprep.subr.mxu0 0.0
    %1331 = vmatpush1.msra.mxu0 0.0
    %1332 = vmatprep.subr.mxu0 0.0
    %1333 = vmatpush1.msra.mxu0 0.0
    %1334 = vmatprep.subr.mxu0 0.0
    %1335 = vmatpush1.msra.mxu0 0.0
    %1336 = vmatprep.subr.mxu0 0.0
    %1337 = vmatpush1.msra.mxu0 0.0
    %1338 = vmatprep.subr.mxu0 0.0
    %1339 = vmatpush1.msra.mxu0 0.0
    %1340 = vmatprep.subr.mxu0 0.0
    %1341 = vmatpush1.msra.mxu0 0.0
    %1342 = vmatprep.subr.mxu0 0.0
    %1343 = vmatpush1.msra.mxu0 0.0
    %1344 = vmatprep.mubr.f32.mxu0 0.0
    %1345 = vmatmul.mubr.f32.gmra.mrb[0].mxu0 %v234
    %v1346 = vpop.f32.mrb[0].mxu0
    %v1347 = vadd.f32 0.0, %v1346
    %v1348 = vpop.f32.mrb[0].mxu0
    %1349 = vmatprep.mubr.f32.mxu0 0.0
    %1350 = vmatmul.mubr.f32.gmra.mrb[0].mxu0 %v237
    %v1351 = vpop.f32.mrb[0].mxu0
    %v1352 = vadd.f32 0.0, %v1351
    %v1353 = vpop.f32.mrb[0].mxu0
    %1354 = vmatprep.mubr.f32.mxu0 0.0
    %1355 = vmatmul.mubr.f32.gmra.mrb[0].mxu0 %v240
    %v1356 = vpop.f32.mrb[0].mxu0
    %v1357 = vadd.f32 0.0, %v1356
    %v1358 = vpop.f32.mrb[0].mxu0
    %1359 = vmatprep.mubr.f32.mxu0 0.0
    %1360 = vmatmul.mubr.f32.gmra.mrb[0].mxu0 %v243
    %v1361 = vpop.f32.mrb[0].mxu0
    %v1362 = vadd.f32 0.0, %v1361
    %v1363 = vpop.f32.mrb[0].mxu0
    %1364 = vmatprep.mubr.f32.mxu0 0.0
    %1365 = vmatmul.mubr.f32.gmra.mrb[0].mxu0 %v246
    %v1366 = vpop.f32.mrb[0].mxu0
    %v1367 = vadd.f32 0.0, %v1366
    %v1368 = vpop.f32.mrb[0].mxu0
    %1369 = vmatprep.mubr.f32.mxu0 0.0
    %1370 = vmatmul.mubr.f32.gmra.mrb[0].mxu0 %v249
    %v1371 = vpop.f32.mrb[0].mxu0
    %v1372 = vadd.f32 0.0, %v1371
    %v1373 = vpop.f32.mrb[0].mxu0
    %1374 = vmatprep.mubr.f32.mxu0 0.0
    %1375 = vmatmul.mubr.f32.gmra.mrb[0].mxu0 %v252
    %v1376 = vpop.f32.mrb[0].mxu0
    %v1377 = vadd.f32 0.0, %v1376
    %v1378 = vpop.f32.mrb[0].mxu0
    %1379 = vmatprep.mubr.f32.mxu0 0.0
    %1380 = vmatmul.mubr.f32.gmra.mrb[0].mxu0 %v255
    %v1381 = vpop.f32.mrb[0].mxu0
    %v1382 = vadd.f32 0.0, %v1381
    %v1383 = vpop.f32.mrb[0].mxu0
    %1384 = vdwg.mxu0
    %v1385 = vmul.f32 %v1347, %v216
    %v1386 = vmul.f32 %v1352, %v217
    %v1387 = vmul.f32 %v1357, %v218
    %v1388 = vmul.f32 %v1362, %v219
    %v1389 = vmul.f32 %v1367, %v220
    %v1390 = vmul.f32 %v1372, %v221
    %v1391 = vmul.f32 %v1377, %v222
    %v1392 = vmul.f32 %v1382, %v223
    %1395 = vrot.lane.b32.xlu0 %v1272, 96
    %v1396 = vpop.permute.xlu0 %1395
    %1397 = vrot.lane.b32.xlu0 %v1277, 96
    %v1398 = vpop.permute.xlu0 %1397
    %v1400 = vsel %vm134, %v1385, 0
    %v1403 = vsel %vm134, %v1386, 0
    %v1406 = vsel %vm134, %v1387, 0
    %v1409 = vsel %vm134, %v1388, 0
    %v1412 = vsel %vm134, %v1389, 0
    %v1415 = vsel %vm134, %v1390, 0
    %v1418 = vsel %vm134, %v1391, 0
    %v1421 = vsel %vm134, %v1392, 0
    %v1423 = vsel %vm134, %v1396, 0
    %v1425 = vsel %vm134, %v1398, 0
    %1427 = vmatprep.subr.mxu0 0.0
    %1428 = vmatpush1.xpose.msra.mxu0 %v1423
    %1429 = vmatprep.subr.mxu0 0.0
    %1430 = vmatpush1.xpose.msra.mxu0 %v1425
    %1431 = vmatprep.subr.mxu0 0.0
    %1432 = vmatpush1.xpose.msra.mxu0 0.0
    %1433 = vmatprep.subr.mxu0 0.0
    %1434 = vmatpush1.xpose.msra.mxu0 0.0
    %1435 = vmatprep.subr.mxu0 0.0
    %1436 = vmatpush1.xpose.msra.mxu0 0.0
    %1437 = vmatprep.subr.mxu0 0.0
    %1438 = vmatpush1.xpose.msra.mxu0 0.0
    %1439 = vmatprep.subr.mxu0 0.0
    %1440 = vmatpush1.xpose.msra.mxu0 0.0
    %1441 = vmatprep.subr.mxu0 0.0
    %1442 = vmatpush1.xpose.msra.mxu0 0.0
    %1443 = vmatprep.subr.mxu0 0.0
    %1444 = vmatpush1.xpose.msra.mxu0 0.0
    %1445 = vmatprep.subr.mxu0 0.0
    %1446 = vmatpush1.xpose.msra.mxu0 0.0
    %1447 = vmatprep.subr.mxu0 0.0
    %1448 = vmatpush1.xpose.msra.mxu0 0.0
    %1449 = vmatprep.subr.mxu0 0.0
    %1450 = vmatpush1.xpose.msra.mxu0 0.0
    %1451 = vmatprep.subr.mxu0 0.0
    %1452 = vmatpush1.xpose.msra.mxu0 0.0
    %1453 = vmatprep.subr.mxu0 0.0
    %1454 = vmatpush1.xpose.msra.mxu0 0.0
    %1455 = vmatprep.subr.mxu0 0.0
    %1456 = vmatpush1.xpose.msra.mxu0 0.0
    %1457 = vmatprep.subr.mxu0 0.0
    %1458 = vmatpush1.xpose.msra.mxu0 0.0
    %1459 = vmatprep.subr.mxu0 0.0
    %1460 = vmatpush1.xpose.msra.mxu0 0.0
    %1461 = vmatprep.subr.mxu0 0.0
    %1462 = vmatpush1.xpose.msra.mxu0 0.0
    %1463 = vmatprep.subr.mxu0 0.0
    %1464 = vmatpush1.xpose.msra.mxu0 0.0
    %1465 = vmatprep.subr.mxu0 0.0
    %1466 = vmatpush1.xpose.msra.mxu0 0.0
    %1467 = vmatprep.subr.mxu0 0.0
    %1468 = vmatpush1.xpose.msra.mxu0 0.0
    %1469 = vmatprep.subr.mxu0 0.0
    %1470 = vmatpush1.xpose.msra.mxu0 0.0
    %1471 = vmatprep.subr.mxu0 0.0
    %1472 = vmatpush1.xpose.msra.mxu0 0.0
    %1473 = vmatprep.subr.mxu0 0.0
    %1474 = vmatpush1.xpose.msra.mxu0 0.0
    %1475 = vmatprep.subr.mxu0 0.0
    %1476 = vmatpush1.xpose.msra.mxu0 0.0
    %1477 = vmatprep.subr.mxu0 0.0
    %1478 = vmatpush1.xpose.msra.mxu0 0.0
    %1479 = vmatprep.subr.mxu0 0.0
    %1480 = vmatpush1.xpose.msra.mxu0 0.0
    %1481 = vmatprep.subr.mxu0 0.0
    %1482 = vmatpush1.xpose.msra.mxu0 0.0
    %1483 = vmatprep.subr.mxu0 0.0
    %1484 = vmatpush1.xpose.msra.mxu0 0.0
    %1485 = vmatprep.subr.mxu0 0.0
    %1486 = vmatpush1.xpose.msra.mxu0 0.0
    %1487 = vmatprep.subr.mxu0 0.0
    %1488 = vmatpush1.xpose.msra.mxu0 0.0
    %1489 = vmatprep.subr.mxu0 0.0
    %1490 = vmatpush1.xpose.msra.mxu0 0.0
    %1491 = vmatprep.mubr.f32.mxu0 0.0
    %1492 = vmatmul.mubr.f32.gmra.mrb[0].mxu0 %v1400
    %v1493 = vpop.f32.mrb[0].mxu0
    %v1494 = vadd.f32 %v370, %v1493
    %v1495 = vpop.f32.mrb[0].mxu0
    %1496 = vmatprep.mubr.f32.mxu0 0.0
    %1497 = vmatmul.mubr.f32.gmra.mrb[0].mxu0 %v1403
    %v1498 = vpop.f32.mrb[0].mxu0
    %v1499 = vadd.f32 %v371, %v1498
    %v1500 = vpop.f32.mrb[0].mxu0
    %1501 = vmatprep.mubr.f32.mxu0 0.0
    %1502 = vmatmul.mubr.f32.gmra.mrb[0].mxu0 %v1406
    %v1503 = vpop.f32.mrb[0].mxu0
    %v1504 = vadd.f32 %v372, %v1503
    %v1505 = vpop.f32.mrb[0].mxu0
    %1506 = vmatprep.mubr.f32.mxu0 0.0
    %1507 = vmatmul.mubr.f32.gmra.mrb[0].mxu0 %v1409
    %v1508 = vpop.f32.mrb[0].mxu0
    %v1509 = vadd.f32 %v373, %v1508
    %v1510 = vpop.f32.mrb[0].mxu0
    %1511 = vmatprep.mubr.f32.mxu0 0.0
    %1512 = vmatmul.mubr.f32.gmra.mrb[0].mxu0 %v1412
    %v1513 = vpop.f32.mrb[0].mxu0
    %v1514 = vadd.f32 %v374, %v1513
    %v1515 = vpop.f32.mrb[0].mxu0
    %1516 = vmatprep.mubr.f32.mxu0 0.0
    %1517 = vmatmul.mubr.f32.gmra.mrb[0].mxu0 %v1415
    %v1518 = vpop.f32.mrb[0].mxu0
    %v1519 = vadd.f32 %v375, %v1518
    %v1520 = vpop.f32.mrb[0].mxu0
    %1521 = vmatprep.mubr.f32.mxu0 0.0
    %1522 = vmatmul.mubr.f32.gmra.mrb[0].mxu0 %v1418
    %v1523 = vpop.f32.mrb[0].mxu0
    %v1524 = vadd.f32 %v376, %v1523
    %v1525 = vpop.f32.mrb[0].mxu0
    %1526 = vmatprep.mubr.f32.mxu0 0.0
    %1527 = vmatmul.mubr.f32.gmra.mrb[0].mxu0 %v1421
    %v1528 = vpop.f32.mrb[0].mxu0
    %v1529 = vadd.f32 %v377, %v1528
    %v1530 = vpop.f32.mrb[0].mxu0
    %1531 = vdwg.mxu0
    %v1532 = vsel %vm232, %v1494, -inf
    %1533 = vmax.xlane.f32.xlu0 %v1532
    %v1534 = vpop.xlane.xlu0 %1533
    %v1535 = vsel %vm232, %v1499, -inf
    %1536 = vmax.xlane.f32.xlu0 %v1535
    %v1537 = vpop.xlane.xlu0 %1536
    %v1538 = vsel %vm232, %v1504, -inf
    %1539 = vmax.xlane.f32.xlu0 %v1538
    %v1540 = vpop.xlane.xlu0 %1539
    %v1541 = vsel %vm232, %v1509, -inf
    %1542 = vmax.xlane.f32.xlu0 %v1541
    %v1543 = vpop.xlane.xlu0 %1542
    %v1544 = vsel %vm232, %v1514, -inf
    %1545 = vmax.xlane.f32.xlu0 %v1544
    %v1546 = vpop.xlane.xlu0 %1545
    %v1547 = vsel %vm232, %v1519, -inf
    %1548 = vmax.xlane.f32.xlu0 %v1547
    %v1549 = vpop.xlane.xlu0 %1548
    %v1550 = vsel %vm232, %v1524, -inf
    %1551 = vmax.xlane.f32.xlu0 %v1550
    %v1552 = vpop.xlane.xlu0 %1551
    %v1553 = vsel %vm232, %v1529, -inf
    %1554 = vmax.xlane.f32.xlu0 %v1553
    %v1555 = vpop.xlane.xlu0 %1554
    %v1556 = vsub.f32 %v1494, %v1534
    %v1557 = vsub.f32 %v1499, %v1537
    %v1558 = vsub.f32 %v1504, %v1540
    %v1559 = vsub.f32 %v1509, %v1543
    %v1560 = vsub.f32 %v1514, %v1546
    %v1561 = vsub.f32 %v1519, %v1549
    %v1562 = vsub.f32 %v1524, %v1552
    %v1563 = vsub.f32 %v1529, %v1555
    %v1564 = vmul.f32 %v1556, 1.442695
    %v1565 = vpow.pop %v1564
    %v1566 = vmul.f32 %v1557, 1.442695
    %v1567 = vpow.pop %v1566
    %v1568 = vmul.f32 %v1558, 1.442695
    %v1569 = vpow.pop %v1568
    %v1570 = vmul.f32 %v1559, 1.442695
    %v1571 = vpow.pop %v1570
    %v1572 = vmul.f32 %v1560, 1.442695
    %v1573 = vpow.pop %v1572
    %v1574 = vmul.f32 %v1561, 1.442695
    %v1575 = vpow.pop %v1574
    %v1576 = vmul.f32 %v1562, 1.442695
    %v1577 = vpow.pop %v1576
    %v1578 = vmul.f32 %v1563, 1.442695
    %v1579 = vpow.pop %v1578
    %v1580 = vsel %vm232, %v1565, 0.0
    %1581 = vadd.xlane.f32.xlu0 %v1580
    %v1582 = vpop.xlane.xlu0 %1581
    %v1583 = vsel %vm232, %v1567, 0.0
    %1584 = vadd.xlane.f32.xlu0 %v1583
    %v1585 = vpop.xlane.xlu0 %1584
    %v1586 = vsel %vm232, %v1569, 0.0
    %1587 = vadd.xlane.f32.xlu0 %v1586
    %v1588 = vpop.xlane.xlu0 %1587
    %v1589 = vsel %vm232, %v1571, 0.0
    %1590 = vadd.xlane.f32.xlu0 %v1589
    %v1591 = vpop.xlane.xlu0 %1590
    %v1592 = vsel %vm232, %v1573, 0.0
    %1593 = vadd.xlane.f32.xlu0 %v1592
    %v1594 = vpop.xlane.xlu0 %1593
    %v1595 = vsel %vm232, %v1575, 0.0
    %1596 = vadd.xlane.f32.xlu0 %v1595
    %v1597 = vpop.xlane.xlu0 %1596
    %v1598 = vsel %vm232, %v1577, 0.0
    %1599 = vadd.xlane.f32.xlu0 %v1598
    %v1600 = vpop.xlane.xlu0 %1599
    %v1601 = vsel %vm232, %v1579, 0.0
    %1602 = vadd.xlane.f32.xlu0 %v1601
    %v1603 = vpop.xlane.xlu0 %1602
    %v1604 = vrcp.pop %v1582
    %v1605 = vmul.f32 %v1565, %v1604
    %v1606 = vrcp.pop %v1585
    %v1607 = vmul.f32 %v1567, %v1606
    %v1608 = vrcp.pop %v1588
    %v1609 = vmul.f32 %v1569, %v1608
    %v1610 = vrcp.pop %v1591
    %v1611 = vmul.f32 %v1571, %v1610
    %v1612 = vrcp.pop %v1594
    %v1613 = vmul.f32 %v1573, %v1612
    %v1614 = vrcp.pop %v1597
    %v1615 = vmul.f32 %v1575, %v1614
    %v1616 = vrcp.pop %v1600
    %v1617 = vmul.f32 %v1577, %v1616
    %v1618 = vrcp.pop %v1603
    %v1619 = vmul.f32 %v1579, %v1618
    %1620 = vrot.lane.b32.xlu0 %v1272, 64
    %v1621 = vpop.permute.xlu0 %1620
    %1622 = vrot.lane.b32.xlu0 %v1277, 64
    %v1623 = vpop.permute.xlu0 %1622
    %v1627 = vsel %vm232, %v1605, 0
    %v1630 = vsel %vm232, %v1607, 0
    %v1633 = vsel %vm232, %v1609, 0
    %v1636 = vsel %vm232, %v1611, 0
    %v1639 = vsel %vm232, %v1613, 0
    %v1642 = vsel %vm232, %v1615, 0
    %v1645 = vsel %vm232, %v1617, 0
    %v1648 = vsel %vm232, %v1619, 0
    %1650 = vmatprep.subr.mxu0 0.0
    %1651 = vmatpush1.msra.mxu0 %v1621
    %1652 = vmatprep.subr.mxu0 0.0
    %1653 = vmatpush1.msra.mxu0 %v1623
    %1654 = vmatprep.subr.mxu0 0.0
    %1655 = vmatpush1.msra.mxu0 0.0
    %1656 = vmatprep.subr.mxu0 0.0
    %1657 = vmatpush1.msra.mxu0 0.0
    %1658 = vmatprep.subr.mxu0 0.0
    %1659 = vmatpush1.msra.mxu0 0.0
    %1660 = vmatprep.subr.mxu0 0.0
    %1661 = vmatpush1.msra.mxu0 0.0
    %1662 = vmatprep.subr.mxu0 0.0
    %1663 = vmatpush1.msra.mxu0 0.0
    %1664 = vmatprep.subr.mxu0 0.0
    %1665 = vmatpush1.msra.mxu0 0.0
    %1666 = vmatprep.subr.mxu0 0.0
    %1667 = vmatpush1.msra.mxu0 0.0
    %1668 = vmatprep.subr.mxu0 0.0
    %1669 = vmatpush1.msra.mxu0 0.0
    %1670 = vmatprep.subr.mxu0 0.0
    %1671 = vmatpush1.msra.mxu0 0.0
    %1672 = vmatprep.subr.mxu0 0.0
    %1673 = vmatpush1.msra.mxu0 0.0
    %1674 = vmatprep.subr.mxu0 0.0
    %1675 = vmatpush1.msra.mxu0 0.0
    %1676 = vmatprep.subr.mxu0 0.0
    %1677 = vmatpush1.msra.mxu0 0.0
    %1678 = vmatprep.subr.mxu0 0.0
    %1679 = vmatpush1.msra.mxu0 0.0
    %1680 = vmatprep.subr.mxu0 0.0
    %1681 = vmatpush1.msra.mxu0 0.0
    %1682 = vmatprep.subr.mxu0 0.0
    %1683 = vmatpush1.msra.mxu0 0.0
    %1684 = vmatprep.subr.mxu0 0.0
    %1685 = vmatpush1.msra.mxu0 0.0
    %1686 = vmatprep.subr.mxu0 0.0
    %1687 = vmatpush1.msra.mxu0 0.0
    %1688 = vmatprep.subr.mxu0 0.0
    %1689 = vmatpush1.msra.mxu0 0.0
    %1690 = vmatprep.subr.mxu0 0.0
    %1691 = vmatpush1.msra.mxu0 0.0
    %1692 = vmatprep.subr.mxu0 0.0
    %1693 = vmatpush1.msra.mxu0 0.0
    %1694 = vmatprep.subr.mxu0 0.0
    %1695 = vmatpush1.msra.mxu0 0.0
    %1696 = vmatprep.subr.mxu0 0.0
    %1697 = vmatpush1.msra.mxu0 0.0
    %1698 = vmatprep.subr.mxu0 0.0
    %1699 = vmatpush1.msra.mxu0 0.0
    %1700 = vmatprep.subr.mxu0 0.0
    %1701 = vmatpush1.msra.mxu0 0.0
    %1702 = vmatprep.subr.mxu0 0.0
    %1703 = vmatpush1.msra.mxu0 0.0
    %1704 = vmatprep.subr.mxu0 0.0
    %1705 = vmatpush1.msra.mxu0 0.0
    %1706 = vmatprep.subr.mxu0 0.0
    %1707 = vmatpush1.msra.mxu0 0.0
    %1708 = vmatprep.subr.mxu0 0.0
    %1709 = vmatpush1.msra.mxu0 0.0
    %1710 = vmatprep.subr.mxu0 0.0
    %1711 = vmatpush1.msra.mxu0 0.0
    %1712 = vmatprep.subr.mxu0 0.0
    %1713 = vmatpush1.msra.mxu0 0.0
    %1714 = vmatprep.mubr.f32.mxu0 0.0
    %1715 = vmatmul.mubr.f32.gmra.mrb[0].mxu0 %v1627
    %v1716 = vpop.f32.mrb[0].mxu0
    %v1717 = vadd.f32 0.0, %v1716
    %v1718 = vpop.f32.mrb[0].mxu0
    %1719 = vmatprep.mubr.f32.mxu0 0.0
    %1720 = vmatmul.mubr.f32.gmra.mrb[0].mxu0 %v1630
    %v1721 = vpop.f32.mrb[0].mxu0
    %v1722 = vadd.f32 0.0, %v1721
    %v1723 = vpop.f32.mrb[0].mxu0
    %1724 = vmatprep.mubr.f32.mxu0 0.0
    %1725 = vmatmul.mubr.f32.gmra.mrb[0].mxu0 %v1633
    %v1726 = vpop.f32.mrb[0].mxu0
    %v1727 = vadd.f32 0.0, %v1726
    %v1728 = vpop.f32.mrb[0].mxu0
    %1729 = vmatprep.mubr.f32.mxu0 0.0
    %1730 = vmatmul.mubr.f32.gmra.mrb[0].mxu0 %v1636
    %v1731 = vpop.f32.mrb[0].mxu0
    %v1732 = vadd.f32 0.0, %v1731
    %v1733 = vpop.f32.mrb[0].mxu0
    %1734 = vmatprep.mubr.f32.mxu0 0.0
    %1735 = vmatmul.mubr.f32.gmra.mrb[0].mxu0 %v1639
    %v1736 = vpop.f32.mrb[0].mxu0
    %v1737 = vadd.f32 0.0, %v1736
    %v1738 = vpop.f32.mrb[0].mxu0
    %1739 = vmatprep.mubr.f32.mxu0 0.0
    %1740 = vmatmul.mubr.f32.gmra.mrb[0].mxu0 %v1642
    %v1741 = vpop.f32.mrb[0].mxu0
    %v1742 = vadd.f32 0.0, %v1741
    %v1743 = vpop.f32.mrb[0].mxu0
    %1744 = vmatprep.mubr.f32.mxu0 0.0
    %1745 = vmatmul.mubr.f32.gmra.mrb[0].mxu0 %v1645
    %v1746 = vpop.f32.mrb[0].mxu0
    %v1747 = vadd.f32 0.0, %v1746
    %v1748 = vpop.f32.mrb[0].mxu0
    %1749 = vmatprep.mubr.f32.mxu0 0.0
    %1750 = vmatmul.mubr.f32.gmra.mrb[0].mxu0 %v1648
    %v1751 = vpop.f32.mrb[0].mxu0
    %v1752 = vadd.f32 0.0, %v1751
    %v1753 = vpop.f32.mrb[0].mxu0
    %1754 = vdwg.mxu0
    %v1755 = vmul.f32 %v1717, %v216
    %v1756 = vmul.f32 %v1722, %v217
    %v1757 = vmul.f32 %v1727, %v218
    %v1758 = vmul.f32 %v1732, %v219
    %v1759 = vmul.f32 %v1737, %v220
    %v1760 = vmul.f32 %v1742, %v221
    %v1761 = vmul.f32 %v1747, %v222
    %v1762 = vmul.f32 %v1752, %v223
    %1763 = vmatprep.subr.mxu0 0.0
    %1764 = vmatpush1.msra.mxu0 %v1755
    %1765 = vmatprep.subr.mxu0 0.0
    %1766 = vmatpush1.msra.mxu0 %v1756
    %1767 = vmatprep.subr.mxu0 0.0
    %1768 = vmatpush1.msra.mxu0 %v1757
    %1769 = vmatprep.subr.mxu0 0.0
    %1770 = vmatpush1.msra.mxu0 %v1758
    %1771 = vmatprep.subr.mxu0 0.0
    %1772 = vmatpush1.msra.mxu0 %v1759
    %1773 = vmatprep.subr.mxu0 0.0
    %1774 = vmatpush1.msra.mxu0 %v1760
    %1775 = vmatprep.subr.mxu0 0.0
    %1776 = vmatpush1.msra.mxu0 %v1761
    %1777 = vmatprep.subr.mxu0 0.0
    %1778 = vmatpush1.msra.mxu0 %v1762
    %1779 = vmatprep.subr.mxu0 0.0
    %1780 = vmatpush1.msra.mxu0 0.0
    %1781 = vmatprep.subr.mxu0 0.0
    %1782 = vmatpush1.msra.mxu0 0.0
    %1783 = vmatprep.subr.mxu0 0.0
    %1784 = vmatpush1.msra.mxu0 0.0
    %1785 = vmatprep.subr.mxu0 0.0
    %1786 = vmatpush1.msra.mxu0 0.0
    %1787 = vmatprep.subr.mxu0 0.0
    %1788 = vmatpush1.msra.mxu0 0.0
    %1789 = vmatprep.subr.mxu0 0.0
    %1790 = vmatpush1.msra.mxu0 0.0
    %1791 = vmatprep.subr.mxu0 0.0
    %1792 = vmatpush1.msra.mxu0 0.0
    %1793 = vmatprep.subr.mxu0 0.0
    %1794 = vmatpush1.msra.mxu0 0.0
    %1795 = vmatprep.subr.mxu0 0.0
    %1796 = vmatpush1.msra.mxu0 0.0
    %1797 = vmatprep.subr.mxu0 0.0
    %1798 = vmatpush1.msra.mxu0 0.0
    %1799 = vmatprep.subr.mxu0 0.0
    %1800 = vmatpush1.msra.mxu0 0.0
    %1801 = vmatprep.subr.mxu0 0.0
    %1802 = vmatpush1.msra.mxu0 0.0
    %1803 = vmatprep.subr.mxu0 0.0
    %1804 = vmatpush1.msra.mxu0 0.0
    %1805 = vmatprep.subr.mxu0 0.0
    %1806 = vmatpush1.msra.mxu0 0.0
    %1807 = vmatprep.subr.mxu0 0.0
    %1808 = vmatpush1.msra.mxu0 0.0
    %1809 = vmatprep.subr.mxu0 0.0
    %1810 = vmatpush1.msra.mxu0 0.0
    %1811 = vmatprep.subr.mxu0 0.0
    %1812 = vmatpush1.msra.mxu0 0.0
    %1813 = vmatprep.subr.mxu0 0.0
    %1814 = vmatpush1.msra.mxu0 0.0
    %1815 = vmatprep.subr.mxu0 0.0
    %1816 = vmatpush1.msra.mxu0 0.0
    %1817 = vmatprep.subr.mxu0 0.0
    %1818 = vmatpush1.msra.mxu0 0.0
    %1819 = vmatprep.subr.mxu0 0.0
    %1820 = vmatpush1.msra.mxu0 0.0
    %1821 = vmatprep.subr.mxu0 0.0
    %1822 = vmatpush1.msra.mxu0 0.0
    %1823 = vmatprep.subr.mxu0 0.0
    %1824 = vmatpush1.msra.mxu0 0.0
    %1825 = vmatprep.subr.mxu0 0.0
    %1826 = vmatpush1.msra.mxu0 0.0
    %1827 = vmatprep.mubr.f32.mxu0 0.0
    %1828 = vmatmul.mubr.f32.gmra.mrb[0].mxu0 %v752
    %v1829 = vpop.f32.mrb[0].mxu0
    %v1830 = vadd.f32 0.0, %v1829
    %v1831 = vpop.f32.mrb[0].mxu0
    %1832 = vmatprep.mubr.f32.mxu0 0.0
    %1833 = vmatmul.mubr.f32.gmra.mrb[0].mxu0 %v755
    %v1834 = vpop.f32.mrb[0].mxu0
    %v1835 = vadd.f32 0.0, %v1834
    %v1836 = vpop.f32.mrb[0].mxu0
    %1837 = vdwg.mxu0
    %v1838 = vld [vmem:[#allocation2 + $0x268] sm:$0xff]
    %v1839 = vld [vmem:[#allocation2 + $0x270] sm:$0xff]
    %v1840 = vld [vmem:[#allocation2 + $0x278] sm:$0xff]
    %v1841 = vld [vmem:[#allocation2 + $0x280] sm:$0xff]
    %v1842 = vld [vmem:[#allocation2 + $0x288] sm:$0x1]
    %v1843 = vlaneseq
    %v1844 = vshrl.u32 %v1843, 7
    %v1845 = vsub.s32 0, %v1844
    %v1846 = vrot.slane %v1842, %v1845
    %v1848 = vsel %vm134, %v1830, 0
    %v1851 = vsel %vm134, %v1835, 0
    %1853 = vmatprep.subr.mxu0 0.0
    %1854 = vmatpush1.msra.mxu0 %v1838
    %1855 = vmatprep.subr.mxu0 0.0
    %1856 = vmatpush1.msra.mxu0 %v1839
    %1857 = vmatprep.subr.mxu0 0.0
    %1858 = vmatpush1.msra.mxu0 %v1840
    %1859 = vmatprep.subr.mxu0 0.0
    %1860 = vmatpush1.msra.mxu0 %v1841
    %1861 = vmatprep.subr.mxu0 0.0
    %1862 = vmatpush1.msra.mxu0 0.0
    %1863 = vmatprep.subr.mxu0 0.0
    %1864 = vmatpush1.msra.mxu0 0.0
    %1865 = vmatprep.subr.mxu0 0.0
    %1866 = vmatpush1.msra.mxu0 0.0
    %1867 = vmatprep.subr.mxu0 0.0
    %1868 = vmatpush1.msra.mxu0 0.0
    %1869 = vmatprep.subr.mxu0 0.0
    %1870 = vmatpush1.msra.mxu0 0.0
    %1871 = vmatprep.subr.mxu0 0.0
    %1872 = vmatpush1.msra.mxu0 0.0
    %1873 = vmatprep.subr.mxu0 0.0
    %1874 = vmatpush1.msra.mxu0 0.0
    %1875 = vmatprep.subr.mxu0 0.0
    %1876 = vmatpush1.msra.mxu0 0.0
    %1877 = vmatprep.subr.mxu0 0.0
    %1878 = vmatpush1.msra.mxu0 0.0
    %1879 = vmatprep.subr.mxu0 0.0
    %1880 = vmatpush1.msra.mxu0 0.0
    %1881 = vmatprep.subr.mxu0 0.0
    %1882 = vmatpush1.msra.mxu0 0.0
    %1883 = vmatprep.subr.mxu0 0.0
    %1884 = vmatpush1.msra.mxu0 0.0
    %1885 = vmatprep.subr.mxu0 0.0
    %1886 = vmatpush1.msra.mxu0 0.0
    %1887 = vmatprep.subr.mxu0 0.0
    %1888 = vmatpush1.msra.mxu0 0.0
    %1889 = vmatprep.subr.mxu0 0.0
    %1890 = vmatpush1.msra.mxu0 0.0
    %1891 = vmatprep.subr.mxu0 0.0
    %1892 = vmatpush1.msra.mxu0 0.0
    %1893 = vmatprep.subr.mxu0 0.0
    %1894 = vmatpush1.msra.mxu0 0.0
    %1895 = vmatprep.subr.mxu0 0.0
    %1896 = vmatpush1.msra.mxu0 0.0
    %1897 = vmatprep.subr.mxu0 0.0
    %1898 = vmatpush1.msra.mxu0 0.0
    %1899 = vmatprep.subr.mxu0 0.0
    %1900 = vmatpush1.msra.mxu0 0.0
    %1901 = vmatprep.subr.mxu0 0.0
    %1902 = vmatpush1.msra.mxu0 0.0
    %1903 = vmatprep.subr.mxu0 0.0
    %1904 = vmatpush1.msra.mxu0 0.0
    %1905 = vmatprep.subr.mxu0 0.0
    %1906 = vmatpush1.msra.mxu0 0.0
    %1907 = vmatprep.subr.mxu0 0.0
    %1908 = vmatpush1.msra.mxu0 0.0
    %1909 = vmatprep.subr.mxu0 0.0
    %1910 = vmatpush1.msra.mxu0 0.0
    %1911 = vmatprep.subr.mxu0 0.0
    %1912 = vmatpush1.msra.mxu0 0.0
    %1913 = vmatprep.subr.mxu0 0.0
    %1914 = vmatpush1.msra.mxu0 0.0
    %1915 = vmatprep.subr.mxu0 0.0
    %1916 = vmatpush1.msra.mxu0 0.0
    %1917 = vmatprep.mubr.f32.mxu0 0.0
    %1918 = vmatmul.mubr.f32.gmra.mrb[0].mxu0 %v1848
    %v1919 = vpop.f32.mrb[0].mxu0
    %v1920 = vadd.f32 %v1846, %v1919
    %v1921 = vpop.f32.mrb[0].mxu0
    %1922 = vmatprep.mubr.f32.mxu0 0.0
    %1923 = vmatmul.mubr.f32.gmra.mrb[0].mxu0 %v1851
    %v1924 = vpop.f32.mrb[0].mxu0
    %v1925 = vadd.f32 %v1846, %v1924
    %v1926 = vpop.f32.mrb[0].mxu0
    %1927 = vdwg.mxu0
    %v1928 = vadd.f32 %v1920, %v1193
    %v1929 = vadd.f32 %v1925, %v1194
    %v1930 = vsel %vm134, %v1928, 0.0
    %1931 = vadd.xlane.f32.xlu0 %v1930
    %v1932 = vpop.xlane.xlu0 %1931
    %v1933 = vsel %vm134, %v1929, 0.0
    %1934 = vadd.xlane.f32.xlu0 %v1933
    %v1935 = vpop.xlane.xlu0 %1934
    %v1936 = vmul.f32 %v1932, %v930
    %v1937 = vmul.f32 %v1935, %v930
    %v1938 = vsub.f32 %v1928, %v1936
    %v1939 = vsub.f32 %v1929, %v1937
    %v1940 = vmul.f32 %v1938, %v1938
    %v1941 = vmul.f32 %v1939, %v1939
    %v1942 = vsel %vm134, %v1940, 0.0
    %1943 = vadd.xlane.f32.xlu0 %v1942
    %v1944 = vpop.xlane.xlu0 %1943
    %v1945 = vsel %vm134, %v1941, 0.0
    %1946 = vadd.xlane.f32.xlu0 %v1945
    %v1947 = vpop.xlane.xlu0 %1946
    %v1948 = vmul.f32 %v1944, %v930
    %v1949 = vmul.f32 %v1947, %v930
    %v1950 = vadd.f32 %v1948, 1e-05
    %v1951 = vadd.f32 %v1949, 1e-05
    %v1952 = vrsqrt.pop %v1950
    %v1953 = vrsqrt.pop %v1951
    %v1954 = vmul.f32 %v1938, %v1952
    %v1955 = vmul.f32 %v1939, %v1953
    %v1956 = vld [vmem:[#allocation2 + $0x290] sm:$0x1]
    %v1957 = vlaneseq
    %v1958 = vshrl.u32 %v1957, 7
    %v1959 = vsub.s32 0, %v1958
    %v1960 = vrot.slane %v1956, %v1959
    %v1961 = vmul.f32 %v1954, %v1960
    %v1962 = vmul.f32 %v1955, %v1960
    %v1963 = vld [vmem:[#allocation2 + $0x298] sm:$0x1]
    %v1964 = vlaneseq
    %v1965 = vshrl.u32 %v1964, 7
    %v1966 = vsub.s32 0, %v1965
    %v1967 = vrot.slane %v1963, %v1966
    %v1968 = vadd.f32 %v1961, %v1967
    %v1969 = vadd.f32 %v1962, %v1967
    %v1970 = vld [vmem:[#allocation2 + $0x2b0] sm:$0xff]
    %v1971 = vld [vmem:[#allocation2 + $0x2b8] sm:$0xff]
    %v1972 = vld [vmem:[#allocation2 + $0x2c0] sm:$0xff]
    %v1973 = vld [vmem:[#allocation2 + $0x2c8] sm:$0xff]
    %v1974 = vld [vmem:[#allocation2 + $0x2d0] sm:$0x1]
    %v1975 = vlaneseq
    %v1976 = vshrl.u32 %v1975, 7
    %v1977 = vsub.s32 0, %v1976
    %v1978 = vrot.slane %v1974, %v1977
    %v1980 = vsel %vm134, %v1968, 0
    %v1983 = vsel %vm134, %v1969, 0
    %1985 = vmatprep.subr.mxu0 0.0
    %1986 = vmatpush1.msra.mxu0 %v1970
    %1987 = vmatprep.subr.mxu0 0.0
    %1988 = vmatpush1.msra.mxu0 %v1971
    %1989 = vmatprep.subr.mxu0 0.0
    %1990 = vmatpush1.msra.mxu0 %v1972
    %1991 = vmatprep.subr.mxu0 0.0
    %1992 = vmatpush1.msra.mxu0 %v1973
    %1993 = vmatprep.subr.mxu0 0.0
    %1994 = vmatpush1.msra.mxu0 0.0
    %1995 = vmatprep.subr.mxu0 0.0
    %1996 = vmatpush1.msra.mxu0 0.0
    %1997 = vmatprep.subr.mxu0 0.0
    %1998 = vmatpush1.msra.mxu0 0.0
    %1999 = vmatprep.subr.mxu0 0.0
    %2000 = vmatpush1.msra.mxu0 0.0
    %2001 = vmatprep.subr.mxu0 0.0
    %2002 = vmatpush1.msra.mxu0 0.0
    %2003 = vmatprep.subr.mxu0 0.0
    %2004 = vmatpush1.msra.mxu0 0.0
    %2005 = vmatprep.subr.mxu0 0.0
    %2006 = vmatpush1.msra.mxu0 0.0
    %2007 = vmatprep.subr.mxu0 0.0
    %2008 = vmatpush1.msra.mxu0 0.0
    %2009 = vmatprep.subr.mxu0 0.0
    %2010 = vmatpush1.msra.mxu0 0.0
    %2011 = vmatprep.subr.mxu0 0.0
    %2012 = vmatpush1.msra.mxu0 0.0
    %2013 = vmatprep.subr.mxu0 0.0
    %2014 = vmatpush1.msra.mxu0 0.0
    %2015 = vmatprep.subr.mxu0 0.0
    %2016 = vmatpush1.msra.mxu0 0.0
    %2017 = vmatprep.subr.mxu0 0.0
    %2018 = vmatpush1.msra.mxu0 0.0
    %2019 = vmatprep.subr.mxu0 0.0
    %2020 = vmatpush1.msra.mxu0 0.0
    %2021 = vmatprep.subr.mxu0 0.0
    %2022 = vmatpush1.msra.mxu0 0.0
    %2023 = vmatprep.subr.mxu0 0.0
    %2024 = vmatpush1.msra.mxu0 0.0
    %2025 = vmatprep.subr.mxu0 0.0
    %2026 = vmatpush1.msra.mxu0 0.0
    %2027 = vmatprep.subr.mxu0 0.0
    %2028 = vmatpush1.msra.mxu0 0.0
    %2029 = vmatprep.subr.mxu0 0.0
    %2030 = vmatpush1.msra.mxu0 0.0
    %2031 = vmatprep.subr.mxu0 0.0
    %2032 = vmatpush1.msra.mxu0 0.0
    %2033 = vmatprep.subr.mxu0 0.0
    %2034 = vmatpush1.msra.mxu0 0.0
    %2035 = vmatprep.subr.mxu0 0.0
    %2036 = vmatpush1.msra.mxu0 0.0
    %2037 = vmatprep.subr.mxu0 0.0
    %2038 = vmatpush1.msra.mxu0 0.0
    %2039 = vmatprep.subr.mxu0 0.0
    %2040 = vmatpush1.msra.mxu0 0.0
    %2041 = vmatprep.subr.mxu0 0.0
    %2042 = vmatpush1.msra.mxu0 0.0
    %2043 = vmatprep.subr.mxu0 0.0
    %2044 = vmatpush1.msra.mxu0 0.0
    %2045 = vmatprep.subr.mxu0 0.0
    %2046 = vmatpush1.msra.mxu0 0.0
    %2047 = vmatprep.subr.mxu0 0.0
    %2048 = vmatpush1.msra.mxu0 0.0
    %2049 = vmatprep.mubr.f32.mxu0 0.0
    %2050 = vmatmul.mubr.f32.gmra.mrb[0].mxu0 %v1980
    %v2051 = vpop.f32.mrb[0].mxu0
    %v2052 = vadd.f32 %v1978, %v2051
    %v2053 = vpop.f32.mrb[0].mxu0
    %2054 = vmatprep.mubr.f32.mxu0 0.0
    %2055 = vmatmul.mubr.f32.gmra.mrb[0].mxu0 %v1983
    %v2056 = vpop.f32.mrb[0].mxu0
    %v2057 = vadd.f32 %v1978, %v2056
    %v2058 = vpop.f32.mrb[0].mxu0
    %2059 = vdwg.mxu0
    %v2060 = vmax.f32 %v2052, 0.0
    %v2061 = vmax.f32 %v2057, 0.0
    %v2062 = vld [vmem:[#allocation2 + $0x2d8] sm:$0xff]
    %v2063 = vld [vmem:[#allocation2 + $0x2e0] sm:$0xff]
    %v2064 = vld [vmem:[#allocation2 + $0x2e8] sm:$0xff]
    %v2065 = vld [vmem:[#allocation2 + $0x2f0] sm:$0xff]
    %v2066 = vld [vmem:[#allocation2 + $0x2f8] sm:$0xff]
    %v2067 = vld [vmem:[#allocation2 + $0x300] sm:$0xff]
    %v2068 = vld [vmem:[#allocation2 + $0x308] sm:$0xff]
    %v2069 = vld [vmem:[#allocation2 + $0x310] sm:$0xff]
    %v2070 = vld [vmem:[#allocation2 + $0x318] sm:$0xff]
    %v2071 = vld [vmem:[#allocation2 + $0x320] sm:$0xff]
    %v2072 = vld [vmem:[#allocation2 + $0x328] sm:$0xff]
    %v2073 = vld [vmem:[#allocation2 + $0x330] sm:$0xff]
    %v2074 = vld [vmem:[#allocation2 + $0x338] sm:$0xff]
    %v2075 = vld [vmem:[#allocation2 + $0x340] sm:$0xff]
    %v2076 = vld [vmem:[#allocation2 + $0x348] sm:$0xff]
    %v2077 = vld [vmem:[#allocation2 + $0x350] sm:$0xff]
    %v2078 = vld [vmem:[#allocation2 + $0x358] sm:$0x1]
    %v2079 = vlaneseq
    %v2080 = vshrl.u32 %v2079, 7
    %v2081 = vsub.s32 0, %v2080
    %v2082 = vrot.slane %v2078, %v2081
    %2083 = vmatprep.subr.mxu0 0.0
    %2084 = vmatpush1.msra.mxu0 %v2062
    %2085 = vmatprep.subr.mxu0 0.0
    %2086 = vmatpush1.msra.mxu0 %v2063
    %2087 = vmatprep.subr.mxu0 0.0
    %2088 = vmatpush1.msra.mxu0 %v2064
    %2089 = vmatprep.subr.mxu0 0.0
    %2090 = vmatpush1.msra.mxu0 %v2065
    %2091 = vmatprep.subr.mxu0 0.0
    %2092 = vmatpush1.msra.mxu0 %v2066
    %2093 = vmatprep.subr.mxu0 0.0
    %2094 = vmatpush1.msra.mxu0 %v2067
    %2095 = vmatprep.subr.mxu0 0.0
    %2096 = vmatpush1.msra.mxu0 %v2068
    %2097 = vmatprep.subr.mxu0 0.0
    %2098 = vmatpush1.msra.mxu0 %v2069
    %2099 = vmatprep.subr.mxu0 0.0
    %2100 = vmatpush1.msra.mxu0 %v2070
    %2101 = vmatprep.subr.mxu0 0.0
    %2102 = vmatpush1.msra.mxu0 %v2071
    %2103 = vmatprep.subr.mxu0 0.0
    %2104 = vmatpush1.msra.mxu0 %v2072
    %2105 = vmatprep.subr.mxu0 0.0
    %2106 = vmatpush1.msra.mxu0 %v2073
    %2107 = vmatprep.subr.mxu0 0.0
    %2108 = vmatpush1.msra.mxu0 %v2074
    %2109 = vmatprep.subr.mxu0 0.0
    %2110 = vmatpush1.msra.mxu0 %v2075
    %2111 = vmatprep.subr.mxu0 0.0
    %2112 = vmatpush1.msra.mxu0 %v2076
    %2113 = vmatprep.subr.mxu0 0.0
    %2114 = vmatpush1.msra.mxu0 %v2077
    %2115 = vmatprep.subr.mxu0 0.0
    %2116 = vmatpush1.msra.mxu0 0.0
    %2117 = vmatprep.subr.mxu0 0.0
    %2118 = vmatpush1.msra.mxu0 0.0
    %2119 = vmatprep.subr.mxu0 0.0
    %2120 = vmatpush1.msra.mxu0 0.0
    %2121 = vmatprep.subr.mxu0 0.0
    %2122 = vmatpush1.msra.mxu0 0.0
    %2123 = vmatprep.subr.mxu0 0.0
    %2124 = vmatpush1.msra.mxu0 0.0
    %2125 = vmatprep.subr.mxu0 0.0
    %2126 = vmatpush1.msra.mxu0 0.0
    %2127 = vmatprep.subr.mxu0 0.0
    %2128 = vmatpush1.msra.mxu0 0.0
    %2129 = vmatprep.subr.mxu0 0.0
    %2130 = vmatpush1.msra.mxu0 0.0
    %2131 = vmatprep.subr.mxu0 0.0
    %2132 = vmatpush1.msra.mxu0 0.0
    %2133 = vmatprep.subr.mxu0 0.0
    %2134 = vmatpush1.msra.mxu0 0.0
    %2135 = vmatprep.subr.mxu0 0.0
    %2136 = vmatpush1.msra.mxu0 0.0
    %2137 = vmatprep.subr.mxu0 0.0
    %2138 = vmatpush1.msra.mxu0 0.0
    %2139 = vmatprep.subr.mxu0 0.0
    %2140 = vmatpush1.msra.mxu0 0.0
    %2141 = vmatprep.subr.mxu0 0.0
    %2142 = vmatpush1.msra.mxu0 0.0
    %2143 = vmatprep.subr.mxu0 0.0
    %2144 = vmatpush1.msra.mxu0 0.0
    %2145 = vmatprep.subr.mxu0 0.0
    %2146 = vmatpush1.msra.mxu0 0.0
    %2147 = vmatprep.mubr.f32.mxu0 0.0
    %2148 = vmatmul.mubr.f32.gmra.mrb[0].mxu0 %v2060
    %v2149 = vpop.f32.mrb[0].mxu0
    %v2150 = vadd.f32 %v2082, %v2149
    %v2151 = vpop.f32.mrb[0].mxu0
    %2152 = vmatprep.mubr.f32.mxu0 0.0
    %2153 = vmatmul.mubr.f32.gmra.mrb[0].mxu0 %v2061
    %v2154 = vpop.f32.mrb[0].mxu0
    %v2155 = vadd.f32 %v2082, %v2154
    %v2156 = vpop.f32.mrb[0].mxu0
    %2157 = vdwg.mxu0
    %v2158 = vadd.f32 %v2150, %v1968
    %v2159 = vadd.f32 %v2155, %v1969
    %v2160 = vsel %vm134, %v2158, 0.0
    %2161 = vadd.xlane.f32.xlu0 %v2160
    %v2162 = vpop.xlane.xlu0 %2161
    %v2163 = vsel %vm134, %v2159, 0.0
    %2164 = vadd.xlane.f32.xlu0 %v2163
    %v2165 = vpop.xlane.xlu0 %2164
    %v2166 = vmul.f32 %v2162, %v930
    %v2167 = vmul.f32 %v2165, %v930
    %v2168 = vsub.f32 %v2158, %v2166
    %v2169 = vsub.f32 %v2159, %v2167
    %v2170 = vmul.f32 %v2168, %v2168
    %v2171 = vmul.f32 %v2169, %v2169
    %v2172 = vsel %vm134, %v2170, 0.0
    %2173 = vadd.xlane.f32.xlu0 %v2172
    %v2174 = vpop.xlane.xlu0 %2173
    %v2175 = vsel %vm134, %v2171, 0.0
    %2176 = vadd.xlane.f32.xlu0 %v2175
    %v2177 = vpop.xlane.xlu0 %2176
    %v2178 = vmul.f32 %v2174, %v930
    %v2179 = vmul.f32 %v2177, %v930
    %v2180 = vadd.f32 %v2178, 1e-05
    %v2181 = vadd.f32 %v2179, 1e-05
    %v2182 = vrsqrt.pop %v2180
    %v2183 = vrsqrt.pop %v2181
    %v2184 = vmul.f32 %v2168, %v2182
    %v2185 = vmul.f32 %v2169, %v2183
    %v2186 = vld [vmem:[#allocation2 + $0x2a0] sm:$0x1]
    %v2187 = vlaneseq
    %v2188 = vshrl.u32 %v2187, 7
    %v2189 = vsub.s32 0, %v2188
    %v2190 = vrot.slane %v2186, %v2189
    %v2191 = vmul.f32 %v2184, %v2190
    %v2192 = vmul.f32 %v2185, %v2190
    %v2193 = vld [vmem:[#allocation2 + $0x2a8] sm:$0x1]
    %v2194 = vlaneseq
    %v2195 = vshrl.u32 %v2194, 7
    %v2196 = vsub.s32 0, %v2195
    %v2197 = vrot.slane %v2193, %v2196
    %v2198 = vadd.f32 %v2191, %v2197
    %v2199 = vadd.f32 %v2192, %v2197
    %v2200 = vld [vmem:[%s1] sm:$0xff]
    %v2201 = vld [vmem:[%s1 + $0x8] sm:$0xff]
    %2202 = vset.pattern.permute.xlu0 0
    %2203 = vperm.xlu0 %2202, %v2200
    %v2204 = vpop.permute.xlu0 %2203
    %2205 = vset.pattern.permute.xlu0 0
    %2206 = vperm.xlu0 %2205, %v2201
    %v2207 = vpop.permute.xlu0 %2206
    %vm2208 = vcmp.eq.s32.totalorder %v32, %v2204
    %vm2209 = vcmp.eq.s32.totalorder %v32, %v2207
    %v2210 = vsel %vm2208, 1, 0
    %v2211 = vsel %vm2209, 1, 0
    %v2212 = vcvt.s32.f32 %v2210
    %v2213 = vcvt.s32.f32 %v2211
    %v2214 = vld [vmem:[#allocation2 + $0x18] sm:$0xff]
    %v2215 = vld [vmem:[#allocation2 + $0x20] sm:$0xff]
    %v2216 = vld [vmem:[#allocation2 + $0x28] sm:$0xff]
    %v2217 = vld [vmem:[#allocation2 + $0x30] sm:$0xff]
    %v2219 = vsel %vm232, %v2212, 0
    %v2222 = vsel %vm232, %v2213, 0
    %2224 = vmatprep.subr.mxu0 0.0
    %2225 = vmatpush1.msra.mxu0 %v2214
    %2226 = vmatprep.subr.mxu0 0.0
    %2227 = vmatpush1.msra.mxu0 %v2215
    %2228 = vmatprep.subr.mxu0 0.0
    %2229 = vmatpush1.msra.mxu0 0.0
    %2230 = vmatprep.subr.mxu0 0.0
    %2231 = vmatpush1.msra.mxu0 0.0
    %2232 = vmatprep.subr.mxu0 0.0
    %2233 = vmatpush1.msra.mxu0 0.0
    %2234 = vmatprep.subr.mxu0 0.0
    %2235 = vmatpush1.msra.mxu0 0.0
    %2236 = vmatprep.subr.mxu0 0.0
    %2237 = vmatpush1.msra.mxu0 0.0
    %2238 = vmatprep.subr.mxu0 0.0
    %2239 = vmatpush1.msra.mxu0 0.0
    %2240 = vmatprep.subr.mxu0 0.0
    %2241 = vmatpush1.msra.mxu0 0.0
    %2242 = vmatprep.subr.mxu0 0.0
    %2243 = vmatpush1.msra.mxu0 0.0
    %2244 = vmatprep.subr.mxu0 0.0
    %2245 = vmatpush1.msra.mxu0 0.0
    %2246 = vmatprep.subr.mxu0 0.0
    %2247 = vmatpush1.msra.mxu0 0.0
    %2248 = vmatprep.subr.mxu0 0.0
    %2249 = vmatpush1.msra.mxu0 0.0
    %2250 = vmatprep.subr.mxu0 0.0
    %2251 = vmatpush1.msra.mxu0 0.0
    %2252 = vmatprep.subr.mxu0 0.0
    %2253 = vmatpush1.msra.mxu0 0.0
    %2254 = vmatprep.subr.mxu0 0.0
    %2255 = vmatpush1.msra.mxu0 0.0
    %2256 = vmatprep.subr.mxu0 0.0
    %2257 = vmatpush1.msra.mxu0 0.0
    %2258 = vmatprep.subr.mxu0 0.0
    %2259 = vmatpush1.msra.mxu0 0.0
    %2260 = vmatprep.subr.mxu0 0.0
    %2261 = vmatpush1.msra.mxu0 0.0
    %2262 = vmatprep.subr.mxu0 0.0
    %2263 = vmatpush1.msra.mxu0 0.0
    %2264 = vmatprep.subr.mxu0 0.0
    %2265 = vmatpush1.msra.mxu0 0.0
    %2266 = vmatprep.subr.mxu0 0.0
    %2267 = vmatpush1.msra.mxu0 0.0
    %2268 = vmatprep.subr.mxu0 0.0
    %2269 = vmatpush1.msra.mxu0 0.0
    %2270 = vmatprep.subr.mxu0 0.0
    %2271 = vmatpush1.msra.mxu0 0.0
    %2272 = vmatprep.subr.mxu0 0.0
    %2273 = vmatpush1.msra.mxu0 0.0
    %2274 = vmatprep.subr.mxu0 0.0
    %2275 = vmatpush1.msra.mxu0 0.0
    %2276 = vmatprep.subr.mxu0 0.0
    %2277 = vmatpush1.msra.mxu0 0.0
    %2278 = vmatprep.subr.mxu0 0.0
    %2279 = vmatpush1.msra.mxu0 0.0
    %2280 = vmatprep.subr.mxu0 0.0
    %2281 = vmatpush1.msra.mxu0 0.0
    %2282 = vmatprep.subr.mxu0 0.0
    %2283 = vmatpush1.msra.mxu0 0.0
    %2284 = vmatprep.subr.mxu0 0.0
    %2285 = vmatpush1.msra.mxu0 0.0
    %2286 = vmatprep.subr.mxu0 0.0
    %2287 = vmatpush1.msra.mxu0 0.0
    %2288 = vmatprep.mubr.f32.mxu0 0.0
    %2289 = vmatmul.mubr.f32.gmra.mrb[0].mxu0 %v2219
    %v2290 = vpop.f32.mrb[0].mxu0
    %v2291 = vadd.f32 %v2216, %v2290
    %v2292 = vpop.f32.mrb[0].mxu0
    %2293 = vmatprep.mubr.f32.mxu0 0.0
    %2294 = vmatmul.mubr.f32.gmra.mrb[0].mxu0 %v2222
    %v2295 = vpop.f32.mrb[0].mxu0
    %v2296 = vadd.f32 %v2217, %v2295
    %v2297 = vpop.f32.mrb[0].mxu0
    %2298 = vdwg.mxu0
    %v2299 = vld [vmem:[#allocation2 + $0x360] sm:$0xff]
    %v2300 = vld [vmem:[#allocation2 + $0x368] sm:$0xff]
    %v2301 = vld [vmem:[#allocation2 + $0x370] sm:$0xff]
    %v2302 = vld [vmem:[#allocation2 + $0x378] sm:$0xff]
    %v2304 = vsel %vm134, %v2291, 0
    %v2307 = vsel %vm134, %v2296, 0
    %2309 = vmatprep.subr.mxu0 0.0
    %2310 = vmatpush1.msra.mxu0 %v2299
    %2311 = vmatprep.subr.mxu0 0.0
    %2312 = vmatpush1.msra.mxu0 %v2300
    %2313 = vmatprep.subr.mxu0 0.0
    %2314 = vmatpush1.msra.mxu0 %v2301
    %2315 = vmatprep.subr.mxu0 0.0
    %2316 = vmatpush1.msra.mxu0 %v2302
    %2317 = vmatprep.subr.mxu0 0.0
    %2318 = vmatpush1.msra.mxu0 0.0
    %2319 = vmatprep.subr.mxu0 0.0
    %2320 = vmatpush1.msra.mxu0 0.0
    %2321 = vmatprep.subr.mxu0 0.0
    %2322 = vmatpush1.msra.mxu0 0.0
    %2323 = vmatprep.subr.mxu0 0.0
    %2324 = vmatpush1.msra.mxu0 0.0
    %2325 = vmatprep.subr.mxu0 0.0
    %2326 = vmatpush1.msra.mxu0 0.0
    %2327 = vmatprep.subr.mxu0 0.0
    %2328 = vmatpush1.msra.mxu0 0.0
    %2329 = vmatprep.subr.mxu0 0.0
    %2330 = vmatpush1.msra.mxu0 0.0
    %2331 = vmatprep.subr.mxu0 0.0
    %2332 = vmatpush1.msra.mxu0 0.0
    %2333 = vmatprep.subr.mxu0 0.0
    %2334 = vmatpush1.msra.mxu0 0.0
    %2335 = vmatprep.subr.mxu0 0.0
    %2336 = vmatpush1.msra.mxu0 0.0
    %2337 = vmatprep.subr.mxu0 0.0
    %2338 = vmatpush1.msra.mxu0 0.0
    %2339 = vmatprep.subr.mxu0 0.0
    %2340 = vmatpush1.msra.mxu0 0.0
    %2341 = vmatprep.subr.mxu0 0.0
    %2342 = vmatpush1.msra.mxu0 0.0
    %2343 = vmatprep.subr.mxu0 0.0
    %2344 = vmatpush1.msra.mxu0 0.0
    %2345 = vmatprep.subr.mxu0 0.0
    %2346 = vmatpush1.msra.mxu0 0.0
    %2347 = vmatprep.subr.mxu0 0.0
    %2348 = vmatpush1.msra.mxu0 0.0
    %2349 = vmatprep.subr.mxu0 0.0
    %2350 = vmatpush1.msra.mxu0 0.0
    %2351 = vmatprep.subr.mxu0 0.0
    %2352 = vmatpush1.msra.mxu0 0.0
    %2353 = vmatprep.subr.mxu0 0.0
    %2354 = vmatpush1.msra.mxu0 0.0
    %2355 = vmatprep.subr.mxu0 0.0
    %2356 = vmatpush1.msra.mxu0 0.0
    %2357 = vmatprep.subr.mxu0 0.0
    %2358 = vmatpush1.msra.mxu0 0.0
    %2359 = vmatprep.subr.mxu0 0.0
    %2360 = vmatpush1.msra.mxu0 0.0
    %2361 = vmatprep.subr.mxu0 0.0
    %2362 = vmatpush1.msra.mxu0 0.0
    %2363 = vmatprep.subr.mxu0 0.0
    %2364 = vmatpush1.msra.mxu0 0.0
    %2365 = vmatprep.subr.mxu0 0.0
    %2366 = vmatpush1.msra.mxu0 0.0
    %2367 = vmatprep.subr.mxu0 0.0
    %2368 = vmatpush1.msra.mxu0 0.0
    %2369 = vmatprep.subr.mxu0 0.0
    %2370 = vmatpush1.msra.mxu0 0.0
    %2371 = vmatprep.subr.mxu0 0.0
    %2372 = vmatpush1.msra.mxu0 0.0
    %2373 = vmatprep.mubr.f32.mxu0 0.0
    %2374 = vmatmul.mubr.f32.gmra.mrb[0].mxu0 %v2304
    %v2375 = vpop.f32.mrb[0].mxu0
    %v2376 = vadd.f32 0.0, %v2375
    %v2377 = vpop.f32.mrb[0].mxu0
    %2378 = vmatprep.mubr.f32.mxu0 0.0
    %2379 = vmatmul.mubr.f32.gmra.mrb[0].mxu0 %v2307
    %v2380 = vpop.f32.mrb[0].mxu0
    %v2381 = vadd.f32 0.0, %v2380
    %v2382 = vpop.f32.mrb[0].mxu0
    %2383 = vdwg.mxu0
    %2384 = vmatprep.subr.mxu0 0.0
    %2385 = vmatpush1.msra.mxu0 %v2376
    %2386 = vmatprep.subr.mxu0 0.0
    %2387 = vmatpush1.msra.mxu0 %v2381
    %2388 = vmatprep.subr.mxu0 0.0
    %2389 = vmatpush1.msra.mxu0 0.0
    %2390 = vmatprep.subr.mxu0 0.0
    %2391 = vmatpush1.msra.mxu0 0.0
    %2392 = vmatprep.subr.mxu0 0.0
    %2393 = vmatpush1.msra.mxu0 0.0
    %2394 = vmatprep.subr.mxu0 0.0
    %2395 = vmatpush1.msra.mxu0 0.0
    %2396 = vmatprep.subr.mxu0 0.0
    %2397 = vmatpush1.msra.mxu0 0.0
    %2398 = vmatprep.subr.mxu0 0.0
    %2399 = vmatpush1.msra.mxu0 0.0
    %2400 = vmatprep.subr.mxu0 0.0
    %2401 = vmatpush1.msra.mxu0 0.0
    %2402 = vmatprep.subr.mxu0 0.0
    %2403 = vmatpush1.msra.mxu0 0.0
    %2404 = vmatprep.subr.mxu0 0.0
    %2405 = vmatpush1.msra.mxu0 0.0
    %2406 = vmatprep.subr.mxu0 0.0
    %2407 = vmatpush1.msra.mxu0 0.0
    %2408 = vmatprep.subr.mxu0 0.0
    %2409 = vmatpush1.msra.mxu0 0.0
    %2410 = vmatprep.subr.mxu0 0.0
    %2411 = vmatpush1.msra.mxu0 0.0
    %2412 = vmatprep.subr.mxu0 0.0
    %2413 = vmatpush1.msra.mxu0 0.0
    %2414 = vmatprep.subr.mxu0 0.0
    %2415 = vmatpush1.msra.mxu0 0.0
    %2416 = vmatprep.subr.mxu0 0.0
    %2417 = vmatpush1.msra.mxu0 0.0
    %2418 = vmatprep.subr.mxu0 0.0
    %2419 = vmatpush1.msra.mxu0 0.0
    %2420 = vmatprep.subr.mxu0 0.0
    %2421 = vmatpush1.msra.mxu0 0.0
    %2422 = vmatprep.subr.mxu0 0.0
    %2423 = vmatpush1.msra.mxu0 0.0
    %2424 = vmatprep.subr.mxu0 0.0
    %2425 = vmatpush1.msra.mxu0 0.0
    %2426 = vmatprep.subr.mxu0 0.0
    %2427 = vmatpush1.msra.mxu0 0.0
    %2428 = vmatprep.subr.mxu0 0.0
    %2429 = vmatpush1.msra.mxu0 0.0
    %2430 = vmatprep.subr.mxu0 0.0
    %2431 = vmatpush1.msra.mxu0 0.0
    %2432 = vmatprep.subr.mxu0 0.0
    %2433 = vmatpush1.msra.mxu0 0.0
    %2434 = vmatprep.subr.mxu0 0.0
    %2435 = vmatpush1.msra.mxu0 0.0
    %2436 = vmatprep.subr.mxu0 0.0
    %2437 = vmatpush1.msra.mxu0 0.0
    %2438 = vmatprep.subr.mxu0 0.0
    %2439 = vmatpush1.msra.mxu0 0.0
    %2440 = vmatprep.subr.mxu0 0.0
    %2441 = vmatpush1.msra.mxu0 0.0
    %2442 = vmatprep.subr.mxu0 0.0
    %2443 = vmatpush1.msra.mxu0 0.0
    %2444 = vmatprep.subr.mxu0 0.0
    %2445 = vmatpush1.msra.mxu0 0.0
    %2446 = vmatprep.subr.mxu0 0.0
    %2447 = vmatpush1.msra.mxu0 0.0
    %2448 = vmatprep.mubr.f32.mxu0 0.0
    %2449 = vmatmul.mubr.f32.gmra.mrb[0].mxu0 %v234
    %v2450 = vpop.f32.mrb[0].mxu0
    %v2451 = vadd.f32 0.0, %v2450
    %v2452 = vpop.f32.mrb[0].mxu0
    %2453 = vmatprep.mubr.f32.mxu0 0.0
    %2454 = vmatmul.mubr.f32.gmra.mrb[0].mxu0 %v237
    %v2455 = vpop.f32.mrb[0].mxu0
    %v2456 = vadd.f32 0.0, %v2455
    %v2457 = vpop.f32.mrb[0].mxu0
    %2458 = vmatprep.mubr.f32.mxu0 0.0
    %2459 = vmatmul.mubr.f32.gmra.mrb[0].mxu0 %v240
    %v2460 = vpop.f32.mrb[0].mxu0
    %v2461 = vadd.f32 0.0, %v2460
    %v2462 = vpop.f32.mrb[0].mxu0
    %2463 = vmatprep.mubr.f32.mxu0 0.0
    %2464 = vmatmul.mubr.f32.gmra.mrb[0].mxu0 %v243
    %v2465 = vpop.f32.mrb[0].mxu0
    %v2466 = vadd.f32 0.0, %v2465
    %v2467 = vpop.f32.mrb[0].mxu0
    %2468 = vmatprep.mubr.f32.mxu0 0.0
    %2469 = vmatmul.mubr.f32.gmra.mrb[0].mxu0 %v246
    %v2470 = vpop.f32.mrb[0].mxu0
    %v2471 = vadd.f32 0.0, %v2470
    %v2472 = vpop.f32.mrb[0].mxu0
    %2473 = vmatprep.mubr.f32.mxu0 0.0
    %2474 = vmatmul.mubr.f32.gmra.mrb[0].mxu0 %v249
    %v2475 = vpop.f32.mrb[0].mxu0
    %v2476 = vadd.f32 0.0, %v2475
    %v2477 = vpop.f32.mrb[0].mxu0
    %2478 = vmatprep.mubr.f32.mxu0 0.0
    %2479 = vmatmul.mubr.f32.gmra.mrb[0].mxu0 %v252
    %v2480 = vpop.f32.mrb[0].mxu0
    %v2481 = vadd.f32 0.0, %v2480
    %v2482 = vpop.f32.mrb[0].mxu0
    %2483 = vmatprep.mubr.f32.mxu0 0.0
    %2484 = vmatmul.mubr.f32.gmra.mrb[0].mxu0 %v255
    %v2485 = vpop.f32.mrb[0].mxu0
    %v2486 = vadd.f32 0.0, %v2485
    %v2487 = vpop.f32.mrb[0].mxu0
    %2488 = vdwg.mxu0
    %v2489 = vmul.f32 %v2451, %v216
    %v2490 = vmul.f32 %v2456, %v217
    %v2491 = vmul.f32 %v2461, %v218
    %v2492 = vmul.f32 %v2466, %v219
    %v2493 = vmul.f32 %v2471, %v220
    %v2494 = vmul.f32 %v2476, %v221
    %v2495 = vmul.f32 %v2481, %v222
    %v2496 = vmul.f32 %v2486, %v223
    %2499 = vrot.lane.b32.xlu0 %v2376, 96
    %v2500 = vpop.permute.xlu0 %2499
    %2501 = vrot.lane.b32.xlu0 %v2381, 96
    %v2502 = vpop.permute.xlu0 %2501
    %v2504 = vsel %vm134, %v2489, 0
    %v2507 = vsel %vm134, %v2490, 0
    %v2510 = vsel %vm134, %v2491, 0
    %v2513 = vsel %vm134, %v2492, 0
    %v2516 = vsel %vm134, %v2493, 0
    %v2519 = vsel %vm134, %v2494, 0
    %v2522 = vsel %vm134, %v2495, 0
    %v2525 = vsel %vm134, %v2496, 0
    %v2527 = vsel %vm134, %v2500, 0
    %v2529 = vsel %vm134, %v2502, 0
    %2531 = vmatprep.subr.mxu0 0.0
    %2532 = vmatpush1.xpose.msra.mxu0 %v2527
    %2533 = vmatprep.subr.mxu0 0.0
    %2534 = vmatpush1.xpose.msra.mxu0 %v2529
    %2535 = vmatprep.subr.mxu0 0.0
    %2536 = vmatpush1.xpose.msra.mxu0 0.0
    %2537 = vmatprep.subr.mxu0 0.0
    %2538 = vmatpush1.xpose.msra.mxu0 0.0
    %2539 = vmatprep.subr.mxu0 0.0
    %2540 = vmatpush1.xpose.msra.mxu0 0.0
    %2541 = vmatprep.subr.mxu0 0.0
    %2542 = vmatpush1.xpose.msra.mxu0 0.0
    %2543 = vmatprep.subr.mxu0 0.0
    %2544 = vmatpush1.xpose.msra.mxu0 0.0
    %2545 = vmatprep.subr.mxu0 0.0
    %2546 = vmatpush1.xpose.msra.mxu0 0.0
    %2547 = vmatprep.subr.mxu0 0.0
    %2548 = vmatpush1.xpose.msra.mxu0 0.0
    %2549 = vmatprep.subr.mxu0 0.0
    %2550 = vmatpush1.xpose.msra.mxu0 0.0
    %2551 = vmatprep.subr.mxu0 0.0
    %2552 = vmatpush1.xpose.msra.mxu0 0.0
    %2553 = vmatprep.subr.mxu0 0.0
    %2554 = vmatpush1.xpose.msra.mxu0 0.0
    %2555 = vmatprep.subr.mxu0 0.0
    %2556 = vmatpush1.xpose.msra.mxu0 0.0
    %2557 = vmatprep.subr.mxu0 0.0
    %2558 = vmatpush1.xpose.msra.mxu0 0.0
    %2559 = vmatprep.subr.mxu0 0.0
    %2560 = vmatpush1.xpose.msra.mxu0 0.0
    %2561 = vmatprep.subr.mxu0 0.0
    %2562 = vmatpush1.xpose.msra.mxu0 0.0
    %2563 = vmatprep.subr.mxu0 0.0
    %2564 = vmatpush1.xpose.msra.mxu0 0.0
    %2565 = vmatprep.subr.mxu0 0.0
    %2566 = vmatpush1.xpose.msra.mxu0 0.0
    %2567 = vmatprep.subr.mxu0 0.0
    %2568 = vmatpush1.xpose.msra.mxu0 0.0
    %2569 = vmatprep.subr.mxu0 0.0
    %2570 = vmatpush1.xpose.msra.mxu0 0.0
    %2571 = vmatprep.subr.mxu0 0.0
    %2572 = vmatpush1.xpose.msra.mxu0 0.0
    %2573 = vmatprep.subr.mxu0 0.0
    %2574 = vmatpush1.xpose.msra.mxu0 0.0
    %2575 = vmatprep.subr.mxu0 0.0
    %2576 = vmatpush1.xpose.msra.mxu0 0.0
    %2577 = vmatprep.subr.mxu0 0.0
    %2578 = vmatpush1.xpose.msra.mxu0 0.0
    %2579 = vmatprep.subr.mxu0 0.0
    %2580 = vmatpush1.xpose.msra.mxu0 0.0
    %2581 = vmatprep.subr.mxu0 0.0
    %2582 = vmatpush1.xpose.msra.mxu0 0.0
    %2583 = vmatprep.subr.mxu0 0.0
    %2584 = vmatpush1.xpose.msra.mxu0 0.0
    %2585 = vmatprep.subr.mxu0 0.0
    %2586 = vmatpush1.xpose.msra.mxu0 0.0
    %2587 = vmatprep.subr.mxu0 0.0
    %2588 = vmatpush1.xpose.msra.mxu0 0.0
    %2589 = vmatprep.subr.mxu0 0.0
    %2590 = vmatpush1.xpose.msra.mxu0 0.0
    %2591 = vmatprep.subr.mxu0 0.0
    %2592 = vmatpush1.xpose.msra.mxu0 0.0
    %2593 = vmatprep.subr.mxu0 0.0
    %2594 = vmatpush1.xpose.msra.mxu0 0.0
    %2595 = vmatprep.mubr.f32.mxu0 0.0
    %2596 = vmatmul.mubr.f32.gmra.mrb[0].mxu0 %v2504
    %v2597 = vpop.f32.mrb[0].mxu0
    %v2598 = vadd.f32 %v370, %v2597
    %v2599 = vpop.f32.mrb[0].mxu0
    %2600 = vmatprep.mubr.f32.mxu0 0.0
    %2601 = vmatmul.mubr.f32.gmra.mrb[0].mxu0 %v2507
    %v2602 = vpop.f32.mrb[0].mxu0
    %v2603 = vadd.f32 %v371, %v2602
    %v2604 = vpop.f32.mrb[0].mxu0
    %2605 = vmatprep.mubr.f32.mxu0 0.0
    %2606 = vmatmul.mubr.f32.gmra.mrb[0].mxu0 %v2510
    %v2607 = vpop.f32.mrb[0].mxu0
    %v2608 = vadd.f32 %v372, %v2607
    %v2609 = vpop.f32.mrb[0].mxu0
    %2610 = vmatprep.mubr.f32.mxu0 0.0
    %2611 = vmatmul.mubr.f32.gmra.mrb[0].mxu0 %v2513
    %v2612 = vpop.f32.mrb[0].mxu0
    %v2613 = vadd.f32 %v373, %v2612
    %v2614 = vpop.f32.mrb[0].mxu0
    %2615 = vmatprep.mubr.f32.mxu0 0.0
    %2616 = vmatmul.mubr.f32.gmra.mrb[0].mxu0 %v2516
    %v2617 = vpop.f32.mrb[0].mxu0
    %v2618 = vadd.f32 %v374, %v2617
    %v2619 = vpop.f32.mrb[0].mxu0
    %2620 = vmatprep.mubr.f32.mxu0 0.0
    %2621 = vmatmul.mubr.f32.gmra.mrb[0].mxu0 %v2519
    %v2622 = vpop.f32.mrb[0].mxu0
    %v2623 = vadd.f32 %v375, %v2622
    %v2624 = vpop.f32.mrb[0].mxu0
    %2625 = vmatprep.mubr.f32.mxu0 0.0
    %2626 = vmatmul.mubr.f32.gmra.mrb[0].mxu0 %v2522
    %v2627 = vpop.f32.mrb[0].mxu0
    %v2628 = vadd.f32 %v376, %v2627
    %v2629 = vpop.f32.mrb[0].mxu0
    %2630 = vmatprep.mubr.f32.mxu0 0.0
    %2631 = vmatmul.mubr.f32.gmra.mrb[0].mxu0 %v2525
    %v2632 = vpop.f32.mrb[0].mxu0
    %v2633 = vadd.f32 %v377, %v2632
    %v2634 = vpop.f32.mrb[0].mxu0
    %2635 = vdwg.mxu0
    %v2636 = vsel %vm232, %v2598, -inf
    %2637 = vmax.xlane.f32.xlu0 %v2636
    %v2638 = vpop.xlane.xlu0 %2637
    %v2639 = vsel %vm232, %v2603, -inf
    %2640 = vmax.xlane.f32.xlu0 %v2639
    %v2641 = vpop.xlane.xlu0 %2640
    %v2642 = vsel %vm232, %v2608, -inf
    %2643 = vmax.xlane.f32.xlu0 %v2642
    %v2644 = vpop.xlane.xlu0 %2643
    %v2645 = vsel %vm232, %v2613, -inf
    %2646 = vmax.xlane.f32.xlu0 %v2645
    %v2647 = vpop.xlane.xlu0 %2646
    %v2648 = vsel %vm232, %v2618, -inf
    %2649 = vmax.xlane.f32.xlu0 %v2648
    %v2650 = vpop.xlane.xlu0 %2649
    %v2651 = vsel %vm232, %v2623, -inf
    %2652 = vmax.xlane.f32.xlu0 %v2651
    %v2653 = vpop.xlane.xlu0 %2652
    %v2654 = vsel %vm232, %v2628, -inf
    %2655 = vmax.xlane.f32.xlu0 %v2654
    %v2656 = vpop.xlane.xlu0 %2655
    %v2657 = vsel %vm232, %v2633, -inf
    %2658 = vmax.xlane.f32.xlu0 %v2657
    %v2659 = vpop.xlane.xlu0 %2658
    %v2660 = vsub.f32 %v2598, %v2638
    %v2661 = vsub.f32 %v2603, %v2641
    %v2662 = vsub.f32 %v2608, %v2644
    %v2663 = vsub.f32 %v2613, %v2647
    %v2664 = vsub.f32 %v2618, %v2650
    %v2665 = vsub.f32 %v2623, %v2653
    %v2666 = vsub.f32 %v2628, %v2656
    %v2667 = vsub.f32 %v2633, %v2659
    %v2668 = vmul.f32 %v2660, 1.442695
    %v2669 = vpow.pop %v2668
    %v2670 = vmul.f32 %v2661, 1.442695
    %v2671 = vpow.pop %v2670
    %v2672 = vmul.f32 %v2662, 1.442695
    %v2673 = vpow.pop %v2672
    %v2674 = vmul.f32 %v2663, 1.442695
    %v2675 = vpow.pop %v2674
    %v2676 = vmul.f32 %v2664, 1.442695
    %v2677 = vpow.pop %v2676
    %v2678 = vmul.f32 %v2665, 1.442695
    %v2679 = vpow.pop %v2678
    %v2680 = vmul.f32 %v2666, 1.442695
    %v2681 = vpow.pop %v2680
    %v2682 = vmul.f32 %v2667, 1.442695
    %v2683 = vpow.pop %v2682
    %v2684 = vsel %vm232, %v2669, 0.0
    %2685 = vadd.xlane.f32.xlu0 %v2684
    %v2686 = vpop.xlane.xlu0 %2685
    %v2687 = vsel %vm232, %v2671, 0.0
    %2688 = vadd.xlane.f32.xlu0 %v2687
    %v2689 = vpop.xlane.xlu0 %2688
    %v2690 = vsel %vm232, %v2673, 0.0
    %2691 = vadd.xlane.f32.xlu0 %v2690
    %v2692 = vpop.xlane.xlu0 %2691
    %v2693 = vsel %vm232, %v2675, 0.0
    %2694 = vadd.xlane.f32.xlu0 %v2693
    %v2695 = vpop.xlane.xlu0 %2694
    %v2696 = vsel %vm232, %v2677, 0.0
    %2697 = vadd.xlane.f32.xlu0 %v2696
    %v2698 = vpop.xlane.xlu0 %2697
    %v2699 = vsel %vm232, %v2679, 0.0
    %2700 = vadd.xlane.f32.xlu0 %v2699
    %v2701 = vpop.xlane.xlu0 %2700
    %v2702 = vsel %vm232, %v2681, 0.0
    %2703 = vadd.xlane.f32.xlu0 %v2702
    %v2704 = vpop.xlane.xlu0 %2703
    %v2705 = vsel %vm232, %v2683, 0.0
    %2706 = vadd.xlane.f32.xlu0 %v2705
    %v2707 = vpop.xlane.xlu0 %2706
    %v2708 = vrcp.pop %v2686
    %v2709 = vmul.f32 %v2669, %v2708
    %v2710 = vrcp.pop %v2689
    %v2711 = vmul.f32 %v2671, %v2710
    %v2712 = vrcp.pop %v2692
    %v2713 = vmul.f32 %v2673, %v2712
    %v2714 = vrcp.pop %v2695
    %v2715 = vmul.f32 %v2675, %v2714
    %v2716 = vrcp.pop %v2698
    %v2717 = vmul.f32 %v2677, %v2716
    %v2718 = vrcp.pop %v2701
    %v2719 = vmul.f32 %v2679, %v2718
    %v2720 = vrcp.pop %v2704
    %v2721 = vmul.f32 %v2681, %v2720
    %v2722 = vrcp.pop %v2707
    %v2723 = vmul.f32 %v2683, %v2722
    %2724 = vrot.lane.b32.xlu0 %v2376, 64
    %v2725 = vpop.permute.xlu0 %2724
    %2726 = vrot.lane.b32.xlu0 %v2381, 64
    %v2727 = vpop.permute.xlu0 %2726
    %v2731 = vsel %vm232, %v2709, 0
    %v2734 = vsel %vm232, %v2711, 0
    %v2737 = vsel %vm232, %v2713, 0
    %v2740 = vsel %vm232, %v2715, 0
    %v2743 = vsel %vm232, %v2717, 0
    %v2746 = vsel %vm232, %v2719, 0
    %v2749 = vsel %vm232, %v2721, 0
    %v2752 = vsel %vm232, %v2723, 0
    %2754 = vmatprep.subr.mxu0 0.0
    %2755 = vmatpush1.msra.mxu0 %v2725
    %2756 = vmatprep.subr.mxu0 0.0
    %2757 = vmatpush1.msra.mxu0 %v2727
    %2758 = vmatprep.subr.mxu0 0.0
    %2759 = vmatpush1.msra.mxu0 0.0
    %2760 = vmatprep.subr.mxu0 0.0
    %2761 = vmatpush1.msra.mxu0 0.0
    %2762 = vmatprep.subr.mxu0 0.0
    %2763 = vmatpush1.msra.mxu0 0.0
    %2764 = vmatprep.subr.mxu0 0.0
    %2765 = vmatpush1.msra.mxu0 0.0
    %2766 = vmatprep.subr.mxu0 0.0
    %2767 = vmatpush1.msra.mxu0 0.0
    %2768 = vmatprep.subr.mxu0 0.0
    %2769 = vmatpush1.msra.mxu0 0.0
    %2770 = vmatprep.subr.mxu0 0.0
    %2771 = vmatpush1.msra.mxu0 0.0
    %2772 = vmatprep.subr.mxu0 0.0
    %2773 = vmatpush1.msra.mxu0 0.0
    %2774 = vmatprep.subr.mxu0 0.0
    %2775 = vmatpush1.msra.mxu0 0.0
    %2776 = vmatprep.subr.mxu0 0.0
    %2777 = vmatpush1.msra.mxu0 0.0
    %2778 = vmatprep.subr.mxu0 0.0
    %2779 = vmatpush1.msra.mxu0 0.0
    %2780 = vmatprep.subr.mxu0 0.0
    %2781 = vmatpush1.msra.mxu0 0.0
    %2782 = vmatprep.subr.mxu0 0.0
    %2783 = vmatpush1.msra.mxu0 0.0
    %2784 = vmatprep.subr.mxu0 0.0
    %2785 = vmatpush1.msra.mxu0 0.0
    %2786 = vmatprep.subr.mxu0 0.0
    %2787 = vmatpush1.msra.mxu0 0.0
    %2788 = vmatprep.subr.mxu0 0.0
    %2789 = vmatpush1.msra.mxu0 0.0
    %2790 = vmatprep.subr.mxu0 0.0
    %2791 = vmatpush1.msra.mxu0 0.0
    %2792 = vmatprep.subr.mxu0 0.0
    %2793 = vmatpush1.msra.mxu0 0.0
    %2794 = vmatprep.subr.mxu0 0.0
    %2795 = vmatpush1.msra.mxu0 0.0
    %2796 = vmatprep.subr.mxu0 0.0
    %2797 = vmatpush1.msra.mxu0 0.0
    %2798 = vmatprep.subr.mxu0 0.0
    %2799 = vmatpush1.msra.mxu0 0.0
    %2800 = vmatprep.subr.mxu0 0.0
    %2801 = vmatpush1.msra.mxu0 0.0
    %2802 = vmatprep.subr.mxu0 0.0
    %2803 = vmatpush1.msra.mxu0 0.0
    %2804 = vmatprep.subr.mxu0 0.0
    %2805 = vmatpush1.msra.mxu0 0.0
    %2806 = vmatprep.subr.mxu0 0.0
    %2807 = vmatpush1.msra.mxu0 0.0
    %2808 = vmatprep.subr.mxu0 0.0
    %2809 = vmatpush1.msra.mxu0 0.0
    %2810 = vmatprep.subr.mxu0 0.0
    %2811 = vmatpush1.msra.mxu0 0.0
    %2812 = vmatprep.subr.mxu0 0.0
    %2813 = vmatpush1.msra.mxu0 0.0
    %2814 = vmatprep.subr.mxu0 0.0
    %2815 = vmatpush1.msra.mxu0 0.0
    %2816 = vmatprep.subr.mxu0 0.0
    %2817 = vmatpush1.msra.mxu0 0.0
    %2818 = vmatprep.mubr.f32.mxu0 0.0
    %2819 = vmatmul.mubr.f32.gmra.mrb[0].mxu0 %v2731
    %v2820 = vpop.f32.mrb[0].mxu0
    %v2821 = vadd.f32 0.0, %v2820
    %v2822 = vpop.f32.mrb[0].mxu0
    %2823 = vmatprep.mubr.f32.mxu0 0.0
    %2824 = vmatmul.mubr.f32.gmra.mrb[0].mxu0 %v2734
    %v2825 = vpop.f32.mrb[0].mxu0
    %v2826 = vadd.f32 0.0, %v2825
    %v2827 = vpop.f32.mrb[0].mxu0
    %2828 = vmatprep.mubr.f32.mxu0 0.0
    %2829 = vmatmul.mubr.f32.gmra.mrb[0].mxu0 %v2737
    %v2830 = vpop.f32.mrb[0].mxu0
    %v2831 = vadd.f32 0.0, %v2830
    %v2832 = vpop.f32.mrb[0].mxu0
    %2833 = vmatprep.mubr.f32.mxu0 0.0
    %2834 = vmatmul.mubr.f32.gmra.mrb[0].mxu0 %v2740
    %v2835 = vpop.f32.mrb[0].mxu0
    %v2836 = vadd.f32 0.0, %v2835
    %v2837 = vpop.f32.mrb[0].mxu0
    %2838 = vmatprep.mubr.f32.mxu0 0.0
    %2839 = vmatmul.mubr.f32.gmra.mrb[0].mxu0 %v2743
    %v2840 = vpop.f32.mrb[0].mxu0
    %v2841 = vadd.f32 0.0, %v2840
    %v2842 = vpop.f32.mrb[0].mxu0
    %2843 = vmatprep.mubr.f32.mxu0 0.0
    %2844 = vmatmul.mubr.f32.gmra.mrb[0].mxu0 %v2746
    %v2845 = vpop.f32.mrb[0].mxu0
    %v2846 = vadd.f32 0.0, %v2845
    %v2847 = vpop.f32.mrb[0].mxu0
    %2848 = vmatprep.mubr.f32.mxu0 0.0
    %2849 = vmatmul.mubr.f32.gmra.mrb[0].mxu0 %v2749
    %v2850 = vpop.f32.mrb[0].mxu0
    %v2851 = vadd.f32 0.0, %v2850
    %v2852 = vpop.f32.mrb[0].mxu0
    %2853 = vmatprep.mubr.f32.mxu0 0.0
    %2854 = vmatmul.mubr.f32.gmra.mrb[0].mxu0 %v2752
    %v2855 = vpop.f32.mrb[0].mxu0
    %v2856 = vadd.f32 0.0, %v2855
    %v2857 = vpop.f32.mrb[0].mxu0
    %2858 = vdwg.mxu0
    %v2859 = vmul.f32 %v2821, %v216
    %v2860 = vmul.f32 %v2826, %v217
    %v2861 = vmul.f32 %v2831, %v218
    %v2862 = vmul.f32 %v2836, %v219
    %v2863 = vmul.f32 %v2841, %v220
    %v2864 = vmul.f32 %v2846, %v221
    %v2865 = vmul.f32 %v2851, %v222
    %v2866 = vmul.f32 %v2856, %v223
    %2867 = vmatprep.subr.mxu0 0.0
    %2868 = vmatpush1.msra.mxu0 %v2859
    %2869 = vmatprep.subr.mxu0 0.0
    %2870 = vmatpush1.msra.mxu0 %v2860
    %2871 = vmatprep.subr.mxu0 0.0
    %2872 = vmatpush1.msra.mxu0 %v2861
    %2873 = vmatprep.subr.mxu0 0.0
    %2874 = vmatpush1.msra.mxu0 %v2862
    %2875 = vmatprep.subr.mxu0 0.0
    %2876 = vmatpush1.msra.mxu0 %v2863
    %2877 = vmatprep.subr.mxu0 0.0
    %2878 = vmatpush1.msra.mxu0 %v2864
    %2879 = vmatprep.subr.mxu0 0.0
    %2880 = vmatpush1.msra.mxu0 %v2865
    %2881 = vmatprep.subr.mxu0 0.0
    %2882 = vmatpush1.msra.mxu0 %v2866
    %2883 = vmatprep.subr.mxu0 0.0
    %2884 = vmatpush1.msra.mxu0 0.0
    %2885 = vmatprep.subr.mxu0 0.0
    %2886 = vmatpush1.msra.mxu0 0.0
    %2887 = vmatprep.subr.mxu0 0.0
    %2888 = vmatpush1.msra.mxu0 0.0
    %2889 = vmatprep.subr.mxu0 0.0
    %2890 = vmatpush1.msra.mxu0 0.0
    %2891 = vmatprep.subr.mxu0 0.0
    %2892 = vmatpush1.msra.mxu0 0.0
    %2893 = vmatprep.subr.mxu0 0.0
    %2894 = vmatpush1.msra.mxu0 0.0
    %2895 = vmatprep.subr.mxu0 0.0
    %2896 = vmatpush1.msra.mxu0 0.0
    %2897 = vmatprep.subr.mxu0 0.0
    %2898 = vmatpush1.msra.mxu0 0.0
    %2899 = vmatprep.subr.mxu0 0.0
    %2900 = vmatpush1.msra.mxu0 0.0
    %2901 = vmatprep.subr.mxu0 0.0
    %2902 = vmatpush1.msra.mxu0 0.0
    %2903 = vmatprep.subr.mxu0 0.0
    %2904 = vmatpush1.msra.mxu0 0.0
    %2905 = vmatprep.subr.mxu0 0.0
    %2906 = vmatpush1.msra.mxu0 0.0
    %2907 = vmatprep.subr.mxu0 0.0
    %2908 = vmatpush1.msra.mxu0 0.0
    %2909 = vmatprep.subr.mxu0 0.0
    %2910 = vmatpush1.msra.mxu0 0.0
    %2911 = vmatprep.subr.mxu0 0.0
    %2912 = vmatpush1.msra.mxu0 0.0
    %2913 = vmatprep.subr.mxu0 0.0
    %2914 = vmatpush1.msra.mxu0 0.0
    %2915 = vmatprep.subr.mxu0 0.0
    %2916 = vmatpush1.msra.mxu0 0.0
    %2917 = vmatprep.subr.mxu0 0.0
    %2918 = vmatpush1.msra.mxu0 0.0
    %2919 = vmatprep.subr.mxu0 0.0
    %2920 = vmatpush1.msra.mxu0 0.0
    %2921 = vmatprep.subr.mxu0 0.0
    %2922 = vmatpush1.msra.mxu0 0.0
    %2923 = vmatprep.subr.mxu0 0.0
    %2924 = vmatpush1.msra.mxu0 0.0
    %2925 = vmatprep.subr.mxu0 0.0
    %2926 = vmatpush1.msra.mxu0 0.0
    %2927 = vmatprep.subr.mxu0 0.0
    %2928 = vmatpush1.msra.mxu0 0.0
    %2929 = vmatprep.subr.mxu0 0.0
    %2930 = vmatpush1.msra.mxu0 0.0
    %2931 = vmatprep.mubr.f32.mxu0 0.0
    %2932 = vmatmul.mubr.f32.gmra.mrb[0].mxu0 %v752
    %v2933 = vpop.f32.mrb[0].mxu0
    %v2934 = vadd.f32 0.0, %v2933
    %v2935 = vpop.f32.mrb[0].mxu0
    %2936 = vmatprep.mubr.f32.mxu0 0.0
    %2937 = vmatmul.mubr.f32.gmra.mrb[0].mxu0 %v755
    %v2938 = vpop.f32.mrb[0].mxu0
    %v2939 = vadd.f32 0.0, %v2938
    %v2940 = vpop.f32.mrb[0].mxu0
    %2941 = vdwg.mxu0
    %v2942 = vld [vmem:[#allocation2 + $0x380] sm:$0xff]
    %v2943 = vld [vmem:[#allocation2 + $0x388] sm:$0xff]
    %v2944 = vld [vmem:[#allocation2 + $0x390] sm:$0xff]
    %v2945 = vld [vmem:[#allocation2 + $0x398] sm:$0xff]
    %v2946 = vld [vmem:[#allocation2 + $0x3a0] sm:$0x1]
    %v2947 = vlaneseq
    %v2948 = vshrl.u32 %v2947, 7
    %v2949 = vsub.s32 0, %v2948
    %v2950 = vrot.slane %v2946, %v2949
    %v2952 = vsel %vm134, %v2934, 0
    %v2955 = vsel %vm134, %v2939, 0
    %2957 = vmatprep.subr.mxu0 0.0
    %2958 = vmatpush1.msra.mxu0 %v2942
    %2959 = vmatprep.subr.mxu0 0.0
    %2960 = vmatpush1.msra.mxu0 %v2943
    %2961 = vmatprep.subr.mxu0 0.0
    %2962 = vmatpush1.msra.mxu0 %v2944
    %2963 = vmatprep.subr.mxu0 0.0
    %2964 = vmatpush1.msra.mxu0 %v2945
    %2965 = vmatprep.subr.mxu0 0.0
    %2966 = vmatpush1.msra.mxu0 0.0
    %2967 = vmatprep.subr.mxu0 0.0
    %2968 = vmatpush1.msra.mxu0 0.0
    %2969 = vmatprep.subr.mxu0 0.0
    %2970 = vmatpush1.msra.mxu0 0.0
    %2971 = vmatprep.subr.mxu0 0.0
    %2972 = vmatpush1.msra.mxu0 0.0
    %2973 = vmatprep.subr.mxu0 0.0
    %2974 = vmatpush1.msra.mxu0 0.0
    %2975 = vmatprep.subr.mxu0 0.0
    %2976 = vmatpush1.msra.mxu0 0.0
    %2977 = vmatprep.subr.mxu0 0.0
    %2978 = vmatpush1.msra.mxu0 0.0
    %2979 = vmatprep.subr.mxu0 0.0
    %2980 = vmatpush1.msra.mxu0 0.0
    %2981 = vmatprep.subr.mxu0 0.0
    %2982 = vmatpush1.msra.mxu0 0.0
    %2983 = vmatprep.subr.mxu0 0.0
    %2984 = vmatpush1.msra.mxu0 0.0
    %2985 = vmatprep.subr.mxu0 0.0
    %2986 = vmatpush1.msra.mxu0 0.0
    %2987 = vmatprep.subr.mxu0 0.0
    %2988 = vmatpush1.msra.mxu0 0.0
    %2989 = vmatprep.subr.mxu0 0.0
    %2990 = vmatpush1.msra.mxu0 0.0
    %2991 = vmatprep.subr.mxu0 0.0
    %2992 = vmatpush1.msra.mxu0 0.0
    %2993 = vmatprep.subr.mxu0 0.0
    %2994 = vmatpush1.msra.mxu0 0.0
    %2995 = vmatprep.subr.mxu0 0.0
    %2996 = vmatpush1.msra.mxu0 0.0
    %2997 = vmatprep.subr.mxu0 0.0
    %2998 = vmatpush1.msra.mxu0 0.0
    %2999 = vmatprep.subr.mxu0 0.0
    %3000 = vmatpush1.msra.mxu0 0.0
    %3001 = vmatprep.subr.mxu0 0.0
    %3002 = vmatpush1.msra.mxu0 0.0
    %3003 = vmatprep.subr.mxu0 0.0
    %3004 = vmatpush1.msra.mxu0 0.0
    %3005 = vmatprep.subr.mxu0 0.0
    %3006 = vmatpush1.msra.mxu0 0.0
    %3007 = vmatprep.subr.mxu0 0.0
    %3008 = vmatpush1.msra.mxu0 0.0
    %3009 = vmatprep.subr.mxu0 0.0
    %3010 = vmatpush1.msra.mxu0 0.0
    %3011 = vmatprep.subr.mxu0 0.0
    %3012 = vmatpush1.msra.mxu0 0.0
    %3013 = vmatprep.subr.mxu0 0.0
    %3014 = vmatpush1.msra.mxu0 0.0
    %3015 = vmatprep.subr.mxu0 0.0
    %3016 = vmatpush1.msra.mxu0 0.0
    %3017 = vmatprep.subr.mxu0 0.0
    %3018 = vmatpush1.msra.mxu0 0.0
    %3019 = vmatprep.subr.mxu0 0.0
    %3020 = vmatpush1.msra.mxu0 0.0
    %3021 = vmatprep.mubr.f32.mxu0 0.0
    %3022 = vmatmul.mubr.f32.gmra.mrb[0].mxu0 %v2952
    %v3023 = vpop.f32.mrb[0].mxu0
    %v3024 = vadd.f32 %v2950, %v3023
    %v3025 = vpop.f32.mrb[0].mxu0
    %3026 = vmatprep.mubr.f32.mxu0 0.0
    %3027 = vmatmul.mubr.f32.gmra.mrb[0].mxu0 %v2955
    %v3028 = vpop.f32.mrb[0].mxu0
    %v3029 = vadd.f32 %v2950, %v3028
    %v3030 = vpop.f32.mrb[0].mxu0
    %3031 = vdwg.mxu0
    %v3032 = vadd.f32 %v3024, %v2291
    %v3033 = vadd.f32 %v3029, %v2296
    %v3034 = vsel %vm134, %v3032, 0.0
    %3035 = vadd.xlane.f32.xlu0 %v3034
    %v3036 = vpop.xlane.xlu0 %3035
    %v3037 = vsel %vm134, %v3033, 0.0
    %3038 = vadd.xlane.f32.xlu0 %v3037
    %v3039 = vpop.xlane.xlu0 %3038
    %v3040 = vmul.f32 %v3036, %v930
    %v3041 = vmul.f32 %v3039, %v930
    %v3042 = vsub.f32 %v3032, %v3040
    %v3043 = vsub.f32 %v3033, %v3041
    %v3044 = vmul.f32 %v3042, %v3042
    %v3045 = vmul.f32 %v3043, %v3043
    %v3046 = vsel %vm134, %v3044, 0.0
    %3047 = vadd.xlane.f32.xlu0 %v3046
    %v3048 = vpop.xlane.xlu0 %3047
    %v3049 = vsel %vm134, %v3045, 0.0
    %3050 = vadd.xlane.f32.xlu0 %v3049
    %v3051 = vpop.xlane.xlu0 %3050
    %v3052 = vmul.f32 %v3048, %v930
    %v3053 = vmul.f32 %v3051, %v930
    %v3054 = vadd.f32 %v3052, 1e-05
    %v3055 = vadd.f32 %v3053, 1e-05
    %v3056 = vrsqrt.pop %v3054
    %v3057 = vrsqrt.pop %v3055
    %v3058 = vmul.f32 %v3042, %v3056
    %v3059 = vmul.f32 %v3043, %v3057
    %v3060 = vld [vmem:[#allocation2 + $0x3a8] sm:$0x1]
    %v3061 = vlaneseq
    %v3062 = vshrl.u32 %v3061, 7
    %v3063 = vsub.s32 0, %v3062
    %v3064 = vrot.slane %v3060, %v3063
    %v3065 = vmul.f32 %v3058, %v3064
    %v3066 = vmul.f32 %v3059, %v3064
    %v3067 = vld [vmem:[#allocation2 + $0x3b0] sm:$0x1]
    %v3068 = vlaneseq
    %v3069 = vshrl.u32 %v3068, 7
    %v3070 = vsub.s32 0, %v3069
    %v3071 = vrot.slane %v3067, %v3070
    %v3072 = vadd.f32 %v3065, %v3071
    %v3073 = vadd.f32 %v3066, %v3071
    %v3074 = vld [vmem:[#allocation2 + $0x3b8] sm:$0xff]
    %v3075 = vld [vmem:[#allocation2 + $0x3c0] sm:$0xff]
    %v3076 = vld [vmem:[#allocation2 + $0x3c8] sm:$0xff]
    %v3077 = vld [vmem:[#allocation2 + $0x3d0] sm:$0xff]
    %v3079 = vsel %vm134, %v3072, 0
    %v3082 = vsel %vm134, %v3073, 0
    %3084 = vmatprep.subr.mxu0 0.0
    %3085 = vmatpush1.msra.mxu0 %v3074
    %3086 = vmatprep.subr.mxu0 0.0
    %3087 = vmatpush1.msra.mxu0 %v3075
    %3088 = vmatprep.subr.mxu0 0.0
    %3089 = vmatpush1.msra.mxu0 %v3076
    %3090 = vmatprep.subr.mxu0 0.0
    %3091 = vmatpush1.msra.mxu0 %v3077
    %3092 = vmatprep.subr.mxu0 0.0
    %3093 = vmatpush1.msra.mxu0 0.0
    %3094 = vmatprep.subr.mxu0 0.0
    %3095 = vmatpush1.msra.mxu0 0.0
    %3096 = vmatprep.subr.mxu0 0.0
    %3097 = vmatpush1.msra.mxu0 0.0
    %3098 = vmatprep.subr.mxu0 0.0
    %3099 = vmatpush1.msra.mxu0 0.0
    %3100 = vmatprep.subr.mxu0 0.0
    %3101 = vmatpush1.msra.mxu0 0.0
    %3102 = vmatprep.subr.mxu0 0.0
    %3103 = vmatpush1.msra.mxu0 0.0
    %3104 = vmatprep.subr.mxu0 0.0
    %3105 = vmatpush1.msra.mxu0 0.0
    %3106 = vmatprep.subr.mxu0 0.0
    %3107 = vmatpush1.msra.mxu0 0.0
    %3108 = vmatprep.subr.mxu0 0.0
    %3109 = vmatpush1.msra.mxu0 0.0
    %3110 = vmatprep.subr.mxu0 0.0
    %3111 = vmatpush1.msra.mxu0 0.0
    %3112 = vmatprep.subr.mxu0 0.0
    %3113 = vmatpush1.msra.mxu0 0.0
    %3114 = vmatprep.subr.mxu0 0.0
    %3115 = vmatpush1.msra.mxu0 0.0
    %3116 = vmatprep.subr.mxu0 0.0
    %3117 = vmatpush1.msra.mxu0 0.0
    %3118 = vmatprep.subr.mxu0 0.0
    %3119 = vmatpush1.msra.mxu0 0.0
    %3120 = vmatprep.subr.mxu0 0.0
    %3121 = vmatpush1.msra.mxu0 0.0
    %3122 = vmatprep.subr.mxu0 0.0
    %3123 = vmatpush1.msra.mxu0 0.0
    %3124 = vmatprep.subr.mxu0 0.0
    %3125 = vmatpush1.msra.mxu0 0.0
    %3126 = vmatprep.subr.mxu0 0.0
    %3127 = vmatpush1.msra.mxu0 0.0
    %3128 = vmatprep.subr.mxu0 0.0
    %3129 = vmatpush1.msra.mxu0 0.0
    %3130 = vmatprep.subr.mxu0 0.0
    %3131 = vmatpush1.msra.mxu0 0.0
    %3132 = vmatprep.subr.mxu0 0.0
    %3133 = vmatpush1.msra.mxu0 0.0
    %3134 = vmatprep.subr.mxu0 0.0
    %3135 = vmatpush1.msra.mxu0 0.0
    %3136 = vmatprep.subr.mxu0 0.0
    %3137 = vmatpush1.msra.mxu0 0.0
    %3138 = vmatprep.subr.mxu0 0.0
    %3139 = vmatpush1.msra.mxu0 0.0
    %3140 = vmatprep.subr.mxu0 0.0
    %3141 = vmatpush1.msra.mxu0 0.0
    %3142 = vmatprep.subr.mxu0 0.0
    %3143 = vmatpush1.msra.mxu0 0.0
    %3144 = vmatprep.subr.mxu0 0.0
    %3145 = vmatpush1.msra.mxu0 0.0
    %3146 = vmatprep.subr.mxu0 0.0
    %3147 = vmatpush1.msra.mxu0 0.0
    %3148 = vmatprep.mubr.f32.mxu0 0.0
    %3149 = vmatmul.mubr.f32.gmra.mrb[0].mxu0 %v3079
    %v3150 = vpop.f32.mrb[0].mxu0
    %v3151 = vadd.f32 0.0, %v3150
    %v3152 = vpop.f32.mrb[0].mxu0
    %3153 = vmatprep.mubr.f32.mxu0 0.0
    %3154 = vmatmul.mubr.f32.gmra.mrb[0].mxu0 %v3082
    %v3155 = vpop.f32.mrb[0].mxu0
    %v3156 = vadd.f32 0.0, %v3155
    %v3157 = vpop.f32.mrb[0].mxu0
    %3158 = vdwg.mxu0
    %3163 = vrot.lane.b32.xlu0 %v3074, 96
    %v3164 = vpop.permute.xlu0 %3163
    %3165 = vrot.lane.b32.xlu0 %v3075, 96
    %v3166 = vpop.permute.xlu0 %3165
    %3167 = vrot.lane.b32.xlu0 %v3076, 96
    %v3168 = vpop.permute.xlu0 %3167
    %3169 = vrot.lane.b32.xlu0 %v3077, 96
    %v3170 = vpop.permute.xlu0 %3169
    %v3176 = vsel %vm134, %v2198, 0
    %v3179 = vsel %vm134, %v2199, 0
    %3181 = vmatprep.subr.mxu0 0.0
    %3182 = vmatpush1.msra.mxu0 %v3164
    %3183 = vmatprep.subr.mxu0 0.0
    %3184 = vmatpush1.msra.mxu0 %v3166
    %3185 = vmatprep.subr.mxu0 0.0
    %3186 = vmatpush1.msra.mxu0 %v3168
    %3187 = vmatprep.subr.mxu0 0.0
    %3188 = vmatpush1.msra.mxu0 %v3170
    %3189 = vmatprep.subr.mxu0 0.0
    %3190 = vmatpush1.msra.mxu0 0.0
    %3191 = vmatprep.subr.mxu0 0.0
    %3192 = vmatpush1.msra.mxu0 0.0
    %3193 = vmatprep.subr.mxu0 0.0
    %3194 = vmatpush1.msra.mxu0 0.0
    %3195 = vmatprep.subr.mxu0 0.0
    %3196 = vmatpush1.msra.mxu0 0.0
    %3197 = vmatprep.subr.mxu0 0.0
    %3198 = vmatpush1.msra.mxu0 0.0
    %3199 = vmatprep.subr.mxu0 0.0
    %3200 = vmatpush1.msra.mxu0 0.0
    %3201 = vmatprep.subr.mxu0 0.0
    %3202 = vmatpush1.msra.mxu0 0.0
    %3203 = vmatprep.subr.mxu0 0.0
    %3204 = vmatpush1.msra.mxu0 0.0
    %3205 = vmatprep.subr.mxu0 0.0
    %3206 = vmatpush1.msra.mxu0 0.0
    %3207 = vmatprep.subr.mxu0 0.0
    %3208 = vmatpush1.msra.mxu0 0.0
    %3209 = vmatprep.subr.mxu0 0.0
    %3210 = vmatpush1.msra.mxu0 0.0
    %3211 = vmatprep.subr.mxu0 0.0
    %3212 = vmatpush1.msra.mxu0 0.0
    %3213 = vmatprep.subr.mxu0 0.0
    %3214 = vmatpush1.msra.mxu0 0.0
    %3215 = vmatprep.subr.mxu0 0.0
    %3216 = vmatpush1.msra.mxu0 0.0
    %3217 = vmatprep.subr.mxu0 0.0
    %3218 = vmatpush1.msra.mxu0 0.0
    %3219 = vmatprep.subr.mxu0 0.0
    %3220 = vmatpush1.msra.mxu0 0.0
    %3221 = vmatprep.subr.mxu0 0.0
    %3222 = vmatpush1.msra.mxu0 0.0
    %3223 = vmatprep.subr.mxu0 0.0
    %3224 = vmatpush1.msra.mxu0 0.0
    %3225 = vmatprep.subr.mxu0 0.0
    %3226 = vmatpush1.msra.mxu0 0.0
    %3227 = vmatprep.subr.mxu0 0.0
    %3228 = vmatpush1.msra.mxu0 0.0
    %3229 = vmatprep.subr.mxu0 0.0
    %3230 = vmatpush1.msra.mxu0 0.0
    %3231 = vmatprep.subr.mxu0 0.0
    %3232 = vmatpush1.msra.mxu0 0.0
    %3233 = vmatprep.subr.mxu0 0.0
    %3234 = vmatpush1.msra.mxu0 0.0
    %3235 = vmatprep.subr.mxu0 0.0
    %3236 = vmatpush1.msra.mxu0 0.0
    %3237 = vmatprep.subr.mxu0 0.0
    %3238 = vmatpush1.msra.mxu0 0.0
    %3239 = vmatprep.subr.mxu0 0.0
    %3240 = vmatpush1.msra.mxu0 0.0
    %3241 = vmatprep.subr.mxu0 0.0
    %3242 = vmatpush1.msra.mxu0 0.0
    %3243 = vmatprep.subr.mxu0 0.0
    %3244 = vmatpush1.msra.mxu0 0.0
    %3245 = vmatprep.mubr.f32.mxu0 0.0
    %3246 = vmatmul.mubr.f32.gmra.mrb[0].mxu0 %v3176
    %v3247 = vpop.f32.mrb[0].mxu0
    %v3248 = vadd.f32 0.0, %v3247
    %v3249 = vpop.f32.mrb[0].mxu0
    %3250 = vmatprep.mubr.f32.mxu0 0.0
    %3251 = vmatmul.mubr.f32.gmra.mrb[0].mxu0 %v3179
    %v3252 = vpop.f32.mrb[0].mxu0
    %v3253 = vadd.f32 0.0, %v3252
    %v3254 = vpop.f32.mrb[0].mxu0
    %3255 = vdwg.mxu0
    %3256 = vmatprep.subr.mxu0 0.0
    %3257 = vmatpush1.msra.mxu0 %v3151
    %3258 = vmatprep.subr.mxu0 0.0
    %3259 = vmatpush1.msra.mxu0 %v3156
    %3260 = vmatprep.subr.mxu0 0.0
    %3261 = vmatpush1.msra.mxu0 0.0
    %3262 = vmatprep.subr.mxu0 0.0
    %3263 = vmatpush1.msra.mxu0 0.0
    %3264 = vmatprep.subr.mxu0 0.0
    %3265 = vmatpush1.msra.mxu0 0.0
    %3266 = vmatprep.subr.mxu0 0.0
    %3267 = vmatpush1.msra.mxu0 0.0
    %3268 = vmatprep.subr.mxu0 0.0
    %3269 = vmatpush1.msra.mxu0 0.0
    %3270 = vmatprep.subr.mxu0 0.0
    %3271 = vmatpush1.msra.mxu0 0.0
    %3272 = vmatprep.subr.mxu0 0.0
    %3273 = vmatpush1.msra.mxu0 0.0
    %3274 = vmatprep.subr.mxu0 0.0
    %3275 = vmatpush1.msra.mxu0 0.0
    %3276 = vmatprep.subr.mxu0 0.0
    %3277 = vmatpush1.msra.mxu0 0.0
    %3278 = vmatprep.subr.mxu0 0.0
    %3279 = vmatpush1.msra.mxu0 0.0
    %3280 = vmatprep.subr.mxu0 0.0
    %3281 = vmatpush1.msra.mxu0 0.0
    %3282 = vmatprep.subr.mxu0 0.0
    %3283 = vmatpush1.msra.mxu0 0.0
    %3284 = vmatprep.subr.mxu0 0.0
    %3285 = vmatpush1.msra.mxu0 0.0
    %3286 = vmatprep.subr.mxu0 0.0
    %3287 = vmatpush1.msra.mxu0 0.0
    %3288 = vmatprep.subr.mxu0 0.0
    %3289 = vmatpush1.msra.mxu0 0.0
    %3290 = vmatprep.subr.mxu0 0.0
    %3291 = vmatpush1.msra.mxu0 0.0
    %3292 = vmatprep.subr.mxu0 0.0
    %3293 = vmatpush1.msra.mxu0 0.0
    %3294 = vmatprep.subr.mxu0 0.0
    %3295 = vmatpush1.msra.mxu0 0.0
    %3296 = vmatprep.subr.mxu0 0.0
    %3297 = vmatpush1.msra.mxu0 0.0
    %3298 = vmatprep.subr.mxu0 0.0
    %3299 = vmatpush1.msra.mxu0 0.0
    %3300 = vmatprep.subr.mxu0 0.0
    %3301 = vmatpush1.msra.mxu0 0.0
    %3302 = vmatprep.subr.mxu0 0.0
    %3303 = vmatpush1.msra.mxu0 0.0
    %3304 = vmatprep.subr.mxu0 0.0
    %3305 = vmatpush1.msra.mxu0 0.0
    %3306 = vmatprep.subr.mxu0 0.0
    %3307 = vmatpush1.msra.mxu0 0.0
    %3308 = vmatprep.subr.mxu0 0.0
    %3309 = vmatpush1.msra.mxu0 0.0
    %3310 = vmatprep.subr.mxu0 0.0
    %3311 = vmatpush1.msra.mxu0 0.0
    %3312 = vmatprep.subr.mxu0 0.0
    %3313 = vmatpush1.msra.mxu0 0.0
    %3314 = vmatprep.subr.mxu0 0.0
    %3315 = vmatpush1.msra.mxu0 0.0
    %3316 = vmatprep.subr.mxu0 0.0
    %3317 = vmatpush1.msra.mxu0 0.0
    %3318 = vmatprep.subr.mxu0 0.0
    %3319 = vmatpush1.msra.mxu0 0.0
    %3320 = vmatprep.mubr.f32.mxu0 0.0
    %3321 = vmatmul.mubr.f32.gmra.mrb[0].mxu0 %v234
    %v3322 = vpop.f32.mrb[0].mxu0
    %v3323 = vadd.f32 0.0, %v3322
    %v3324 = vpop.f32.mrb[0].mxu0
    %3325 = vmatprep.mubr.f32.mxu0 0.0
    %3326 = vmatmul.mubr.f32.gmra.mrb[0].mxu0 %v237
    %v3327 = vpop.f32.mrb[0].mxu0
    %v3328 = vadd.f32 0.0, %v3327
    %v3329 = vpop.f32.mrb[0].mxu0
    %3330 = vmatprep.mubr.f32.mxu0 0.0
    %3331 = vmatmul.mubr.f32.gmra.mrb[0].mxu0 %v240
    %v3332 = vpop.f32.mrb[0].mxu0
    %v3333 = vadd.f32 0.0, %v3332
    %v3334 = vpop.f32.mrb[0].mxu0
    %3335 = vmatprep.mubr.f32.mxu0 0.0
    %3336 = vmatmul.mubr.f32.gmra.mrb[0].mxu0 %v243
    %v3337 = vpop.f32.mrb[0].mxu0
    %v3338 = vadd.f32 0.0, %v3337
    %v3339 = vpop.f32.mrb[0].mxu0
    %3340 = vmatprep.mubr.f32.mxu0 0.0
    %3341 = vmatmul.mubr.f32.gmra.mrb[0].mxu0 %v246
    %v3342 = vpop.f32.mrb[0].mxu0
    %v3343 = vadd.f32 0.0, %v3342
    %v3344 = vpop.f32.mrb[0].mxu0
    %3345 = vmatprep.mubr.f32.mxu0 0.0
    %3346 = vmatmul.mubr.f32.gmra.mrb[0].mxu0 %v249
    %v3347 = vpop.f32.mrb[0].mxu0
    %v3348 = vadd.f32 0.0, %v3347
    %v3349 = vpop.f32.mrb[0].mxu0
    %3350 = vmatprep.mubr.f32.mxu0 0.0
    %3351 = vmatmul.mubr.f32.gmra.mrb[0].mxu0 %v252
    %v3352 = vpop.f32.mrb[0].mxu0
    %v3353 = vadd.f32 0.0, %v3352
    %v3354 = vpop.f32.mrb[0].mxu0
    %3355 = vmatprep.mubr.f32.mxu0 0.0
    %3356 = vmatmul.mubr.f32.gmra.mrb[0].mxu0 %v255
    %v3357 = vpop.f32.mrb[0].mxu0
    %v3358 = vadd.f32 0.0, %v3357
    %v3359 = vpop.f32.mrb[0].mxu0
    %3360 = vdwg.mxu0
    %v3361 = vmul.f32 %v3323, %v216
    %v3362 = vmul.f32 %v3328, %v217
    %v3363 = vmul.f32 %v3333, %v218
    %v3364 = vmul.f32 %v3338, %v219
    %v3365 = vmul.f32 %v3343, %v220
    %v3366 = vmul.f32 %v3348, %v221
    %v3367 = vmul.f32 %v3353, %v222
    %v3368 = vmul.f32 %v3358, %v223
    %v3370 = vsel %vm134, %v3361, 0
    %v3373 = vsel %vm134, %v3362, 0
    %v3376 = vsel %vm134, %v3363, 0
    %v3379 = vsel %vm134, %v3364, 0
    %v3382 = vsel %vm134, %v3365, 0
    %v3385 = vsel %vm134, %v3366, 0
    %v3388 = vsel %vm134, %v3367, 0
    %v3391 = vsel %vm134, %v3368, 0
    %v3394 = vsel %vm134, %v3248, 0
    %v3397 = vsel %vm134, %v3253, 0
    %3399 = vmatprep.subr.mxu0 0.0
    %3400 = vmatpush1.xpose.msra.mxu0 %v3394
    %3401 = vmatprep.subr.mxu0 0.0
    %3402 = vmatpush1.xpose.msra.mxu0 %v3397
    %3403 = vmatprep.subr.mxu0 0.0
    %3404 = vmatpush1.xpose.msra.mxu0 0.0
    %3405 = vmatprep.subr.mxu0 0.0
    %3406 = vmatpush1.xpose.msra.mxu0 0.0
    %3407 = vmatprep.subr.mxu0 0.0
    %3408 = vmatpush1.xpose.msra.mxu0 0.0
    %3409 = vmatprep.subr.mxu0 0.0
    %3410 = vmatpush1.xpose.msra.mxu0 0.0
    %3411 = vmatprep.subr.mxu0 0.0
    %3412 = vmatpush1.xpose.msra.mxu0 0.0
    %3413 = vmatprep.subr.mxu0 0.0
    %3414 = vmatpush1.xpose.msra.mxu0 0.0
    %3415 = vmatprep.subr.mxu0 0.0
    %3416 = vmatpush1.xpose.msra.mxu0 0.0
    %3417 = vmatprep.subr.mxu0 0.0
    %3418 = vmatpush1.xpose.msra.mxu0 0.0
    %3419 = vmatprep.subr.mxu0 0.0
    %3420 = vmatpush1.xpose.msra.mxu0 0.0
    %3421 = vmatprep.subr.mxu0 0.0
    %3422 = vmatpush1.xpose.msra.mxu0 0.0
    %3423 = vmatprep.subr.mxu0 0.0
    %3424 = vmatpush1.xpose.msra.mxu0 0.0
    %3425 = vmatprep.subr.mxu0 0.0
    %3426 = vmatpush1.xpose.msra.mxu0 0.0
    %3427 = vmatprep.subr.mxu0 0.0
    %3428 = vmatpush1.xpose.msra.mxu0 0.0
    %3429 = vmatprep.subr.mxu0 0.0
    %3430 = vmatpush1.xpose.msra.mxu0 0.0
    %3431 = vmatprep.subr.mxu0 0.0
    %3432 = vmatpush1.xpose.msra.mxu0 0.0
    %3433 = vmatprep.subr.mxu0 0.0
    %3434 = vmatpush1.xpose.msra.mxu0 0.0
    %3435 = vmatprep.subr.mxu0 0.0
    %3436 = vmatpush1.xpose.msra.mxu0 0.0
    %3437 = vmatprep.subr.mxu0 0.0
    %3438 = vmatpush1.xpose.msra.mxu0 0.0
    %3439 = vmatprep.subr.mxu0 0.0
    %3440 = vmatpush1.xpose.msra.mxu0 0.0
    %3441 = vmatprep.subr.mxu0 0.0
    %3442 = vmatpush1.xpose.msra.mxu0 0.0
    %3443 = vmatprep.subr.mxu0 0.0
    %3444 = vmatpush1.xpose.msra.mxu0 0.0
    %3445 = vmatprep.subr.mxu0 0.0
    %3446 = vmatpush1.xpose.msra.mxu0 0.0
    %3447 = vmatprep.subr.mxu0 0.0
    %3448 = vmatpush1.xpose.msra.mxu0 0.0
    %3449 = vmatprep.subr.mxu0 0.0
    %3450 = vmatpush1.xpose.msra.mxu0 0.0
    %3451 = vmatprep.subr.mxu0 0.0
    %3452 = vmatpush1.xpose.msra.mxu0 0.0
    %3453 = vmatprep.subr.mxu0 0.0
    %3454 = vmatpush1.xpose.msra.mxu0 0.0
    %3455 = vmatprep.subr.mxu0 0.0
    %3456 = vmatpush1.xpose.msra.mxu0 0.0
    %3457 = vmatprep.subr.mxu0 0.0
    %3458 = vmatpush1.xpose.msra.mxu0 0.0
    %3459 = vmatprep.subr.mxu0 0.0
    %3460 = vmatpush1.xpose.msra.mxu0 0.0
    %3461 = vmatprep.subr.mxu0 0.0
    %3462 = vmatpush1.xpose.msra.mxu0 0.0
    %3463 = vmatprep.mubr.f32.mxu0 0.0
    %3464 = vmatmul.mubr.f32.gmra.mrb[0].mxu0 %v3370
    %v3465 = vpop.f32.mrb[0].mxu0
    %v3466 = vadd.f32 %v370, %v3465
    %v3467 = vpop.f32.mrb[0].mxu0
    %3468 = vmatprep.mubr.f32.mxu0 0.0
    %3469 = vmatmul.mubr.f32.gmra.mrb[0].mxu0 %v3373
    %v3470 = vpop.f32.mrb[0].mxu0
    %v3471 = vadd.f32 %v371, %v3470
    %v3472 = vpop.f32.mrb[0].mxu0
    %3473 = vmatprep.mubr.f32.mxu0 0.0
    %3474 = vmatmul.mubr.f32.gmra.mrb[0].mxu0 %v3376
    %v3475 = vpop.f32.mrb[0].mxu0
    %v3476 = vadd.f32 %v372, %v3475
    %v3477 = vpop.f32.mrb[0].mxu0
    %3478 = vmatprep.mubr.f32.mxu0 0.0
    %3479 = vmatmul.mubr.f32.gmra.mrb[0].mxu0 %v3379
    %v3480 = vpop.f32.mrb[0].mxu0
    %v3481 = vadd.f32 %v373, %v3480
    %v3482 = vpop.f32.mrb[0].mxu0
    %3483 = vmatprep.mubr.f32.mxu0 0.0
    %3484 = vmatmul.mubr.f32.gmra.mrb[0].mxu0 %v3382
    %v3485 = vpop.f32.mrb[0].mxu0
    %v3486 = vadd.f32 %v374, %v3485
    %v3487 = vpop.f32.mrb[0].mxu0
    %3488 = vmatprep.mubr.f32.mxu0 0.0
    %3489 = vmatmul.mubr.f32.gmra.mrb[0].mxu0 %v3385
    %v3490 = vpop.f32.mrb[0].mxu0
    %v3491 = vadd.f32 %v375, %v3490
    %v3492 = vpop.f32.mrb[0].mxu0
    %3493 = vmatprep.mubr.f32.mxu0 0.0
    %3494 = vmatmul.mubr.f32.gmra.mrb[0].mxu0 %v3388
    %v3495 = vpop.f32.mrb[0].mxu0
    %v3496 = vadd.f32 %v376, %v3495
    %v3497 = vpop.f32.mrb[0].mxu0
    %3498 = vmatprep.mubr.f32.mxu0 0.0
    %3499 = vmatmul.mubr.f32.gmra.mrb[0].mxu0 %v3391
    %v3500 = vpop.f32.mrb[0].mxu0
    %v3501 = vadd.f32 %v377, %v3500
    %v3502 = vpop.f32.mrb[0].mxu0
    %3503 = vdwg.mxu0
    %v3504 = vsel %vm232, %v3466, -inf
    %3505 = vmax.xlane.f32.xlu0 %v3504
    %v3506 = vpop.xlane.xlu0 %3505
    %v3507 = vsel %vm232, %v3471, -inf
    %3508 = vmax.xlane.f32.xlu0 %v3507
    %v3509 = vpop.xlane.xlu0 %3508
    %v3510 = vsel %vm232, %v3476, -inf
    %3511 = vmax.xlane.f32.xlu0 %v3510
    %v3512 = vpop.xlane.xlu0 %3511
    %v3513 = vsel %vm232, %v3481, -inf
    %3514 = vmax.xlane.f32.xlu0 %v3513
    %v3515 = vpop.xlane.xlu0 %3514
    %v3516 = vsel %vm232, %v3486, -inf
    %3517 = vmax.xlane.f32.xlu0 %v3516
    %v3518 = vpop.xlane.xlu0 %3517
    %v3519 = vsel %vm232, %v3491, -inf
    %3520 = vmax.xlane.f32.xlu0 %v3519
    %v3521 = vpop.xlane.xlu0 %3520
    %v3522 = vsel %vm232, %v3496, -inf
    %3523 = vmax.xlane.f32.xlu0 %v3522
    %v3524 = vpop.xlane.xlu0 %3523
    %v3525 = vsel %vm232, %v3501, -inf
    %3526 = vmax.xlane.f32.xlu0 %v3525
    %v3527 = vpop.xlane.xlu0 %3526
    %v3528 = vsub.f32 %v3466, %v3506
    %v3529 = vsub.f32 %v3471, %v3509
    %v3530 = vsub.f32 %v3476, %v3512
    %v3531 = vsub.f32 %v3481, %v3515
    %v3532 = vsub.f32 %v3486, %v3518
    %v3533 = vsub.f32 %v3491, %v3521
    %v3534 = vsub.f32 %v3496, %v3524
    %v3535 = vsub.f32 %v3501, %v3527
    %v3536 = vmul.f32 %v3528, 1.442695
    %v3537 = vpow.pop %v3536
    %v3538 = vmul.f32 %v3529, 1.442695
    %v3539 = vpow.pop %v3538
    %v3540 = vmul.f32 %v3530, 1.442695
    %v3541 = vpow.pop %v3540
    %v3542 = vmul.f32 %v3531, 1.442695
    %v3543 = vpow.pop %v3542
    %v3544 = vmul.f32 %v3532, 1.442695
    %v3545 = vpow.pop %v3544
    %v3546 = vmul.f32 %v3533, 1.442695
    %v3547 = vpow.pop %v3546
    %v3548 = vmul.f32 %v3534, 1.442695
    %v3549 = vpow.pop %v3548
    %v3550 = vmul.f32 %v3535, 1.442695
    %v3551 = vpow.pop %v3550
    %v3552 = vsel %vm232, %v3537, 0.0
    %3553 = vadd.xlane.f32.xlu0 %v3552
    %v3554 = vpop.xlane.xlu0 %3553
    %v3555 = vsel %vm232, %v3539, 0.0
    %3556 = vadd.xlane.f32.xlu0 %v3555
    %v3557 = vpop.xlane.xlu0 %3556
    %v3558 = vsel %vm232, %v3541, 0.0
    %3559 = vadd.xlane.f32.xlu0 %v3558
    %v3560 = vpop.xlane.xlu0 %3559
    %v3561 = vsel %vm232, %v3543, 0.0
    %3562 = vadd.xlane.f32.xlu0 %v3561
    %v3563 = vpop.xlane.xlu0 %3562
    %v3564 = vsel %vm232, %v3545, 0.0
    %3565 = vadd.xlane.f32.xlu0 %v3564
    %v3566 = vpop.xlane.xlu0 %3565
    %v3567 = vsel %vm232, %v3547, 0.0
    %3568 = vadd.xlane.f32.xlu0 %v3567
    %v3569 = vpop.xlane.xlu0 %3568
    %v3570 = vsel %vm232, %v3549, 0.0
    %3571 = vadd.xlane.f32.xlu0 %v3570
    %v3572 = vpop.xlane.xlu0 %3571
    %v3573 = vsel %vm232, %v3551, 0.0
    %3574 = vadd.xlane.f32.xlu0 %v3573
    %v3575 = vpop.xlane.xlu0 %3574
    %v3576 = vrcp.pop %v3554
    %v3577 = vmul.f32 %v3537, %v3576
    %v3578 = vrcp.pop %v3557
    %v3579 = vmul.f32 %v3539, %v3578
    %v3580 = vrcp.pop %v3560
    %v3581 = vmul.f32 %v3541, %v3580
    %v3582 = vrcp.pop %v3563
    %v3583 = vmul.f32 %v3543, %v3582
    %v3584 = vrcp.pop %v3566
    %v3585 = vmul.f32 %v3545, %v3584
    %v3586 = vrcp.pop %v3569
    %v3587 = vmul.f32 %v3547, %v3586
    %v3588 = vrcp.pop %v3572
    %v3589 = vmul.f32 %v3549, %v3588
    %v3590 = vrcp.pop %v3575
    %v3591 = vmul.f32 %v3551, %v3590
    %3592 = vrot.lane.b32.xlu0 %v3248, 96
    %v3593 = vpop.permute.xlu0 %3592
    %3594 = vrot.lane.b32.xlu0 %v3253, 96
    %v3595 = vpop.permute.xlu0 %3594
    %v3599 = vsel %vm232, %v3577, 0
    %v3602 = vsel %vm232, %v3579, 0
    %v3605 = vsel %vm232, %v3581, 0
    %v3608 = vsel %vm232, %v3583, 0
    %v3611 = vsel %vm232, %v3585, 0
    %v3614 = vsel %vm232, %v3587, 0
    %v3617 = vsel %vm232, %v3589, 0
    %v3620 = vsel %vm232, %v3591, 0
    %3622 = vmatprep.subr.mxu0 0.0
    %3623 = vmatpush1.msra.mxu0 %v3593
    %3624 = vmatprep.subr.mxu0 0.0
    %3625 = vmatpush1.msra.mxu0 %v3595
    %3626 = vmatprep.subr.mxu0 0.0
    %3627 = vmatpush1.msra.mxu0 0.0
    %3628 = vmatprep.subr.mxu0 0.0
    %3629 = vmatpush1.msra.mxu0 0.0
    %3630 = vmatprep.subr.mxu0 0.0
    %3631 = vmatpush1.msra.mxu0 0.0
    %3632 = vmatprep.subr.mxu0 0.0
    %3633 = vmatpush1.msra.mxu0 0.0
    %3634 = vmatprep.subr.mxu0 0.0
    %3635 = vmatpush1.msra.mxu0 0.0
    %3636 = vmatprep.subr.mxu0 0.0
    %3637 = vmatpush1.msra.mxu0 0.0
    %3638 = vmatprep.subr.mxu0 0.0
    %3639 = vmatpush1.msra.mxu0 0.0
    %3640 = vmatprep.subr.mxu0 0.0
    %3641 = vmatpush1.msra.mxu0 0.0
    %3642 = vmatprep.subr.mxu0 0.0
    %3643 = vmatpush1.msra.mxu0 0.0
    %3644 = vmatprep.subr.mxu0 0.0
    %3645 = vmatpush1.msra.mxu0 0.0
    %3646 = vmatprep.subr.mxu0 0.0
    %3647 = vmatpush1.msra.mxu0 0.0
    %3648 = vmatprep.subr.mxu0 0.0
    %3649 = vmatpush1.msra.mxu0 0.0
    %3650 = vmatprep.subr.mxu0 0.0
    %3651 = vmatpush1.msra.mxu0 0.0
    %3652 = vmatprep.subr.mxu0 0.0
    %3653 = vmatpush1.msra.mxu0 0.0
    %3654 = vmatprep.subr.mxu0 0.0
    %3655 = vmatpush1.msra.mxu0 0.0
    %3656 = vmatprep.subr.mxu0 0.0
    %3657 = vmatpush1.msra.mxu0 0.0
    %3658 = vmatprep.subr.mxu0 0.0
    %3659 = vmatpush1.msra.mxu0 0.0
    %3660 = vmatprep.subr.mxu0 0.0
    %3661 = vmatpush1.msra.mxu0 0.0
    %3662 = vmatprep.subr.mxu0 0.0
    %3663 = vmatpush1.msra.mxu0 0.0
    %3664 = vmatprep.subr.mxu0 0.0
    %3665 = vmatpush1.msra.mxu0 0.0
    %3666 = vmatprep.subr.mxu0 0.0
    %3667 = vmatpush1.msra.mxu0 0.0
    %3668 = vmatprep.subr.mxu0 0.0
    %3669 = vmatpush1.msra.mxu0 0.0
    %3670 = vmatprep.subr.mxu0 0.0
    %3671 = vmatpush1.msra.mxu0 0.0
    %3672 = vmatprep.subr.mxu0 0.0
    %3673 = vmatpush1.msra.mxu0 0.0
    %3674 = vmatprep.subr.mxu0 0.0
    %3675 = vmatpush1.msra.mxu0 0.0
    %3676 = vmatprep.subr.mxu0 0.0
    %3677 = vmatpush1.msra.mxu0 0.0
    %3678 = vmatprep.subr.mxu0 0.0
    %3679 = vmatpush1.msra.mxu0 0.0
    %3680 = vmatprep.subr.mxu0 0.0
    %3681 = vmatpush1.msra.mxu0 0.0
    %3682 = vmatprep.subr.mxu0 0.0
    %3683 = vmatpush1.msra.mxu0 0.0
    %3684 = vmatprep.subr.mxu0 0.0
    %3685 = vmatpush1.msra.mxu0 0.0
    %3686 = vmatprep.mubr.f32.mxu0 0.0
    %3687 = vmatmul.mubr.f32.gmra.mrb[0].mxu0 %v3599
    %v3688 = vpop.f32.mrb[0].mxu0
    %v3689 = vadd.f32 0.0, %v3688
    %v3690 = vpop.f32.mrb[0].mxu0
    %3691 = vmatprep.mubr.f32.mxu0 0.0
    %3692 = vmatmul.mubr.f32.gmra.mrb[0].mxu0 %v3602
    %v3693 = vpop.f32.mrb[0].mxu0
    %v3694 = vadd.f32 0.0, %v3693
    %v3695 = vpop.f32.mrb[0].mxu0
    %3696 = vmatprep.mubr.f32.mxu0 0.0
    %3697 = vmatmul.mubr.f32.gmra.mrb[0].mxu0 %v3605
    %v3698 = vpop.f32.mrb[0].mxu0
    %v3699 = vadd.f32 0.0, %v3698
    %v3700 = vpop.f32.mrb[0].mxu0
    %3701 = vmatprep.mubr.f32.mxu0 0.0
    %3702 = vmatmul.mubr.f32.gmra.mrb[0].mxu0 %v3608
    %v3703 = vpop.f32.mrb[0].mxu0
    %v3704 = vadd.f32 0.0, %v3703
    %v3705 = vpop.f32.mrb[0].mxu0
    %3706 = vmatprep.mubr.f32.mxu0 0.0
    %3707 = vmatmul.mubr.f32.gmra.mrb[0].mxu0 %v3611
    %v3708 = vpop.f32.mrb[0].mxu0
    %v3709 = vadd.f32 0.0, %v3708
    %v3710 = vpop.f32.mrb[0].mxu0
    %3711 = vmatprep.mubr.f32.mxu0 0.0
    %3712 = vmatmul.mubr.f32.gmra.mrb[0].mxu0 %v3614
    %v3713 = vpop.f32.mrb[0].mxu0
    %v3714 = vadd.f32 0.0, %v3713
    %v3715 = vpop.f32.mrb[0].mxu0
    %3716 = vmatprep.mubr.f32.mxu0 0.0
    %3717 = vmatmul.mubr.f32.gmra.mrb[0].mxu0 %v3617
    %v3718 = vpop.f32.mrb[0].mxu0
    %v3719 = vadd.f32 0.0, %v3718
    %v3720 = vpop.f32.mrb[0].mxu0
    %3721 = vmatprep.mubr.f32.mxu0 0.0
    %3722 = vmatmul.mubr.f32.gmra.mrb[0].mxu0 %v3620
    %v3723 = vpop.f32.mrb[0].mxu0
    %v3724 = vadd.f32 0.0, %v3723
    %v3725 = vpop.f32.mrb[0].mxu0
    %3726 = vdwg.mxu0
    %v3727 = vmul.f32 %v3689, %v216
    %v3728 = vmul.f32 %v3694, %v217
    %v3729 = vmul.f32 %v3699, %v218
    %v3730 = vmul.f32 %v3704, %v219
    %v3731 = vmul.f32 %v3709, %v220
    %v3732 = vmul.f32 %v3714, %v221
    %v3733 = vmul.f32 %v3719, %v222
    %v3734 = vmul.f32 %v3724, %v223
    %3735 = vmatprep.subr.mxu0 0.0
    %3736 = vmatpush1.msra.mxu0 %v3727
    %3737 = vmatprep.subr.mxu0 0.0
    %3738 = vmatpush1.msra.mxu0 %v3728
    %3739 = vmatprep.subr.mxu0 0.0
    %3740 = vmatpush1.msra.mxu0 %v3729
    %3741 = vmatprep.subr.mxu0 0.0
    %3742 = vmatpush1.msra.mxu0 %v3730
    %3743 = vmatprep.subr.mxu0 0.0
    %3744 = vmatpush1.msra.mxu0 %v3731
    %3745 = vmatprep.subr.mxu0 0.0
    %3746 = vmatpush1.msra.mxu0 %v3732
    %3747 = vmatprep.subr.mxu0 0.0
    %3748 = vmatpush1.msra.mxu0 %v3733
    %3749 = vmatprep.subr.mxu0 0.0
    %3750 = vmatpush1.msra.mxu0 %v3734
    %3751 = vmatprep.subr.mxu0 0.0
    %3752 = vmatpush1.msra.mxu0 0.0
    %3753 = vmatprep.subr.mxu0 0.0
    %3754 = vmatpush1.msra.mxu0 0.0
    %3755 = vmatprep.subr.mxu0 0.0
    %3756 = vmatpush1.msra.mxu0 0.0
    %3757 = vmatprep.subr.mxu0 0.0
    %3758 = vmatpush1.msra.mxu0 0.0
    %3759 = vmatprep.subr.mxu0 0.0
    %3760 = vmatpush1.msra.mxu0 0.0
    %3761 = vmatprep.subr.mxu0 0.0
    %3762 = vmatpush1.msra.mxu0 0.0
    %3763 = vmatprep.subr.mxu0 0.0
    %3764 = vmatpush1.msra.mxu0 0.0
    %3765 = vmatprep.subr.mxu0 0.0
    %3766 = vmatpush1.msra.mxu0 0.0
    %3767 = vmatprep.subr.mxu0 0.0
    %3768 = vmatpush1.msra.mxu0 0.0
    %3769 = vmatprep.subr.mxu0 0.0
    %3770 = vmatpush1.msra.mxu0 0.0
    %3771 = vmatprep.subr.mxu0 0.0
    %3772 = vmatpush1.msra.mxu0 0.0
    %3773 = vmatprep.subr.mxu0 0.0
    %3774 = vmatpush1.msra.mxu0 0.0
    %3775 = vmatprep.subr.mxu0 0.0
    %3776 = vmatpush1.msra.mxu0 0.0
    %3777 = vmatprep.subr.mxu0 0.0
    %3778 = vmatpush1.msra.mxu0 0.0
    %3779 = vmatprep.subr.mxu0 0.0
    %3780 = vmatpush1.msra.mxu0 0.0
    %3781 = vmatprep.subr.mxu0 0.0
    %3782 = vmatpush1.msra.mxu0 0.0
    %3783 = vmatprep.subr.mxu0 0.0
    %3784 = vmatpush1.msra.mxu0 0.0
    %3785 = vmatprep.subr.mxu0 0.0
    %3786 = vmatpush1.msra.mxu0 0.0
    %3787 = vmatprep.subr.mxu0 0.0
    %3788 = vmatpush1.msra.mxu0 0.0
    %3789 = vmatprep.subr.mxu0 0.0
    %3790 = vmatpush1.msra.mxu0 0.0
    %3791 = vmatprep.subr.mxu0 0.0
    %3792 = vmatpush1.msra.mxu0 0.0
    %3793 = vmatprep.subr.mxu0 0.0
    %3794 = vmatpush1.msra.mxu0 0.0
    %3795 = vmatprep.subr.mxu0 0.0
    %3796 = vmatpush1.msra.mxu0 0.0
    %3797 = vmatprep.subr.mxu0 0.0
    %3798 = vmatpush1.msra.mxu0 0.0
    %3799 = vmatprep.mubr.f32.mxu0 0.0
    %3800 = vmatmul.mubr.f32.gmra.mrb[0].mxu0 %v752
    %v3801 = vpop.f32.mrb[0].mxu0
    %v3802 = vadd.f32 0.0, %v3801
    %v3803 = vpop.f32.mrb[0].mxu0
    %3804 = vmatprep.mubr.f32.mxu0 0.0
    %3805 = vmatmul.mubr.f32.gmra.mrb[0].mxu0 %v755
    %v3806 = vpop.f32.mrb[0].mxu0
    %v3807 = vadd.f32 0.0, %v3806
    %v3808 = vpop.f32.mrb[0].mxu0
    %3809 = vdwg.mxu0
    %v3810 = vld [vmem:[#allocation2 + $0x3d8] sm:$0xff]
    %v3811 = vld [vmem:[#allocation2 + $0x3e0] sm:$0xff]
    %v3812 = vld [vmem:[#allocation2 + $0x3e8] sm:$0xff]
    %v3813 = vld [vmem:[#allocation2 + $0x3f0] sm:$0xff]
    %v3814 = vld [vmem:[#allocation2 + $0x3f8] sm:$0x1]
    %v3815 = vlaneseq
    %v3816 = vshrl.u32 %v3815, 7
    %v3817 = vsub.s32 0, %v3816
    %v3818 = vrot.slane %v3814, %v3817
    %v3820 = vsel %vm134, %v3802, 0
    %v3823 = vsel %vm134, %v3807, 0
    %3825 = vmatprep.subr.mxu0 0.0
    %3826 = vmatpush1.msra.mxu0 %v3810
    %3827 = vmatprep.subr.mxu0 0.0
    %3828 = vmatpush1.msra.mxu0 %v3811
    %3829 = vmatprep.subr.mxu0 0.0
    %3830 = vmatpush1.msra.mxu0 %v3812
    %3831 = vmatprep.subr.mxu0 0.0
    %3832 = vmatpush1.msra.mxu0 %v3813
    %3833 = vmatprep.subr.mxu0 0.0
    %3834 = vmatpush1.msra.mxu0 0.0
    %3835 = vmatprep.subr.mxu0 0.0
    %3836 = vmatpush1.msra.mxu0 0.0
    %3837 = vmatprep.subr.mxu0 0.0
    %3838 = vmatpush1.msra.mxu0 0.0
    %3839 = vmatprep.subr.mxu0 0.0
    %3840 = vmatpush1.msra.mxu0 0.0
    %3841 = vmatprep.subr.mxu0 0.0
    %3842 = vmatpush1.msra.mxu0 0.0
    %3843 = vmatprep.subr.mxu0 0.0
    %3844 = vmatpush1.msra.mxu0 0.0
    %3845 = vmatprep.subr.mxu0 0.0
    %3846 = vmatpush1.msra.mxu0 0.0
    %3847 = vmatprep.subr.mxu0 0.0
    %3848 = vmatpush1.msra.mxu0 0.0
    %3849 = vmatprep.subr.mxu0 0.0
    %3850 = vmatpush1.msra.mxu0 0.0
    %3851 = vmatprep.subr.mxu0 0.0
    %3852 = vmatpush1.msra.mxu0 0.0
    %3853 = vmatprep.subr.mxu0 0.0
    %3854 = vmatpush1.msra.mxu0 0.0
    %3855 = vmatprep.subr.mxu0 0.0
    %3856 = vmatpush1.msra.mxu0 0.0
    %3857 = vmatprep.subr.mxu0 0.0
    %3858 = vmatpush1.msra.mxu0 0.0
    %3859 = vmatprep.subr.mxu0 0.0
    %3860 = vmatpush1.msra.mxu0 0.0
    %3861 = vmatprep.subr.mxu0 0.0
    %3862 = vmatpush1.msra.mxu0 0.0
    %3863 = vmatprep.subr.mxu0 0.0
    %3864 = vmatpush1.msra.mxu0 0.0
    %3865 = vmatprep.subr.mxu0 0.0
    %3866 = vmatpush1.msra.mxu0 0.0
    %3867 = vmatprep.subr.mxu0 0.0
    %3868 = vmatpush1.msra.mxu0 0.0
    %3869 = vmatprep.subr.mxu0 0.0
    %3870 = vmatpush1.msra.mxu0 0.0
    %3871 = vmatprep.subr.mxu0 0.0
    %3872 = vmatpush1.msra.mxu0 0.0
    %3873 = vmatprep.subr.mxu0 0.0
    %3874 = vmatpush1.msra.mxu0 0.0
    %3875 = vmatprep.subr.mxu0 0.0
    %3876 = vmatpush1.msra.mxu0 0.0
    %3877 = vmatprep.subr.mxu0 0.0
    %3878 = vmatpush1.msra.mxu0 0.0
    %3879 = vmatprep.subr.mxu0 0.0
    %3880 = vmatpush1.msra.mxu0 0.0
    %3881 = vmatprep.subr.mxu0 0.0
    %3882 = vmatpush1.msra.mxu0 0.0
    %3883 = vmatprep.subr.mxu0 0.0
    %3884 = vmatpush1.msra.mxu0 0.0
    %3885 = vmatprep.subr.mxu0 0.0
    %3886 = vmatpush1.msra.mxu0 0.0
    %3887 = vmatprep.subr.mxu0 0.0
    %3888 = vmatpush1.msra.mxu0 0.0
    %3889 = vmatprep.mubr.f32.mxu0 0.0
    %3890 = vmatmul.mubr.f32.gmra.mrb[0].mxu0 %v3820
    %v3891 = vpop.f32.mrb[0].mxu0
    %v3892 = vadd.f32 %v3818, %v3891
    %v3893 = vpop.f32.mrb[0].mxu0
    %3894 = vmatprep.mubr.f32.mxu0 0.0
    %3895 = vmatmul.mubr.f32.gmra.mrb[0].mxu0 %v3823
    %v3896 = vpop.f32.mrb[0].mxu0
    %v3897 = vadd.f32 %v3818, %v3896
    %v3898 = vpop.f32.mrb[0].mxu0
    %3899 = vdwg.mxu0
    %v3900 = vadd.f32 %v3892, %v3072
    %v3901 = vadd.f32 %v3897, %v3073
    %v3902 = vsel %vm134, %v3900, 0.0
    %3903 = vadd.xlane.f32.xlu0 %v3902
    %v3904 = vpop.xlane.xlu0 %3903
    %v3905 = vsel %vm134, %v3901, 0.0
    %3906 = vadd.xlane.f32.xlu0 %v3905
    %v3907 = vpop.xlane.xlu0 %3906
    %v3908 = vmul.f32 %v3904, %v930
    %v3909 = vmul.f32 %v3907, %v930
    %v3910 = vsub.f32 %v3900, %v3908
    %v3911 = vsub.f32 %v3901, %v3909
    %v3912 = vmul.f32 %v3910, %v3910
    %v3913 = vmul.f32 %v3911, %v3911
    %v3914 = vsel %vm134, %v3912, 0.0
    %3915 = vadd.xlane.f32.xlu0 %v3914
    %v3916 = vpop.xlane.xlu0 %3915
    %v3917 = vsel %vm134, %v3913, 0.0
    %3918 = vadd.xlane.f32.xlu0 %v3917
    %v3919 = vpop.xlane.xlu0 %3918
    %v3920 = vmul.f32 %v3916, %v930
    %v3921 = vmul.f32 %v3919, %v930
    %v3922 = vadd.f32 %v3920, 1e-05
    %v3923 = vadd.f32 %v3921, 1e-05
    %v3924 = vrsqrt.pop %v3922
    %v3925 = vrsqrt.pop %v3923
    %v3926 = vmul.f32 %v3910, %v3924
    %v3927 = vmul.f32 %v3911, %v3925
    %v3928 = vld [vmem:[#allocation2 + $0x400] sm:$0x1]
    %v3929 = vlaneseq
    %v3930 = vshrl.u32 %v3929, 7
    %v3931 = vsub.s32 0, %v3930
    %v3932 = vrot.slane %v3928, %v3931
    %v3933 = vmul.f32 %v3926, %v3932
    %v3934 = vmul.f32 %v3927, %v3932
    %v3935 = vld [vmem:[#allocation2 + $0x408] sm:$0x1]
    %v3936 = vlaneseq
    %v3937 = vshrl.u32 %v3936, 7
    %v3938 = vsub.s32 0, %v3937
    %v3939 = vrot.slane %v3935, %v3938
    %v3940 = vadd.f32 %v3933, %v3939
    %v3941 = vadd.f32 %v3934, %v3939
    %v3942 = vld [vmem:[#allocation2 + $0x420] sm:$0xff]
    %v3943 = vld [vmem:[#allocation2 + $0x428] sm:$0xff]
    %v3944 = vld [vmem:[#allocation2 + $0x430] sm:$0xff]
    %v3945 = vld [vmem:[#allocation2 + $0x438] sm:$0xff]
    %v3946 = vld [vmem:[#allocation2 + $0x440] sm:$0x1]
    %v3947 = vlaneseq
    %v3948 = vshrl.u32 %v3947, 7
    %v3949 = vsub.s32 0, %v3948
    %v3950 = vrot.slane %v3946, %v3949
    %v3952 = vsel %vm134, %v3940, 0
    %v3955 = vsel %vm134, %v3941, 0
    %3957 = vmatprep.subr.mxu0 0.0
    %3958 = vmatpush1.msra.mxu0 %v3942
    %3959 = vmatprep.subr.mxu0 0.0
    %3960 = vmatpush1.msra.mxu0 %v3943
    %3961 = vmatprep.subr.mxu0 0.0
    %3962 = vmatpush1.msra.mxu0 %v3944
    %3963 = vmatprep.subr.mxu0 0.0
    %3964 = vmatpush1.msra.mxu0 %v3945
    %3965 = vmatprep.subr.mxu0 0.0
    %3966 = vmatpush1.msra.mxu0 0.0
    %3967 = vmatprep.subr.mxu0 0.0
    %3968 = vmatpush1.msra.mxu0 0.0
    %3969 = vmatprep.subr.mxu0 0.0
    %3970 = vmatpush1.msra.mxu0 0.0
    %3971 = vmatprep.subr.mxu0 0.0
    %3972 = vmatpush1.msra.mxu0 0.0
    %3973 = vmatprep.subr.mxu0 0.0
    %3974 = vmatpush1.msra.mxu0 0.0
    %3975 = vmatprep.subr.mxu0 0.0
    %3976 = vmatpush1.msra.mxu0 0.0
    %3977 = vmatprep.subr.mxu0 0.0
    %3978 = vmatpush1.msra.mxu0 0.0
    %3979 = vmatprep.subr.mxu0 0.0
    %3980 = vmatpush1.msra.mxu0 0.0
    %3981 = vmatprep.subr.mxu0 0.0
    %3982 = vmatpush1.msra.mxu0 0.0
    %3983 = vmatprep.subr.mxu0 0.0
    %3984 = vmatpush1.msra.mxu0 0.0
    %3985 = vmatprep.subr.mxu0 0.0
    %3986 = vmatpush1.msra.mxu0 0.0
    %3987 = vmatprep.subr.mxu0 0.0
    %3988 = vmatpush1.msra.mxu0 0.0
    %3989 = vmatprep.subr.mxu0 0.0
    %3990 = vmatpush1.msra.mxu0 0.0
    %3991 = vmatprep.subr.mxu0 0.0
    %3992 = vmatpush1.msra.mxu0 0.0
    %3993 = vmatprep.subr.mxu0 0.0
    %3994 = vmatpush1.msra.mxu0 0.0
    %3995 = vmatprep.subr.mxu0 0.0
    %3996 = vmatpush1.msra.mxu0 0.0
    %3997 = vmatprep.subr.mxu0 0.0
    %3998 = vmatpush1.msra.mxu0 0.0
    %3999 = vmatprep.subr.mxu0 0.0
    %4000 = vmatpush1.msra.mxu0 0.0
    %4001 = vmatprep.subr.mxu0 0.0
    %4002 = vmatpush1.msra.mxu0 0.0
    %4003 = vmatprep.subr.mxu0 0.0
    %4004 = vmatpush1.msra.mxu0 0.0
    %4005 = vmatprep.subr.mxu0 0.0
    %4006 = vmatpush1.msra.mxu0 0.0
    %4007 = vmatprep.subr.mxu0 0.0
    %4008 = vmatpush1.msra.mxu0 0.0
    %4009 = vmatprep.subr.mxu0 0.0
    %4010 = vmatpush1.msra.mxu0 0.0
    %4011 = vmatprep.subr.mxu0 0.0
    %4012 = vmatpush1.msra.mxu0 0.0
    %4013 = vmatprep.subr.mxu0 0.0
    %4014 = vmatpush1.msra.mxu0 0.0
    %4015 = vmatprep.subr.mxu0 0.0
    %4016 = vmatpush1.msra.mxu0 0.0
    %4017 = vmatprep.subr.mxu0 0.0
    %4018 = vmatpush1.msra.mxu0 0.0
    %4019 = vmatprep.subr.mxu0 0.0
    %4020 = vmatpush1.msra.mxu0 0.0
    %4021 = vmatprep.mubr.f32.mxu0 0.0
    %4022 = vmatmul.mubr.f32.gmra.mrb[0].mxu0 %v3952
    %v4023 = vpop.f32.mrb[0].mxu0
    %v4024 = vadd.f32 %v3950, %v4023
    %v4025 = vpop.f32.mrb[0].mxu0
    %4026 = vmatprep.mubr.f32.mxu0 0.0
    %4027 = vmatmul.mubr.f32.gmra.mrb[0].mxu0 %v3955
    %v4028 = vpop.f32.mrb[0].mxu0
    %v4029 = vadd.f32 %v3950, %v4028
    %v4030 = vpop.f32.mrb[0].mxu0
    %4031 = vdwg.mxu0
    %v4032 = vmax.f32 %v4024, 0.0
    %v4033 = vmax.f32 %v4029, 0.0
    %v4034 = vld [vmem:[#allocation2 + $0x448] sm:$0xff]
    %v4035 = vld [vmem:[#allocation2 + $0x450] sm:$0xff]
    %v4036 = vld [vmem:[#allocation2 + $0x458] sm:$0xff]
    %v4037 = vld [vmem:[#allocation2 + $0x460] sm:$0xff]
    %v4038 = vld [vmem:[#allocation2 + $0x468] sm:$0xff]
    %v4039 = vld [vmem:[#allocation2 + $0x470] sm:$0xff]
    %v4040 = vld [vmem:[#allocation2 + $0x478] sm:$0xff]
    %v4041 = vld [vmem:[#allocation2 + $0x480] sm:$0xff]
    %v4042 = vld [vmem:[#allocation2 + $0x488] sm:$0xff]
    %v4043 = vld [vmem:[#allocation2 + $0x490] sm:$0xff]
    %v4044 = vld [vmem:[#allocation2 + $0x498] sm:$0xff]
    %v4045 = vld [vmem:[#allocation2 + $0x4a0] sm:$0xff]
    %v4046 = vld [vmem:[#allocation2 + $0x4a8] sm:$0xff]
    %v4047 = vld [vmem:[#allocation2 + $0x4b0] sm:$0xff]
    %v4048 = vld [vmem:[#allocation2 + $0x4b8] sm:$0xff]
    %v4049 = vld [vmem:[#allocation2 + $0x4c0] sm:$0xff]
    %v4050 = vld [vmem:[#allocation2 + $0x4c8] sm:$0x1]
    %v4051 = vlaneseq
    %v4052 = vshrl.u32 %v4051, 7
    %v4053 = vsub.s32 0, %v4052
    %v4054 = vrot.slane %v4050, %v4053
    %4055 = vmatprep.subr.mxu0 0.0
    %4056 = vmatpush1.msra.mxu0 %v4034
    %4057 = vmatprep.subr.mxu0 0.0
    %4058 = vmatpush1.msra.mxu0 %v4035
    %4059 = vmatprep.subr.mxu0 0.0
    %4060 = vmatpush1.msra.mxu0 %v4036
    %4061 = vmatprep.subr.mxu0 0.0
    %4062 = vmatpush1.msra.mxu0 %v4037
    %4063 = vmatprep.subr.mxu0 0.0
    %4064 = vmatpush1.msra.mxu0 %v4038
    %4065 = vmatprep.subr.mxu0 0.0
    %4066 = vmatpush1.msra.mxu0 %v4039
    %4067 = vmatprep.subr.mxu0 0.0
    %4068 = vmatpush1.msra.mxu0 %v4040
    %4069 = vmatprep.subr.mxu0 0.0
    %4070 = vmatpush1.msra.mxu0 %v4041
    %4071 = vmatprep.subr.mxu0 0.0
    %4072 = vmatpush1.msra.mxu0 %v4042
    %4073 = vmatprep.subr.mxu0 0.0
    %4074 = vmatpush1.msra.mxu0 %v4043
    %4075 = vmatprep.subr.mxu0 0.0
    %4076 = vmatpush1.msra.mxu0 %v4044
    %4077 = vmatprep.subr.mxu0 0.0
    %4078 = vmatpush1.msra.mxu0 %v4045
    %4079 = vmatprep.subr.mxu0 0.0
    %4080 = vmatpush1.msra.mxu0 %v4046
    %4081 = vmatprep.subr.mxu0 0.0
    %4082 = vmatpush1.msra.mxu0 %v4047
    %4083 = vmatprep.subr.mxu0 0.0
    %4084 = vmatpush1.msra.mxu0 %v4048
    %4085 = vmatprep.subr.mxu0 0.0
    %4086 = vmatpush1.msra.mxu0 %v4049
    %4087 = vmatprep.subr.mxu0 0.0
    %4088 = vmatpush1.msra.mxu0 0.0
    %4089 = vmatprep.subr.mxu0 0.0
    %4090 = vmatpush1.msra.mxu0 0.0
    %4091 = vmatprep.subr.mxu0 0.0
    %4092 = vmatpush1.msra.mxu0 0.0
    %4093 = vmatprep.subr.mxu0 0.0
    %4094 = vmatpush1.msra.mxu0 0.0
    %4095 = vmatprep.subr.mxu0 0.0
    %4096 = vmatpush1.msra.mxu0 0.0
    %4097 = vmatprep.subr.mxu0 0.0
    %4098 = vmatpush1.msra.mxu0 0.0
    %4099 = vmatprep.subr.mxu0 0.0
    %4100 = vmatpush1.msra.mxu0 0.0
    %4101 = vmatprep.subr.mxu0 0.0
    %4102 = vmatpush1.msra.mxu0 0.0
    %4103 = vmatprep.subr.mxu0 0.0
    %4104 = vmatpush1.msra.mxu0 0.0
    %4105 = vmatprep.subr.mxu0 0.0
    %4106 = vmatpush1.msra.mxu0 0.0
    %4107 = vmatprep.subr.mxu0 0.0
    %4108 = vmatpush1.msra.mxu0 0.0
    %4109 = vmatprep.subr.mxu0 0.0
    %4110 = vmatpush1.msra.mxu0 0.0
    %4111 = vmatprep.subr.mxu0 0.0
    %4112 = vmatpush1.msra.mxu0 0.0
    %4113 = vmatprep.subr.mxu0 0.0
    %4114 = vmatpush1.msra.mxu0 0.0
    %4115 = vmatprep.subr.mxu0 0.0
    %4116 = vmatpush1.msra.mxu0 0.0
    %4117 = vmatprep.subr.mxu0 0.0
    %4118 = vmatpush1.msra.mxu0 0.0
    %4119 = vmatprep.mubr.f32.mxu0 0.0
    %4120 = vmatmul.mubr.f32.gmra.mrb[0].mxu0 %v4032
    %v4121 = vpop.f32.mrb[0].mxu0
    %v4122 = vadd.f32 %v4054, %v4121
    %v4123 = vpop.f32.mrb[0].mxu0
    %4124 = vmatprep.mubr.f32.mxu0 0.0
    %4125 = vmatmul.mubr.f32.gmra.mrb[0].mxu0 %v4033
    %v4126 = vpop.f32.mrb[0].mxu0
    %v4127 = vadd.f32 %v4054, %v4126
    %v4128 = vpop.f32.mrb[0].mxu0
    %4129 = vdwg.mxu0
    %v4130 = vadd.f32 %v4122, %v3940
    %v4131 = vadd.f32 %v4127, %v3941
    %v4132 = vsel %vm134, %v4130, 0.0
    %4133 = vadd.xlane.f32.xlu0 %v4132
    %v4134 = vpop.xlane.xlu0 %4133
    %v4135 = vsel %vm134, %v4131, 0.0
    %4136 = vadd.xlane.f32.xlu0 %v4135
    %v4137 = vpop.xlane.xlu0 %4136
    %v4138 = vmul.f32 %v4134, %v930
    %v4139 = vmul.f32 %v4137, %v930
    %v4140 = vsub.f32 %v4130, %v4138
    %v4141 = vsub.f32 %v4131, %v4139
    %v4142 = vmul.f32 %v4140, %v4140
    %v4143 = vmul.f32 %v4141, %v4141
    %v4144 = vsel %vm134, %v4142, 0.0
    %4145 = vadd.xlane.f32.xlu0 %v4144
    %v4146 = vpop.xlane.xlu0 %4145
    %v4147 = vsel %vm134, %v4143, 0.0
    %4148 = vadd.xlane.f32.xlu0 %v4147
    %v4149 = vpop.xlane.xlu0 %4148
    %v4150 = vmul.f32 %v4146, %v930
    %v4151 = vmul.f32 %v4149, %v930
    %v4152 = vadd.f32 %v4150, 1e-05
    %v4153 = vadd.f32 %v4151, 1e-05
    %v4154 = vrsqrt.pop %v4152
    %v4155 = vrsqrt.pop %v4153
    %v4156 = vmul.f32 %v4140, %v4154
    %v4157 = vmul.f32 %v4141, %v4155
    %v4158 = vld [vmem:[#allocation2 + $0x410] sm:$0x1]
    %v4159 = vlaneseq
    %v4160 = vshrl.u32 %v4159, 7
    %v4161 = vsub.s32 0, %v4160
    %v4162 = vrot.slane %v4158, %v4161
    %v4163 = vmul.f32 %v4156, %v4162
    %v4164 = vmul.f32 %v4157, %v4162
    %v4165 = vld [vmem:[#allocation2 + $0x418] sm:$0x1]
    %v4166 = vlaneseq
    %v4167 = vshrl.u32 %v4166, 7
    %v4168 = vsub.s32 0, %v4167
    %v4169 = vrot.slane %v4165, %v4168
    %v4170 = vadd.f32 %v4163, %v4169
    %v4171 = vadd.f32 %v4164, %v4169
    %v4172 = vld [vmem:[#allocation2 + $0x4d0] sm:$0xff]
    %v4173 = vld [vmem:[#allocation2 + $0x4d8] sm:$0xff]
    %v4174 = vld [vmem:[#allocation2 + $0x4e0] sm:$0xff]
    %v4175 = vld [vmem:[#allocation2 + $0x4e8] sm:$0xff]
    %v4177 = vsel %vm134, %v4170, 0
    %v4180 = vsel %vm134, %v4171, 0
    %4182 = vmatprep.subr.mxu0 0.0
    %4183 = vmatpush1.msra.mxu0 %v4172
    %4184 = vmatprep.subr.mxu0 0.0
    %4185 = vmatpush1.msra.mxu0 %v4173
    %4186 = vmatprep.subr.mxu0 0.0
    %4187 = vmatpush1.msra.mxu0 %v4174
    %4188 = vmatprep.subr.mxu0 0.0
    %4189 = vmatpush1.msra.mxu0 %v4175
    %4190 = vmatprep.subr.mxu0 0.0
    %4191 = vmatpush1.msra.mxu0 0.0
    %4192 = vmatprep.subr.mxu0 0.0
    %4193 = vmatpush1.msra.mxu0 0.0
    %4194 = vmatprep.subr.mxu0 0.0
    %4195 = vmatpush1.msra.mxu0 0.0
    %4196 = vmatprep.subr.mxu0 0.0
    %4197 = vmatpush1.msra.mxu0 0.0
    %4198 = vmatprep.subr.mxu0 0.0
    %4199 = vmatpush1.msra.mxu0 0.0
    %4200 = vmatprep.subr.mxu0 0.0
    %4201 = vmatpush1.msra.mxu0 0.0
    %4202 = vmatprep.subr.mxu0 0.0
    %4203 = vmatpush1.msra.mxu0 0.0
    %4204 = vmatprep.subr.mxu0 0.0
    %4205 = vmatpush1.msra.mxu0 0.0
    %4206 = vmatprep.subr.mxu0 0.0
    %4207 = vmatpush1.msra.mxu0 0.0
    %4208 = vmatprep.subr.mxu0 0.0
    %4209 = vmatpush1.msra.mxu0 0.0
    %4210 = vmatprep.subr.mxu0 0.0
    %4211 = vmatpush1.msra.mxu0 0.0
    %4212 = vmatprep.subr.mxu0 0.0
    %4213 = vmatpush1.msra.mxu0 0.0
    %4214 = vmatprep.subr.mxu0 0.0
    %4215 = vmatpush1.msra.mxu0 0.0
    %4216 = vmatprep.subr.mxu0 0.0
    %4217 = vmatpush1.msra.mxu0 0.0
    %4218 = vmatprep.subr.mxu0 0.0
    %4219 = vmatpush1.msra.mxu0 0.0
    %4220 = vmatprep.subr.mxu0 0.0
    %4221 = vmatpush1.msra.mxu0 0.0
    %4222 = vmatprep.subr.mxu0 0.0
    %4223 = vmatpush1.msra.mxu0 0.0
    %4224 = vmatprep.subr.mxu0 0.0
    %4225 = vmatpush1.msra.mxu0 0.0
    %4226 = vmatprep.subr.mxu0 0.0
    %4227 = vmatpush1.msra.mxu0 0.0
    %4228 = vmatprep.subr.mxu0 0.0
    %4229 = vmatpush1.msra.mxu0 0.0
    %4230 = vmatprep.subr.mxu0 0.0
    %4231 = vmatpush1.msra.mxu0 0.0
    %4232 = vmatprep.subr.mxu0 0.0
    %4233 = vmatpush1.msra.mxu0 0.0
    %4234 = vmatprep.subr.mxu0 0.0
    %4235 = vmatpush1.msra.mxu0 0.0
    %4236 = vmatprep.subr.mxu0 0.0
    %4237 = vmatpush1.msra.mxu0 0.0
    %4238 = vmatprep.subr.mxu0 0.0
    %4239 = vmatpush1.msra.mxu0 0.0
    %4240 = vmatprep.subr.mxu0 0.0
    %4241 = vmatpush1.msra.mxu0 0.0
    %4242 = vmatprep.subr.mxu0 0.0
    %4243 = vmatpush1.msra.mxu0 0.0
    %4244 = vmatprep.subr.mxu0 0.0
    %4245 = vmatpush1.msra.mxu0 0.0
    %4246 = vmatprep.mubr.f32.mxu0 0.0
    %4247 = vmatmul.mubr.f32.gmra.mrb[0].mxu0 %v4177
    %v4248 = vpop.f32.mrb[0].mxu0
    %v4249 = vadd.f32 0.0, %v4248
    %v4250 = vpop.f32.mrb[0].mxu0
    %4251 = vmatprep.mubr.f32.mxu0 0.0
    %4252 = vmatmul.mubr.f32.gmra.mrb[0].mxu0 %v4180
    %v4253 = vpop.f32.mrb[0].mxu0
    %v4254 = vadd.f32 0.0, %v4253
    %v4255 = vpop.f32.mrb[0].mxu0
    %4256 = vdwg.mxu0
    %4257 = vmatprep.subr.mxu0 0.0
    %4258 = vmatpush1.msra.mxu0 %v4249
    %4259 = vmatprep.subr.mxu0 0.0
    %4260 = vmatpush1.msra.mxu0 %v4254
    %4261 = vmatprep.subr.mxu0 0.0
    %4262 = vmatpush1.msra.mxu0 0.0
    %4263 = vmatprep.subr.mxu0 0.0
    %4264 = vmatpush1.msra.mxu0 0.0
    %4265 = vmatprep.subr.mxu0 0.0
    %4266 = vmatpush1.msra.mxu0 0.0
    %4267 = vmatprep.subr.mxu0 0.0
    %4268 = vmatpush1.msra.mxu0 0.0
    %4269 = vmatprep.subr.mxu0 0.0
    %4270 = vmatpush1.msra.mxu0 0.0
    %4271 = vmatprep.subr.mxu0 0.0
    %4272 = vmatpush1.msra.mxu0 0.0
    %4273 = vmatprep.subr.mxu0 0.0
    %4274 = vmatpush1.msra.mxu0 0.0
    %4275 = vmatprep.subr.mxu0 0.0
    %4276 = vmatpush1.msra.mxu0 0.0
    %4277 = vmatprep.subr.mxu0 0.0
    %4278 = vmatpush1.msra.mxu0 0.0
    %4279 = vmatprep.subr.mxu0 0.0
    %4280 = vmatpush1.msra.mxu0 0.0
    %4281 = vmatprep.subr.mxu0 0.0
    %4282 = vmatpush1.msra.mxu0 0.0
    %4283 = vmatprep.subr.mxu0 0.0
    %4284 = vmatpush1.msra.mxu0 0.0
    %4285 = vmatprep.subr.mxu0 0.0
    %4286 = vmatpush1.msra.mxu0 0.0
    %4287 = vmatprep.subr.mxu0 0.0
    %4288 = vmatpush1.msra.mxu0 0.0
    %4289 = vmatprep.subr.mxu0 0.0
    %4290 = vmatpush1.msra.mxu0 0.0
    %4291 = vmatprep.subr.mxu0 0.0
    %4292 = vmatpush1.msra.mxu0 0.0
    %4293 = vmatprep.subr.mxu0 0.0
    %4294 = vmatpush1.msra.mxu0 0.0
    %4295 = vmatprep.subr.mxu0 0.0
    %4296 = vmatpush1.msra.mxu0 0.0
    %4297 = vmatprep.subr.mxu0 0.0
    %4298 = vmatpush1.msra.mxu0 0.0
    %4299 = vmatprep.subr.mxu0 0.0
    %4300 = vmatpush1.msra.mxu0 0.0
    %4301 = vmatprep.subr.mxu0 0.0
    %4302 = vmatpush1.msra.mxu0 0.0
    %4303 = vmatprep.subr.mxu0 0.0
    %4304 = vmatpush1.msra.mxu0 0.0
    %4305 = vmatprep.subr.mxu0 0.0
    %4306 = vmatpush1.msra.mxu0 0.0
    %4307 = vmatprep.subr.mxu0 0.0
    %4308 = vmatpush1.msra.mxu0 0.0
    %4309 = vmatprep.subr.mxu0 0.0
    %4310 = vmatpush1.msra.mxu0 0.0
    %4311 = vmatprep.subr.mxu0 0.0
    %4312 = vmatpush1.msra.mxu0 0.0
    %4313 = vmatprep.subr.mxu0 0.0
    %4314 = vmatpush1.msra.mxu0 0.0
    %4315 = vmatprep.subr.mxu0 0.0
    %4316 = vmatpush1.msra.mxu0 0.0
    %4317 = vmatprep.subr.mxu0 0.0
    %4318 = vmatpush1.msra.mxu0 0.0
    %4319 = vmatprep.subr.mxu0 0.0
    %4320 = vmatpush1.msra.mxu0 0.0
    %4321 = vmatprep.mubr.f32.mxu0 0.0
    %4322 = vmatmul.mubr.f32.gmra.mrb[0].mxu0 %v234
    %v4323 = vpop.f32.mrb[0].mxu0
    %v4324 = vadd.f32 0.0, %v4323
    %v4325 = vpop.f32.mrb[0].mxu0
    %4326 = vmatprep.mubr.f32.mxu0 0.0
    %4327 = vmatmul.mubr.f32.gmra.mrb[0].mxu0 %v237
    %v4328 = vpop.f32.mrb[0].mxu0
    %v4329 = vadd.f32 0.0, %v4328
    %v4330 = vpop.f32.mrb[0].mxu0
    %4331 = vmatprep.mubr.f32.mxu0 0.0
    %4332 = vmatmul.mubr.f32.gmra.mrb[0].mxu0 %v240
    %v4333 = vpop.f32.mrb[0].mxu0
    %v4334 = vadd.f32 0.0, %v4333
    %v4335 = vpop.f32.mrb[0].mxu0
    %4336 = vmatprep.mubr.f32.mxu0 0.0
    %4337 = vmatmul.mubr.f32.gmra.mrb[0].mxu0 %v243
    %v4338 = vpop.f32.mrb[0].mxu0
    %v4339 = vadd.f32 0.0, %v4338
    %v4340 = vpop.f32.mrb[0].mxu0
    %4341 = vmatprep.mubr.f32.mxu0 0.0
    %4342 = vmatmul.mubr.f32.gmra.mrb[0].mxu0 %v246
    %v4343 = vpop.f32.mrb[0].mxu0
    %v4344 = vadd.f32 0.0, %v4343
    %v4345 = vpop.f32.mrb[0].mxu0
    %4346 = vmatprep.mubr.f32.mxu0 0.0
    %4347 = vmatmul.mubr.f32.gmra.mrb[0].mxu0 %v249
    %v4348 = vpop.f32.mrb[0].mxu0
    %v4349 = vadd.f32 0.0, %v4348
    %v4350 = vpop.f32.mrb[0].mxu0
    %4351 = vmatprep.mubr.f32.mxu0 0.0
    %4352 = vmatmul.mubr.f32.gmra.mrb[0].mxu0 %v252
    %v4353 = vpop.f32.mrb[0].mxu0
    %v4354 = vadd.f32 0.0, %v4353
    %v4355 = vpop.f32.mrb[0].mxu0
    %4356 = vmatprep.mubr.f32.mxu0 0.0
    %4357 = vmatmul.mubr.f32.gmra.mrb[0].mxu0 %v255
    %v4358 = vpop.f32.mrb[0].mxu0
    %v4359 = vadd.f32 0.0, %v4358
    %v4360 = vpop.f32.mrb[0].mxu0
    %4361 = vdwg.mxu0
    %v4362 = vmul.f32 %v4324, %v216
    %v4363 = vmul.f32 %v4329, %v217
    %v4364 = vmul.f32 %v4334, %v218
    %v4365 = vmul.f32 %v4339, %v219
    %v4366 = vmul.f32 %v4344, %v220
    %v4367 = vmul.f32 %v4349, %v221
    %v4368 = vmul.f32 %v4354, %v222
    %v4369 = vmul.f32 %v4359, %v223
    %4372 = vrot.lane.b32.xlu0 %v4249, 96
    %v4373 = vpop.permute.xlu0 %4372
    %4374 = vrot.lane.b32.xlu0 %v4254, 96
    %v4375 = vpop.permute.xlu0 %4374
    %v4377 = vsel %vm134, %v4362, 0
    %v4380 = vsel %vm134, %v4363, 0
    %v4383 = vsel %vm134, %v4364, 0
    %v4386 = vsel %vm134, %v4365, 0
    %v4389 = vsel %vm134, %v4366, 0
    %v4392 = vsel %vm134, %v4367, 0
    %v4395 = vsel %vm134, %v4368, 0
    %v4398 = vsel %vm134, %v4369, 0
    %v4400 = vsel %vm134, %v4373, 0
    %v4402 = vsel %vm134, %v4375, 0
    %4404 = vmatprep.subr.mxu0 0.0
    %4405 = vmatpush1.xpose.msra.mxu0 %v4400
    %4406 = vmatprep.subr.mxu0 0.0
    %4407 = vmatpush1.xpose.msra.mxu0 %v4402
    %4408 = vmatprep.subr.mxu0 0.0
    %4409 = vmatpush1.xpose.msra.mxu0 0.0
    %4410 = vmatprep.subr.mxu0 0.0
    %4411 = vmatpush1.xpose.msra.mxu0 0.0
    %4412 = vmatprep.subr.mxu0 0.0
    %4413 = vmatpush1.xpose.msra.mxu0 0.0
    %4414 = vmatprep.subr.mxu0 0.0
    %4415 = vmatpush1.xpose.msra.mxu0 0.0
    %4416 = vmatprep.subr.mxu0 0.0
    %4417 = vmatpush1.xpose.msra.mxu0 0.0
    %4418 = vmatprep.subr.mxu0 0.0
    %4419 = vmatpush1.xpose.msra.mxu0 0.0
    %4420 = vmatprep.subr.mxu0 0.0
    %4421 = vmatpush1.xpose.msra.mxu0 0.0
    %4422 = vmatprep.subr.mxu0 0.0
    %4423 = vmatpush1.xpose.msra.mxu0 0.0
    %4424 = vmatprep.subr.mxu0 0.0
    %4425 = vmatpush1.xpose.msra.mxu0 0.0
    %4426 = vmatprep.subr.mxu0 0.0
    %4427 = vmatpush1.xpose.msra.mxu0 0.0
    %4428 = vmatprep.subr.mxu0 0.0
    %4429 = vmatpush1.xpose.msra.mxu0 0.0
    %4430 = vmatprep.subr.mxu0 0.0
    %4431 = vmatpush1.xpose.msra.mxu0 0.0
    %4432 = vmatprep.subr.mxu0 0.0
    %4433 = vmatpush1.xpose.msra.mxu0 0.0
    %4434 = vmatprep.subr.mxu0 0.0
    %4435 = vmatpush1.xpose.msra.mxu0 0.0
    %4436 = vmatprep.subr.mxu0 0.0
    %4437 = vmatpush1.xpose.msra.mxu0 0.0
    %4438 = vmatprep.subr.mxu0 0.0
    %4439 = vmatpush1.xpose.msra.mxu0 0.0
    %4440 = vmatprep.subr.mxu0 0.0
    %4441 = vmatpush1.xpose.msra.mxu0 0.0
    %4442 = vmatprep.subr.mxu0 0.0
    %4443 = vmatpush1.xpose.msra.mxu0 0.0
    %4444 = vmatprep.subr.mxu0 0.0
    %4445 = vmatpush1.xpose.msra.mxu0 0.0
    %4446 = vmatprep.subr.mxu0 0.0
    %4447 = vmatpush1.xpose.msra.mxu0 0.0
    %4448 = vmatprep.subr.mxu0 0.0
    %4449 = vmatpush1.xpose.msra.mxu0 0.0
    %4450 = vmatprep.subr.mxu0 0.0
    %4451 = vmatpush1.xpose.msra.mxu0 0.0
    %4452 = vmatprep.subr.mxu0 0.0
    %4453 = vmatpush1.xpose.msra.mxu0 0.0
    %4454 = vmatprep.subr.mxu0 0.0
    %4455 = vmatpush1.xpose.msra.mxu0 0.0
    %4456 = vmatprep.subr.mxu0 0.0
    %4457 = vmatpush1.xpose.msra.mxu0 0.0
    %4458 = vmatprep.subr.mxu0 0.0
    %4459 = vmatpush1.xpose.msra.mxu0 0.0
    %4460 = vmatprep.subr.mxu0 0.0
    %4461 = vmatpush1.xpose.msra.mxu0 0.0
    %4462 = vmatprep.subr.mxu0 0.0
    %4463 = vmatpush1.xpose.msra.mxu0 0.0
    %4464 = vmatprep.subr.mxu0 0.0
    %4465 = vmatpush1.xpose.msra.mxu0 0.0
    %4466 = vmatprep.subr.mxu0 0.0
    %4467 = vmatpush1.xpose.msra.mxu0 0.0
    %4468 = vmatprep.mubr.f32.mxu0 0.0
    %4469 = vmatmul.mubr.f32.gmra.mrb[0].mxu0 %v4377
    %v4470 = vpop.f32.mrb[0].mxu0
    %v4471 = vadd.f32 %v370, %v4470
    %v4472 = vpop.f32.mrb[0].mxu0
    %4473 = vmatprep.mubr.f32.mxu0 0.0
    %4474 = vmatmul.mubr.f32.gmra.mrb[0].mxu0 %v4380
    %v4475 = vpop.f32.mrb[0].mxu0
    %v4476 = vadd.f32 %v371, %v4475
    %v4477 = vpop.f32.mrb[0].mxu0
    %4478 = vmatprep.mubr.f32.mxu0 0.0
    %4479 = vmatmul.mubr.f32.gmra.mrb[0].mxu0 %v4383
    %v4480 = vpop.f32.mrb[0].mxu0
    %v4481 = vadd.f32 %v372, %v4480
    %v4482 = vpop.f32.mrb[0].mxu0
    %4483 = vmatprep.mubr.f32.mxu0 0.0
    %4484 = vmatmul.mubr.f32.gmra.mrb[0].mxu0 %v4386
    %v4485 = vpop.f32.mrb[0].mxu0
    %v4486 = vadd.f32 %v373, %v4485
    %v4487 = vpop.f32.mrb[0].mxu0
    %4488 = vmatprep.mubr.f32.mxu0 0.0
    %4489 = vmatmul.mubr.f32.gmra.mrb[0].mxu0 %v4389
    %v4490 = vpop.f32.mrb[0].mxu0
    %v4491 = vadd.f32 %v374, %v4490
    %v4492 = vpop.f32.mrb[0].mxu0
    %4493 = vmatprep.mubr.f32.mxu0 0.0
    %4494 = vmatmul.mubr.f32.gmra.mrb[0].mxu0 %v4392
    %v4495 = vpop.f32.mrb[0].mxu0
    %v4496 = vadd.f32 %v375, %v4495
    %v4497 = vpop.f32.mrb[0].mxu0
    %4498 = vmatprep.mubr.f32.mxu0 0.0
    %4499 = vmatmul.mubr.f32.gmra.mrb[0].mxu0 %v4395
    %v4500 = vpop.f32.mrb[0].mxu0
    %v4501 = vadd.f32 %v376, %v4500
    %v4502 = vpop.f32.mrb[0].mxu0
    %4503 = vmatprep.mubr.f32.mxu0 0.0
    %4504 = vmatmul.mubr.f32.gmra.mrb[0].mxu0 %v4398
    %v4505 = vpop.f32.mrb[0].mxu0
    %v4506 = vadd.f32 %v377, %v4505
    %v4507 = vpop.f32.mrb[0].mxu0
    %4508 = vdwg.mxu0
    %v4509 = vsel %vm232, %v4471, -inf
    %4510 = vmax.xlane.f32.xlu0 %v4509
    %v4511 = vpop.xlane.xlu0 %4510
    %v4512 = vsel %vm232, %v4476, -inf
    %4513 = vmax.xlane.f32.xlu0 %v4512
    %v4514 = vpop.xlane.xlu0 %4513
    %v4515 = vsel %vm232, %v4481, -inf
    %4516 = vmax.xlane.f32.xlu0 %v4515
    %v4517 = vpop.xlane.xlu0 %4516
    %v4518 = vsel %vm232, %v4486, -inf
    %4519 = vmax.xlane.f32.xlu0 %v4518
    %v4520 = vpop.xlane.xlu0 %4519
    %v4521 = vsel %vm232, %v4491, -inf
    %4522 = vmax.xlane.f32.xlu0 %v4521
    %v4523 = vpop.xlane.xlu0 %4522
    %v4524 = vsel %vm232, %v4496, -inf
    %4525 = vmax.xlane.f32.xlu0 %v4524
    %v4526 = vpop.xlane.xlu0 %4525
    %v4527 = vsel %vm232, %v4501, -inf
    %4528 = vmax.xlane.f32.xlu0 %v4527
    %v4529 = vpop.xlane.xlu0 %4528
    %v4530 = vsel %vm232, %v4506, -inf
    %4531 = vmax.xlane.f32.xlu0 %v4530
    %v4532 = vpop.xlane.xlu0 %4531
    %v4533 = vsub.f32 %v4471, %v4511
    %v4534 = vsub.f32 %v4476, %v4514
    %v4535 = vsub.f32 %v4481, %v4517
    %v4536 = vsub.f32 %v4486, %v4520
    %v4537 = vsub.f32 %v4491, %v4523
    %v4538 = vsub.f32 %v4496, %v4526
    %v4539 = vsub.f32 %v4501, %v4529
    %v4540 = vsub.f32 %v4506, %v4532
    %v4541 = vmul.f32 %v4533, 1.442695
    %v4542 = vpow.pop %v4541
    %v4543 = vmul.f32 %v4534, 1.442695
    %v4544 = vpow.pop %v4543
    %v4545 = vmul.f32 %v4535, 1.442695
    %v4546 = vpow.pop %v4545
    %v4547 = vmul.f32 %v4536, 1.442695
    %v4548 = vpow.pop %v4547
    %v4549 = vmul.f32 %v4537, 1.442695
    %v4550 = vpow.pop %v4549
    %v4551 = vmul.f32 %v4538, 1.442695
    %v4552 = vpow.pop %v4551
    %v4553 = vmul.f32 %v4539, 1.442695
    %v4554 = vpow.pop %v4553
    %v4555 = vmul.f32 %v4540, 1.442695
    %v4556 = vpow.pop %v4555
    %v4557 = vsel %vm232, %v4542, 0.0
    %4558 = vadd.xlane.f32.xlu0 %v4557
    %v4559 = vpop.xlane.xlu0 %4558
    %v4560 = vsel %vm232, %v4544, 0.0
    %4561 = vadd.xlane.f32.xlu0 %v4560
    %v4562 = vpop.xlane.xlu0 %4561
    %v4563 = vsel %vm232, %v4546, 0.0
    %4564 = vadd.xlane.f32.xlu0 %v4563
    %v4565 = vpop.xlane.xlu0 %4564
    %v4566 = vsel %vm232, %v4548, 0.0
    %4567 = vadd.xlane.f32.xlu0 %v4566
    %v4568 = vpop.xlane.xlu0 %4567
    %v4569 = vsel %vm232, %v4550, 0.0
    %4570 = vadd.xlane.f32.xlu0 %v4569
    %v4571 = vpop.xlane.xlu0 %4570
    %v4572 = vsel %vm232, %v4552, 0.0
    %4573 = vadd.xlane.f32.xlu0 %v4572
    %v4574 = vpop.xlane.xlu0 %4573
    %v4575 = vsel %vm232, %v4554, 0.0
    %4576 = vadd.xlane.f32.xlu0 %v4575
    %v4577 = vpop.xlane.xlu0 %4576
    %v4578 = vsel %vm232, %v4556, 0.0
    %4579 = vadd.xlane.f32.xlu0 %v4578
    %v4580 = vpop.xlane.xlu0 %4579
    %v4581 = vrcp.pop %v4559
    %v4582 = vmul.f32 %v4542, %v4581
    %v4583 = vrcp.pop %v4562
    %v4584 = vmul.f32 %v4544, %v4583
    %v4585 = vrcp.pop %v4565
    %v4586 = vmul.f32 %v4546, %v4585
    %v4587 = vrcp.pop %v4568
    %v4588 = vmul.f32 %v4548, %v4587
    %v4589 = vrcp.pop %v4571
    %v4590 = vmul.f32 %v4550, %v4589
    %v4591 = vrcp.pop %v4574
    %v4592 = vmul.f32 %v4552, %v4591
    %v4593 = vrcp.pop %v4577
    %v4594 = vmul.f32 %v4554, %v4593
    %v4595 = vrcp.pop %v4580
    %v4596 = vmul.f32 %v4556, %v4595
    %4597 = vrot.lane.b32.xlu0 %v4249, 64
    %v4598 = vpop.permute.xlu0 %4597
    %4599 = vrot.lane.b32.xlu0 %v4254, 64
    %v4600 = vpop.permute.xlu0 %4599
    %v4604 = vsel %vm232, %v4582, 0
    %v4607 = vsel %vm232, %v4584, 0
    %v4610 = vsel %vm232, %v4586, 0
    %v4613 = vsel %vm232, %v4588, 0
    %v4616 = vsel %vm232, %v4590, 0
    %v4619 = vsel %vm232, %v4592, 0
    %v4622 = vsel %vm232, %v4594, 0
    %v4625 = vsel %vm232, %v4596, 0
    %4627 = vmatprep.subr.mxu0 0.0
    %4628 = vmatpush1.msra.mxu0 %v4598
    %4629 = vmatprep.subr.mxu0 0.0
    %4630 = vmatpush1.msra.mxu0 %v4600
    %4631 = vmatprep.subr.mxu0 0.0
    %4632 = vmatpush1.msra.mxu0 0.0
    %4633 = vmatprep.subr.mxu0 0.0
    %4634 = vmatpush1.msra.mxu0 0.0
    %4635 = vmatprep.subr.mxu0 0.0
    %4636 = vmatpush1.msra.mxu0 0.0
    %4637 = vmatprep.subr.mxu0 0.0
    %4638 = vmatpush1.msra.mxu0 0.0
    %4639 = vmatprep.subr.mxu0 0.0
    %4640 = vmatpush1.msra.mxu0 0.0
    %4641 = vmatprep.subr.mxu0 0.0
    %4642 = vmatpush1.msra.mxu0 0.0
    %4643 = vmatprep.subr.mxu0 0.0
    %4644 = vmatpush1.msra.mxu0 0.0
    %4645 = vmatprep.subr.mxu0 0.0
    %4646 = vmatpush1.msra.mxu0 0.0
    %4647 = vmatprep.subr.mxu0 0.0
    %4648 = vmatpush1.msra.mxu0 0.0
    %4649 = vmatprep.subr.mxu0 0.0
    %4650 = vmatpush1.msra.mxu0 0.0
    %4651 = vmatprep.subr.mxu0 0.0
    %4652 = vmatpush1.msra.mxu0 0.0
    %4653 = vmatprep.subr.mxu0 0.0
    %4654 = vmatpush1.msra.mxu0 0.0
    %4655 = vmatprep.subr.mxu0 0.0
    %4656 = vmatpush1.msra.mxu0 0.0
    %4657 = vmatprep.subr.mxu0 0.0
    %4658 = vmatpush1.msra.mxu0 0.0
    %4659 = vmatprep.subr.mxu0 0.0
    %4660 = vmatpush1.msra.mxu0 0.0
    %4661 = vmatprep.subr.mxu0 0.0
    %4662 = vmatpush1.msra.mxu0 0.0
    %4663 = vmatprep.subr.mxu0 0.0
    %4664 = vmatpush1.msra.mxu0 0.0
    %4665 = vmatprep.subr.mxu0 0.0
    %4666 = vmatpush1.msra.mxu0 0.0
    %4667 = vmatprep.subr.mxu0 0.0
    %4668 = vmatpush1.msra.mxu0 0.0
    %4669 = vmatprep.subr.mxu0 0.0
    %4670 = vmatpush1.msra.mxu0 0.0
    %4671 = vmatprep.subr.mxu0 0.0
    %4672 = vmatpush1.msra.mxu0 0.0
    %4673 = vmatprep.subr.mxu0 0.0
    %4674 = vmatpush1.msra.mxu0 0.0
    %4675 = vmatprep.subr.mxu0 0.0
    %4676 = vmatpush1.msra.mxu0 0.0
    %4677 = vmatprep.subr.mxu0 0.0
    %4678 = vmatpush1.msra.mxu0 0.0
    %4679 = vmatprep.subr.mxu0 0.0
    %4680 = vmatpush1.msra.mxu0 0.0
    %4681 = vmatprep.subr.mxu0 0.0
    %4682 = vmatpush1.msra.mxu0 0.0
    %4683 = vmatprep.subr.mxu0 0.0
    %4684 = vmatpush1.msra.mxu0 0.0
    %4685 = vmatprep.subr.mxu0 0.0
    %4686 = vmatpush1.msra.mxu0 0.0
    %4687 = vmatprep.subr.mxu0 0.0
    %4688 = vmatpush1.msra.mxu0 0.0
    %4689 = vmatprep.subr.mxu0 0.0
    %4690 = vmatpush1.msra.mxu0 0.0
    %4691 = vmatprep.mubr.f32.mxu0 0.0
    %4692 = vmatmul.mubr.f32.gmra.mrb[0].mxu0 %v4604
    %v4693 = vpop.f32.mrb[0].mxu0
    %v4694 = vadd.f32 0.0, %v4693
    %v4695 = vpop.f32.mrb[0].mxu0
    %4696 = vmatprep.mubr.f32.mxu0 0.0
    %4697 = vmatmul.mubr.f32.gmra.mrb[0].mxu0 %v4607
    %v4698 = vpop.f32.mrb[0].mxu0
    %v4699 = vadd.f32 0.0, %v4698
    %v4700 = vpop.f32.mrb[0].mxu0
    %4701 = vmatprep.mubr.f32.mxu0 0.0
    %4702 = vmatmul.mubr.f32.gmra.mrb[0].mxu0 %v4610
    %v4703 = vpop.f32.mrb[0].mxu0
    %v4704 = vadd.f32 0.0, %v4703
    %v4705 = vpop.f32.mrb[0].mxu0
    %4706 = vmatprep.mubr.f32.mxu0 0.0
    %4707 = vmatmul.mubr.f32.gmra.mrb[0].mxu0 %v4613
    %v4708 = vpop.f32.mrb[0].mxu0
    %v4709 = vadd.f32 0.0, %v4708
    %v4710 = vpop.f32.mrb[0].mxu0
    %4711 = vmatprep.mubr.f32.mxu0 0.0
    %4712 = vmatmul.mubr.f32.gmra.mrb[0].mxu0 %v4616
    %v4713 = vpop.f32.mrb[0].mxu0
    %v4714 = vadd.f32 0.0, %v4713
    %v4715 = vpop.f32.mrb[0].mxu0
    %4716 = vmatprep.mubr.f32.mxu0 0.0
    %4717 = vmatmul.mubr.f32.gmra.mrb[0].mxu0 %v4619
    %v4718 = vpop.f32.mrb[0].mxu0
    %v4719 = vadd.f32 0.0, %v4718
    %v4720 = vpop.f32.mrb[0].mxu0
    %4721 = vmatprep.mubr.f32.mxu0 0.0
    %4722 = vmatmul.mubr.f32.gmra.mrb[0].mxu0 %v4622
    %v4723 = vpop.f32.mrb[0].mxu0
    %v4724 = vadd.f32 0.0, %v4723
    %v4725 = vpop.f32.mrb[0].mxu0
    %4726 = vmatprep.mubr.f32.mxu0 0.0
    %4727 = vmatmul.mubr.f32.gmra.mrb[0].mxu0 %v4625
    %v4728 = vpop.f32.mrb[0].mxu0
    %v4729 = vadd.f32 0.0, %v4728
    %v4730 = vpop.f32.mrb[0].mxu0
    %4731 = vdwg.mxu0
    %v4732 = vmul.f32 %v4694, %v216
    %v4733 = vmul.f32 %v4699, %v217
    %v4734 = vmul.f32 %v4704, %v218
    %v4735 = vmul.f32 %v4709, %v219
    %v4736 = vmul.f32 %v4714, %v220
    %v4737 = vmul.f32 %v4719, %v221
    %v4738 = vmul.f32 %v4724, %v222
    %v4739 = vmul.f32 %v4729, %v223
    %4740 = vmatprep.subr.mxu0 0.0
    %4741 = vmatpush1.msra.mxu0 %v4732
    %4742 = vmatprep.subr.mxu0 0.0
    %4743 = vmatpush1.msra.mxu0 %v4733
    %4744 = vmatprep.subr.mxu0 0.0
    %4745 = vmatpush1.msra.mxu0 %v4734
    %4746 = vmatprep.subr.mxu0 0.0
    %4747 = vmatpush1.msra.mxu0 %v4735
    %4748 = vmatprep.subr.mxu0 0.0
    %4749 = vmatpush1.msra.mxu0 %v4736
    %4750 = vmatprep.subr.mxu0 0.0
    %4751 = vmatpush1.msra.mxu0 %v4737
    %4752 = vmatprep.subr.mxu0 0.0
    %4753 = vmatpush1.msra.mxu0 %v4738
    %4754 = vmatprep.subr.mxu0 0.0
    %4755 = vmatpush1.msra.mxu0 %v4739
    %4756 = vmatprep.subr.mxu0 0.0
    %4757 = vmatpush1.msra.mxu0 0.0
    %4758 = vmatprep.subr.mxu0 0.0
    %4759 = vmatpush1.msra.mxu0 0.0
    %4760 = vmatprep.subr.mxu0 0.0
    %4761 = vmatpush1.msra.mxu0 0.0
    %4762 = vmatprep.subr.mxu0 0.0
    %4763 = vmatpush1.msra.mxu0 0.0
    %4764 = vmatprep.subr.mxu0 0.0
    %4765 = vmatpush1.msra.mxu0 0.0
    %4766 = vmatprep.subr.mxu0 0.0
    %4767 = vmatpush1.msra.mxu0 0.0
    %4768 = vmatprep.subr.mxu0 0.0
    %4769 = vmatpush1.msra.mxu0 0.0
    %4770 = vmatprep.subr.mxu0 0.0
    %4771 = vmatpush1.msra.mxu0 0.0
    %4772 = vmatprep.subr.mxu0 0.0
    %4773 = vmatpush1.msra.mxu0 0.0
    %4774 = vmatprep.subr.mxu0 0.0
    %4775 = vmatpush1.msra.mxu0 0.0
    %4776 = vmatprep.subr.mxu0 0.0
    %4777 = vmatpush1.msra.mxu0 0.0
    %4778 = vmatprep.subr.mxu0 0.0
    %4779 = vmatpush1.msra.mxu0 0.0
    %4780 = vmatprep.subr.mxu0 0.0
    %4781 = vmatpush1.msra.mxu0 0.0
    %4782 = vmatprep.subr.mxu0 0.0
    %4783 = vmatpush1.msra.mxu0 0.0
    %4784 = vmatprep.subr.mxu0 0.0
    %4785 = vmatpush1.msra.mxu0 0.0
    %4786 = vmatprep.subr.mxu0 0.0
    %4787 = vmatpush1.msra.mxu0 0.0
    %4788 = vmatprep.subr.mxu0 0.0
    %4789 = vmatpush1.msra.mxu0 0.0
    %4790 = vmatprep.subr.mxu0 0.0
    %4791 = vmatpush1.msra.mxu0 0.0
    %4792 = vmatprep.subr.mxu0 0.0
    %4793 = vmatpush1.msra.mxu0 0.0
    %4794 = vmatprep.subr.mxu0 0.0
    %4795 = vmatpush1.msra.mxu0 0.0
    %4796 = vmatprep.subr.mxu0 0.0
    %4797 = vmatpush1.msra.mxu0 0.0
    %4798 = vmatprep.subr.mxu0 0.0
    %4799 = vmatpush1.msra.mxu0 0.0
    %4800 = vmatprep.subr.mxu0 0.0
    %4801 = vmatpush1.msra.mxu0 0.0
    %4802 = vmatprep.subr.mxu0 0.0
    %4803 = vmatpush1.msra.mxu0 0.0
    %4804 = vmatprep.mubr.f32.mxu0 0.0
    %4805 = vmatmul.mubr.f32.gmra.mrb[0].mxu0 %v752
    %v4806 = vpop.f32.mrb[0].mxu0
    %v4807 = vadd.f32 0.0, %v4806
    %v4808 = vpop.f32.mrb[0].mxu0
    %4809 = vmatprep.mubr.f32.mxu0 0.0
    %4810 = vmatmul.mubr.f32.gmra.mrb[0].mxu0 %v755
    %v4811 = vpop.f32.mrb[0].mxu0
    %v4812 = vadd.f32 0.0, %v4811
    %v4813 = vpop.f32.mrb[0].mxu0
    %4814 = vdwg.mxu0
    %v4815 = vld [vmem:[#allocation2 + $0x4f0] sm:$0xff]
    %v4816 = vld [vmem:[#allocation2 + $0x4f8] sm:$0xff]
    %v4817 = vld [vmem:[#allocation2 + $0x500] sm:$0xff]
    %v4818 = vld [vmem:[#allocation2 + $0x508] sm:$0xff]
    %v4819 = vld [vmem:[#allocation2 + $0x510] sm:$0x1]
    %v4820 = vlaneseq
    %v4821 = vshrl.u32 %v4820, 7
    %v4822 = vsub.s32 0, %v4821
    %v4823 = vrot.slane %v4819, %v4822
    %v4825 = vsel %vm134, %v4807, 0
    %v4828 = vsel %vm134, %v4812, 0
    %4830 = vmatprep.subr.mxu0 0.0
    %4831 = vmatpush1.msra.mxu0 %v4815
    %4832 = vmatprep.subr.mxu0 0.0
    %4833 = vmatpush1.msra.mxu0 %v4816
    %4834 = vmatprep.subr.mxu0 0.0
    %4835 = vmatpush1.msra.mxu0 %v4817
    %4836 = vmatprep.subr.mxu0 0.0
    %4837 = vmatpush1.msra.mxu0 %v4818
    %4838 = vmatprep.subr.mxu0 0.0
    %4839 = vmatpush1.msra.mxu0 0.0
    %4840 = vmatprep.subr.mxu0 0.0
    %4841 = vmatpush1.msra.mxu0 0.0
    %4842 = vmatprep.subr.mxu0 0.0
    %4843 = vmatpush1.msra.mxu0 0.0
    %4844 = vmatprep.subr.mxu0 0.0
    %4845 = vmatpush1.msra.mxu0 0.0
    %4846 = vmatprep.subr.mxu0 0.0
    %4847 = vmatpush1.msra.mxu0 0.0
    %4848 = vmatprep.subr.mxu0 0.0
    %4849 = vmatpush1.msra.mxu0 0.0
    %4850 = vmatprep.subr.mxu0 0.0
    %4851 = vmatpush1.msra.mxu0 0.0
    %4852 = vmatprep.subr.mxu0 0.0
    %4853 = vmatpush1.msra.mxu0 0.0
    %4854 = vmatprep.subr.mxu0 0.0
    %4855 = vmatpush1.msra.mxu0 0.0
    %4856 = vmatprep.subr.mxu0 0.0
    %4857 = vmatpush1.msra.mxu0 0.0
    %4858 = vmatprep.subr.mxu0 0.0
    %4859 = vmatpush1.msra.mxu0 0.0
    %4860 = vmatprep.subr.mxu0 0.0
    %4861 = vmatpush1.msra.mxu0 0.0
    %4862 = vmatprep.subr.mxu0 0.0
    %4863 = vmatpush1.msra.mxu0 0.0
    %4864 = vmatprep.subr.mxu0 0.0
    %4865 = vmatpush1.msra.mxu0 0.0
    %4866 = vmatprep.subr.mxu0 0.0
    %4867 = vmatpush1.msra.mxu0 0.0
    %4868 = vmatprep.subr.mxu0 0.0
    %4869 = vmatpush1.msra.mxu0 0.0
    %4870 = vmatprep.subr.mxu0 0.0
    %4871 = vmatpush1.msra.mxu0 0.0
    %4872 = vmatprep.subr.mxu0 0.0
    %4873 = vmatpush1.msra.mxu0 0.0
    %4874 = vmatprep.subr.mxu0 0.0
    %4875 = vmatpush1.msra.mxu0 0.0
    %4876 = vmatprep.subr.mxu0 0.0
    %4877 = vmatpush1.msra.mxu0 0.0
    %4878 = vmatprep.subr.mxu0 0.0
    %4879 = vmatpush1.msra.mxu0 0.0
    %4880 = vmatprep.subr.mxu0 0.0
    %4881 = vmatpush1.msra.mxu0 0.0
    %4882 = vmatprep.subr.mxu0 0.0
    %4883 = vmatpush1.msra.mxu0 0.0
    %4884 = vmatprep.subr.mxu0 0.0
    %4885 = vmatpush1.msra.mxu0 0.0
    %4886 = vmatprep.subr.mxu0 0.0
    %4887 = vmatpush1.msra.mxu0 0.0
    %4888 = vmatprep.subr.mxu0 0.0
    %4889 = vmatpush1.msra.mxu0 0.0
    %4890 = vmatprep.subr.mxu0 0.0
    %4891 = vmatpush1.msra.mxu0 0.0
    %4892 = vmatprep.subr.mxu0 0.0
    %4893 = vmatpush1.msra.mxu0 0.0
    %4894 = vmatprep.mubr.f32.mxu0 0.0
    %4895 = vmatmul.mubr.f32.gmra.mrb[0].mxu0 %v4825
    %v4896 = vpop.f32.mrb[0].mxu0
    %v4897 = vadd.f32 %v4823, %v4896
    %v4898 = vpop.f32.mrb[0].mxu0
    %4899 = vmatprep.mubr.f32.mxu0 0.0
    %4900 = vmatmul.mubr.f32.gmra.mrb[0].mxu0 %v4828
    %v4901 = vpop.f32.mrb[0].mxu0
    %v4902 = vadd.f32 %v4823, %v4901
    %v4903 = vpop.f32.mrb[0].mxu0
    %4904 = vdwg.mxu0
    %v4905 = vadd.f32 %v4897, %v4170
    %v4906 = vadd.f32 %v4902, %v4171
    %v4907 = vsel %vm134, %v4905, 0.0
    %4908 = vadd.xlane.f32.xlu0 %v4907
    %v4909 = vpop.xlane.xlu0 %4908
    %v4910 = vsel %vm134, %v4906, 0.0
    %4911 = vadd.xlane.f32.xlu0 %v4910
    %v4912 = vpop.xlane.xlu0 %4911
    %v4913 = vmul.f32 %v4909, %v930
    %v4914 = vmul.f32 %v4912, %v930
    %v4915 = vsub.f32 %v4905, %v4913
    %v4916 = vsub.f32 %v4906, %v4914
    %v4917 = vmul.f32 %v4915, %v4915
    %v4918 = vmul.f32 %v4916, %v4916
    %v4919 = vsel %vm134, %v4917, 0.0
    %4920 = vadd.xlane.f32.xlu0 %v4919
    %v4921 = vpop.xlane.xlu0 %4920
    %v4922 = vsel %vm134, %v4918, 0.0
    %4923 = vadd.xlane.f32.xlu0 %v4922
    %v4924 = vpop.xlane.xlu0 %4923
    %v4925 = vmul.f32 %v4921, %v930
    %v4926 = vmul.f32 %v4924, %v930
    %v4927 = vadd.f32 %v4925, 1e-05
    %v4928 = vadd.f32 %v4926, 1e-05
    %v4929 = vrsqrt.pop %v4927
    %v4930 = vrsqrt.pop %v4928
    %v4931 = vmul.f32 %v4915, %v4929
    %v4932 = vmul.f32 %v4916, %v4930
    %v4933 = vld [vmem:[#allocation2 + $0x518] sm:$0x1]
    %v4934 = vlaneseq
    %v4935 = vshrl.u32 %v4934, 7
    %v4936 = vsub.s32 0, %v4935
    %v4937 = vrot.slane %v4933, %v4936
    %v4938 = vmul.f32 %v4931, %v4937
    %v4939 = vmul.f32 %v4932, %v4937
    %v4940 = vld [vmem:[#allocation2 + $0x520] sm:$0x1]
    %v4941 = vlaneseq
    %v4942 = vshrl.u32 %v4941, 7
    %v4943 = vsub.s32 0, %v4942
    %v4944 = vrot.slane %v4940, %v4943
    %v4945 = vadd.f32 %v4938, %v4944
    %v4946 = vadd.f32 %v4939, %v4944
    %v4947 = vld [vmem:[#allocation2 + $0x528] sm:$0xff]
    %v4948 = vld [vmem:[#allocation2 + $0x530] sm:$0xff]
    %v4949 = vld [vmem:[#allocation2 + $0x538] sm:$0xff]
    %v4950 = vld [vmem:[#allocation2 + $0x540] sm:$0xff]
    %v4952 = vsel %vm134, %v4945, 0
    %v4955 = vsel %vm134, %v4946, 0
    %4957 = vmatprep.subr.mxu0 0.0
    %4958 = vmatpush1.msra.mxu0 %v4947
    %4959 = vmatprep.subr.mxu0 0.0
    %4960 = vmatpush1.msra.mxu0 %v4948
    %4961 = vmatprep.subr.mxu0 0.0
    %4962 = vmatpush1.msra.mxu0 %v4949
    %4963 = vmatprep.subr.mxu0 0.0
    %4964 = vmatpush1.msra.mxu0 %v4950
    %4965 = vmatprep.subr.mxu0 0.0
    %4966 = vmatpush1.msra.mxu0 0.0
    %4967 = vmatprep.subr.mxu0 0.0
    %4968 = vmatpush1.msra.mxu0 0.0
    %4969 = vmatprep.subr.mxu0 0.0
    %4970 = vmatpush1.msra.mxu0 0.0
    %4971 = vmatprep.subr.mxu0 0.0
    %4972 = vmatpush1.msra.mxu0 0.0
    %4973 = vmatprep.subr.mxu0 0.0
    %4974 = vmatpush1.msra.mxu0 0.0
    %4975 = vmatprep.subr.mxu0 0.0
    %4976 = vmatpush1.msra.mxu0 0.0
    %4977 = vmatprep.subr.mxu0 0.0
    %4978 = vmatpush1.msra.mxu0 0.0
    %4979 = vmatprep.subr.mxu0 0.0
    %4980 = vmatpush1.msra.mxu0 0.0
    %4981 = vmatprep.subr.mxu0 0.0
    %4982 = vmatpush1.msra.mxu0 0.0
    %4983 = vmatprep.subr.mxu0 0.0
    %4984 = vmatpush1.msra.mxu0 0.0
    %4985 = vmatprep.subr.mxu0 0.0
    %4986 = vmatpush1.msra.mxu0 0.0
    %4987 = vmatprep.subr.mxu0 0.0
    %4988 = vmatpush1.msra.mxu0 0.0
    %4989 = vmatprep.subr.mxu0 0.0
    %4990 = vmatpush1.msra.mxu0 0.0
    %4991 = vmatprep.subr.mxu0 0.0
    %4992 = vmatpush1.msra.mxu0 0.0
    %4993 = vmatprep.subr.mxu0 0.0
    %4994 = vmatpush1.msra.mxu0 0.0
    %4995 = vmatprep.subr.mxu0 0.0
    %4996 = vmatpush1.msra.mxu0 0.0
    %4997 = vmatprep.subr.mxu0 0.0
    %4998 = vmatpush1.msra.mxu0 0.0
    %4999 = vmatprep.subr.mxu0 0.0
    %5000 = vmatpush1.msra.mxu0 0.0
    %5001 = vmatprep.subr.mxu0 0.0
    %5002 = vmatpush1.msra.mxu0 0.0
    %5003 = vmatprep.subr.mxu0 0.0
    %5004 = vmatpush1.msra.mxu0 0.0
    %5005 = vmatprep.subr.mxu0 0.0
    %5006 = vmatpush1.msra.mxu0 0.0
    %5007 = vmatprep.subr.mxu0 0.0
    %5008 = vmatpush1.msra.mxu0 0.0
    %5009 = vmatprep.subr.mxu0 0.0
    %5010 = vmatpush1.msra.mxu0 0.0
    %5011 = vmatprep.subr.mxu0 0.0
    %5012 = vmatpush1.msra.mxu0 0.0
    %5013 = vmatprep.subr.mxu0 0.0
    %5014 = vmatpush1.msra.mxu0 0.0
    %5015 = vmatprep.subr.mxu0 0.0
    %5016 = vmatpush1.msra.mxu0 0.0
    %5017 = vmatprep.subr.mxu0 0.0
    %5018 = vmatpush1.msra.mxu0 0.0
    %5019 = vmatprep.subr.mxu0 0.0
    %5020 = vmatpush1.msra.mxu0 0.0
    %5021 = vmatprep.mubr.f32.mxu0 0.0
    %5022 = vmatmul.mubr.f32.gmra.mrb[0].mxu0 %v4952
    %v5023 = vpop.f32.mrb[0].mxu0
    %v5024 = vadd.f32 0.0, %v5023
    %v5025 = vpop.f32.mrb[0].mxu0
    %5026 = vmatprep.mubr.f32.mxu0 0.0
    %5027 = vmatmul.mubr.f32.gmra.mrb[0].mxu0 %v4955
    %v5028 = vpop.f32.mrb[0].mxu0
    %v5029 = vadd.f32 0.0, %v5028
    %v5030 = vpop.f32.mrb[0].mxu0
    %5031 = vdwg.mxu0
    %5036 = vrot.lane.b32.xlu0 %v4947, 96
    %v5037 = vpop.permute.xlu0 %5036
    %5038 = vrot.lane.b32.xlu0 %v4948, 96
    %v5039 = vpop.permute.xlu0 %5038
    %5040 = vrot.lane.b32.xlu0 %v4949, 96
    %v5041 = vpop.permute.xlu0 %5040
    %5042 = vrot.lane.b32.xlu0 %v4950, 96
    %v5043 = vpop.permute.xlu0 %5042
    %5048 = vmatprep.subr.mxu0 0.0
    %5049 = vmatpush1.msra.mxu0 %v5037
    %5050 = vmatprep.subr.mxu0 0.0
    %5051 = vmatpush1.msra.mxu0 %v5039
    %5052 = vmatprep.subr.mxu0 0.0
    %5053 = vmatpush1.msra.mxu0 %v5041
    %5054 = vmatprep.subr.mxu0 0.0
    %5055 = vmatpush1.msra.mxu0 %v5043
    %5056 = vmatprep.subr.mxu0 0.0
    %5057 = vmatpush1.msra.mxu0 0.0
    %5058 = vmatprep.subr.mxu0 0.0
    %5059 = vmatpush1.msra.mxu0 0.0
    %5060 = vmatprep.subr.mxu0 0.0
    %5061 = vmatpush1.msra.mxu0 0.0
    %5062 = vmatprep.subr.mxu0 0.0
    %5063 = vmatpush1.msra.mxu0 0.0
    %5064 = vmatprep.subr.mxu0 0.0
    %5065 = vmatpush1.msra.mxu0 0.0
    %5066 = vmatprep.subr.mxu0 0.0
    %5067 = vmatpush1.msra.mxu0 0.0
    %5068 = vmatprep.subr.mxu0 0.0
    %5069 = vmatpush1.msra.mxu0 0.0
    %5070 = vmatprep.subr.mxu0 0.0
    %5071 = vmatpush1.msra.mxu0 0.0
    %5072 = vmatprep.subr.mxu0 0.0
    %5073 = vmatpush1.msra.mxu0 0.0
    %5074 = vmatprep.subr.mxu0 0.0
    %5075 = vmatpush1.msra.mxu0 0.0
    %5076 = vmatprep.subr.mxu0 0.0
    %5077 = vmatpush1.msra.mxu0 0.0
    %5078 = vmatprep.subr.mxu0 0.0
    %5079 = vmatpush1.msra.mxu0 0.0
    %5080 = vmatprep.subr.mxu0 0.0
    %5081 = vmatpush1.msra.mxu0 0.0
    %5082 = vmatprep.subr.mxu0 0.0
    %5083 = vmatpush1.msra.mxu0 0.0
    %5084 = vmatprep.subr.mxu0 0.0
    %5085 = vmatpush1.msra.mxu0 0.0
    %5086 = vmatprep.subr.mxu0 0.0
    %5087 = vmatpush1.msra.mxu0 0.0
    %5088 = vmatprep.subr.mxu0 0.0
    %5089 = vmatpush1.msra.mxu0 0.0
    %5090 = vmatprep.subr.mxu0 0.0
    %5091 = vmatpush1.msra.mxu0 0.0
    %5092 = vmatprep.subr.mxu0 0.0
    %5093 = vmatpush1.msra.mxu0 0.0
    %5094 = vmatprep.subr.mxu0 0.0
    %5095 = vmatpush1.msra.mxu0 0.0
    %5096 = vmatprep.subr.mxu0 0.0
    %5097 = vmatpush1.msra.mxu0 0.0
    %5098 = vmatprep.subr.mxu0 0.0
    %5099 = vmatpush1.msra.mxu0 0.0
    %5100 = vmatprep.subr.mxu0 0.0
    %5101 = vmatpush1.msra.mxu0 0.0
    %5102 = vmatprep.subr.mxu0 0.0
    %5103 = vmatpush1.msra.mxu0 0.0
    %5104 = vmatprep.subr.mxu0 0.0
    %5105 = vmatpush1.msra.mxu0 0.0
    %5106 = vmatprep.subr.mxu0 0.0
    %5107 = vmatpush1.msra.mxu0 0.0
    %5108 = vmatprep.subr.mxu0 0.0
    %5109 = vmatpush1.msra.mxu0 0.0
    %5110 = vmatprep.subr.mxu0 0.0
    %5111 = vmatpush1.msra.mxu0 0.0
    %5112 = vmatprep.mubr.f32.mxu0 0.0
    %5113 = vmatmul.mubr.f32.gmra.mrb[0].mxu0 %v3176
    %v5114 = vpop.f32.mrb[0].mxu0
    %v5115 = vadd.f32 0.0, %v5114
    %v5116 = vpop.f32.mrb[0].mxu0
    %5117 = vmatprep.mubr.f32.mxu0 0.0
    %5118 = vmatmul.mubr.f32.gmra.mrb[0].mxu0 %v3179
    %v5119 = vpop.f32.mrb[0].mxu0
    %v5120 = vadd.f32 0.0, %v5119
    %v5121 = vpop.f32.mrb[0].mxu0
    %5122 = vdwg.mxu0
    %5123 = vmatprep.subr.mxu0 0.0
    %5124 = vmatpush1.msra.mxu0 %v5024
    %5125 = vmatprep.subr.mxu0 0.0
    %5126 = vmatpush1.msra.mxu0 %v5029
    %5127 = vmatprep.subr.mxu0 0.0
    %5128 = vmatpush1.msra.mxu0 0.0
    %5129 = vmatprep.subr.mxu0 0.0
    %5130 = vmatpush1.msra.mxu0 0.0
    %5131 = vmatprep.subr.mxu0 0.0
    %5132 = vmatpush1.msra.mxu0 0.0
    %5133 = vmatprep.subr.mxu0 0.0
    %5134 = vmatpush1.msra.mxu0 0.0
    %5135 = vmatprep.subr.mxu0 0.0
    %5136 = vmatpush1.msra.mxu0 0.0
    %5137 = vmatprep.subr.mxu0 0.0
    %5138 = vmatpush1.msra.mxu0 0.0
    %5139 = vmatprep.subr.mxu0 0.0
    %5140 = vmatpush1.msra.mxu0 0.0
    %5141 = vmatprep.subr.mxu0 0.0
    %5142 = vmatpush1.msra.mxu0 0.0
    %5143 = vmatprep.subr.mxu0 0.0
    %5144 = vmatpush1.msra.mxu0 0.0
    %5145 = vmatprep.subr.mxu0 0.0
    %5146 = vmatpush1.msra.mxu0 0.0
    %5147 = vmatprep.subr.mxu0 0.0
    %5148 = vmatpush1.msra.mxu0 0.0
    %5149 = vmatprep.subr.mxu0 0.0
    %5150 = vmatpush1.msra.mxu0 0.0
    %5151 = vmatprep.subr.mxu0 0.0
    %5152 = vmatpush1.msra.mxu0 0.0
    %5153 = vmatprep.subr.mxu0 0.0
    %5154 = vmatpush1.msra.mxu0 0.0
    %5155 = vmatprep.subr.mxu0 0.0
    %5156 = vmatpush1.msra.mxu0 0.0
    %5157 = vmatprep.subr.mxu0 0.0
    %5158 = vmatpush1.msra.mxu0 0.0
    %5159 = vmatprep.subr.mxu0 0.0
    %5160 = vmatpush1.msra.mxu0 0.0
    %5161 = vmatprep.subr.mxu0 0.0
    %5162 = vmatpush1.msra.mxu0 0.0
    %5163 = vmatprep.subr.mxu0 0.0
    %5164 = vmatpush1.msra.mxu0 0.0
    %5165 = vmatprep.subr.mxu0 0.0
    %5166 = vmatpush1.msra.mxu0 0.0
    %5167 = vmatprep.subr.mxu0 0.0
    %5168 = vmatpush1.msra.mxu0 0.0
    %5169 = vmatprep.subr.mxu0 0.0
    %5170 = vmatpush1.msra.mxu0 0.0
    %5171 = vmatprep.subr.mxu0 0.0
    %5172 = vmatpush1.msra.mxu0 0.0
    %5173 = vmatprep.subr.mxu0 0.0
    %5174 = vmatpush1.msra.mxu0 0.0
    %5175 = vmatprep.subr.mxu0 0.0
    %5176 = vmatpush1.msra.mxu0 0.0
    %5177 = vmatprep.subr.mxu0 0.0
    %5178 = vmatpush1.msra.mxu0 0.0
    %5179 = vmatprep.subr.mxu0 0.0
    %5180 = vmatpush1.msra.mxu0 0.0
    %5181 = vmatprep.subr.mxu0 0.0
    %5182 = vmatpush1.msra.mxu0 0.0
    %5183 = vmatprep.subr.mxu0 0.0
    %5184 = vmatpush1.msra.mxu0 0.0
    %5185 = vmatprep.subr.mxu0 0.0
    %5186 = vmatpush1.msra.mxu0 0.0
    %5187 = vmatprep.mubr.f32.mxu0 0.0
    %5188 = vmatmul.mubr.f32.gmra.mrb[0].mxu0 %v234
    %v5189 = vpop.f32.mrb[0].mxu0
    %v5190 = vadd.f32 0.0, %v5189
    %v5191 = vpop.f32.mrb[0].mxu0
    %5192 = vmatprep.mubr.f32.mxu0 0.0
    %5193 = vmatmul.mubr.f32.gmra.mrb[0].mxu0 %v237
    %v5194 = vpop.f32.mrb[0].mxu0
    %v5195 = vadd.f32 0.0, %v5194
    %v5196 = vpop.f32.mrb[0].mxu0
    %5197 = vmatprep.mubr.f32.mxu0 0.0
    %5198 = vmatmul.mubr.f32.gmra.mrb[0].mxu0 %v240
    %v5199 = vpop.f32.mrb[0].mxu0
    %v5200 = vadd.f32 0.0, %v5199
    %v5201 = vpop.f32.mrb[0].mxu0
    %5202 = vmatprep.mubr.f32.mxu0 0.0
    %5203 = vmatmul.mubr.f32.gmra.mrb[0].mxu0 %v243
    %v5204 = vpop.f32.mrb[0].mxu0
    %v5205 = vadd.f32 0.0, %v5204
    %v5206 = vpop.f32.mrb[0].mxu0
    %5207 = vmatprep.mubr.f32.mxu0 0.0
    %5208 = vmatmul.mubr.f32.gmra.mrb[0].mxu0 %v246
    %v5209 = vpop.f32.mrb[0].mxu0
    %v5210 = vadd.f32 0.0, %v5209
    %v5211 = vpop.f32.mrb[0].mxu0
    %5212 = vmatprep.mubr.f32.mxu0 0.0
    %5213 = vmatmul.mubr.f32.gmra.mrb[0].mxu0 %v249
    %v5214 = vpop.f32.mrb[0].mxu0
    %v5215 = vadd.f32 0.0, %v5214
    %v5216 = vpop.f32.mrb[0].mxu0
    %5217 = vmatprep.mubr.f32.mxu0 0.0
    %5218 = vmatmul.mubr.f32.gmra.mrb[0].mxu0 %v252
    %v5219 = vpop.f32.mrb[0].mxu0
    %v5220 = vadd.f32 0.0, %v5219
    %v5221 = vpop.f32.mrb[0].mxu0
    %5222 = vmatprep.mubr.f32.mxu0 0.0
    %5223 = vmatmul.mubr.f32.gmra.mrb[0].mxu0 %v255
    %v5224 = vpop.f32.mrb[0].mxu0
    %v5225 = vadd.f32 0.0, %v5224
    %v5226 = vpop.f32.mrb[0].mxu0
    %5227 = vdwg.mxu0
    %v5228 = vmul.f32 %v5190, %v216
    %v5229 = vmul.f32 %v5195, %v217
    %v5230 = vmul.f32 %v5200, %v218
    %v5231 = vmul.f32 %v5205, %v219
    %v5232 = vmul.f32 %v5210, %v220
    %v5233 = vmul.f32 %v5215, %v221
    %v5234 = vmul.f32 %v5220, %v222
    %v5235 = vmul.f32 %v5225, %v223
    %v5237 = vsel %vm134, %v5228, 0
    %v5240 = vsel %vm134, %v5229, 0
    %v5243 = vsel %vm134, %v5230, 0
    %v5246 = vsel %vm134, %v5231, 0
    %v5249 = vsel %vm134, %v5232, 0
    %v5252 = vsel %vm134, %v5233, 0
    %v5255 = vsel %vm134, %v5234, 0
    %v5258 = vsel %vm134, %v5235, 0
    %v5261 = vsel %vm134, %v5115, 0
    %v5264 = vsel %vm134, %v5120, 0
    %5266 = vmatprep.subr.mxu0 0.0
    %5267 = vmatpush1.xpose.msra.mxu0 %v5261
    %5268 = vmatprep.subr.mxu0 0.0
    %5269 = vmatpush1.xpose.msra.mxu0 %v5264
    %5270 = vmatprep.subr.mxu0 0.0
    %5271 = vmatpush1.xpose.msra.mxu0 0.0
    %5272 = vmatprep.subr.mxu0 0.0
    %5273 = vmatpush1.xpose.msra.mxu0 0.0
    %5274 = vmatprep.subr.mxu0 0.0
    %5275 = vmatpush1.xpose.msra.mxu0 0.0
    %5276 = vmatprep.subr.mxu0 0.0
    %5277 = vmatpush1.xpose.msra.mxu0 0.0
    %5278 = vmatprep.subr.mxu0 0.0
    %5279 = vmatpush1.xpose.msra.mxu0 0.0
    %5280 = vmatprep.subr.mxu0 0.0
    %5281 = vmatpush1.xpose.msra.mxu0 0.0
    %5282 = vmatprep.subr.mxu0 0.0
    %5283 = vmatpush1.xpose.msra.mxu0 0.0
    %5284 = vmatprep.subr.mxu0 0.0
    %5285 = vmatpush1.xpose.msra.mxu0 0.0
    %5286 = vmatprep.subr.mxu0 0.0
    %5287 = vmatpush1.xpose.msra.mxu0 0.0
    %5288 = vmatprep.subr.mxu0 0.0
    %5289 = vmatpush1.xpose.msra.mxu0 0.0
    %5290 = vmatprep.subr.mxu0 0.0
    %5291 = vmatpush1.xpose.msra.mxu0 0.0
    %5292 = vmatprep.subr.mxu0 0.0
    %5293 = vmatpush1.xpose.msra.mxu0 0.0
    %5294 = vmatprep.subr.mxu0 0.0
    %5295 = vmatpush1.xpose.msra.mxu0 0.0
    %5296 = vmatprep.subr.mxu0 0.0
    %5297 = vmatpush1.xpose.msra.mxu0 0.0
    %5298 = vmatprep.subr.mxu0 0.0
    %5299 = vmatpush1.xpose.msra.mxu0 0.0
    %5300 = vmatprep.subr.mxu0 0.0
    %5301 = vmatpush1.xpose.msra.mxu0 0.0
    %5302 = vmatprep.subr.mxu0 0.0
    %5303 = vmatpush1.xpose.msra.mxu0 0.0
    %5304 = vmatprep.subr.mxu0 0.0
    %5305 = vmatpush1.xpose.msra.mxu0 0.0
    %5306 = vmatprep.subr.mxu0 0.0
    %5307 = vmatpush1.xpose.msra.mxu0 0.0
    %5308 = vmatprep.subr.mxu0 0.0
    %5309 = vmatpush1.xpose.msra.mxu0 0.0
    %5310 = vmatprep.subr.mxu0 0.0
    %5311 = vmatpush1.xpose.msra.mxu0 0.0
    %5312 = vmatprep.subr.mxu0 0.0
    %5313 = vmatpush1.xpose.msra.mxu0 0.0
    %5314 = vmatprep.subr.mxu0 0.0
    %5315 = vmatpush1.xpose.msra.mxu0 0.0
    %5316 = vmatprep.subr.mxu0 0.0
    %5317 = vmatpush1.xpose.msra.mxu0 0.0
    %5318 = vmatprep.subr.mxu0 0.0
    %5319 = vmatpush1.xpose.msra.mxu0 0.0
    %5320 = vmatprep.subr.mxu0 0.0
    %5321 = vmatpush1.xpose.msra.mxu0 0.0
    %5322 = vmatprep.subr.mxu0 0.0
    %5323 = vmatpush1.xpose.msra.mxu0 0.0
    %5324 = vmatprep.subr.mxu0 0.0
    %5325 = vmatpush1.xpose.msra.mxu0 0.0
    %5326 = vmatprep.subr.mxu0 0.0
    %5327 = vmatpush1.xpose.msra.mxu0 0.0
    %5328 = vmatprep.subr.mxu0 0.0
    %5329 = vmatpush1.xpose.msra.mxu0 0.0
    %5330 = vmatprep.mubr.f32.mxu0 0.0
    %5331 = vmatmul.mubr.f32.gmra.mrb[0].mxu0 %v5237
    %v5332 = vpop.f32.mrb[0].mxu0
    %v5333 = vadd.f32 %v370, %v5332
    %v5334 = vpop.f32.mrb[0].mxu0
    %5335 = vmatprep.mubr.f32.mxu0 0.0
    %5336 = vmatmul.mubr.f32.gmra.mrb[0].mxu0 %v5240
    %v5337 = vpop.f32.mrb[0].mxu0
    %v5338 = vadd.f32 %v371, %v5337
    %v5339 = vpop.f32.mrb[0].mxu0
    %5340 = vmatprep.mubr.f32.mxu0 0.0
    %5341 = vmatmul.mubr.f32.gmra.mrb[0].mxu0 %v5243
    %v5342 = vpop.f32.mrb[0].mxu0
    %v5343 = vadd.f32 %v372, %v5342
    %v5344 = vpop.f32.mrb[0].mxu0
    %5345 = vmatprep.mubr.f32.mxu0 0.0
    %5346 = vmatmul.mubr.f32.gmra.mrb[0].mxu0 %v5246
    %v5347 = vpop.f32.mrb[0].mxu0
    %v5348 = vadd.f32 %v373, %v5347
    %v5349 = vpop.f32.mrb[0].mxu0
    %5350 = vmatprep.mubr.f32.mxu0 0.0
    %5351 = vmatmul.mubr.f32.gmra.mrb[0].mxu0 %v5249
    %v5352 = vpop.f32.mrb[0].mxu0
    %v5353 = vadd.f32 %v374, %v5352
    %v5354 = vpop.f32.mrb[0].mxu0
    %5355 = vmatprep.mubr.f32.mxu0 0.0
    %5356 = vmatmul.mubr.f32.gmra.mrb[0].mxu0 %v5252
    %v5357 = vpop.f32.mrb[0].mxu0
    %v5358 = vadd.f32 %v375, %v5357
    %v5359 = vpop.f32.mrb[0].mxu0
    %5360 = vmatprep.mubr.f32.mxu0 0.0
    %5361 = vmatmul.mubr.f32.gmra.mrb[0].mxu0 %v5255
    %v5362 = vpop.f32.mrb[0].mxu0
    %v5363 = vadd.f32 %v376, %v5362
    %v5364 = vpop.f32.mrb[0].mxu0
    %5365 = vmatprep.mubr.f32.mxu0 0.0
    %5366 = vmatmul.mubr.f32.gmra.mrb[0].mxu0 %v5258
    %v5367 = vpop.f32.mrb[0].mxu0
    %v5368 = vadd.f32 %v377, %v5367
    %v5369 = vpop.f32.mrb[0].mxu0
    %5370 = vdwg.mxu0
    %v5371 = vsel %vm232, %v5333, -inf
    %5372 = vmax.xlane.f32.xlu0 %v5371
    %v5373 = vpop.xlane.xlu0 %5372
    %v5374 = vsel %vm232, %v5338, -inf
    %5375 = vmax.xlane.f32.xlu0 %v5374
    %v5376 = vpop.xlane.xlu0 %5375
    %v5377 = vsel %vm232, %v5343, -inf
    %5378 = vmax.xlane.f32.xlu0 %v5377
    %v5379 = vpop.xlane.xlu0 %5378
    %v5380 = vsel %vm232, %v5348, -inf
    %5381 = vmax.xlane.f32.xlu0 %v5380
    %v5382 = vpop.xlane.xlu0 %5381
    %v5383 = vsel %vm232, %v5353, -inf
    %5384 = vmax.xlane.f32.xlu0 %v5383
    %v5385 = vpop.xlane.xlu0 %5384
    %v5386 = vsel %vm232, %v5358, -inf
    %5387 = vmax.xlane.f32.xlu0 %v5386
    %v5388 = vpop.xlane.xlu0 %5387
    %v5389 = vsel %vm232, %v5363, -inf
    %5390 = vmax.xlane.f32.xlu0 %v5389
    %v5391 = vpop.xlane.xlu0 %5390
    %v5392 = vsel %vm232, %v5368, -inf
    %5393 = vmax.xlane.f32.xlu0 %v5392
    %v5394 = vpop.xlane.xlu0 %5393
    %v5395 = vsub.f32 %v5333, %v5373
    %v5396 = vsub.f32 %v5338, %v5376
    %v5397 = vsub.f32 %v5343, %v5379
    %v5398 = vsub.f32 %v5348, %v5382
    %v5399 = vsub.f32 %v5353, %v5385
    %v5400 = vsub.f32 %v5358, %v5388
    %v5401 = vsub.f32 %v5363, %v5391
    %v5402 = vsub.f32 %v5368, %v5394
    %v5403 = vmul.f32 %v5395, 1.442695
    %v5404 = vpow.pop %v5403
    %v5405 = vmul.f32 %v5396, 1.442695
    %v5406 = vpow.pop %v5405
    %v5407 = vmul.f32 %v5397, 1.442695
    %v5408 = vpow.pop %v5407
    %v5409 = vmul.f32 %v5398, 1.442695
    %v5410 = vpow.pop %v5409
    %v5411 = vmul.f32 %v5399, 1.442695
    %v5412 = vpow.pop %v5411
    %v5413 = vmul.f32 %v5400, 1.442695
    %v5414 = vpow.pop %v5413
    %v5415 = vmul.f32 %v5401, 1.442695
    %v5416 = vpow.pop %v5415
    %v5417 = vmul.f32 %v5402, 1.442695
    %v5418 = vpow.pop %v5417
    %v5419 = vsel %vm232, %v5404, 0.0
    %5420 = vadd.xlane.f32.xlu0 %v5419
    %v5421 = vpop.xlane.xlu0 %5420
    %v5422 = vsel %vm232, %v5406, 0.0
    %5423 = vadd.xlane.f32.xlu0 %v5422
    %v5424 = vpop.xlane.xlu0 %5423
    %v5425 = vsel %vm232, %v5408, 0.0
    %5426 = vadd.xlane.f32.xlu0 %v5425
    %v5427 = vpop.xlane.xlu0 %5426
    %v5428 = vsel %vm232, %v5410, 0.0
    %5429 = vadd.xlane.f32.xlu0 %v5428
    %v5430 = vpop.xlane.xlu0 %5429
    %v5431 = vsel %vm232, %v5412, 0.0
    %5432 = vadd.xlane.f32.xlu0 %v5431
    %v5433 = vpop.xlane.xlu0 %5432
    %v5434 = vsel %vm232, %v5414, 0.0
    %5435 = vadd.xlane.f32.xlu0 %v5434
    %v5436 = vpop.xlane.xlu0 %5435
    %v5437 = vsel %vm232, %v5416, 0.0
    %5438 = vadd.xlane.f32.xlu0 %v5437
    %v5439 = vpop.xlane.xlu0 %5438
    %v5440 = vsel %vm232, %v5418, 0.0
    %5441 = vadd.xlane.f32.xlu0 %v5440
    %v5442 = vpop.xlane.xlu0 %5441
    %v5443 = vrcp.pop %v5421
    %v5444 = vmul.f32 %v5404, %v5443
    %v5445 = vrcp.pop %v5424
    %v5446 = vmul.f32 %v5406, %v5445
    %v5447 = vrcp.pop %v5427
    %v5448 = vmul.f32 %v5408, %v5447
    %v5449 = vrcp.pop %v5430
    %v5450 = vmul.f32 %v5410, %v5449
    %v5451 = vrcp.pop %v5433
    %v5452 = vmul.f32 %v5412, %v5451
    %v5453 = vrcp.pop %v5436
    %v5454 = vmul.f32 %v5414, %v5453
    %v5455 = vrcp.pop %v5439
    %v5456 = vmul.f32 %v5416, %v5455
    %v5457 = vrcp.pop %v5442
    %v5458 = vmul.f32 %v5418, %v5457
    %5459 = vrot.lane.b32.xlu0 %v5115, 96
    %v5460 = vpop.permute.xlu0 %5459
    %5461 = vrot.lane.b32.xlu0 %v5120, 96
    %v5462 = vpop.permute.xlu0 %5461
    %v5466 = vsel %vm232, %v5444, 0
    %v5469 = vsel %vm232, %v5446, 0
    %v5472 = vsel %vm232, %v5448, 0
    %v5475 = vsel %vm232, %v5450, 0
    %v5478 = vsel %vm232, %v5452, 0
    %v5481 = vsel %vm232, %v5454, 0
    %v5484 = vsel %vm232, %v5456, 0
    %v5487 = vsel %vm232, %v5458, 0
    %5489 = vmatprep.subr.mxu0 0.0
    %5490 = vmatpush1.msra.mxu0 %v5460
    %5491 = vmatprep.subr.mxu0 0.0
    %5492 = vmatpush1.msra.mxu0 %v5462
    %5493 = vmatprep.subr.mxu0 0.0
    %5494 = vmatpush1.msra.mxu0 0.0
    %5495 = vmatprep.subr.mxu0 0.0
    %5496 = vmatpush1.msra.mxu0 0.0
    %5497 = vmatprep.subr.mxu0 0.0
    %5498 = vmatpush1.msra.mxu0 0.0
    %5499 = vmatprep.subr.mxu0 0.0
    %5500 = vmatpush1.msra.mxu0 0.0
    %5501 = vmatprep.subr.mxu0 0.0
    %5502 = vmatpush1.msra.mxu0 0.0
    %5503 = vmatprep.subr.mxu0 0.0
    %5504 = vmatpush1.msra.mxu0 0.0
    %5505 = vmatprep.subr.mxu0 0.0
    %5506 = vmatpush1.msra.mxu0 0.0
    %5507 = vmatprep.subr.mxu0 0.0
    %5508 = vmatpush1.msra.mxu0 0.0
    %5509 = vmatprep.subr.mxu0 0.0
    %5510 = vmatpush1.msra.mxu0 0.0
    %5511 = vmatprep.subr.mxu0 0.0
    %5512 = vmatpush1.msra.mxu0 0.0
    %5513 = vmatprep.subr.mxu0 0.0
    %5514 = vmatpush1.msra.mxu0 0.0
    %5515 = vmatprep.subr.mxu0 0.0
    %5516 = vmatpush1.msra.mxu0 0.0
    %5517 = vmatprep.subr.mxu0 0.0
    %5518 = vmatpush1.msra.mxu0 0.0
    %5519 = vmatprep.subr.mxu0 0.0
    %5520 = vmatpush1.msra.mxu0 0.0
    %5521 = vmatprep.subr.mxu0 0.0
    %5522 = vmatpush1.msra.mxu0 0.0
    %5523 = vmatprep.subr.mxu0 0.0
    %5524 = vmatpush1.msra.mxu0 0.0
    %5525 = vmatprep.subr.mxu0 0.0
    %5526 = vmatpush1.msra.mxu0 0.0
    %5527 = vmatprep.subr.mxu0 0.0
    %5528 = vmatpush1.msra.mxu0 0.0
    %5529 = vmatprep.subr.mxu0 0.0
    %5530 = vmatpush1.msra.mxu0 0.0
    %5531 = vmatprep.subr.mxu0 0.0
    %5532 = vmatpush1.msra.mxu0 0.0
    %5533 = vmatprep.subr.mxu0 0.0
    %5534 = vmatpush1.msra.mxu0 0.0
    %5535 = vmatprep.subr.mxu0 0.0
    %5536 = vmatpush1.msra.mxu0 0.0
    %5537 = vmatprep.subr.mxu0 0.0
    %5538 = vmatpush1.msra.mxu0 0.0
    %5539 = vmatprep.subr.mxu0 0.0
    %5540 = vmatpush1.msra.mxu0 0.0
    %5541 = vmatprep.subr.mxu0 0.0
    %5542 = vmatpush1.msra.mxu0 0.0
    %5543 = vmatprep.subr.mxu0 0.0
    %5544 = vmatpush1.msra.mxu0 0.0
    %5545 = vmatprep.subr.mxu0 0.0
    %5546 = vmatpush1.msra.mxu0 0.0
    %5547 = vmatprep.subr.mxu0 0.0
    %5548 = vmatpush1.msra.mxu0 0.0
    %5549 = vmatprep.subr.mxu0 0.0
    %5550 = vmatpush1.msra.mxu0 0.0
    %5551 = vmatprep.subr.mxu0 0.0
    %5552 = vmatpush1.msra.mxu0 0.0
    %5553 = vmatprep.mubr.f32.mxu0 0.0
    %5554 = vmatmul.mubr.f32.gmra.mrb[0].mxu0 %v5466
    %v5555 = vpop.f32.mrb[0].mxu0
    %v5556 = vadd.f32 0.0, %v5555
    %v5557 = vpop.f32.mrb[0].mxu0
    %5558 = vmatprep.mubr.f32.mxu0 0.0
    %5559 = vmatmul.mubr.f32.gmra.mrb[0].mxu0 %v5469
    %v5560 = vpop.f32.mrb[0].mxu0
    %v5561 = vadd.f32 0.0, %v5560
    %v5562 = vpop.f32.mrb[0].mxu0
    %5563 = vmatprep.mubr.f32.mxu0 0.0
    %5564 = vmatmul.mubr.f32.gmra.mrb[0].mxu0 %v5472
    %v5565 = vpop.f32.mrb[0].mxu0
    %v5566 = vadd.f32 0.0, %v5565
    %v5567 = vpop.f32.mrb[0].mxu0
    %5568 = vmatprep.mubr.f32.mxu0 0.0
    %5569 = vmatmul.mubr.f32.gmra.mrb[0].mxu0 %v5475
    %v5570 = vpop.f32.mrb[0].mxu0
    %v5571 = vadd.f32 0.0, %v5570
    %v5572 = vpop.f32.mrb[0].mxu0
    %5573 = vmatprep.mubr.f32.mxu0 0.0
    %5574 = vmatmul.mubr.f32.gmra.mrb[0].mxu0 %v5478
    %v5575 = vpop.f32.mrb[0].mxu0
    %v5576 = vadd.f32 0.0, %v5575
    %v5577 = vpop.f32.mrb[0].mxu0
    %5578 = vmatprep.mubr.f32.mxu0 0.0
    %5579 = vmatmul.mubr.f32.gmra.mrb[0].mxu0 %v5481
    %v5580 = vpop.f32.mrb[0].mxu0
    %v5581 = vadd.f32 0.0, %v5580
    %v5582 = vpop.f32.mrb[0].mxu0
    %5583 = vmatprep.mubr.f32.mxu0 0.0
    %5584 = vmatmul.mubr.f32.gmra.mrb[0].mxu0 %v5484
    %v5585 = vpop.f32.mrb[0].mxu0
    %v5586 = vadd.f32 0.0, %v5585
    %v5587 = vpop.f32.mrb[0].mxu0
    %5588 = vmatprep.mubr.f32.mxu0 0.0
    %5589 = vmatmul.mubr.f32.gmra.mrb[0].mxu0 %v5487
    %v5590 = vpop.f32.mrb[0].mxu0
    %v5591 = vadd.f32 0.0, %v5590
    %v5592 = vpop.f32.mrb[0].mxu0
    %5593 = vdwg.mxu0
    %v5594 = vmul.f32 %v5556, %v216
    %v5595 = vmul.f32 %v5561, %v217
    %v5596 = vmul.f32 %v5566, %v218
    %v5597 = vmul.f32 %v5571, %v219
    %v5598 = vmul.f32 %v5576, %v220
    %v5599 = vmul.f32 %v5581, %v221
    %v5600 = vmul.f32 %v5586, %v222
    %v5601 = vmul.f32 %v5591, %v223
    %5602 = vmatprep.subr.mxu0 0.0
    %5603 = vmatpush1.msra.mxu0 %v5594
    %5604 = vmatprep.subr.mxu0 0.0
    %5605 = vmatpush1.msra.mxu0 %v5595
    %5606 = vmatprep.subr.mxu0 0.0
    %5607 = vmatpush1.msra.mxu0 %v5596
    %5608 = vmatprep.subr.mxu0 0.0
    %5609 = vmatpush1.msra.mxu0 %v5597
    %5610 = vmatprep.subr.mxu0 0.0
    %5611 = vmatpush1.msra.mxu0 %v5598
    %5612 = vmatprep.subr.mxu0 0.0
    %5613 = vmatpush1.msra.mxu0 %v5599
    %5614 = vmatprep.subr.mxu0 0.0
    %5615 = vmatpush1.msra.mxu0 %v5600
    %5616 = vmatprep.subr.mxu0 0.0
    %5617 = vmatpush1.msra.mxu0 %v5601
    %5618 = vmatprep.subr.mxu0 0.0
    %5619 = vmatpush1.msra.mxu0 0.0
    %5620 = vmatprep.subr.mxu0 0.0
    %5621 = vmatpush1.msra.mxu0 0.0
    %5622 = vmatprep.subr.mxu0 0.0
    %5623 = vmatpush1.msra.mxu0 0.0
    %5624 = vmatprep.subr.mxu0 0.0
    %5625 = vmatpush1.msra.mxu0 0.0
    %5626 = vmatprep.subr.mxu0 0.0
    %5627 = vmatpush1.msra.mxu0 0.0
    %5628 = vmatprep.subr.mxu0 0.0
    %5629 = vmatpush1.msra.mxu0 0.0
    %5630 = vmatprep.subr.mxu0 0.0
    %5631 = vmatpush1.msra.mxu0 0.0
    %5632 = vmatprep.subr.mxu0 0.0
    %5633 = vmatpush1.msra.mxu0 0.0
    %5634 = vmatprep.subr.mxu0 0.0
    %5635 = vmatpush1.msra.mxu0 0.0
    %5636 = vmatprep.subr.mxu0 0.0
    %5637 = vmatpush1.msra.mxu0 0.0
    %5638 = vmatprep.subr.mxu0 0.0
    %5639 = vmatpush1.msra.mxu0 0.0
    %5640 = vmatprep.subr.mxu0 0.0
    %5641 = vmatpush1.msra.mxu0 0.0
    %5642 = vmatprep.subr.mxu0 0.0
    %5643 = vmatpush1.msra.mxu0 0.0
    %5644 = vmatprep.subr.mxu0 0.0
    %5645 = vmatpush1.msra.mxu0 0.0
    %5646 = vmatprep.subr.mxu0 0.0
    %5647 = vmatpush1.msra.mxu0 0.0
    %5648 = vmatprep.subr.mxu0 0.0
    %5649 = vmatpush1.msra.mxu0 0.0
    %5650 = vmatprep.subr.mxu0 0.0
    %5651 = vmatpush1.msra.mxu0 0.0
    %5652 = vmatprep.subr.mxu0 0.0
    %5653 = vmatpush1.msra.mxu0 0.0
    %5654 = vmatprep.subr.mxu0 0.0
    %5655 = vmatpush1.msra.mxu0 0.0
    %5656 = vmatprep.subr.mxu0 0.0
    %5657 = vmatpush1.msra.mxu0 0.0
    %5658 = vmatprep.subr.mxu0 0.0
    %5659 = vmatpush1.msra.mxu0 0.0
    %5660 = vmatprep.subr.mxu0 0.0
    %5661 = vmatpush1.msra.mxu0 0.0
    %5662 = vmatprep.subr.mxu0 0.0
    %5663 = vmatpush1.msra.mxu0 0.0
    %5664 = vmatprep.subr.mxu0 0.0
    %5665 = vmatpush1.msra.mxu0 0.0
    %5666 = vmatprep.mubr.f32.mxu0 0.0
    %5667 = vmatmul.mubr.f32.gmra.mrb[0].mxu0 %v752
    %v5668 = vpop.f32.mrb[0].mxu0
    %v5669 = vadd.f32 0.0, %v5668
    %v5670 = vpop.f32.mrb[0].mxu0
    %5671 = vmatprep.mubr.f32.mxu0 0.0
    %5672 = vmatmul.mubr.f32.gmra.mrb[0].mxu0 %v755
    %v5673 = vpop.f32.mrb[0].mxu0
    %v5674 = vadd.f32 0.0, %v5673
    %v5675 = vpop.f32.mrb[0].mxu0
    %5676 = vdwg.mxu0
    %v5677 = vld [vmem:[#allocation2 + $0x548] sm:$0xff]
    %v5678 = vld [vmem:[#allocation2 + $0x550] sm:$0xff]
    %v5679 = vld [vmem:[#allocation2 + $0x558] sm:$0xff]
    %v5680 = vld [vmem:[#allocation2 + $0x560] sm:$0xff]
    %v5681 = vld [vmem:[#allocation2 + $0x568] sm:$0x1]
    %v5682 = vlaneseq
    %v5683 = vshrl.u32 %v5682, 7
    %v5684 = vsub.s32 0, %v5683
    %v5685 = vrot.slane %v5681, %v5684
    %v5687 = vsel %vm134, %v5669, 0
    %v5690 = vsel %vm134, %v5674, 0
    %5692 = vmatprep.subr.mxu0 0.0
    %5693 = vmatpush1.msra.mxu0 %v5677
    %5694 = vmatprep.subr.mxu0 0.0
    %5695 = vmatpush1.msra.mxu0 %v5678
    %5696 = vmatprep.subr.mxu0 0.0
    %5697 = vmatpush1.msra.mxu0 %v5679
    %5698 = vmatprep.subr.mxu0 0.0
    %5699 = vmatpush1.msra.mxu0 %v5680
    %5700 = vmatprep.subr.mxu0 0.0
    %5701 = vmatpush1.msra.mxu0 0.0
    %5702 = vmatprep.subr.mxu0 0.0
    %5703 = vmatpush1.msra.mxu0 0.0
    %5704 = vmatprep.subr.mxu0 0.0
    %5705 = vmatpush1.msra.mxu0 0.0
    %5706 = vmatprep.subr.mxu0 0.0
    %5707 = vmatpush1.msra.mxu0 0.0
    %5708 = vmatprep.subr.mxu0 0.0
    %5709 = vmatpush1.msra.mxu0 0.0
    %5710 = vmatprep.subr.mxu0 0.0
    %5711 = vmatpush1.msra.mxu0 0.0
    %5712 = vmatprep.subr.mxu0 0.0
    %5713 = vmatpush1.msra.mxu0 0.0
    %5714 = vmatprep.subr.mxu0 0.0
    %5715 = vmatpush1.msra.mxu0 0.0
    %5716 = vmatprep.subr.mxu0 0.0
    %5717 = vmatpush1.msra.mxu0 0.0
    %5718 = vmatprep.subr.mxu0 0.0
    %5719 = vmatpush1.msra.mxu0 0.0
    %5720 = vmatprep.subr.mxu0 0.0
    %5721 = vmatpush1.msra.mxu0 0.0
    %5722 = vmatprep.subr.mxu0 0.0
    %5723 = vmatpush1.msra.mxu0 0.0
    %5724 = vmatprep.subr.mxu0 0.0
    %5725 = vmatpush1.msra.mxu0 0.0
    %5726 = vmatprep.subr.mxu0 0.0
    %5727 = vmatpush1.msra.mxu0 0.0
    %5728 = vmatprep.subr.mxu0 0.0
    %5729 = vmatpush1.msra.mxu0 0.0
    %5730 = vmatprep.subr.mxu0 0.0
    %5731 = vmatpush1.msra.mxu0 0.0
    %5732 = vmatprep.subr.mxu0 0.0
    %5733 = vmatpush1.msra.mxu0 0.0
    %5734 = vmatprep.subr.mxu0 0.0
    %5735 = vmatpush1.msra.mxu0 0.0
    %5736 = vmatprep.subr.mxu0 0.0
    %5737 = vmatpush1.msra.mxu0 0.0
    %5738 = vmatprep.subr.mxu0 0.0
    %5739 = vmatpush1.msra.mxu0 0.0
    %5740 = vmatprep.subr.mxu0 0.0
    %5741 = vmatpush1.msra.mxu0 0.0
    %5742 = vmatprep.subr.mxu0 0.0
    %5743 = vmatpush1.msra.mxu0 0.0
    %5744 = vmatprep.subr.mxu0 0.0
    %5745 = vmatpush1.msra.mxu0 0.0
    %5746 = vmatprep.subr.mxu0 0.0
    %5747 = vmatpush1.msra.mxu0 0.0
    %5748 = vmatprep.subr.mxu0 0.0
    %5749 = vmatpush1.msra.mxu0 0.0
    %5750 = vmatprep.subr.mxu0 0.0
    %5751 = vmatpush1.msra.mxu0 0.0
    %5752 = vmatprep.subr.mxu0 0.0
    %5753 = vmatpush1.msra.mxu0 0.0
    %5754 = vmatprep.subr.mxu0 0.0
    %5755 = vmatpush1.msra.mxu0 0.0
    %5756 = vmatprep.mubr.f32.mxu0 0.0
    %5757 = vmatmul.mubr.f32.gmra.mrb[0].mxu0 %v5687
    %v5758 = vpop.f32.mrb[0].mxu0
    %v5759 = vadd.f32 %v5685, %v5758
    %v5760 = vpop.f32.mrb[0].mxu0
    %5761 = vmatprep.mubr.f32.mxu0 0.0
    %5762 = vmatmul.mubr.f32.gmra.mrb[0].mxu0 %v5690
    %v5763 = vpop.f32.mrb[0].mxu0
    %v5764 = vadd.f32 %v5685, %v5763
    %v5765 = vpop.f32.mrb[0].mxu0
    %5766 = vdwg.mxu0
    %v5767 = vadd.f32 %v5759, %v4945
    %v5768 = vadd.f32 %v5764, %v4946
    %v5769 = vsel %vm134, %v5767, 0.0
    %5770 = vadd.xlane.f32.xlu0 %v5769
    %v5771 = vpop.xlane.xlu0 %5770
    %v5772 = vsel %vm134, %v5768, 0.0
    %5773 = vadd.xlane.f32.xlu0 %v5772
    %v5774 = vpop.xlane.xlu0 %5773
    %v5775 = vmul.f32 %v5771, %v930
    %v5776 = vmul.f32 %v5774, %v930
    %v5777 = vsub.f32 %v5767, %v5775
    %v5778 = vsub.f32 %v5768, %v5776
    %v5779 = vmul.f32 %v5777, %v5777
    %v5780 = vmul.f32 %v5778, %v5778
    %v5781 = vsel %vm134, %v5779, 0.0
    %5782 = vadd.xlane.f32.xlu0 %v5781
    %v5783 = vpop.xlane.xlu0 %5782
    %v5784 = vsel %vm134, %v5780, 0.0
    %5785 = vadd.xlane.f32.xlu0 %v5784
    %v5786 = vpop.xlane.xlu0 %5785
    %v5787 = vmul.f32 %v5783, %v930
    %v5788 = vmul.f32 %v5786, %v930
    %v5789 = vadd.f32 %v5787, 1e-05
    %v5790 = vadd.f32 %v5788, 1e-05
    %v5791 = vrsqrt.pop %v5789
    %v5792 = vrsqrt.pop %v5790
    %v5793 = vmul.f32 %v5777, %v5791
    %v5794 = vmul.f32 %v5778, %v5792
    %v5795 = vld [vmem:[#allocation2 + $0x570] sm:$0x1]
    %v5796 = vlaneseq
    %v5797 = vshrl.u32 %v5796, 7
    %v5798 = vsub.s32 0, %v5797
    %v5799 = vrot.slane %v5795, %v5798
    %v5800 = vmul.f32 %v5793, %v5799
    %v5801 = vmul.f32 %v5794, %v5799
    %v5802 = vld [vmem:[#allocation2 + $0x578] sm:$0x1]
    %v5803 = vlaneseq
    %v5804 = vshrl.u32 %v5803, 7
    %v5805 = vsub.s32 0, %v5804
    %v5806 = vrot.slane %v5802, %v5805
    %v5807 = vadd.f32 %v5800, %v5806
    %v5808 = vadd.f32 %v5801, %v5806
    %v5809 = vld [vmem:[#allocation2 + $0x590] sm:$0xff]
    %v5810 = vld [vmem:[#allocation2 + $0x598] sm:$0xff]
    %v5811 = vld [vmem:[#allocation2 + $0x5a0] sm:$0xff]
    %v5812 = vld [vmem:[#allocation2 + $0x5a8] sm:$0xff]
    %v5813 = vld [vmem:[#allocation2 + $0x5b0] sm:$0x1]
    %v5814 = vlaneseq
    %v5815 = vshrl.u32 %v5814, 7
    %v5816 = vsub.s32 0, %v5815
    %v5817 = vrot.slane %v5813, %v5816
    %v5819 = vsel %vm134, %v5807, 0
    %v5822 = vsel %vm134, %v5808, 0
    %5824 = vmatprep.subr.mxu0 0.0
    %5825 = vmatpush1.msra.mxu0 %v5809
    %5826 = vmatprep.subr.mxu0 0.0
    %5827 = vmatpush1.msra.mxu0 %v5810
    %5828 = vmatprep.subr.mxu0 0.0
    %5829 = vmatpush1.msra.mxu0 %v5811
    %5830 = vmatprep.subr.mxu0 0.0
    %5831 = vmatpush1.msra.mxu0 %v5812
    %5832 = vmatprep.subr.mxu0 0.0
    %5833 = vmatpush1.msra.mxu0 0.0
    %5834 = vmatprep.subr.mxu0 0.0
    %5835 = vmatpush1.msra.mxu0 0.0
    %5836 = vmatprep.subr.mxu0 0.0
    %5837 = vmatpush1.msra.mxu0 0.0
    %5838 = vmatprep.subr.mxu0 0.0
    %5839 = vmatpush1.msra.mxu0 0.0
    %5840 = vmatprep.subr.mxu0 0.0
    %5841 = vmatpush1.msra.mxu0 0.0
    %5842 = vmatprep.subr.mxu0 0.0
    %5843 = vmatpush1.msra.mxu0 0.0
    %5844 = vmatprep.subr.mxu0 0.0
    %5845 = vmatpush1.msra.mxu0 0.0
    %5846 = vmatprep.subr.mxu0 0.0
    %5847 = vmatpush1.msra.mxu0 0.0
    %5848 = vmatprep.subr.mxu0 0.0
    %5849 = vmatpush1.msra.mxu0 0.0
    %5850 = vmatprep.subr.mxu0 0.0
    %5851 = vmatpush1.msra.mxu0 0.0
    %5852 = vmatprep.subr.mxu0 0.0
    %5853 = vmatpush1.msra.mxu0 0.0
    %5854 = vmatprep.subr.mxu0 0.0
    %5855 = vmatpush1.msra.mxu0 0.0
    %5856 = vmatprep.subr.mxu0 0.0
    %5857 = vmatpush1.msra.mxu0 0.0
    %5858 = vmatprep.subr.mxu0 0.0
    %5859 = vmatpush1.msra.mxu0 0.0
    %5860 = vmatprep.subr.mxu0 0.0
    %5861 = vmatpush1.msra.mxu0 0.0
    %5862 = vmatprep.subr.mxu0 0.0
    %5863 = vmatpush1.msra.mxu0 0.0
    %5864 = vmatprep.subr.mxu0 0.0
    %5865 = vmatpush1.msra.mxu0 0.0
    %5866 = vmatprep.subr.mxu0 0.0
    %5867 = vmatpush1.msra.mxu0 0.0
    %5868 = vmatprep.subr.mxu0 0.0
    %5869 = vmatpush1.msra.mxu0 0.0
    %5870 = vmatprep.subr.mxu0 0.0
    %5871 = vmatpush1.msra.mxu0 0.0
    %5872 = vmatprep.subr.mxu0 0.0
    %5873 = vmatpush1.msra.mxu0 0.0
    %5874 = vmatprep.subr.mxu0 0.0
    %5875 = vmatpush1.msra.mxu0 0.0
    %5876 = vmatprep.subr.mxu0 0.0
    %5877 = vmatpush1.msra.mxu0 0.0
    %5878 = vmatprep.subr.mxu0 0.0
    %5879 = vmatpush1.msra.mxu0 0.0
    %5880 = vmatprep.subr.mxu0 0.0
    %5881 = vmatpush1.msra.mxu0 0.0
    %5882 = vmatprep.subr.mxu0 0.0
    %5883 = vmatpush1.msra.mxu0 0.0
    %5884 = vmatprep.subr.mxu0 0.0
    %5885 = vmatpush1.msra.mxu0 0.0
    %5886 = vmatprep.subr.mxu0 0.0
    %5887 = vmatpush1.msra.mxu0 0.0
    %5888 = vmatprep.mubr.f32.mxu0 0.0
    %5889 = vmatmul.mubr.f32.gmra.mrb[0].mxu0 %v5819
    %v5890 = vpop.f32.mrb[0].mxu0
    %v5891 = vadd.f32 %v5817, %v5890
    %v5892 = vpop.f32.mrb[0].mxu0
    %5893 = vmatprep.mubr.f32.mxu0 0.0
    %5894 = vmatmul.mubr.f32.gmra.mrb[0].mxu0 %v5822
    %v5895 = vpop.f32.mrb[0].mxu0
    %v5896 = vadd.f32 %v5817, %v5895
    %v5897 = vpop.f32.mrb[0].mxu0
    %5898 = vdwg.mxu0
    %v5899 = vmax.f32 %v5891, 0.0
    %v5900 = vmax.f32 %v5896, 0.0
    %v5901 = vld [vmem:[#allocation2 + $0x5b8] sm:$0xff]
    %v5902 = vld [vmem:[#allocation2 + $0x5c0] sm:$0xff]
    %v5903 = vld [vmem:[#allocation2 + $0x5c8] sm:$0xff]
    %v5904 = vld [vmem:[#allocation2 + $0x5d0] sm:$0xff]
    %v5905 = vld [vmem:[#allocation2 + $0x5d8] sm:$0xff]
    %v5906 = vld [vmem:[#allocation2 + $0x5e0] sm:$0xff]
    %v5907 = vld [vmem:[#allocation2 + $0x5e8] sm:$0xff]
    %v5908 = vld [vmem:[#allocation2 + $0x5f0] sm:$0xff]
    %v5909 = vld [vmem:[#allocation2 + $0x5f8] sm:$0xff]
    %v5910 = vld [vmem:[#allocation2 + $0x600] sm:$0xff]
    %v5911 = vld [vmem:[#allocation2 + $0x608] sm:$0xff]
    %v5912 = vld [vmem:[#allocation2 + $0x610] sm:$0xff]
    %v5913 = vld [vmem:[#allocation2 + $0x618] sm:$0xff]
    %v5914 = vld [vmem:[#allocation2 + $0x620] sm:$0xff]
    %v5915 = vld [vmem:[#allocation2 + $0x628] sm:$0xff]
    %v5916 = vld [vmem:[#allocation2 + $0x630] sm:$0xff]
    %v5917 = vld [vmem:[#allocation2 + $0x638] sm:$0x1]
    %v5918 = vlaneseq
    %v5919 = vshrl.u32 %v5918, 7
    %v5920 = vsub.s32 0, %v5919
    %v5921 = vrot.slane %v5917, %v5920
    %5922 = vmatprep.subr.mxu0 0.0
    %5923 = vmatpush1.msra.mxu0 %v5901
    %5924 = vmatprep.subr.mxu0 0.0
    %5925 = vmatpush1.msra.mxu0 %v5902
    %5926 = vmatprep.subr.mxu0 0.0
    %5927 = vmatpush1.msra.mxu0 %v5903
    %5928 = vmatprep.subr.mxu0 0.0
    %5929 = vmatpush1.msra.mxu0 %v5904
    %5930 = vmatprep.subr.mxu0 0.0
    %5931 = vmatpush1.msra.mxu0 %v5905
    %5932 = vmatprep.subr.mxu0 0.0
    %5933 = vmatpush1.msra.mxu0 %v5906
    %5934 = vmatprep.subr.mxu0 0.0
    %5935 = vmatpush1.msra.mxu0 %v5907
    %5936 = vmatprep.subr.mxu0 0.0
    %5937 = vmatpush1.msra.mxu0 %v5908
    %5938 = vmatprep.subr.mxu0 0.0
    %5939 = vmatpush1.msra.mxu0 %v5909
    %5940 = vmatprep.subr.mxu0 0.0
    %5941 = vmatpush1.msra.mxu0 %v5910
    %5942 = vmatprep.subr.mxu0 0.0
    %5943 = vmatpush1.msra.mxu0 %v5911
    %5944 = vmatprep.subr.mxu0 0.0
    %5945 = vmatpush1.msra.mxu0 %v5912
    %5946 = vmatprep.subr.mxu0 0.0
    %5947 = vmatpush1.msra.mxu0 %v5913
    %5948 = vmatprep.subr.mxu0 0.0
    %5949 = vmatpush1.msra.mxu0 %v5914
    %5950 = vmatprep.subr.mxu0 0.0
    %5951 = vmatpush1.msra.mxu0 %v5915
    %5952 = vmatprep.subr.mxu0 0.0
    %5953 = vmatpush1.msra.mxu0 %v5916
    %5954 = vmatprep.subr.mxu0 0.0
    %5955 = vmatpush1.msra.mxu0 0.0
    %5956 = vmatprep.subr.mxu0 0.0
    %5957 = vmatpush1.msra.mxu0 0.0
    %5958 = vmatprep.subr.mxu0 0.0
    %5959 = vmatpush1.msra.mxu0 0.0
    %5960 = vmatprep.subr.mxu0 0.0
    %5961 = vmatpush1.msra.mxu0 0.0
    %5962 = vmatprep.subr.mxu0 0.0
    %5963 = vmatpush1.msra.mxu0 0.0
    %5964 = vmatprep.subr.mxu0 0.0
    %5965 = vmatpush1.msra.mxu0 0.0
    %5966 = vmatprep.subr.mxu0 0.0
    %5967 = vmatpush1.msra.mxu0 0.0
    %5968 = vmatprep.subr.mxu0 0.0
    %5969 = vmatpush1.msra.mxu0 0.0
    %5970 = vmatprep.subr.mxu0 0.0
    %5971 = vmatpush1.msra.mxu0 0.0
    %5972 = vmatprep.subr.mxu0 0.0
    %5973 = vmatpush1.msra.mxu0 0.0
    %5974 = vmatprep.subr.mxu0 0.0
    %5975 = vmatpush1.msra.mxu0 0.0
    %5976 = vmatprep.subr.mxu0 0.0
    %5977 = vmatpush1.msra.mxu0 0.0
    %5978 = vmatprep.subr.mxu0 0.0
    %5979 = vmatpush1.msra.mxu0 0.0
    %5980 = vmatprep.subr.mxu0 0.0
    %5981 = vmatpush1.msra.mxu0 0.0
    %5982 = vmatprep.subr.mxu0 0.0
    %5983 = vmatpush1.msra.mxu0 0.0
    %5984 = vmatprep.subr.mxu0 0.0
    %5985 = vmatpush1.msra.mxu0 0.0
    %5986 = vmatprep.mubr.f32.mxu0 0.0
    %5987 = vmatmul.mubr.f32.gmra.mrb[0].mxu0 %v5899
    %v5988 = vpop.f32.mrb[0].mxu0
    %v5989 = vadd.f32 %v5921, %v5988
    %v5990 = vpop.f32.mrb[0].mxu0
    %5991 = vmatprep.mubr.f32.mxu0 0.0
    %5992 = vmatmul.mubr.f32.gmra.mrb[0].mxu0 %v5900
    %v5993 = vpop.f32.mrb[0].mxu0
    %v5994 = vadd.f32 %v5921, %v5993
    %v5995 = vpop.f32.mrb[0].mxu0
    %5996 = vdwg.mxu0
    %v5997 = vadd.f32 %v5989, %v5807
    %v5998 = vadd.f32 %v5994, %v5808
    %v5999 = vsel %vm134, %v5997, 0.0
    %6000 = vadd.xlane.f32.xlu0 %v5999
    %v6001 = vpop.xlane.xlu0 %6000
    %v6002 = vsel %vm134, %v5998, 0.0
    %6003 = vadd.xlane.f32.xlu0 %v6002
    %v6004 = vpop.xlane.xlu0 %6003
    %v6005 = vmul.f32 %v6001, %v930
    %v6006 = vmul.f32 %v6004, %v930
    %v6007 = vsub.f32 %v5997, %v6005
    %v6008 = vsub.f32 %v5998, %v6006
    %v6009 = vmul.f32 %v6007, %v6007
    %v6010 = vmul.f32 %v6008, %v6008
    %v6011 = vsel %vm134, %v6009, 0.0
    %6012 = vadd.xlane.f32.xlu0 %v6011
    %v6013 = vpop.xlane.xlu0 %6012
    %v6014 = vsel %vm134, %v6010, 0.0
    %6015 = vadd.xlane.f32.xlu0 %v6014
    %v6016 = vpop.xlane.xlu0 %6015
    %v6017 = vmul.f32 %v6013, %v930
    %v6018 = vmul.f32 %v6016, %v930
    %v6019 = vadd.f32 %v6017, 1e-05
    %v6020 = vadd.f32 %v6018, 1e-05
    %v6021 = vrsqrt.pop %v6019
    %v6022 = vrsqrt.pop %v6020
    %v6023 = vmul.f32 %v6007, %v6021
    %v6024 = vmul.f32 %v6008, %v6022
    %v6025 = vld [vmem:[#allocation2 + $0x580] sm:$0x1]
    %v6026 = vlaneseq
    %v6027 = vshrl.u32 %v6026, 7
    %v6028 = vsub.s32 0, %v6027
    %v6029 = vrot.slane %v6025, %v6028
    %v6030 = vmul.f32 %v6023, %v6029
    %v6031 = vmul.f32 %v6024, %v6029
    %v6032 = vld [vmem:[#allocation2 + $0x588] sm:$0x1]
    %v6033 = vlaneseq
    %v6034 = vshrl.u32 %v6033, 7
    %v6035 = vsub.s32 0, %v6034
    %v6036 = vrot.slane %v6032, %v6035
    %v6037 = vadd.f32 %v6030, %v6036
    %v6038 = vadd.f32 %v6031, %v6036
    %v6039 = vld [vmem:[#allocation2 + $0x38] sm:$0xff]
    %v6040 = vld [vmem:[#allocation2 + $0x40] sm:$0xff]
    %v6041 = vld [vmem:[#allocation2 + $0x48] sm:$0xff]
    %v6042 = vld [vmem:[#allocation2 + $0x50] sm:$0xff]
    %v6043 = vld [vmem:[#allocation2 + $0x58] sm:$0x1]
    %v6044 = vlaneseq
    %v6045 = vshrl.u32 %v6044, 7
    %v6046 = vsub.s32 0, %v6045
    %v6047 = vrot.slane %v6043, %v6046
    %v6049 = vsel %vm134, %v6037, 0
    %v6052 = vsel %vm134, %v6038, 0
    %6054 = vmatprep.subr.mxu0 0.0
    %6055 = vmatpush1.msra.mxu0 %v6039
    %6056 = vmatprep.subr.mxu0 0.0
    %6057 = vmatpush1.msra.mxu0 %v6040
    %6058 = vmatprep.subr.mxu0 0.0
    %6059 = vmatpush1.msra.mxu0 %v6041
    %6060 = vmatprep.subr.mxu0 0.0
    %6061 = vmatpush1.msra.mxu0 %v6042
    %6062 = vmatprep.subr.mxu0 0.0
    %6063 = vmatpush1.msra.mxu0 0.0
    %6064 = vmatprep.subr.mxu0 0.0
    %6065 = vmatpush1.msra.mxu0 0.0
    %6066 = vmatprep.subr.mxu0 0.0
    %6067 = vmatpush1.msra.mxu0 0.0
    %6068 = vmatprep.subr.mxu0 0.0
    %6069 = vmatpush1.msra.mxu0 0.0
    %6070 = vmatprep.subr.mxu0 0.0
    %6071 = vmatpush1.msra.mxu0 0.0
    %6072 = vmatprep.subr.mxu0 0.0
    %6073 = vmatpush1.msra.mxu0 0.0
    %6074 = vmatprep.subr.mxu0 0.0
    %6075 = vmatpush1.msra.mxu0 0.0
    %6076 = vmatprep.subr.mxu0 0.0
    %6077 = vmatpush1.msra.mxu0 0.0
    %6078 = vmatprep.subr.mxu0 0.0
    %6079 = vmatpush1.msra.mxu0 0.0
    %6080 = vmatprep.subr.mxu0 0.0
    %6081 = vmatpush1.msra.mxu0 0.0
    %6082 = vmatprep.subr.mxu0 0.0
    %6083 = vmatpush1.msra.mxu0 0.0
    %6084 = vmatprep.subr.mxu0 0.0
    %6085 = vmatpush1.msra.mxu0 0.0
    %6086 = vmatprep.subr.mxu0 0.0
    %6087 = vmatpush1.msra.mxu0 0.0
    %6088 = vmatprep.subr.mxu0 0.0
    %6089 = vmatpush1.msra.mxu0 0.0
    %6090 = vmatprep.subr.mxu0 0.0
    %6091 = vmatpush1.msra.mxu0 0.0
    %6092 = vmatprep.subr.mxu0 0.0
    %6093 = vmatpush1.msra.mxu0 0.0
    %6094 = vmatprep.subr.mxu0 0.0
    %6095 = vmatpush1.msra.mxu0 0.0
    %6096 = vmatprep.subr.mxu0 0.0
    %6097 = vmatpush1.msra.mxu0 0.0
    %6098 = vmatprep.subr.mxu0 0.0
    %6099 = vmatpush1.msra.mxu0 0.0
    %6100 = vmatprep.subr.mxu0 0.0
    %6101 = vmatpush1.msra.mxu0 0.0
    %6102 = vmatprep.subr.mxu0 0.0
    %6103 = vmatpush1.msra.mxu0 0.0
    %6104 = vmatprep.subr.mxu0 0.0
    %6105 = vmatpush1.msra.mxu0 0.0
    %6106 = vmatprep.subr.mxu0 0.0
    %6107 = vmatpush1.msra.mxu0 0.0
    %6108 = vmatprep.subr.mxu0 0.0
    %6109 = vmatpush1.msra.mxu0 0.0
    %6110 = vmatprep.subr.mxu0 0.0
    %6111 = vmatpush1.msra.mxu0 0.0
    %6112 = vmatprep.subr.mxu0 0.0
    %6113 = vmatpush1.msra.mxu0 0.0
    %6114 = vmatprep.subr.mxu0 0.0
    %6115 = vmatpush1.msra.mxu0 0.0
    %6116 = vmatprep.subr.mxu0 0.0
    %6117 = vmatpush1.msra.mxu0 0.0
    %6118 = vmatprep.mubr.f32.mxu0 0.0
    %6119 = vmatmul.mubr.f32.gmra.mrb[0].mxu0 %v6049
    %v6120 = vpop.f32.mrb[0].mxu0
    %v6121 = vadd.f32 %v6047, %v6120
    %v6122 = vpop.f32.mrb[0].mxu0
    %6123 = vmatprep.mubr.f32.mxu0 0.0
    %6124 = vmatmul.mubr.f32.gmra.mrb[0].mxu0 %v6052
    %v6125 = vpop.f32.mrb[0].mxu0
    %v6126 = vadd.f32 %v6047, %v6125
    %v6127 = vpop.f32.mrb[0].mxu0
    %6128 = vdwg.mxu0
    %v6129 = vsel %vm232, %v6121, -inf
    %v6130 = vrot.slane %v6129, 4
    %v6131 = vmax.f32 %v6129, %v6130
    %v6132 = vrot.slane %v6131, 2
    %v6133 = vmax.f32 %v6131, %v6132
    %v6134 = vrot.slane %v6133, 1
    %v6135 = vmax.f32 %v6133, %v6134
    %v6136 = vsub.f32 %v6121, %v6135
    %v6137 = vmul.f32 %v6136, 1.442695
    %v6138 = vpow.pop %v6137
    %v6139 = vsel %vm232, %v6138, 0.0
    %v6140 = vrot.slane %v6139, 4
    %v6141 = vadd.f32 %v6139, %v6140
    %v6142 = vrot.slane %v6141, 2
    %v6143 = vadd.f32 %v6141, %v6142
    %v6144 = vrot.slane %v6143, 1
    %v6145 = vadd.f32 %v6143, %v6144
    %v6146 = vrcp.pop %v6145
    %v6147 = vmul.f32 %v6138, %v6146
    %6148 = vst.msk [vmem:[#allocation5] sm:$0xff] %vm232, %v6147
    %v6149 = vsel %vm232, %v6126, -inf
    %v6150 = vrot.slane %v6149, 4
    %v6151 = vmax.f32 %v6149, %v6150
    %v6152 = vrot.slane %v6151, 2
    %v6153 = vmax.f32 %v6151, %v6152
    %v6154 = vrot.slane %v6153, 1
    %v6155 = vmax.f32 %v6153, %v6154
    %v6156 = vsub.f32 %v6126, %v6155
    %v6157 = vmul.f32 %v6156, 1.442695
    %v6158 = vpow.pop %v6157
    %v6159 = vsel %vm232, %v6158, 0.0
    %v6160 = vrot.slane %v6159, 4
    %v6161 = vadd.f32 %v6159, %v6160
    %v6162 = vrot.slane %v6161, 2
    %v6163 = vadd.f32 %v6161, %v6162
    %v6164 = vrot.slane %v6163, 1
    %v6165 = vadd.f32 %v6163, %v6164
    %v6166 = vrcp.pop %v6165
    %v6167 = vmul.f32 %v6158, %v6166
    %s6168 = scalar_lea.vmem [#allocation5], 8
    %6169 = vst.msk [vmem:[%s6168] sm:$0xff] %vm232, %v6167
    // Predicated region
    $region18: #{transformer_fwd.1} parent=1 // pred_check
      _
    $region19: #{transformer_fwd.1} parent=1 // pred_check_branch
      %6171 = sbr.rel (0) target = $region21
    $region20: #{transformer_fwd.1} parent=1 // pred_region
      %s6173 = ssub.s32 256, 256
      %6174 = vsyncadd [#allocation4], %s6173
      %s6175 = sshll.u32 [#allocation5], 4
      %s6176 = int_to_ptr.vmem [resolvable:$true] %s6175
      %6181 = dma.vmem_to_hbm [thread:$0]  %s6176, 256, %s3, [#allocation4], 128, 128, 8
    $region21: #{transformer_fwd.1} parent=1 // pred_fallthru
      _
    // Predicated region
    $region22: #{transformer_fwd.1} parent=1 // pred_check
      _
    $region23: #{transformer_fwd.1} parent=1 // pred_check_branch
      %6183 = sbr.rel (0) target = $region25
    $region24: #{transformer_fwd.1} parent=1 // pred_region
      %6184 = dma.done [#allocation4], 256
    $region25: #{transformer_fwd.1} parent=1 // pred_fallthru
      _
    %6185 = vsyncpa [#allocation3], 1
    %6186 = vsyncpa [#allocation4], 1

</llo_original>
